<compile_context>
chip_gen: v5e
topology: v5e:2x2
jax: 0.10.0
libtpu: 0.0.40
codegen_flags: <defaults>
</compile_context>

<pallas_src>
import functools

import jax
import jax.numpy as jnp
from jax.experimental import pallas as pl
from jax.experimental.pallas import tpu as pltpu

_BN_EPS = 1e-5
_COMPUTE_DTYPE = jnp.bfloat16   # MXU input / inter-stage activation dtype
_SUBLANE = 16                   # bf16 sublane packing (align interior stores)


def _round_up(x, m):
    return (x + m - 1) // m * m


# ---------------------------------------------------------------------------
# Fused encoder kernel (one batch element per grid step, everything in VMEM)
# ---------------------------------------------------------------------------

def _encoder_kernel(x_ref, wlat_ref, blat_ref, wfpn_ref, bfpn_ref,
                    w1_ref, b1_ref, w2_ref, b2_ref, w3_ref, b3_ref,
                    o_ref, pad_fpn, pad_blk,
                    *, H, W, dilations, dmax, wl_fpn, wl_blk):
    """lateral 1x1+BN -> fpn 3x3+BN -> [Bottleneck(d) for d in dilations].

    x_ref:   (1, H, W, Cin)            o_ref: (1, H, W, Ce)
    wlat:    (Cin, Ce)                 wfpn: (3, 3, Ce, Ce)
    w1:      (nb, Ce, Cm)   w2: (nb, 3, 3, Cm, Cm)   w3: (nb, Cm, Ce)
    pad_fpn: VMEM (H+2,      wl_fpn+W+1,    Ce)   halo scratch, halo width 1
    pad_blk: VMEM (H+2*dmax, wl_blk+W+dmax, Cm)   halo scratch, halo width dmax
    """
    Cin = x_ref.shape[-1]
    Ce = wlat_ref.shape[-1]
    Cm = w1_ref.shape[-1]

    # ---- zero ONLY the halo rings (interiors are fully overwritten before
    # every read; the rings are never written with data).  Re-done each grid
    # step because scratch is per-core and the batch axis is "parallel", so a
    # program_id==0-only init would leave other cores' rings uninitialised.
    def _zero_ring(pad, row0, col0):
        Hp, Wp, C = pad.shape
        dt = pad.dtype
        pad[0:row0, :, :] = jnp.zeros((row0, Wp, C), dt)                 # top
        pad[row0 + H:Hp, :, :] = jnp.zeros((Hp - row0 - H, Wp, C), dt)   # bottom
        pad[row0:row0 + H, 0:col0, :] = jnp.zeros((H, col0, C), dt)      # left
        pad[row0:row0 + H, col0 + W:Wp, :] = (                            # right
            jnp.zeros((H, Wp - col0 - W, C), dt))

    _zero_ring(pad_fpn, 1, wl_fpn)
    _zero_ring(pad_blk, dmax, wl_blk)

    def _conv3x3(pad, row0, col0, d, w_tap, shift, relu):
        """3x3 (dilated) conv over the zero-padded VMEM scratch.

        w_tap(ky, kx) loads a single (C_in, C_out) tap straight from its Ref,
        so the full 3x3 weight is never materialised.  Returns f32 (H*W, Cout).
        """
        acc = None
        for kx in range(3):
            # Hoist the W (sublane-axis) slice out of the ky loop: 3 retiling
            # slices per conv instead of 9.
            c0 = col0 + (kx - 1) * d
            xk = pad[:, c0:c0 + W, :]                      # (Hp, W, C)
            for ky in range(3):
                r0 = row0 + (ky - 1) * d
                xs = xk[r0:r0 + H].reshape(H * W, xk.shape[-1])
                t = jnp.dot(xs, w_tap(ky, kx),
                            preferred_element_type=jnp.float32)
                acc = t if acc is None else acc + t
        acc = acc + shift
        return jnp.maximum(acc, 0.0) if relu else acc

    # ------------------------- projector ---------------------------------
    # lateral 1x1 conv + folded BN (no activation)
    x2 = x_ref[...].reshape(H * W, Cin)
    lat = jnp.dot(x2, wlat_ref[...], preferred_element_type=jnp.float32)
    lat = lat + blat_ref[...]
    pad_fpn[1:1 + H, wl_fpn:wl_fpn + W, :] = (
        lat.reshape(H, W, Ce).astype(pad_fpn.dtype))

    # fpn 3x3 conv + folded BN (no activation); halo handled in VMEM scratch
    y = _conv3x3(pad_fpn, 1, wl_fpn, 1,
                 lambda ky, kx: wfpn_ref[ky, kx], bfpn_ref[...], relu=False)
    o_ref[...] = y.reshape(1, H, W, Ce).astype(o_ref.dtype)

    # -------------------- dilated residual blocks ------------------------
    for i, d in enumerate(dilations):
        inp = o_ref[...].reshape(H * W, Ce)               # bf16, VMEM resident

        # conv1: 1x1 + BN + ReLU
        h1 = jnp.dot(inp, w1_ref[i], preferred_element_type=jnp.float32)
        h1 = jnp.maximum(h1 + b1_ref[i], 0.0)

        # conv2: dilated 3x3 + BN + ReLU (mid channels never leave VMEM)
        pad_blk[dmax:dmax + H, wl_blk:wl_blk + W, :] = (
            h1.reshape(H, W, Cm).astype(pad_blk.dtype))
        h2 = _conv3x3(pad_blk, dmax, wl_blk, d,
                      lambda ky, kx, i=i: w2_ref[i, ky, kx],
                      b2_ref[i], relu=True)

        # conv3: 1x1 + BN + ReLU, then residual add.  The identity is re-read
        # from the VMEM-resident activation (no long-lived f32 copy).
        y = jnp.dot(h2.astype(_COMPUTE_DTYPE), w3_ref[i],
                    preferred_element_type=jnp.float32)
        y = jnp.maximum(y + b3_ref[i], 0.0)
        y = y + o_ref[...].reshape(H * W, Ce).astype(jnp.float32)
        o_ref[...] = y.reshape(1, H, W, Ce).astype(o_ref.dtype)


# ---------------------------------------------------------------------------
# pallas_call wrapper
# ---------------------------------------------------------------------------

def _encoder_pallas(x_nhwc, params):
    N, H, W, Cin = x_nhwc.shape
    lat, fpn, blk = params['lateral'], params['fpn'], params['blocks']
    Ce = lat['w'].shape[-1]
    Cm = blk['w1'].shape[-1]                 # lane-padded mid channels
    dil = tuple(int(d) for d in blk['dilations'])
    assert len(dil) >= 1
    nb = len(dil)
    dmax = max(dil)
    wl_fpn = _round_up(1, _SUBLANE)          # sublane-aligned left halo
    wl_blk = _round_up(dmax, _SUBLANE)

    def const_spec(shape):
        """Grid-invariant input: full-array block, single-buffered (it never
        changes across the batch grid, so double-buffering wastes VMEM)."""
        ndim = len(shape)
        idx = lambda n: (0,) * ndim
        try:
            return pl.BlockSpec(shape, idx,
                                pipeline_mode=pl.Buffered(buffer_count=1))
        except (TypeError, AttributeError):   # older jax: no pipeline_mode
            return pl.BlockSpec(shape, idx)

    weight_args = (lat['w'], lat['shift'], fpn['w'], fpn['shift'],
                   blk['w1'], blk['b1'], blk['w2'], blk['b2'],
                   blk['w3'], blk['b3'])
    in_specs = [pl.BlockSpec((1, H, W, Cin), lambda n: (n, 0, 0, 0))]
    in_specs += [const_spec(tuple(a.shape)) for a in weight_args]

    pad_fpn_shape = (H + 2, wl_fpn + W + 1, Ce)
    pad_blk_shape = (H + 2 * dmax, wl_blk + W + dmax, Cm)

    # Per-call VMEM working set (double-buffered x/out, single-buffered
    # weights, scratch); used to set an explicit scoped-VMEM limit, clamped to
    # v7x's 64 MiB physical VMEM.
    def nbytes(shape, dt):
        sz = 1
        for s in shape:
            sz *= int(s)
        return sz * jnp.dtype(dt).itemsize

    est = (2 * nbytes((1, H, W, Cin), x_nhwc.dtype)
           + 2 * nbytes((1, H, W, Ce), _COMPUTE_DTYPE)
           + sum(int(a.size) * a.dtype.itemsize for a in weight_args)
           + nbytes(pad_fpn_shape, _COMPUTE_DTYPE)
           + nbytes(pad_blk_shape, _COMPUTE_DTYPE))
    vmem_limit = int(min(max(2 * est, 32 * 1024 * 1024), 64 * 1024 * 1024))

    flops_per_n = 2 * H * W * (Cin * Ce + 9 * Ce * Ce
                               + nb * (Ce * Cm + 9 * Cm * Cm + Cm * Ce))
    bytes_accessed = (int(x_nhwc.size) * x_nhwc.dtype.itemsize
                      + N * H * W * Ce * jnp.dtype(_COMPUTE_DTYPE).itemsize
                      + sum(int(a.size) * a.dtype.itemsize for a in weight_args))

    return pl.pallas_call(
        functools.partial(_encoder_kernel, H=H, W=W, dilations=dil, dmax=dmax,
                          wl_fpn=wl_fpn, wl_blk=wl_blk),
        out_shape=jax.ShapeDtypeStruct((N, H, W, Ce), _COMPUTE_DTYPE),
        grid=(N,),
        in_specs=in_specs,
        out_specs=pl.BlockSpec((1, H, W, Ce), lambda n: (n, 0, 0, 0)),
        scratch_shapes=[pltpu.VMEM(pad_fpn_shape, _COMPUTE_DTYPE),
                        pltpu.VMEM(pad_blk_shape, _COMPUTE_DTYPE)],
        compiler_params=pltpu.CompilerParams(
            dimension_semantics=("parallel",),
            vmem_limit_bytes=vmem_limit),
        cost_estimate=pl.CostEstimate(flops=N * flops_per_n,
                                      transcendentals=0,
                                      bytes_accessed=bytes_accessed),
    )(x_nhwc, *weight_args)


# ---------------------------------------------------------------------------
# Parameter construction (mirrors DilatedEncoder._init_weight, eval-mode BN
# folded into bf16 conv weights + f32 per-channel shifts).
# ---------------------------------------------------------------------------

def _fold_bn(w, conv_bias, gamma, beta, mean, var):
    """w has Cout as its LAST axis.  Returns (bf16 folded weight, f32 shift)."""
    scale = gamma / jnp.sqrt(var + _BN_EPS)
    shift = (conv_bias - mean) * scale + beta
    return (w * scale).astype(_COMPUTE_DTYPE), shift.astype(jnp.float32).reshape(1, -1)


def _pad_axis(a, axis, new_size):
    axis = axis % a.ndim
    extra = new_size - a.shape[axis]
    if extra <= 0:
        return a
    widths = [(0, 0)] * a.ndim
    widths[axis] = (0, extra)
    return jnp.pad(a, widths)


def make_params(key, in_channels, encoder_channels, mid_channels, block_dilations):
    nb = len(block_dilations)
    keys = jax.random.split(key, 2 + 3 * nb)
    kiter = iter(keys)

    def bn_identity(c):
        return (jnp.ones((c,), jnp.float32), jnp.zeros((c,), jnp.float32),
                jnp.zeros((c,), jnp.float32), jnp.ones((c,), jnp.float32))

    p = {}

    # lateral 1x1: c2_xavier_fill (uniform +-sqrt(3/fan_in)), zero bias + BN
    bound = (3.0 / in_channels) ** 0.5
    w = jax.random.uniform(next(kiter), (in_channels, encoder_channels),
                           jnp.float32, -bound, bound)
    wf, sh = _fold_bn(w, jnp.zeros((encoder_channels,), jnp.float32),
                      *bn_identity(encoder_channels))
    p['lateral'] = dict(w=wf, shift=sh)

    # fpn 3x3: c2_xavier_fill, zero bias + BN
    bound = (3.0 / (encoder_channels * 9)) ** 0.5
    w = jax.random.uniform(next(kiter),
                           (3, 3, encoder_channels, encoder_channels),
                           jnp.float32, -bound, bound)
    wf, sh = _fold_bn(w, jnp.zeros((encoder_channels,), jnp.float32),
                      *bn_identity(encoder_channels))
    p['fpn'] = dict(w=wf, shift=sh)

    # Bottleneck blocks: conv weights ~ N(0, 0.01), zero bias, identity BN.
    # Mid channels are zero-padded to a multiple of 128 so every matmul is
    # lane-dense on the MXU (exact: padded channels stay identically zero).
    cm_pad = _round_up(mid_channels, 128)
    w1s, b1s, w2s, b2s, w3s, b3s = [], [], [], [], [], []
    for _ in block_dilations:
        w1 = 0.01 * jax.random.normal(next(kiter),
                                      (encoder_channels, mid_channels), jnp.float32)
        w2 = 0.01 * jax.random.normal(next(kiter),
                                      (3, 3, mid_channels, mid_channels), jnp.float32)
        w3 = 0.01 * jax.random.normal(next(kiter),
                                      (mid_channels, encoder_channels), jnp.float32)
        w1f, b1 = _fold_bn(w1, jnp.zeros((mid_channels,), jnp.float32),
                           *bn_identity(mid_channels))
        w2f, b2 = _fold_bn(w2, jnp.zeros((mid_channels,), jnp.float32),
                           *bn_identity(mid_channels))
        w3f, b3 = _fold_bn(w3, jnp.zeros((encoder_channels,), jnp.float32),
                           *bn_identity(encoder_channels))
        w1s.append(_pad_axis(w1f, -1, cm_pad))
        b1s.append(_pad_axis(b1, -1, cm_pad))
        w2s.append(_pad_axis(_pad_axis(w2f, -1, cm_pad), -2, cm_pad))
        b2s.append(_pad_axis(b2, -1, cm_pad))
        w3s.append(_pad_axis(w3f, 0, cm_pad))
        b3s.append(b3)

    p['blocks'] = dict(dilations=tuple(int(d) for d in block_dilations),
                       w1=jnp.stack(w1s), b1=jnp.stack(b1s),
                       w2=jnp.stack(w2s), b2=jnp.stack(b2s),
                       w3=jnp.stack(w3s), b3=jnp.stack(b3s))
    return p


# ---------------------------------------------------------------------------
# Forward passes (Pallas + pure-JAX reference for a tolerance check)
# ---------------------------------------------------------------------------

def dilated_encoder_forward(feature_nchw, params):
    # NCHW -> NHWC, bf16 activations into the fused kernel (f32 math inside).
    x = jnp.transpose(feature_nchw, (0, 2, 3, 1)).astype(_COMPUTE_DTYPE)
    out = _encoder_pallas(x, params)
    return jnp.transpose(out, (0, 3, 1, 2)).astype(feature_nchw.dtype)


def _conv_ref(x, w, shift, d=1, relu=False):
    if w.ndim == 2:
        w = w.reshape(1, 1, *w.shape)
    k = int(w.shape[0])
    pad = d * (k // 2)
    y = jax.lax.conv_general_dilated(
        x, w.astype(jnp.float32), window_strides=(1, 1),
        padding=[(pad, pad), (pad, pad)], rhs_dilation=(d, d),
        dimension_numbers=('NHWC', 'HWIO', 'NHWC'),
        precision=jax.lax.Precision.HIGHEST)
    y = y + shift.reshape(1, 1, 1, -1).astype(jnp.float32)
    return jnp.maximum(y, 0.0) if relu else y


def dilated_encoder_reference(feature_nchw, params):
    """Pure-JAX reference (f32 activations) using the same folded weights."""
    x = jnp.transpose(feature_nchw, (0, 2, 3, 1))
    x = x.astype(_COMPUTE_DTYPE).astype(jnp.float32)     # same input rounding
    out = _conv_ref(x, params['lateral']['w'], params['lateral']['shift'])
    out = _conv_ref(out, params['fpn']['w'], params['fpn']['shift'])
    blk = params['blocks']
    for i, d in enumerate(blk['dilations']):
        h = _conv_ref(out, blk['w1'][i], blk['b1'][i], relu=True)
        h = _conv_ref(h, blk['w2'][i], blk['b2'][i], d=int(d), relu=True)
        h = _conv_ref(h, blk['w3'][i], blk['b3'][i], relu=True)
        out = out + h
    return jnp.transpose(out, (0, 3, 1, 2)).astype(feature_nchw.dtype)


# ---------------------------------------------------------------------------
# Main
# ---------------------------------------------------------------------------

if __name__ == "__main__":
    # Small config consistent with the module (YOLOF defaults scaled down).
    # N=4 keeps >=2 grid steps per TensorCore on dual-core parts.
    N, C_IN, H, W = 4, 64, 8, 8
    ENCODER_CHANNELS = 128
    MID_CHANNELS = 32
    BLOCK_DILATIONS = [2, 4, 6, 8]

    key = jax.random.PRNGKey(0)
    k_x, k_p = jax.random.split(key)
    feature = jax.random.normal(k_x, (N, C_IN, H, W), jnp.float32)
    params = make_params(k_p, C_IN, ENCODER_CHANNELS, MID_CHANNELS,
                         BLOCK_DILATIONS)

    out = dilated_encoder_forward(feature, params)
    out = jax.block_until_ready(out)
    assert out.shape == (N, ENCODER_CHANNELS, H, W)
    assert bool(jnp.all(jnp.isfinite(out)))

    # Tolerance check (not bit-compare): bf16 weights/activations drift a
    # little from the f32 reference, which is expected for eval-mode inference.
    ref = dilated_encoder_reference(feature, params)
    err = float(jnp.max(jnp.abs(out.astype(jnp.float32) - ref.astype(jnp.float32))))
    scale = float(jnp.max(jnp.abs(ref))) + 1e-6
    assert err <= 0.05 * scale + 1e-2, (err, scale)

    print("KERNEL_OK")
</pallas_src>

<mosaic_0001>
module attributes {stable_mosaic.version = 11 : i64} {
  func.func @_encoder_kernel(%arg0: i32, %arg1: memref<1x8x8x64xbf16, #tpu.memory_space<vmem>>, %arg2: memref<64x128xbf16, #tpu.memory_space<vmem>>, %arg3: memref<1x128xf32, #tpu.memory_space<vmem>>, %arg4: memref<3x3x128x128xbf16, #tpu.memory_space<vmem>>, %arg5: memref<1x128xf32, #tpu.memory_space<vmem>>, %arg6: memref<4x128x128xbf16, #tpu.memory_space<vmem>>, %arg7: memref<4x1x128xf32, #tpu.memory_space<vmem>>, %arg8: memref<4x3x3x128x128xbf16, #tpu.memory_space<vmem>>, %arg9: memref<4x1x128xf32, #tpu.memory_space<vmem>>, %arg10: memref<4x128x128xbf16, #tpu.memory_space<vmem>>, %arg11: memref<4x1x128xf32, #tpu.memory_space<vmem>>, %arg12: memref<1x8x8x128xbf16, #tpu.memory_space<vmem>>, %arg13: memref<10x25x128xbf16, #tpu.memory_space<vmem>>, %arg14: memref<24x32x128xbf16, #tpu.memory_space<vmem>>) attributes {dimension_semantics = [#tpu.dimension_semantics<parallel>], iteration_bounds = array<i64: 4>, scalar_prefetch = 0 : i64, scratch_operands = 2 : i64, tpu.core_type = #tpu.core_type<tc>, window_params = [{transform_indices = @transform_0, window_bounds = array<i64: 1, 8, 8, 64>}, {pipeline_mode = #tpu.pipeline_mode<synchronous>, transform_indices = @transform_1, window_bounds = array<i64: 64, 128>}, {pipeline_mode = #tpu.pipeline_mode<synchronous>, transform_indices = @transform_2, window_bounds = array<i64: 1, 128>}, {pipeline_mode = #tpu.pipeline_mode<synchronous>, transform_indices = @transform_3, window_bounds = array<i64: 3, 3, 128, 128>}, {pipeline_mode = #tpu.pipeline_mode<synchronous>, transform_indices = @transform_4, window_bounds = array<i64: 1, 128>}, {pipeline_mode = #tpu.pipeline_mode<synchronous>, transform_indices = @transform_5, window_bounds = array<i64: 4, 128, 128>}, {pipeline_mode = #tpu.pipeline_mode<synchronous>, transform_indices = @transform_6, window_bounds = array<i64: 4, 1, 128>}, {pipeline_mode = #tpu.pipeline_mode<synchronous>, transform_indices = @transform_7, window_bounds = array<i64: 4, 3, 3, 128, 128>}, {pipeline_mode = #tpu.pipeline_mode<synchronous>, transform_indices = @transform_8, window_bounds = array<i64: 4, 1, 128>}, {pipeline_mode = #tpu.pipeline_mode<synchronous>, transform_indices = @transform_9, window_bounds = array<i64: 4, 128, 128>}, {pipeline_mode = #tpu.pipeline_mode<synchronous>, transform_indices = @transform_10, window_bounds = array<i64: 4, 1, 128>}, {transform_indices = @transform_11, window_bounds = array<i64: 1, 8, 8, 128>}]} {
    %cst = arith.constant 0.000000e+00 : bf16
    %0 = vector.broadcast %cst : bf16 to vector<1x25x128xbf16>
    %c0 = arith.constant 0 : index
    %c0_0 = arith.constant 0 : index
    %c0_1 = arith.constant 0 : index
    %1 = vector.load %arg13[%c0, %c0_0, %c0_1] : memref<10x25x128xbf16, #tpu.memory_space<vmem>>, vector<1x25x128xbf16>
    tpu.vector_store %arg13[%c0, %c0_0, %c0_1], %0 {strides = array<i32>} : memref<10x25x128xbf16, #tpu.memory_space<vmem>>, vector<1x25x128xbf16>,
    %cst_2 = arith.constant 0.000000e+00 : bf16
    %2 = vector.broadcast %cst_2 : bf16 to vector<1x25x128xbf16>
    %c9 = arith.constant 9 : index
    %c0_3 = arith.constant 0 : index
    %c0_4 = arith.constant 0 : index
    %3 = vector.load %arg13[%c9, %c0_3, %c0_4] : memref<10x25x128xbf16, #tpu.memory_space<vmem>>, vector<1x25x128xbf16>
    tpu.vector_store %arg13[%c9, %c0_3, %c0_4], %2 {strides = array<i32>} : memref<10x25x128xbf16, #tpu.memory_space<vmem>>, vector<1x25x128xbf16>,
    %cst_5 = arith.constant 0.000000e+00 : bf16
    %4 = vector.broadcast %cst_5 : bf16 to vector<8x16x128xbf16>
    %c1 = arith.constant 1 : index
    %c0_6 = arith.constant 0 : index
    %c0_7 = arith.constant 0 : index
    %5 = vector.load %arg13[%c1, %c0_6, %c0_7] : memref<10x25x128xbf16, #tpu.memory_space<vmem>>, vector<8x16x128xbf16>
    tpu.vector_store %arg13[%c1, %c0_6, %c0_7], %4 {strides = array<i32>} : memref<10x25x128xbf16, #tpu.memory_space<vmem>>, vector<8x16x128xbf16>,
    %cst_8 = arith.constant 0.000000e+00 : bf16
    %6 = vector.broadcast %cst_8 : bf16 to vector<8x1x128xbf16>
    %c1_9 = arith.constant 1 : index
    %c24 = arith.constant 24 : index
    %c0_10 = arith.constant 0 : index
    %7 = vector.load %arg13[%c1_9, %c24, %c0_10] : memref<10x25x128xbf16, #tpu.memory_space<vmem>>, vector<8x1x128xbf16>
    tpu.vector_store %arg13[%c1_9, %c24, %c0_10], %6 {strides = array<i32>} : memref<10x25x128xbf16, #tpu.memory_space<vmem>>, vector<8x1x128xbf16>,
    %cst_11 = arith.constant 0.000000e+00 : bf16
    %8 = vector.broadcast %cst_11 : bf16 to vector<8x32x128xbf16>
    %c0_12 = arith.constant 0 : index
    %c0_13 = arith.constant 0 : index
    %c0_14 = arith.constant 0 : index
    %9 = vector.load %arg14[%c0_12, %c0_13, %c0_14] : memref<24x32x128xbf16, #tpu.memory_space<vmem>>, vector<8x32x128xbf16>
    tpu.vector_store %arg14[%c0_12, %c0_13, %c0_14], %8 {strides = array<i32>} : memref<24x32x128xbf16, #tpu.memory_space<vmem>>, vector<8x32x128xbf16>,
    %cst_15 = arith.constant 0.000000e+00 : bf16
    %10 = vector.broadcast %cst_15 : bf16 to vector<8x32x128xbf16>
    %c16 = arith.constant 16 : index
    %c0_16 = arith.constant 0 : index
    %c0_17 = arith.constant 0 : index
    %11 = vector.load %arg14[%c16, %c0_16, %c0_17] : memref<24x32x128xbf16, #tpu.memory_space<vmem>>, vector<8x32x128xbf16>
    tpu.vector_store %arg14[%c16, %c0_16, %c0_17], %10 {strides = array<i32>} : memref<24x32x128xbf16, #tpu.memory_space<vmem>>, vector<8x32x128xbf16>,
    %cst_18 = arith.constant 0.000000e+00 : bf16
    %12 = vector.broadcast %cst_18 : bf16 to vector<8x16x128xbf16>
    %c8 = arith.constant 8 : index
    %c0_19 = arith.constant 0 : index
    %c0_20 = arith.constant 0 : index
    %13 = vector.load %arg14[%c8, %c0_19, %c0_20] : memref<24x32x128xbf16, #tpu.memory_space<vmem>>, vector<8x16x128xbf16>
    tpu.vector_store %arg14[%c8, %c0_19, %c0_20], %12 {strides = array<i32>} : memref<24x32x128xbf16, #tpu.memory_space<vmem>>, vector<8x16x128xbf16>,
    %cst_21 = arith.constant 0.000000e+00 : bf16
    %14 = vector.broadcast %cst_21 : bf16 to vector<8x8x128xbf16>
    %c8_22 = arith.constant 8 : index
    %c24_23 = arith.constant 24 : index
    %c0_24 = arith.constant 0 : index
    %15 = vector.load %arg14[%c8_22, %c24_23, %c0_24] : memref<24x32x128xbf16, #tpu.memory_space<vmem>>, vector<8x8x128xbf16>
    tpu.vector_store %arg14[%c8_22, %c24_23, %c0_24], %14 {strides = array<i32>} : memref<24x32x128xbf16, #tpu.memory_space<vmem>>, vector<8x8x128xbf16>,
    %c0_25 = arith.constant 0 : index
    %c0_26 = arith.constant 0 : index
    %c0_27 = arith.constant 0 : index
    %c0_28 = arith.constant 0 : index
    %16 = vector.load %arg1[%c0_25, %c0_26, %c0_27, %c0_28] : memref<1x8x8x64xbf16, #tpu.memory_space<vmem>>, vector<1x8x8x64xbf16>
    %17 = vector.shape_cast %16 : vector<1x8x8x64xbf16> to vector<64x64xbf16>
    %c0_29 = arith.constant 0 : index
    %c0_30 = arith.constant 0 : index
    %18 = vector.load %arg2[%c0_29, %c0_30] : memref<64x128xbf16, #tpu.memory_space<vmem>>, vector<64x128xbf16>
    %cst_31 = arith.constant dense<0.000000e+00> : vector<64x128xf32>
    %19 = tpu.matmul %17, %18, %cst_31 {dimension_numbers = #tpu.dot_dimension_numbers<[1], [0], [0], [1], [0, 0, 1, 1], [], []>} : vector<64x64xbf16>, vector<64x128xbf16>, vector<64x128xf32> -> vector<64x128xf32>
    %c0_32 = arith.constant 0 : index
    %c0_33 = arith.constant 0 : index
    %20 = vector.load %arg3[%c0_32, %c0_33] : memref<1x128xf32, #tpu.memory_space<vmem>>, vector<1x128xf32>
    %21 = vector.broadcast %20 : vector<1x128xf32> to vector<64x128xf32>
    %22 = arith.addf %19, %21 : vector<64x128xf32>
    %23 = vector.shape_cast %22 : vector<64x128xf32> to vector<8x8x128xf32>
    %24 = arith.truncf %23 : vector<8x8x128xf32> to vector<8x8x128xbf16>
    %c1_34 = arith.constant 1 : index
    %c16_35 = arith.constant 16 : index
    %c0_36 = arith.constant 0 : index
    %25 = vector.load %arg13[%c1_34, %c16_35, %c0_36] : memref<10x25x128xbf16, #tpu.memory_space<vmem>>, vector<8x8x128xbf16>
    tpu.vector_store %arg13[%c1_34, %c16_35, %c0_36], %24 {strides = array<i32>} : memref<10x25x128xbf16, #tpu.memory_space<vmem>>, vector<8x8x128xbf16>,
    %c0_37 = arith.constant 0 : index
    %c0_38 = arith.constant 0 : index
    %26 = vector.load %arg5[%c0_37, %c0_38] : memref<1x128xf32, #tpu.memory_space<vmem>>, vector<1x128xf32>
    %c0_39 = arith.constant 0 : index
    %c15 = arith.constant 15 : index
    %c0_40 = arith.constant 0 : index
    %27 = vector.load %arg13[%c0_39, %c15, %c0_40] : memref<10x25x128xbf16, #tpu.memory_space<vmem>>, vector<10x8x128xbf16>
    %28 = vector.extract_strided_slice %27 {offsets = [0, 0, 0], sizes = [8, 8, 128], strides = [1, 1, 1]} : vector<10x8x128xbf16> to vector<8x8x128xbf16>
    %29 = vector.shape_cast %28 : vector<8x8x128xbf16> to vector<64x128xbf16>
    %c0_41 = arith.constant 0 : index
    %c0_42 = arith.constant 0 : index
    %c0_43 = arith.constant 0 : index
    %c0_44 = arith.constant 0 : index
    %30 = vector.load %arg4[%c0_41, %c0_42, %c0_43, %c0_44] : memref<3x3x128x128xbf16, #tpu.memory_space<vmem>>, vector<1x1x128x128xbf16>
    %31 = vector.shape_cast %30 : vector<1x1x128x128xbf16> to vector<128x128xbf16>
    %cst_45 = arith.constant dense<0.000000e+00> : vector<64x128xf32>
    %32 = tpu.matmul %29, %31, %cst_45 {dimension_numbers = #tpu.dot_dimension_numbers<[1], [0], [0], [1], [0, 0, 1, 1], [], []>} : vector<64x128xbf16>, vector<128x128xbf16>, vector<64x128xf32> -> vector<64x128xf32>
    %33 = vector.extract_strided_slice %27 {offsets = [1, 0, 0], sizes = [8, 8, 128], strides = [1, 1, 1]} : vector<10x8x128xbf16> to vector<8x8x128xbf16>
    %34 = vector.shape_cast %33 : vector<8x8x128xbf16> to vector<64x128xbf16>
    %c1_46 = arith.constant 1 : index
    %c0_47 = arith.constant 0 : index
    %c0_48 = arith.constant 0 : index
    %c0_49 = arith.constant 0 : index
    %35 = vector.load %arg4[%c1_46, %c0_47, %c0_48, %c0_49] : memref<3x3x128x128xbf16, #tpu.memory_space<vmem>>, vector<1x1x128x128xbf16>
    %36 = vector.shape_cast %35 : vector<1x1x128x128xbf16> to vector<128x128xbf16>
    %cst_50 = arith.constant dense<0.000000e+00> : vector<64x128xf32>
    %37 = tpu.matmul %34, %36, %cst_50 {dimension_numbers = #tpu.dot_dimension_numbers<[1], [0], [0], [1], [0, 0, 1, 1], [], []>} : vector<64x128xbf16>, vector<128x128xbf16>, vector<64x128xf32> -> vector<64x128xf32>
    %38 = arith.addf %32, %37 : vector<64x128xf32>
    %39 = vector.extract_strided_slice %27 {offsets = [2, 0, 0], sizes = [8, 8, 128], strides = [1, 1, 1]} : vector<10x8x128xbf16> to vector<8x8x128xbf16>
    %40 = vector.shape_cast %39 : vector<8x8x128xbf16> to vector<64x128xbf16>
    %c2 = arith.constant 2 : index
    %c0_51 = arith.constant 0 : index
    %c0_52 = arith.constant 0 : index
    %c0_53 = arith.constant 0 : index
    %41 = vector.load %arg4[%c2, %c0_51, %c0_52, %c0_53] : memref<3x3x128x128xbf16, #tpu.memory_space<vmem>>, vector<1x1x128x128xbf16>
    %42 = vector.shape_cast %41 : vector<1x1x128x128xbf16> to vector<128x128xbf16>
    %cst_54 = arith.constant dense<0.000000e+00> : vector<64x128xf32>
    %43 = tpu.matmul %40, %42, %cst_54 {dimension_numbers = #tpu.dot_dimension_numbers<[1], [0], [0], [1], [0, 0, 1, 1], [], []>} : vector<64x128xbf16>, vector<128x128xbf16>, vector<64x128xf32> -> vector<64x128xf32>
    %44 = arith.addf %38, %43 : vector<64x128xf32>
    %c0_55 = arith.constant 0 : index
    %c16_56 = arith.constant 16 : index
    %c0_57 = arith.constant 0 : index
    %45 = vector.load %arg13[%c0_55, %c16_56, %c0_57] : memref<10x25x128xbf16, #tpu.memory_space<vmem>>, vector<10x8x128xbf16>
    %46 = vector.extract_strided_slice %45 {offsets = [0, 0, 0], sizes = [8, 8, 128], strides = [1, 1, 1]} : vector<10x8x128xbf16> to vector<8x8x128xbf16>
    %47 = vector.shape_cast %46 : vector<8x8x128xbf16> to vector<64x128xbf16>
    %c0_58 = arith.constant 0 : index
    %c1_59 = arith.constant 1 : index
    %c0_60 = arith.constant 0 : index
    %c0_61 = arith.constant 0 : index
    %48 = vector.load %arg4[%c0_58, %c1_59, %c0_60, %c0_61] : memref<3x3x128x128xbf16, #tpu.memory_space<vmem>>, vector<1x1x128x128xbf16>
    %49 = vector.shape_cast %48 : vector<1x1x128x128xbf16> to vector<128x128xbf16>
    %cst_62 = arith.constant dense<0.000000e+00> : vector<64x128xf32>
    %50 = tpu.matmul %47, %49, %cst_62 {dimension_numbers = #tpu.dot_dimension_numbers<[1], [0], [0], [1], [0, 0, 1, 1], [], []>} : vector<64x128xbf16>, vector<128x128xbf16>, vector<64x128xf32> -> vector<64x128xf32>
    %51 = arith.addf %44, %50 : vector<64x128xf32>
    %52 = vector.extract_strided_slice %45 {offsets = [1, 0, 0], sizes = [8, 8, 128], strides = [1, 1, 1]} : vector<10x8x128xbf16> to vector<8x8x128xbf16>
    %53 = vector.shape_cast %52 : vector<8x8x128xbf16> to vector<64x128xbf16>
    %c1_63 = arith.constant 1 : index
    %c1_64 = arith.constant 1 : index
    %c0_65 = arith.constant 0 : index
    %c0_66 = arith.constant 0 : index
    %54 = vector.load %arg4[%c1_63, %c1_64, %c0_65, %c0_66] : memref<3x3x128x128xbf16, #tpu.memory_space<vmem>>, vector<1x1x128x128xbf16>
    %55 = vector.shape_cast %54 : vector<1x1x128x128xbf16> to vector<128x128xbf16>
    %cst_67 = arith.constant dense<0.000000e+00> : vector<64x128xf32>
    %56 = tpu.matmul %53, %55, %cst_67 {dimension_numbers = #tpu.dot_dimension_numbers<[1], [0], [0], [1], [0, 0, 1, 1], [], []>} : vector<64x128xbf16>, vector<128x128xbf16>, vector<64x128xf32> -> vector<64x128xf32>
    %57 = arith.addf %51, %56 : vector<64x128xf32>
    %58 = vector.extract_strided_slice %45 {offsets = [2, 0, 0], sizes = [8, 8, 128], strides = [1, 1, 1]} : vector<10x8x128xbf16> to vector<8x8x128xbf16>
    %59 = vector.shape_cast %58 : vector<8x8x128xbf16> to vector<64x128xbf16>
    %c2_68 = arith.constant 2 : index
    %c1_69 = arith.constant 1 : index
    %c0_70 = arith.constant 0 : index
    %c0_71 = arith.constant 0 : index
    %60 = vector.load %arg4[%c2_68, %c1_69, %c0_70, %c0_71] : memref<3x3x128x128xbf16, #tpu.memory_space<vmem>>, vector<1x1x128x128xbf16>
    %61 = vector.shape_cast %60 : vector<1x1x128x128xbf16> to vector<128x128xbf16>
    %cst_72 = arith.constant dense<0.000000e+00> : vector<64x128xf32>
    %62 = tpu.matmul %59, %61, %cst_72 {dimension_numbers = #tpu.dot_dimension_numbers<[1], [0], [0], [1], [0, 0, 1, 1], [], []>} : vector<64x128xbf16>, vector<128x128xbf16>, vector<64x128xf32> -> vector<64x128xf32>
    %63 = arith.addf %57, %62 : vector<64x128xf32>
    %c0_73 = arith.constant 0 : index
    %c17 = arith.constant 17 : index
    %c0_74 = arith.constant 0 : index
    %64 = vector.load %arg13[%c0_73, %c17, %c0_74] : memref<10x25x128xbf16, #tpu.memory_space<vmem>>, vector<10x8x128xbf16>
    %65 = vector.extract_strided_slice %64 {offsets = [0, 0, 0], sizes = [8, 8, 128], strides = [1, 1, 1]} : vector<10x8x128xbf16> to vector<8x8x128xbf16>
    %66 = vector.shape_cast %65 : vector<8x8x128xbf16> to vector<64x128xbf16>
    %c0_75 = arith.constant 0 : index
    %c2_76 = arith.constant 2 : index
    %c0_77 = arith.constant 0 : index
    %c0_78 = arith.constant 0 : index
    %67 = vector.load %arg4[%c0_75, %c2_76, %c0_77, %c0_78] : memref<3x3x128x128xbf16, #tpu.memory_space<vmem>>, vector<1x1x128x128xbf16>
    %68 = vector.shape_cast %67 : vector<1x1x128x128xbf16> to vector<128x128xbf16>
    %cst_79 = arith.constant dense<0.000000e+00> : vector<64x128xf32>
    %69 = tpu.matmul %66, %68, %cst_79 {dimension_numbers = #tpu.dot_dimension_numbers<[1], [0], [0], [1], [0, 0, 1, 1], [], []>} : vector<64x128xbf16>, vector<128x128xbf16>, vector<64x128xf32> -> vector<64x128xf32>
    %70 = arith.addf %63, %69 : vector<64x128xf32>
    %71 = vector.extract_strided_slice %64 {offsets = [1, 0, 0], sizes = [8, 8, 128], strides = [1, 1, 1]} : vector<10x8x128xbf16> to vector<8x8x128xbf16>
    %72 = vector.shape_cast %71 : vector<8x8x128xbf16> to vector<64x128xbf16>
    %c1_80 = arith.constant 1 : index
    %c2_81 = arith.constant 2 : index
    %c0_82 = arith.constant 0 : index
    %c0_83 = arith.constant 0 : index
    %73 = vector.load %arg4[%c1_80, %c2_81, %c0_82, %c0_83] : memref<3x3x128x128xbf16, #tpu.memory_space<vmem>>, vector<1x1x128x128xbf16>
    %74 = vector.shape_cast %73 : vector<1x1x128x128xbf16> to vector<128x128xbf16>
    %cst_84 = arith.constant dense<0.000000e+00> : vector<64x128xf32>
    %75 = tpu.matmul %72, %74, %cst_84 {dimension_numbers = #tpu.dot_dimension_numbers<[1], [0], [0], [1], [0, 0, 1, 1], [], []>} : vector<64x128xbf16>, vector<128x128xbf16>, vector<64x128xf32> -> vector<64x128xf32>
    %76 = arith.addf %70, %75 : vector<64x128xf32>
    %77 = vector.extract_strided_slice %64 {offsets = [2, 0, 0], sizes = [8, 8, 128], strides = [1, 1, 1]} : vector<10x8x128xbf16> to vector<8x8x128xbf16>
    %78 = vector.shape_cast %77 : vector<8x8x128xbf16> to vector<64x128xbf16>
    %c2_85 = arith.constant 2 : index
    %c2_86 = arith.constant 2 : index
    %c0_87 = arith.constant 0 : index
    %c0_88 = arith.constant 0 : index
    %79 = vector.load %arg4[%c2_85, %c2_86, %c0_87, %c0_88] : memref<3x3x128x128xbf16, #tpu.memory_space<vmem>>, vector<1x1x128x128xbf16>
    %80 = vector.shape_cast %79 : vector<1x1x128x128xbf16> to vector<128x128xbf16>
    %cst_89 = arith.constant dense<0.000000e+00> : vector<64x128xf32>
    %81 = tpu.matmul %78, %80, %cst_89 {dimension_numbers = #tpu.dot_dimension_numbers<[1], [0], [0], [1], [0, 0, 1, 1], [], []>} : vector<64x128xbf16>, vector<128x128xbf16>, vector<64x128xf32> -> vector<64x128xf32>
    %82 = arith.addf %76, %81 : vector<64x128xf32>
    %83 = vector.broadcast %26 : vector<1x128xf32> to vector<64x128xf32>
    %84 = arith.addf %82, %83 : vector<64x128xf32>
    %85 = vector.shape_cast %84 : vector<64x128xf32> to vector<1x8x8x128xf32>
    %86 = arith.truncf %85 : vector<1x8x8x128xf32> to vector<1x8x8x128xbf16>
    %c0_90 = arith.constant 0 : index
    %c0_91 = arith.constant 0 : index
    %c0_92 = arith.constant 0 : index
    %c0_93 = arith.constant 0 : index
    %87 = vector.load %arg12[%c0_90, %c0_91, %c0_92, %c0_93] : memref<1x8x8x128xbf16, #tpu.memory_space<vmem>>, vector<1x8x8x128xbf16>
    tpu.vector_store %arg12[%c0_90, %c0_91, %c0_92, %c0_93], %86 {strides = array<i32>} : memref<1x8x8x128xbf16, #tpu.memory_space<vmem>>, vector<1x8x8x128xbf16>,
    %c0_94 = arith.constant 0 : index
    %c0_95 = arith.constant 0 : index
    %c0_96 = arith.constant 0 : index
    %c0_97 = arith.constant 0 : index
    %88 = vector.load %arg12[%c0_94, %c0_95, %c0_96, %c0_97] : memref<1x8x8x128xbf16, #tpu.memory_space<vmem>>, vector<1x8x8x128xbf16>
    %89 = vector.shape_cast %88 : vector<1x8x8x128xbf16> to vector<64x128xbf16>
    %c0_98 = arith.constant 0 : index
    %c0_99 = arith.constant 0 : index
    %c0_100 = arith.constant 0 : index
    %90 = vector.load %arg6[%c0_98, %c0_99, %c0_100] : memref<4x128x128xbf16, #tpu.memory_space<vmem>>, vector<1x128x128xbf16>
    %91 = vector.shape_cast %90 : vector<1x128x128xbf16> to vector<128x128xbf16>
    %cst_101 = arith.constant dense<0.000000e+00> : vector<64x128xf32>
    %92 = tpu.matmul %89, %91, %cst_101 {dimension_numbers = #tpu.dot_dimension_numbers<[1], [0], [0], [1], [0, 0, 1, 1], [], []>} : vector<64x128xbf16>, vector<128x128xbf16>, vector<64x128xf32> -> vector<64x128xf32>
    %c0_102 = arith.constant 0 : index
    %c0_103 = arith.constant 0 : index
    %c0_104 = arith.constant 0 : index
    %93 = vector.load %arg7[%c0_102, %c0_103, %c0_104] : memref<4x1x128xf32, #tpu.memory_space<vmem>>, vector<1x1x128xf32>
    %94 = vector.shape_cast %93 : vector<1x1x128xf32> to vector<1x128xf32>
    %95 = vector.broadcast %94 : vector<1x128xf32> to vector<64x128xf32>
    %96 = arith.addf %92, %95 : vector<64x128xf32>
    %cst_105 = arith.constant 0.000000e+00 : f32
    %97 = vector.broadcast %cst_105 : f32 to vector<64x128xf32>
    %98 = arith.maximumf %96, %97 : vector<64x128xf32>
    %99 = vector.shape_cast %98 : vector<64x128xf32> to vector<8x8x128xf32>
    %100 = arith.truncf %99 : vector<8x8x128xf32> to vector<8x8x128xbf16>
    %c8_106 = arith.constant 8 : index
    %c16_107 = arith.constant 16 : index
    %c0_108 = arith.constant 0 : index
    %101 = vector.load %arg14[%c8_106, %c16_107, %c0_108] : memref<24x32x128xbf16, #tpu.memory_space<vmem>>, vector<8x8x128xbf16>
    tpu.vector_store %arg14[%c8_106, %c16_107, %c0_108], %100 {strides = array<i32>} : memref<24x32x128xbf16, #tpu.memory_space<vmem>>, vector<8x8x128xbf16>,
    %c0_109 = arith.constant 0 : index
    %c0_110 = arith.constant 0 : index
    %c0_111 = arith.constant 0 : index
    %102 = vector.load %arg9[%c0_109, %c0_110, %c0_111] : memref<4x1x128xf32, #tpu.memory_space<vmem>>, vector<1x1x128xf32>
    %103 = vector.shape_cast %102 : vector<1x1x128xf32> to vector<1x128xf32>
    %c0_112 = arith.constant 0 : index
    %c14 = arith.constant 14 : index
    %c0_113 = arith.constant 0 : index
    %104 = vector.load %arg14[%c0_112, %c14, %c0_113] : memref<24x32x128xbf16, #tpu.memory_space<vmem>>, vector<24x8x128xbf16>
    %105 = vector.extract_strided_slice %104 {offsets = [6, 0, 0], sizes = [8, 8, 128], strides = [1, 1, 1]} : vector<24x8x128xbf16> to vector<8x8x128xbf16>
    %106 = vector.shape_cast %105 : vector<8x8x128xbf16> to vector<64x128xbf16>
    %c0_114 = arith.constant 0 : index
    %c0_115 = arith.constant 0 : index
    %c0_116 = arith.constant 0 : index
    %c0_117 = arith.constant 0 : index
    %c0_118 = arith.constant 0 : index
    %107 = vector.load %arg8[%c0_114, %c0_115, %c0_116, %c0_117, %c0_118] : memref<4x3x3x128x128xbf16, #tpu.memory_space<vmem>>, vector<1x1x1x128x128xbf16>
    %108 = vector.shape_cast %107 : vector<1x1x1x128x128xbf16> to vector<128x128xbf16>
    %cst_119 = arith.constant dense<0.000000e+00> : vector<64x128xf32>
    %109 = tpu.matmul %106, %108, %cst_119 {dimension_numbers = #tpu.dot_dimension_numbers<[1], [0], [0], [1], [0, 0, 1, 1], [], []>} : vector<64x128xbf16>, vector<128x128xbf16>, vector<64x128xf32> -> vector<64x128xf32>
    %110 = vector.extract_strided_slice %104 {offsets = [8, 0, 0], sizes = [8, 8, 128], strides = [1, 1, 1]} : vector<24x8x128xbf16> to vector<8x8x128xbf16>
    %111 = vector.shape_cast %110 : vector<8x8x128xbf16> to vector<64x128xbf16>
    %c0_120 = arith.constant 0 : index
    %c1_121 = arith.constant 1 : index
    %c0_122 = arith.constant 0 : index
    %c0_123 = arith.constant 0 : index
    %c0_124 = arith.constant 0 : index
    %112 = vector.load %arg8[%c0_120, %c1_121, %c0_122, %c0_123, %c0_124] : memref<4x3x3x128x128xbf16, #tpu.memory_space<vmem>>, vector<1x1x1x128x128xbf16>
    %113 = vector.shape_cast %112 : vector<1x1x1x128x128xbf16> to vector<128x128xbf16>
    %cst_125 = arith.constant dense<0.000000e+00> : vector<64x128xf32>
    %114 = tpu.matmul %111, %113, %cst_125 {dimension_numbers = #tpu.dot_dimension_numbers<[1], [0], [0], [1], [0, 0, 1, 1], [], []>} : vector<64x128xbf16>, vector<128x128xbf16>, vector<64x128xf32> -> vector<64x128xf32>
    %115 = arith.addf %109, %114 : vector<64x128xf32>
    %116 = vector.extract_strided_slice %104 {offsets = [10, 0, 0], sizes = [8, 8, 128], strides = [1, 1, 1]} : vector<24x8x128xbf16> to vector<8x8x128xbf16>
    %117 = vector.shape_cast %116 : vector<8x8x128xbf16> to vector<64x128xbf16>
    %c0_126 = arith.constant 0 : index
    %c2_127 = arith.constant 2 : index
    %c0_128 = arith.constant 0 : index
    %c0_129 = arith.constant 0 : index
    %c0_130 = arith.constant 0 : index
    %118 = vector.load %arg8[%c0_126, %c2_127, %c0_128, %c0_129, %c0_130] : memref<4x3x3x128x128xbf16, #tpu.memory_space<vmem>>, vector<1x1x1x128x128xbf16>
    %119 = vector.shape_cast %118 : vector<1x1x1x128x128xbf16> to vector<128x128xbf16>
    %cst_131 = arith.constant dense<0.000000e+00> : vector<64x128xf32>
    %120 = tpu.matmul %117, %119, %cst_131 {dimension_numbers = #tpu.dot_dimension_numbers<[1], [0], [0], [1], [0, 0, 1, 1], [], []>} : vector<64x128xbf16>, vector<128x128xbf16>, vector<64x128xf32> -> vector<64x128xf32>
    %121 = arith.addf %115, %120 : vector<64x128xf32>
    %c0_132 = arith.constant 0 : index
    %c16_133 = arith.constant 16 : index
    %c0_134 = arith.constant 0 : index
    %122 = vector.load %arg14[%c0_132, %c16_133, %c0_134] : memref<24x32x128xbf16, #tpu.memory_space<vmem>>, vector<24x8x128xbf16>
    %123 = vector.extract_strided_slice %122 {offsets = [6, 0, 0], sizes = [8, 8, 128], strides = [1, 1, 1]} : vector<24x8x128xbf16> to vector<8x8x128xbf16>
    %124 = vector.shape_cast %123 : vector<8x8x128xbf16> to vector<64x128xbf16>
    %c0_135 = arith.constant 0 : index
    %c0_136 = arith.constant 0 : index
    %c1_137 = arith.constant 1 : index
    %c0_138 = arith.constant 0 : index
    %c0_139 = arith.constant 0 : index
    %125 = vector.load %arg8[%c0_135, %c0_136, %c1_137, %c0_138, %c0_139] : memref<4x3x3x128x128xbf16, #tpu.memory_space<vmem>>, vector<1x1x1x128x128xbf16>
    %126 = vector.shape_cast %125 : vector<1x1x1x128x128xbf16> to vector<128x128xbf16>
    %cst_140 = arith.constant dense<0.000000e+00> : vector<64x128xf32>
    %127 = tpu.matmul %124, %126, %cst_140 {dimension_numbers = #tpu.dot_dimension_numbers<[1], [0], [0], [1], [0, 0, 1, 1], [], []>} : vector<64x128xbf16>, vector<128x128xbf16>, vector<64x128xf32> -> vector<64x128xf32>
    %128 = arith.addf %121, %127 : vector<64x128xf32>
    %129 = vector.extract_strided_slice %122 {offsets = [8, 0, 0], sizes = [8, 8, 128], strides = [1, 1, 1]} : vector<24x8x128xbf16> to vector<8x8x128xbf16>
    %130 = vector.shape_cast %129 : vector<8x8x128xbf16> to vector<64x128xbf16>
    %c0_141 = arith.constant 0 : index
    %c1_142 = arith.constant 1 : index
    %c1_143 = arith.constant 1 : index
    %c0_144 = arith.constant 0 : index
    %c0_145 = arith.constant 0 : index
    %131 = vector.load %arg8[%c0_141, %c1_142, %c1_143, %c0_144, %c0_145] : memref<4x3x3x128x128xbf16, #tpu.memory_space<vmem>>, vector<1x1x1x128x128xbf16>
    %132 = vector.shape_cast %131 : vector<1x1x1x128x128xbf16> to vector<128x128xbf16>
    %cst_146 = arith.constant dense<0.000000e+00> : vector<64x128xf32>
    %133 = tpu.matmul %130, %132, %cst_146 {dimension_numbers = #tpu.dot_dimension_numbers<[1], [0], [0], [1], [0, 0, 1, 1], [], []>} : vector<64x128xbf16>, vector<128x128xbf16>, vector<64x128xf32> -> vector<64x128xf32>
    %134 = arith.addf %128, %133 : vector<64x128xf32>
    %135 = vector.extract_strided_slice %122 {offsets = [10, 0, 0], sizes = [8, 8, 128], strides = [1, 1, 1]} : vector<24x8x128xbf16> to vector<8x8x128xbf16>
    %136 = vector.shape_cast %135 : vector<8x8x128xbf16> to vector<64x128xbf16>
    %c0_147 = arith.constant 0 : index
    %c2_148 = arith.constant 2 : index
    %c1_149 = arith.constant 1 : index
    %c0_150 = arith.constant 0 : index
    %c0_151 = arith.constant 0 : index
    %137 = vector.load %arg8[%c0_147, %c2_148, %c1_149, %c0_150, %c0_151] : memref<4x3x3x128x128xbf16, #tpu.memory_space<vmem>>, vector<1x1x1x128x128xbf16>
    %138 = vector.shape_cast %137 : vector<1x1x1x128x128xbf16> to vector<128x128xbf16>
    %cst_152 = arith.constant dense<0.000000e+00> : vector<64x128xf32>
    %139 = tpu.matmul %136, %138, %cst_152 {dimension_numbers = #tpu.dot_dimension_numbers<[1], [0], [0], [1], [0, 0, 1, 1], [], []>} : vector<64x128xbf16>, vector<128x128xbf16>, vector<64x128xf32> -> vector<64x128xf32>
    %140 = arith.addf %134, %139 : vector<64x128xf32>
    %c0_153 = arith.constant 0 : index
    %c18 = arith.constant 18 : index
    %c0_154 = arith.constant 0 : index
    %141 = vector.load %arg14[%c0_153, %c18, %c0_154] : memref<24x32x128xbf16, #tpu.memory_space<vmem>>, vector<24x8x128xbf16>
    %142 = vector.extract_strided_slice %141 {offsets = [6, 0, 0], sizes = [8, 8, 128], strides = [1, 1, 1]} : vector<24x8x128xbf16> to vector<8x8x128xbf16>
    %143 = vector.shape_cast %142 : vector<8x8x128xbf16> to vector<64x128xbf16>
    %c0_155 = arith.constant 0 : index
    %c0_156 = arith.constant 0 : index
    %c2_157 = arith.constant 2 : index
    %c0_158 = arith.constant 0 : index
    %c0_159 = arith.constant 0 : index
    %144 = vector.load %arg8[%c0_155, %c0_156, %c2_157, %c0_158, %c0_159] : memref<4x3x3x128x128xbf16, #tpu.memory_space<vmem>>, vector<1x1x1x128x128xbf16>
    %145 = vector.shape_cast %144 : vector<1x1x1x128x128xbf16> to vector<128x128xbf16>
    %cst_160 = arith.constant dense<0.000000e+00> : vector<64x128xf32>
    %146 = tpu.matmul %143, %145, %cst_160 {dimension_numbers = #tpu.dot_dimension_numbers<[1], [0], [0], [1], [0, 0, 1, 1], [], []>} : vector<64x128xbf16>, vector<128x128xbf16>, vector<64x128xf32> -> vector<64x128xf32>
    %147 = arith.addf %140, %146 : vector<64x128xf32>
    %148 = vector.extract_strided_slice %141 {offsets = [8, 0, 0], sizes = [8, 8, 128], strides = [1, 1, 1]} : vector<24x8x128xbf16> to vector<8x8x128xbf16>
    %149 = vector.shape_cast %148 : vector<8x8x128xbf16> to vector<64x128xbf16>
    %c0_161 = arith.constant 0 : index
    %c1_162 = arith.constant 1 : index
    %c2_163 = arith.constant 2 : index
    %c0_164 = arith.constant 0 : index
    %c0_165 = arith.constant 0 : index
    %150 = vector.load %arg8[%c0_161, %c1_162, %c2_163, %c0_164, %c0_165] : memref<4x3x3x128x128xbf16, #tpu.memory_space<vmem>>, vector<1x1x1x128x128xbf16>
    %151 = vector.shape_cast %150 : vector<1x1x1x128x128xbf16> to vector<128x128xbf16>
    %cst_166 = arith.constant dense<0.000000e+00> : vector<64x128xf32>
    %152 = tpu.matmul %149, %151, %cst_166 {dimension_numbers = #tpu.dot_dimension_numbers<[1], [0], [0], [1], [0, 0, 1, 1], [], []>} : vector<64x128xbf16>, vector<128x128xbf16>, vector<64x128xf32> -> vector<64x128xf32>
    %153 = arith.addf %147, %152 : vector<64x128xf32>
    %154 = vector.extract_strided_slice %141 {offsets = [10, 0, 0], sizes = [8, 8, 128], strides = [1, 1, 1]} : vector<24x8x128xbf16> to vector<8x8x128xbf16>
    %155 = vector.shape_cast %154 : vector<8x8x128xbf16> to vector<64x128xbf16>
    %c0_167 = arith.constant 0 : index
    %c2_168 = arith.constant 2 : index
    %c2_169 = arith.constant 2 : index
    %c0_170 = arith.constant 0 : index
    %c0_171 = arith.constant 0 : index
    %156 = vector.load %arg8[%c0_167, %c2_168, %c2_169, %c0_170, %c0_171] : memref<4x3x3x128x128xbf16, #tpu.memory_space<vmem>>, vector<1x1x1x128x128xbf16>
    %157 = vector.shape_cast %156 : vector<1x1x1x128x128xbf16> to vector<128x128xbf16>
    %cst_172 = arith.constant dense<0.000000e+00> : vector<64x128xf32>
    %158 = tpu.matmul %155, %157, %cst_172 {dimension_numbers = #tpu.dot_dimension_numbers<[1], [0], [0], [1], [0, 0, 1, 1], [], []>} : vector<64x128xbf16>, vector<128x128xbf16>, vector<64x128xf32> -> vector<64x128xf32>
    %159 = arith.addf %153, %158 : vector<64x128xf32>
    %160 = vector.broadcast %103 : vector<1x128xf32> to vector<64x128xf32>
    %161 = arith.addf %159, %160 : vector<64x128xf32>
    %cst_173 = arith.constant 0.000000e+00 : f32
    %162 = vector.broadcast %cst_173 : f32 to vector<64x128xf32>
    %163 = arith.maximumf %161, %162 : vector<64x128xf32>
    %164 = arith.truncf %163 : vector<64x128xf32> to vector<64x128xbf16>
    %c0_174 = arith.constant 0 : index
    %c0_175 = arith.constant 0 : index
    %c0_176 = arith.constant 0 : index
    %165 = vector.load %arg10[%c0_174, %c0_175, %c0_176] : memref<4x128x128xbf16, #tpu.memory_space<vmem>>, vector<1x128x128xbf16>
    %166 = vector.shape_cast %165 : vector<1x128x128xbf16> to vector<128x128xbf16>
    %cst_177 = arith.constant dense<0.000000e+00> : vector<64x128xf32>
    %167 = tpu.matmul %164, %166, %cst_177 {dimension_numbers = #tpu.dot_dimension_numbers<[1], [0], [0], [1], [0, 0, 1, 1], [], []>} : vector<64x128xbf16>, vector<128x128xbf16>, vector<64x128xf32> -> vector<64x128xf32>
    %c0_178 = arith.constant 0 : index
    %c0_179 = arith.constant 0 : index
    %c0_180 = arith.constant 0 : index
    %168 = vector.load %arg11[%c0_178, %c0_179, %c0_180] : memref<4x1x128xf32, #tpu.memory_space<vmem>>, vector<1x1x128xf32>
    %169 = vector.shape_cast %168 : vector<1x1x128xf32> to vector<1x128xf32>
    %170 = vector.broadcast %169 : vector<1x128xf32> to vector<64x128xf32>
    %171 = arith.addf %167, %170 : vector<64x128xf32>
    %cst_181 = arith.constant 0.000000e+00 : f32
    %172 = vector.broadcast %cst_181 : f32 to vector<64x128xf32>
    %173 = arith.maximumf %171, %172 : vector<64x128xf32>
    %c0_182 = arith.constant 0 : index
    %c0_183 = arith.constant 0 : index
    %c0_184 = arith.constant 0 : index
    %c0_185 = arith.constant 0 : index
    %174 = vector.load %arg12[%c0_182, %c0_183, %c0_184, %c0_185] : memref<1x8x8x128xbf16, #tpu.memory_space<vmem>>, vector<1x8x8x128xbf16>
    %175 = vector.shape_cast %174 : vector<1x8x8x128xbf16> to vector<64x128xbf16>
    %176 = arith.extf %175 : vector<64x128xbf16> to vector<64x128xf32>
    %177 = arith.addf %173, %176 : vector<64x128xf32>
    %178 = vector.shape_cast %177 : vector<64x128xf32> to vector<1x8x8x128xf32>
    %179 = arith.truncf %178 : vector<1x8x8x128xf32> to vector<1x8x8x128xbf16>
    %c0_186 = arith.constant 0 : index
    %c0_187 = arith.constant 0 : index
    %c0_188 = arith.constant 0 : index
    %c0_189 = arith.constant 0 : index
    %180 = vector.load %arg12[%c0_186, %c0_187, %c0_188, %c0_189] : memref<1x8x8x128xbf16, #tpu.memory_space<vmem>>, vector<1x8x8x128xbf16>
    tpu.vector_store %arg12[%c0_186, %c0_187, %c0_188, %c0_189], %179 {strides = array<i32>} : memref<1x8x8x128xbf16, #tpu.memory_space<vmem>>, vector<1x8x8x128xbf16>,
    %c0_190 = arith.constant 0 : index
    %c0_191 = arith.constant 0 : index
    %c0_192 = arith.constant 0 : index
    %c0_193 = arith.constant 0 : index
    %181 = vector.load %arg12[%c0_190, %c0_191, %c0_192, %c0_193] : memref<1x8x8x128xbf16, #tpu.memory_space<vmem>>, vector<1x8x8x128xbf16>
    %182 = vector.shape_cast %181 : vector<1x8x8x128xbf16> to vector<64x128xbf16>
    %c1_194 = arith.constant 1 : index
    %c0_195 = arith.constant 0 : index
    %c0_196 = arith.constant 0 : index
    %183 = vector.load %arg6[%c1_194, %c0_195, %c0_196] : memref<4x128x128xbf16, #tpu.memory_space<vmem>>, vector<1x128x128xbf16>
    %184 = vector.shape_cast %183 : vector<1x128x128xbf16> to vector<128x128xbf16>
    %cst_197 = arith.constant dense<0.000000e+00> : vector<64x128xf32>
    %185 = tpu.matmul %182, %184, %cst_197 {dimension_numbers = #tpu.dot_dimension_numbers<[1], [0], [0], [1], [0, 0, 1, 1], [], []>} : vector<64x128xbf16>, vector<128x128xbf16>, vector<64x128xf32> -> vector<64x128xf32>
    %c1_198 = arith.constant 1 : index
    %c0_199 = arith.constant 0 : index
    %c0_200 = arith.constant 0 : index
    %186 = vector.load %arg7[%c1_198, %c0_199, %c0_200] : memref<4x1x128xf32, #tpu.memory_space<vmem>>, vector<1x1x128xf32>
    %187 = vector.shape_cast %186 : vector<1x1x128xf32> to vector<1x128xf32>
    %188 = vector.broadcast %187 : vector<1x128xf32> to vector<64x128xf32>
    %189 = arith.addf %185, %188 : vector<64x128xf32>
    %cst_201 = arith.constant 0.000000e+00 : f32
    %190 = vector.broadcast %cst_201 : f32 to vector<64x128xf32>
    %191 = arith.maximumf %189, %190 : vector<64x128xf32>
    %192 = vector.shape_cast %191 : vector<64x128xf32> to vector<8x8x128xf32>
    %193 = arith.truncf %192 : vector<8x8x128xf32> to vector<8x8x128xbf16>
    %c8_202 = arith.constant 8 : index
    %c16_203 = arith.constant 16 : index
    %c0_204 = arith.constant 0 : index
    %194 = vector.load %arg14[%c8_202, %c16_203, %c0_204] : memref<24x32x128xbf16, #tpu.memory_space<vmem>>, vector<8x8x128xbf16>
    tpu.vector_store %arg14[%c8_202, %c16_203, %c0_204], %193 {strides = array<i32>} : memref<24x32x128xbf16, #tpu.memory_space<vmem>>, vector<8x8x128xbf16>,
    %c1_205 = arith.constant 1 : index
    %c0_206 = arith.constant 0 : index
    %c0_207 = arith.constant 0 : index
    %195 = vector.load %arg9[%c1_205, %c0_206, %c0_207] : memref<4x1x128xf32, #tpu.memory_space<vmem>>, vector<1x1x128xf32>
    %196 = vector.shape_cast %195 : vector<1x1x128xf32> to vector<1x128xf32>
    %c0_208 = arith.constant 0 : index
    %c12 = arith.constant 12 : index
    %c0_209 = arith.constant 0 : index
    %197 = vector.load %arg14[%c0_208, %c12, %c0_209] : memref<24x32x128xbf16, #tpu.memory_space<vmem>>, vector<24x8x128xbf16>
    %198 = vector.extract_strided_slice %197 {offsets = [4, 0, 0], sizes = [8, 8, 128], strides = [1, 1, 1]} : vector<24x8x128xbf16> to vector<8x8x128xbf16>
    %199 = vector.shape_cast %198 : vector<8x8x128xbf16> to vector<64x128xbf16>
    %c1_210 = arith.constant 1 : index
    %c0_211 = arith.constant 0 : index
    %c0_212 = arith.constant 0 : index
    %c0_213 = arith.constant 0 : index
    %c0_214 = arith.constant 0 : index
    %200 = vector.load %arg8[%c1_210, %c0_211, %c0_212, %c0_213, %c0_214] : memref<4x3x3x128x128xbf16, #tpu.memory_space<vmem>>, vector<1x1x1x128x128xbf16>
    %201 = vector.shape_cast %200 : vector<1x1x1x128x128xbf16> to vector<128x128xbf16>
    %cst_215 = arith.constant dense<0.000000e+00> : vector<64x128xf32>
    %202 = tpu.matmul %199, %201, %cst_215 {dimension_numbers = #tpu.dot_dimension_numbers<[1], [0], [0], [1], [0, 0, 1, 1], [], []>} : vector<64x128xbf16>, vector<128x128xbf16>, vector<64x128xf32> -> vector<64x128xf32>
    %203 = vector.extract_strided_slice %197 {offsets = [8, 0, 0], sizes = [8, 8, 128], strides = [1, 1, 1]} : vector<24x8x128xbf16> to vector<8x8x128xbf16>
    %204 = vector.shape_cast %203 : vector<8x8x128xbf16> to vector<64x128xbf16>
    %c1_216 = arith.constant 1 : index
    %c1_217 = arith.constant 1 : index
    %c0_218 = arith.constant 0 : index
    %c0_219 = arith.constant 0 : index
    %c0_220 = arith.constant 0 : index
    %205 = vector.load %arg8[%c1_216, %c1_217, %c0_218, %c0_219, %c0_220] : memref<4x3x3x128x128xbf16, #tpu.memory_space<vmem>>, vector<1x1x1x128x128xbf16>
    %206 = vector.shape_cast %205 : vector<1x1x1x128x128xbf16> to vector<128x128xbf16>
    %cst_221 = arith.constant dense<0.000000e+00> : vector<64x128xf32>
    %207 = tpu.matmul %204, %206, %cst_221 {dimension_numbers = #tpu.dot_dimension_numbers<[1], [0], [0], [1], [0, 0, 1, 1], [], []>} : vector<64x128xbf16>, vector<128x128xbf16>, vector<64x128xf32> -> vector<64x128xf32>
    %208 = arith.addf %202, %207 : vector<64x128xf32>
    %209 = vector.extract_strided_slice %197 {offsets = [12, 0, 0], sizes = [8, 8, 128], strides = [1, 1, 1]} : vector<24x8x128xbf16> to vector<8x8x128xbf16>
    %210 = vector.shape_cast %209 : vector<8x8x128xbf16> to vector<64x128xbf16>
    %c1_222 = arith.constant 1 : index
    %c2_223 = arith.constant 2 : index
    %c0_224 = arith.constant 0 : index
    %c0_225 = arith.constant 0 : index
    %c0_226 = arith.constant 0 : index
    %211 = vector.load %arg8[%c1_222, %c2_223, %c0_224, %c0_225, %c0_226] : memref<4x3x3x128x128xbf16, #tpu.memory_space<vmem>>, vector<1x1x1x128x128xbf16>
    %212 = vector.shape_cast %211 : vector<1x1x1x128x128xbf16> to vector<128x128xbf16>
    %cst_227 = arith.constant dense<0.000000e+00> : vector<64x128xf32>
    %213 = tpu.matmul %210, %212, %cst_227 {dimension_numbers = #tpu.dot_dimension_numbers<[1], [0], [0], [1], [0, 0, 1, 1], [], []>} : vector<64x128xbf16>, vector<128x128xbf16>, vector<64x128xf32> -> vector<64x128xf32>
    %214 = arith.addf %208, %213 : vector<64x128xf32>
    %c0_228 = arith.constant 0 : index
    %c16_229 = arith.constant 16 : index
    %c0_230 = arith.constant 0 : index
    %215 = vector.load %arg14[%c0_228, %c16_229, %c0_230] : memref<24x32x128xbf16, #tpu.memory_space<vmem>>, vector<24x8x128xbf16>
    %216 = vector.extract_strided_slice %215 {offsets = [4, 0, 0], sizes = [8, 8, 128], strides = [1, 1, 1]} : vector<24x8x128xbf16> to vector<8x8x128xbf16>
    %217 = vector.shape_cast %216 : vector<8x8x128xbf16> to vector<64x128xbf16>
    %c1_231 = arith.constant 1 : index
    %c0_232 = arith.constant 0 : index
    %c1_233 = arith.constant 1 : index
    %c0_234 = arith.constant 0 : index
    %c0_235 = arith.constant 0 : index
    %218 = vector.load %arg8[%c1_231, %c0_232, %c1_233, %c0_234, %c0_235] : memref<4x3x3x128x128xbf16, #tpu.memory_space<vmem>>, vector<1x1x1x128x128xbf16>
    %219 = vector.shape_cast %218 : vector<1x1x1x128x128xbf16> to vector<128x128xbf16>
    %cst_236 = arith.constant dense<0.000000e+00> : vector<64x128xf32>
    %220 = tpu.matmul %217, %219, %cst_236 {dimension_numbers = #tpu.dot_dimension_numbers<[1], [0], [0], [1], [0, 0, 1, 1], [], []>} : vector<64x128xbf16>, vector<128x128xbf16>, vector<64x128xf32> -> vector<64x128xf32>
    %221 = arith.addf %214, %220 : vector<64x128xf32>
    %222 = vector.extract_strided_slice %215 {offsets = [8, 0, 0], sizes = [8, 8, 128], strides = [1, 1, 1]} : vector<24x8x128xbf16> to vector<8x8x128xbf16>
    %223 = vector.shape_cast %222 : vector<8x8x128xbf16> to vector<64x128xbf16>
    %c1_237 = arith.constant 1 : index
    %c1_238 = arith.constant 1 : index
    %c1_239 = arith.constant 1 : index
    %c0_240 = arith.constant 0 : index
    %c0_241 = arith.constant 0 : index
    %224 = vector.load %arg8[%c1_237, %c1_238, %c1_239, %c0_240, %c0_241] : memref<4x3x3x128x128xbf16, #tpu.memory_space<vmem>>, vector<1x1x1x128x128xbf16>
    %225 = vector.shape_cast %224 : vector<1x1x1x128x128xbf16> to vector<128x128xbf16>
    %cst_242 = arith.constant dense<0.000000e+00> : vector<64x128xf32>
    %226 = tpu.matmul %223, %225, %cst_242 {dimension_numbers = #tpu.dot_dimension_numbers<[1], [0], [0], [1], [0, 0, 1, 1], [], []>} : vector<64x128xbf16>, vector<128x128xbf16>, vector<64x128xf32> -> vector<64x128xf32>
    %227 = arith.addf %221, %226 : vector<64x128xf32>
    %228 = vector.extract_strided_slice %215 {offsets = [12, 0, 0], sizes = [8, 8, 128], strides = [1, 1, 1]} : vector<24x8x128xbf16> to vector<8x8x128xbf16>
    %229 = vector.shape_cast %228 : vector<8x8x128xbf16> to vector<64x128xbf16>
    %c1_243 = arith.constant 1 : index
    %c2_244 = arith.constant 2 : index
    %c1_245 = arith.constant 1 : index
    %c0_246 = arith.constant 0 : index
    %c0_247 = arith.constant 0 : index
    %230 = vector.load %arg8[%c1_243, %c2_244, %c1_245, %c0_246, %c0_247] : memref<4x3x3x128x128xbf16, #tpu.memory_space<vmem>>, vector<1x1x1x128x128xbf16>
    %231 = vector.shape_cast %230 : vector<1x1x1x128x128xbf16> to vector<128x128xbf16>
    %cst_248 = arith.constant dense<0.000000e+00> : vector<64x128xf32>
    %232 = tpu.matmul %229, %231, %cst_248 {dimension_numbers = #tpu.dot_dimension_numbers<[1], [0], [0], [1], [0, 0, 1, 1], [], []>} : vector<64x128xbf16>, vector<128x128xbf16>, vector<64x128xf32> -> vector<64x128xf32>
    %233 = arith.addf %227, %232 : vector<64x128xf32>
    %c0_249 = arith.constant 0 : index
    %c20 = arith.constant 20 : index
    %c0_250 = arith.constant 0 : index
    %234 = vector.load %arg14[%c0_249, %c20, %c0_250] : memref<24x32x128xbf16, #tpu.memory_space<vmem>>, vector<24x8x128xbf16>
    %235 = vector.extract_strided_slice %234 {offsets = [4, 0, 0], sizes = [8, 8, 128], strides = [1, 1, 1]} : vector<24x8x128xbf16> to vector<8x8x128xbf16>
    %236 = vector.shape_cast %235 : vector<8x8x128xbf16> to vector<64x128xbf16>
    %c1_251 = arith.constant 1 : index
    %c0_252 = arith.constant 0 : index
    %c2_253 = arith.constant 2 : index
    %c0_254 = arith.constant 0 : index
    %c0_255 = arith.constant 0 : index
    %237 = vector.load %arg8[%c1_251, %c0_252, %c2_253, %c0_254, %c0_255] : memref<4x3x3x128x128xbf16, #tpu.memory_space<vmem>>, vector<1x1x1x128x128xbf16>
    %238 = vector.shape_cast %237 : vector<1x1x1x128x128xbf16> to vector<128x128xbf16>
    %cst_256 = arith.constant dense<0.000000e+00> : vector<64x128xf32>
    %239 = tpu.matmul %236, %238, %cst_256 {dimension_numbers = #tpu.dot_dimension_numbers<[1], [0], [0], [1], [0, 0, 1, 1], [], []>} : vector<64x128xbf16>, vector<128x128xbf16>, vector<64x128xf32> -> vector<64x128xf32>
    %240 = arith.addf %233, %239 : vector<64x128xf32>
    %241 = vector.extract_strided_slice %234 {offsets = [8, 0, 0], sizes = [8, 8, 128], strides = [1, 1, 1]} : vector<24x8x128xbf16> to vector<8x8x128xbf16>
    %242 = vector.shape_cast %241 : vector<8x8x128xbf16> to vector<64x128xbf16>
    %c1_257 = arith.constant 1 : index
    %c1_258 = arith.constant 1 : index
    %c2_259 = arith.constant 2 : index
    %c0_260 = arith.constant 0 : index
    %c0_261 = arith.constant 0 : index
    %243 = vector.load %arg8[%c1_257, %c1_258, %c2_259, %c0_260, %c0_261] : memref<4x3x3x128x128xbf16, #tpu.memory_space<vmem>>, vector<1x1x1x128x128xbf16>
    %244 = vector.shape_cast %243 : vector<1x1x1x128x128xbf16> to vector<128x128xbf16>
    %cst_262 = arith.constant dense<0.000000e+00> : vector<64x128xf32>
    %245 = tpu.matmul %242, %244, %cst_262 {dimension_numbers = #tpu.dot_dimension_numbers<[1], [0], [0], [1], [0, 0, 1, 1], [], []>} : vector<64x128xbf16>, vector<128x128xbf16>, vector<64x128xf32> -> vector<64x128xf32>
    %246 = arith.addf %240, %245 : vector<64x128xf32>
    %247 = vector.extract_strided_slice %234 {offsets = [12, 0, 0], sizes = [8, 8, 128], strides = [1, 1, 1]} : vector<24x8x128xbf16> to vector<8x8x128xbf16>
    %248 = vector.shape_cast %247 : vector<8x8x128xbf16> to vector<64x128xbf16>
    %c1_263 = arith.constant 1 : index
    %c2_264 = arith.constant 2 : index
    %c2_265 = arith.constant 2 : index
    %c0_266 = arith.constant 0 : index
    %c0_267 = arith.constant 0 : index
    %249 = vector.load %arg8[%c1_263, %c2_264, %c2_265, %c0_266, %c0_267] : memref<4x3x3x128x128xbf16, #tpu.memory_space<vmem>>, vector<1x1x1x128x128xbf16>
    %250 = vector.shape_cast %249 : vector<1x1x1x128x128xbf16> to vector<128x128xbf16>
    %cst_268 = arith.constant dense<0.000000e+00> : vector<64x128xf32>
    %251 = tpu.matmul %248, %250, %cst_268 {dimension_numbers = #tpu.dot_dimension_numbers<[1], [0], [0], [1], [0, 0, 1, 1], [], []>} : vector<64x128xbf16>, vector<128x128xbf16>, vector<64x128xf32> -> vector<64x128xf32>
    %252 = arith.addf %246, %251 : vector<64x128xf32>
    %253 = vector.broadcast %196 : vector<1x128xf32> to vector<64x128xf32>
    %254 = arith.addf %252, %253 : vector<64x128xf32>
    %cst_269 = arith.constant 0.000000e+00 : f32
    %255 = vector.broadcast %cst_269 : f32 to vector<64x128xf32>
    %256 = arith.maximumf %254, %255 : vector<64x128xf32>
    %257 = arith.truncf %256 : vector<64x128xf32> to vector<64x128xbf16>
    %c1_270 = arith.constant 1 : index
    %c0_271 = arith.constant 0 : index
    %c0_272 = arith.constant 0 : index
    %258 = vector.load %arg10[%c1_270, %c0_271, %c0_272] : memref<4x128x128xbf16, #tpu.memory_space<vmem>>, vector<1x128x128xbf16>
    %259 = vector.shape_cast %258 : vector<1x128x128xbf16> to vector<128x128xbf16>
    %cst_273 = arith.constant dense<0.000000e+00> : vector<64x128xf32>
    %260 = tpu.matmul %257, %259, %cst_273 {dimension_numbers = #tpu.dot_dimension_numbers<[1], [0], [0], [1], [0, 0, 1, 1], [], []>} : vector<64x128xbf16>, vector<128x128xbf16>, vector<64x128xf32> -> vector<64x128xf32>
    %c1_274 = arith.constant 1 : index
    %c0_275 = arith.constant 0 : index
    %c0_276 = arith.constant 0 : index
    %261 = vector.load %arg11[%c1_274, %c0_275, %c0_276] : memref<4x1x128xf32, #tpu.memory_space<vmem>>, vector<1x1x128xf32>
    %262 = vector.shape_cast %261 : vector<1x1x128xf32> to vector<1x128xf32>
    %263 = vector.broadcast %262 : vector<1x128xf32> to vector<64x128xf32>
    %264 = arith.addf %260, %263 : vector<64x128xf32>
    %cst_277 = arith.constant 0.000000e+00 : f32
    %265 = vector.broadcast %cst_277 : f32 to vector<64x128xf32>
    %266 = arith.maximumf %264, %265 : vector<64x128xf32>
    %c0_278 = arith.constant 0 : index
    %c0_279 = arith.constant 0 : index
    %c0_280 = arith.constant 0 : index
    %c0_281 = arith.constant 0 : index
    %267 = vector.load %arg12[%c0_278, %c0_279, %c0_280, %c0_281] : memref<1x8x8x128xbf16, #tpu.memory_space<vmem>>, vector<1x8x8x128xbf16>
    %268 = vector.shape_cast %267 : vector<1x8x8x128xbf16> to vector<64x128xbf16>
    %269 = arith.extf %268 : vector<64x128xbf16> to vector<64x128xf32>
    %270 = arith.addf %266, %269 : vector<64x128xf32>
    %271 = vector.shape_cast %270 : vector<64x128xf32> to vector<1x8x8x128xf32>
    %272 = arith.truncf %271 : vector<1x8x8x128xf32> to vector<1x8x8x128xbf16>
    %c0_282 = arith.constant 0 : index
    %c0_283 = arith.constant 0 : index
    %c0_284 = arith.constant 0 : index
    %c0_285 = arith.constant 0 : index
    %273 = vector.load %arg12[%c0_282, %c0_283, %c0_284, %c0_285] : memref<1x8x8x128xbf16, #tpu.memory_space<vmem>>, vector<1x8x8x128xbf16>
    tpu.vector_store %arg12[%c0_282, %c0_283, %c0_284, %c0_285], %272 {strides = array<i32>} : memref<1x8x8x128xbf16, #tpu.memory_space<vmem>>, vector<1x8x8x128xbf16>,
    %c0_286 = arith.constant 0 : index
    %c0_287 = arith.constant 0 : index
    %c0_288 = arith.constant 0 : index
    %c0_289 = arith.constant 0 : index
    %274 = vector.load %arg12[%c0_286, %c0_287, %c0_288, %c0_289] : memref<1x8x8x128xbf16, #tpu.memory_space<vmem>>, vector<1x8x8x128xbf16>
    %275 = vector.shape_cast %274 : vector<1x8x8x128xbf16> to vector<64x128xbf16>
    %c2_290 = arith.constant 2 : index
    %c0_291 = arith.constant 0 : index
    %c0_292 = arith.constant 0 : index
    %276 = vector.load %arg6[%c2_290, %c0_291, %c0_292] : memref<4x128x128xbf16, #tpu.memory_space<vmem>>, vector<1x128x128xbf16>
    %277 = vector.shape_cast %276 : vector<1x128x128xbf16> to vector<128x128xbf16>
    %cst_293 = arith.constant dense<0.000000e+00> : vector<64x128xf32>
    %278 = tpu.matmul %275, %277, %cst_293 {dimension_numbers = #tpu.dot_dimension_numbers<[1], [0], [0], [1], [0, 0, 1, 1], [], []>} : vector<64x128xbf16>, vector<128x128xbf16>, vector<64x128xf32> -> vector<64x128xf32>
    %c2_294 = arith.constant 2 : index
    %c0_295 = arith.constant 0 : index
    %c0_296 = arith.constant 0 : index
    %279 = vector.load %arg7[%c2_294, %c0_295, %c0_296] : memref<4x1x128xf32, #tpu.memory_space<vmem>>, vector<1x1x128xf32>
    %280 = vector.shape_cast %279 : vector<1x1x128xf32> to vector<1x128xf32>
    %281 = vector.broadcast %280 : vector<1x128xf32> to vector<64x128xf32>
    %282 = arith.addf %278, %281 : vector<64x128xf32>
    %cst_297 = arith.constant 0.000000e+00 : f32
    %283 = vector.broadcast %cst_297 : f32 to vector<64x128xf32>
    %284 = arith.maximumf %282, %283 : vector<64x128xf32>
    %285 = vector.shape_cast %284 : vector<64x128xf32> to vector<8x8x128xf32>
    %286 = arith.truncf %285 : vector<8x8x128xf32> to vector<8x8x128xbf16>
    %c8_298 = arith.constant 8 : index
    %c16_299 = arith.constant 16 : index
    %c0_300 = arith.constant 0 : index
    %287 = vector.load %arg14[%c8_298, %c16_299, %c0_300] : memref<24x32x128xbf16, #tpu.memory_space<vmem>>, vector<8x8x128xbf16>
    tpu.vector_store %arg14[%c8_298, %c16_299, %c0_300], %286 {strides = array<i32>} : memref<24x32x128xbf16, #tpu.memory_space<vmem>>, vector<8x8x128xbf16>,
    %c2_301 = arith.constant 2 : index
    %c0_302 = arith.constant 0 : index
    %c0_303 = arith.constant 0 : index
    %288 = vector.load %arg9[%c2_301, %c0_302, %c0_303] : memref<4x1x128xf32, #tpu.memory_space<vmem>>, vector<1x1x128xf32>
    %289 = vector.shape_cast %288 : vector<1x1x128xf32> to vector<1x128xf32>
    %c0_304 = arith.constant 0 : index
    %c10 = arith.constant 10 : index
    %c0_305 = arith.constant 0 : index
    %290 = vector.load %arg14[%c0_304, %c10, %c0_305] : memref<24x32x128xbf16, #tpu.memory_space<vmem>>, vector<24x8x128xbf16>
    %291 = vector.extract_strided_slice %290 {offsets = [2, 0, 0], sizes = [8, 8, 128], strides = [1, 1, 1]} : vector<24x8x128xbf16> to vector<8x8x128xbf16>
    %292 = vector.shape_cast %291 : vector<8x8x128xbf16> to vector<64x128xbf16>
    %c2_306 = arith.constant 2 : index
    %c0_307 = arith.constant 0 : index
    %c0_308 = arith.constant 0 : index
    %c0_309 = arith.constant 0 : index
    %c0_310 = arith.constant 0 : index
    %293 = vector.load %arg8[%c2_306, %c0_307, %c0_308, %c0_309, %c0_310] : memref<4x3x3x128x128xbf16, #tpu.memory_space<vmem>>, vector<1x1x1x128x128xbf16>
    %294 = vector.shape_cast %293 : vector<1x1x1x128x128xbf16> to vector<128x128xbf16>
    %cst_311 = arith.constant dense<0.000000e+00> : vector<64x128xf32>
    %295 = tpu.matmul %292, %294, %cst_311 {dimension_numbers = #tpu.dot_dimension_numbers<[1], [0], [0], [1], [0, 0, 1, 1], [], []>} : vector<64x128xbf16>, vector<128x128xbf16>, vector<64x128xf32> -> vector<64x128xf32>
    %296 = vector.extract_strided_slice %290 {offsets = [8, 0, 0], sizes = [8, 8, 128], strides = [1, 1, 1]} : vector<24x8x128xbf16> to vector<8x8x128xbf16>
    %297 = vector.shape_cast %296 : vector<8x8x128xbf16> to vector<64x128xbf16>
    %c2_312 = arith.constant 2 : index
    %c1_313 = arith.constant 1 : index
    %c0_314 = arith.constant 0 : index
    %c0_315 = arith.constant 0 : index
    %c0_316 = arith.constant 0 : index
    %298 = vector.load %arg8[%c2_312, %c1_313, %c0_314, %c0_315, %c0_316] : memref<4x3x3x128x128xbf16, #tpu.memory_space<vmem>>, vector<1x1x1x128x128xbf16>
    %299 = vector.shape_cast %298 : vector<1x1x1x128x128xbf16> to vector<128x128xbf16>
    %cst_317 = arith.constant dense<0.000000e+00> : vector<64x128xf32>
    %300 = tpu.matmul %297, %299, %cst_317 {dimension_numbers = #tpu.dot_dimension_numbers<[1], [0], [0], [1], [0, 0, 1, 1], [], []>} : vector<64x128xbf16>, vector<128x128xbf16>, vector<64x128xf32> -> vector<64x128xf32>
    %301 = arith.addf %295, %300 : vector<64x128xf32>
    %302 = vector.extract_strided_slice %290 {offsets = [14, 0, 0], sizes = [8, 8, 128], strides = [1, 1, 1]} : vector<24x8x128xbf16> to vector<8x8x128xbf16>
    %303 = vector.shape_cast %302 : vector<8x8x128xbf16> to vector<64x128xbf16>
    %c2_318 = arith.constant 2 : index
    %c2_319 = arith.constant 2 : index
    %c0_320 = arith.constant 0 : index
    %c0_321 = arith.constant 0 : index
    %c0_322 = arith.constant 0 : index
    %304 = vector.load %arg8[%c2_318, %c2_319, %c0_320, %c0_321, %c0_322] : memref<4x3x3x128x128xbf16, #tpu.memory_space<vmem>>, vector<1x1x1x128x128xbf16>
    %305 = vector.shape_cast %304 : vector<1x1x1x128x128xbf16> to vector<128x128xbf16>
    %cst_323 = arith.constant dense<0.000000e+00> : vector<64x128xf32>
    %306 = tpu.matmul %303, %305, %cst_323 {dimension_numbers = #tpu.dot_dimension_numbers<[1], [0], [0], [1], [0, 0, 1, 1], [], []>} : vector<64x128xbf16>, vector<128x128xbf16>, vector<64x128xf32> -> vector<64x128xf32>
    %307 = arith.addf %301, %306 : vector<64x128xf32>
    %c0_324 = arith.constant 0 : index
    %c16_325 = arith.constant 16 : index
    %c0_326 = arith.constant 0 : index
    %308 = vector.load %arg14[%c0_324, %c16_325, %c0_326] : memref<24x32x128xbf16, #tpu.memory_space<vmem>>, vector<24x8x128xbf16>
    %309 = vector.extract_strided_slice %308 {offsets = [2, 0, 0], sizes = [8, 8, 128], strides = [1, 1, 1]} : vector<24x8x128xbf16> to vector<8x8x128xbf16>
    %310 = vector.shape_cast %309 : vector<8x8x128xbf16> to vector<64x128xbf16>
    %c2_327 = arith.constant 2 : index
    %c0_328 = arith.constant 0 : index
    %c1_329 = arith.constant 1 : index
    %c0_330 = arith.constant 0 : index
    %c0_331 = arith.constant 0 : index
    %311 = vector.load %arg8[%c2_327, %c0_328, %c1_329, %c0_330, %c0_331] : memref<4x3x3x128x128xbf16, #tpu.memory_space<vmem>>, vector<1x1x1x128x128xbf16>
    %312 = vector.shape_cast %311 : vector<1x1x1x128x128xbf16> to vector<128x128xbf16>
    %cst_332 = arith.constant dense<0.000000e+00> : vector<64x128xf32>
    %313 = tpu.matmul %310, %312, %cst_332 {dimension_numbers = #tpu.dot_dimension_numbers<[1], [0], [0], [1], [0, 0, 1, 1], [], []>} : vector<64x128xbf16>, vector<128x128xbf16>, vector<64x128xf32> -> vector<64x128xf32>
    %314 = arith.addf %307, %313 : vector<64x128xf32>
    %315 = vector.extract_strided_slice %308 {offsets = [8, 0, 0], sizes = [8, 8, 128], strides = [1, 1, 1]} : vector<24x8x128xbf16> to vector<8x8x128xbf16>
    %316 = vector.shape_cast %315 : vector<8x8x128xbf16> to vector<64x128xbf16>
    %c2_333 = arith.constant 2 : index
    %c1_334 = arith.constant 1 : index
    %c1_335 = arith.constant 1 : index
    %c0_336 = arith.constant 0 : index
    %c0_337 = arith.constant 0 : index
    %317 = vector.load %arg8[%c2_333, %c1_334, %c1_335, %c0_336, %c0_337] : memref<4x3x3x128x128xbf16, #tpu.memory_space<vmem>>, vector<1x1x1x128x128xbf16>
    %318 = vector.shape_cast %317 : vector<1x1x1x128x128xbf16> to vector<128x128xbf16>
    %cst_338 = arith.constant dense<0.000000e+00> : vector<64x128xf32>
    %319 = tpu.matmul %316, %318, %cst_338 {dimension_numbers = #tpu.dot_dimension_numbers<[1], [0], [0], [1], [0, 0, 1, 1], [], []>} : vector<64x128xbf16>, vector<128x128xbf16>, vector<64x128xf32> -> vector<64x128xf32>
    %320 = arith.addf %314, %319 : vector<64x128xf32>
    %321 = vector.extract_strided_slice %308 {offsets = [14, 0, 0], sizes = [8, 8, 128], strides = [1, 1, 1]} : vector<24x8x128xbf16> to vector<8x8x128xbf16>
    %322 = vector.shape_cast %321 : vector<8x8x128xbf16> to vector<64x128xbf16>
    %c2_339 = arith.constant 2 : index
    %c2_340 = arith.constant 2 : index
    %c1_341 = arith.constant 1 : index
    %c0_342 = arith.constant 0 : index
    %c0_343 = arith.constant 0 : index
    %323 = vector.load %arg8[%c2_339, %c2_340, %c1_341, %c0_342, %c0_343] : memref<4x3x3x128x128xbf16, #tpu.memory_space<vmem>>, vector<1x1x1x128x128xbf16>
    %324 = vector.shape_cast %323 : vector<1x1x1x128x128xbf16> to vector<128x128xbf16>
    %cst_344 = arith.constant dense<0.000000e+00> : vector<64x128xf32>
    %325 = tpu.matmul %322, %324, %cst_344 {dimension_numbers = #tpu.dot_dimension_numbers<[1], [0], [0], [1], [0, 0, 1, 1], [], []>} : vector<64x128xbf16>, vector<128x128xbf16>, vector<64x128xf32> -> vector<64x128xf32>
    %326 = arith.addf %320, %325 : vector<64x128xf32>
    %c0_345 = arith.constant 0 : index
    %c22 = arith.constant 22 : index
    %c0_346 = arith.constant 0 : index
    %327 = vector.load %arg14[%c0_345, %c22, %c0_346] : memref<24x32x128xbf16, #tpu.memory_space<vmem>>, vector<24x8x128xbf16>
    %328 = vector.extract_strided_slice %327 {offsets = [2, 0, 0], sizes = [8, 8, 128], strides = [1, 1, 1]} : vector<24x8x128xbf16> to vector<8x8x128xbf16>
    %329 = vector.shape_cast %328 : vector<8x8x128xbf16> to vector<64x128xbf16>
    %c2_347 = arith.constant 2 : index
    %c0_348 = arith.constant 0 : index
    %c2_349 = arith.constant 2 : index
    %c0_350 = arith.constant 0 : index
    %c0_351 = arith.constant 0 : index
    %330 = vector.load %arg8[%c2_347, %c0_348, %c2_349, %c0_350, %c0_351] : memref<4x3x3x128x128xbf16, #tpu.memory_space<vmem>>, vector<1x1x1x128x128xbf16>
    %331 = vector.shape_cast %330 : vector<1x1x1x128x128xbf16> to vector<128x128xbf16>
    %cst_352 = arith.constant dense<0.000000e+00> : vector<64x128xf32>
    %332 = tpu.matmul %329, %331, %cst_352 {dimension_numbers = #tpu.dot_dimension_numbers<[1], [0], [0], [1], [0, 0, 1, 1], [], []>} : vector<64x128xbf16>, vector<128x128xbf16>, vector<64x128xf32> -> vector<64x128xf32>
    %333 = arith.addf %326, %332 : vector<64x128xf32>
    %334 = vector.extract_strided_slice %327 {offsets = [8, 0, 0], sizes = [8, 8, 128], strides = [1, 1, 1]} : vector<24x8x128xbf16> to vector<8x8x128xbf16>
    %335 = vector.shape_cast %334 : vector<8x8x128xbf16> to vector<64x128xbf16>
    %c2_353 = arith.constant 2 : index
    %c1_354 = arith.constant 1 : index
    %c2_355 = arith.constant 2 : index
    %c0_356 = arith.constant 0 : index
    %c0_357 = arith.constant 0 : index
    %336 = vector.load %arg8[%c2_353, %c1_354, %c2_355, %c0_356, %c0_357] : memref<4x3x3x128x128xbf16, #tpu.memory_space<vmem>>, vector<1x1x1x128x128xbf16>
    %337 = vector.shape_cast %336 : vector<1x1x1x128x128xbf16> to vector<128x128xbf16>
    %cst_358 = arith.constant dense<0.000000e+00> : vector<64x128xf32>
    %338 = tpu.matmul %335, %337, %cst_358 {dimension_numbers = #tpu.dot_dimension_numbers<[1], [0], [0], [1], [0, 0, 1, 1], [], []>} : vector<64x128xbf16>, vector<128x128xbf16>, vector<64x128xf32> -> vector<64x128xf32>
    %339 = arith.addf %333, %338 : vector<64x128xf32>
    %340 = vector.extract_strided_slice %327 {offsets = [14, 0, 0], sizes = [8, 8, 128], strides = [1, 1, 1]} : vector<24x8x128xbf16> to vector<8x8x128xbf16>
    %341 = vector.shape_cast %340 : vector<8x8x128xbf16> to vector<64x128xbf16>
    %c2_359 = arith.constant 2 : index
    %c2_360 = arith.constant 2 : index
    %c2_361 = arith.constant 2 : index
    %c0_362 = arith.constant 0 : index
    %c0_363 = arith.constant 0 : index
    %342 = vector.load %arg8[%c2_359, %c2_360, %c2_361, %c0_362, %c0_363] : memref<4x3x3x128x128xbf16, #tpu.memory_space<vmem>>, vector<1x1x1x128x128xbf16>
    %343 = vector.shape_cast %342 : vector<1x1x1x128x128xbf16> to vector<128x128xbf16>
    %cst_364 = arith.constant dense<0.000000e+00> : vector<64x128xf32>
    %344 = tpu.matmul %341, %343, %cst_364 {dimension_numbers = #tpu.dot_dimension_numbers<[1], [0], [0], [1], [0, 0, 1, 1], [], []>} : vector<64x128xbf16>, vector<128x128xbf16>, vector<64x128xf32> -> vector<64x128xf32>
    %345 = arith.addf %339, %344 : vector<64x128xf32>
    %346 = vector.broadcast %289 : vector<1x128xf32> to vector<64x128xf32>
    %347 = arith.addf %345, %346 : vector<64x128xf32>
    %cst_365 = arith.constant 0.000000e+00 : f32
    %348 = vector.broadcast %cst_365 : f32 to vector<64x128xf32>
    %349 = arith.maximumf %347, %348 : vector<64x128xf32>
    %350 = arith.truncf %349 : vector<64x128xf32> to vector<64x128xbf16>
    %c2_366 = arith.constant 2 : index
    %c0_367 = arith.constant 0 : index
    %c0_368 = arith.constant 0 : index
    %351 = vector.load %arg10[%c2_366, %c0_367, %c0_368] : memref<4x128x128xbf16, #tpu.memory_space<vmem>>, vector<1x128x128xbf16>
    %352 = vector.shape_cast %351 : vector<1x128x128xbf16> to vector<128x128xbf16>
    %cst_369 = arith.constant dense<0.000000e+00> : vector<64x128xf32>
    %353 = tpu.matmul %350, %352, %cst_369 {dimension_numbers = #tpu.dot_dimension_numbers<[1], [0], [0], [1], [0, 0, 1, 1], [], []>} : vector<64x128xbf16>, vector<128x128xbf16>, vector<64x128xf32> -> vector<64x128xf32>
    %c2_370 = arith.constant 2 : index
    %c0_371 = arith.constant 0 : index
    %c0_372 = arith.constant 0 : index
    %354 = vector.load %arg11[%c2_370, %c0_371, %c0_372] : memref<4x1x128xf32, #tpu.memory_space<vmem>>, vector<1x1x128xf32>
    %355 = vector.shape_cast %354 : vector<1x1x128xf32> to vector<1x128xf32>
    %356 = vector.broadcast %355 : vector<1x128xf32> to vector<64x128xf32>
    %357 = arith.addf %353, %356 : vector<64x128xf32>
    %cst_373 = arith.constant 0.000000e+00 : f32
    %358 = vector.broadcast %cst_373 : f32 to vector<64x128xf32>
    %359 = arith.maximumf %357, %358 : vector<64x128xf32>
    %c0_374 = arith.constant 0 : index
    %c0_375 = arith.constant 0 : index
    %c0_376 = arith.constant 0 : index
    %c0_377 = arith.constant 0 : index
    %360 = vector.load %arg12[%c0_374, %c0_375, %c0_376, %c0_377] : memref<1x8x8x128xbf16, #tpu.memory_space<vmem>>, vector<1x8x8x128xbf16>
    %361 = vector.shape_cast %360 : vector<1x8x8x128xbf16> to vector<64x128xbf16>
    %362 = arith.extf %361 : vector<64x128xbf16> to vector<64x128xf32>
    %363 = arith.addf %359, %362 : vector<64x128xf32>
    %364 = vector.shape_cast %363 : vector<64x128xf32> to vector<1x8x8x128xf32>
    %365 = arith.truncf %364 : vector<1x8x8x128xf32> to vector<1x8x8x128xbf16>
    %c0_378 = arith.constant 0 : index
    %c0_379 = arith.constant 0 : index
    %c0_380 = arith.constant 0 : index
    %c0_381 = arith.constant 0 : index
    %366 = vector.load %arg12[%c0_378, %c0_379, %c0_380, %c0_381] : memref<1x8x8x128xbf16, #tpu.memory_space<vmem>>, vector<1x8x8x128xbf16>
    tpu.vector_store %arg12[%c0_378, %c0_379, %c0_380, %c0_381], %365 {strides = array<i32>} : memref<1x8x8x128xbf16, #tpu.memory_space<vmem>>, vector<1x8x8x128xbf16>,
    %c0_382 = arith.constant 0 : index
    %c0_383 = arith.constant 0 : index
    %c0_384 = arith.constant 0 : index
    %c0_385 = arith.constant 0 : index
    %367 = vector.load %arg12[%c0_382, %c0_383, %c0_384, %c0_385] : memref<1x8x8x128xbf16, #tpu.memory_space<vmem>>, vector<1x8x8x128xbf16>
    %368 = vector.shape_cast %367 : vector<1x8x8x128xbf16> to vector<64x128xbf16>
    %c3 = arith.constant 3 : index
    %c0_386 = arith.constant 0 : index
    %c0_387 = arith.constant 0 : index
    %369 = vector.load %arg6[%c3, %c0_386, %c0_387] : memref<4x128x128xbf16, #tpu.memory_space<vmem>>, vector<1x128x128xbf16>
    %370 = vector.shape_cast %369 : vector<1x128x128xbf16> to vector<128x128xbf16>
    %cst_388 = arith.constant dense<0.000000e+00> : vector<64x128xf32>
    %371 = tpu.matmul %368, %370, %cst_388 {dimension_numbers = #tpu.dot_dimension_numbers<[1], [0], [0], [1], [0, 0, 1, 1], [], []>} : vector<64x128xbf16>, vector<128x128xbf16>, vector<64x128xf32> -> vector<64x128xf32>
    %c3_389 = arith.constant 3 : index
    %c0_390 = arith.constant 0 : index
    %c0_391 = arith.constant 0 : index
    %372 = vector.load %arg7[%c3_389, %c0_390, %c0_391] : memref<4x1x128xf32, #tpu.memory_space<vmem>>, vector<1x1x128xf32>
    %373 = vector.shape_cast %372 : vector<1x1x128xf32> to vector<1x128xf32>
    %374 = vector.broadcast %373 : vector<1x128xf32> to vector<64x128xf32>
    %375 = arith.addf %371, %374 : vector<64x128xf32>
    %cst_392 = arith.constant 0.000000e+00 : f32
    %376 = vector.broadcast %cst_392 : f32 to vector<64x128xf32>
    %377 = arith.maximumf %375, %376 : vector<64x128xf32>
    %378 = vector.shape_cast %377 : vector<64x128xf32> to vector<8x8x128xf32>
    %379 = arith.truncf %378 : vector<8x8x128xf32> to vector<8x8x128xbf16>
    %c8_393 = arith.constant 8 : index
    %c16_394 = arith.constant 16 : index
    %c0_395 = arith.constant 0 : index
    %380 = vector.load %arg14[%c8_393, %c16_394, %c0_395] : memref<24x32x128xbf16, #tpu.memory_space<vmem>>, vector<8x8x128xbf16>
    tpu.vector_store %arg14[%c8_393, %c16_394, %c0_395], %379 {strides = array<i32>} : memref<24x32x128xbf16, #tpu.memory_space<vmem>>, vector<8x8x128xbf16>,
    %c3_396 = arith.constant 3 : index
    %c0_397 = arith.constant 0 : index
    %c0_398 = arith.constant 0 : index
    %381 = vector.load %arg9[%c3_396, %c0_397, %c0_398] : memref<4x1x128xf32, #tpu.memory_space<vmem>>, vector<1x1x128xf32>
    %382 = vector.shape_cast %381 : vector<1x1x128xf32> to vector<1x128xf32>
    %c0_399 = arith.constant 0 : index
    %c8_400 = arith.constant 8 : index
    %c0_401 = arith.constant 0 : index
    %383 = vector.load %arg14[%c0_399, %c8_400, %c0_401] : memref<24x32x128xbf16, #tpu.memory_space<vmem>>, vector<24x8x128xbf16>
    %384 = vector.extract_strided_slice %383 {offsets = [0, 0, 0], sizes = [8, 8, 128], strides = [1, 1, 1]} : vector<24x8x128xbf16> to vector<8x8x128xbf16>
    %385 = vector.shape_cast %384 : vector<8x8x128xbf16> to vector<64x128xbf16>
    %c3_402 = arith.constant 3 : index
    %c0_403 = arith.constant 0 : index
    %c0_404 = arith.constant 0 : index
    %c0_405 = arith.constant 0 : index
    %c0_406 = arith.constant 0 : index
    %386 = vector.load %arg8[%c3_402, %c0_403, %c0_404, %c0_405, %c0_406] : memref<4x3x3x128x128xbf16, #tpu.memory_space<vmem>>, vector<1x1x1x128x128xbf16>
    %387 = vector.shape_cast %386 : vector<1x1x1x128x128xbf16> to vector<128x128xbf16>
    %cst_407 = arith.constant dense<0.000000e+00> : vector<64x128xf32>
    %388 = tpu.matmul %385, %387, %cst_407 {dimension_numbers = #tpu.dot_dimension_numbers<[1], [0], [0], [1], [0, 0, 1, 1], [], []>} : vector<64x128xbf16>, vector<128x128xbf16>, vector<64x128xf32> -> vector<64x128xf32>
    %389 = vector.extract_strided_slice %383 {offsets = [8, 0, 0], sizes = [8, 8, 128], strides = [1, 1, 1]} : vector<24x8x128xbf16> to vector<8x8x128xbf16>
    %390 = vector.shape_cast %389 : vector<8x8x128xbf16> to vector<64x128xbf16>
    %c3_408 = arith.constant 3 : index
    %c1_409 = arith.constant 1 : index
    %c0_410 = arith.constant 0 : index
    %c0_411 = arith.constant 0 : index
    %c0_412 = arith.constant 0 : index
    %391 = vector.load %arg8[%c3_408, %c1_409, %c0_410, %c0_411, %c0_412] : memref<4x3x3x128x128xbf16, #tpu.memory_space<vmem>>, vector<1x1x1x128x128xbf16>
    %392 = vector.shape_cast %391 : vector<1x1x1x128x128xbf16> to vector<128x128xbf16>
    %cst_413 = arith.constant dense<0.000000e+00> : vector<64x128xf32>
    %393 = tpu.matmul %390, %392, %cst_413 {dimension_numbers = #tpu.dot_dimension_numbers<[1], [0], [0], [1], [0, 0, 1, 1], [], []>} : vector<64x128xbf16>, vector<128x128xbf16>, vector<64x128xf32> -> vector<64x128xf32>
    %394 = arith.addf %388, %393 : vector<64x128xf32>
    %395 = vector.extract_strided_slice %383 {offsets = [16, 0, 0], sizes = [8, 8, 128], strides = [1, 1, 1]} : vector<24x8x128xbf16> to vector<8x8x128xbf16>
    %396 = vector.shape_cast %395 : vector<8x8x128xbf16> to vector<64x128xbf16>
    %c3_414 = arith.constant 3 : index
    %c2_415 = arith.constant 2 : index
    %c0_416 = arith.constant 0 : index
    %c0_417 = arith.constant 0 : index
    %c0_418 = arith.constant 0 : index
    %397 = vector.load %arg8[%c3_414, %c2_415, %c0_416, %c0_417, %c0_418] : memref<4x3x3x128x128xbf16, #tpu.memory_space<vmem>>, vector<1x1x1x128x128xbf16>
    %398 = vector.shape_cast %397 : vector<1x1x1x128x128xbf16> to vector<128x128xbf16>
    %cst_419 = arith.constant dense<0.000000e+00> : vector<64x128xf32>
    %399 = tpu.matmul %396, %398, %cst_419 {dimension_numbers = #tpu.dot_dimension_numbers<[1], [0], [0], [1], [0, 0, 1, 1], [], []>} : vector<64x128xbf16>, vector<128x128xbf16>, vector<64x128xf32> -> vector<64x128xf32>
    %400 = arith.addf %394, %399 : vector<64x128xf32>
    %c0_420 = arith.constant 0 : index
    %c16_421 = arith.constant 16 : index
    %c0_422 = arith.constant 0 : index
    %401 = vector.load %arg14[%c0_420, %c16_421, %c0_422] : memref<24x32x128xbf16, #tpu.memory_space<vmem>>, vector<24x8x128xbf16>
    %402 = vector.extract_strided_slice %401 {offsets = [0, 0, 0], sizes = [8, 8, 128], strides = [1, 1, 1]} : vector<24x8x128xbf16> to vector<8x8x128xbf16>
    %403 = vector.shape_cast %402 : vector<8x8x128xbf16> to vector<64x128xbf16>
    %c3_423 = arith.constant 3 : index
    %c0_424 = arith.constant 0 : index
    %c1_425 = arith.constant 1 : index
    %c0_426 = arith.constant 0 : index
    %c0_427 = arith.constant 0 : index
    %404 = vector.load %arg8[%c3_423, %c0_424, %c1_425, %c0_426, %c0_427] : memref<4x3x3x128x128xbf16, #tpu.memory_space<vmem>>, vector<1x1x1x128x128xbf16>
    %405 = vector.shape_cast %404 : vector<1x1x1x128x128xbf16> to vector<128x128xbf16>
    %cst_428 = arith.constant dense<0.000000e+00> : vector<64x128xf32>
    %406 = tpu.matmul %403, %405, %cst_428 {dimension_numbers = #tpu.dot_dimension_numbers<[1], [0], [0], [1], [0, 0, 1, 1], [], []>} : vector<64x128xbf16>, vector<128x128xbf16>, vector<64x128xf32> -> vector<64x128xf32>
    %407 = arith.addf %400, %406 : vector<64x128xf32>
    %408 = vector.extract_strided_slice %401 {offsets = [8, 0, 0], sizes = [8, 8, 128], strides = [1, 1, 1]} : vector<24x8x128xbf16> to vector<8x8x128xbf16>
    %409 = vector.shape_cast %408 : vector<8x8x128xbf16> to vector<64x128xbf16>
    %c3_429 = arith.constant 3 : index
    %c1_430 = arith.constant 1 : index
    %c1_431 = arith.constant 1 : index
    %c0_432 = arith.constant 0 : index
    %c0_433 = arith.constant 0 : index
    %410 = vector.load %arg8[%c3_429, %c1_430, %c1_431, %c0_432, %c0_433] : memref<4x3x3x128x128xbf16, #tpu.memory_space<vmem>>, vector<1x1x1x128x128xbf16>
    %411 = vector.shape_cast %410 : vector<1x1x1x128x128xbf16> to vector<128x128xbf16>
    %cst_434 = arith.constant dense<0.000000e+00> : vector<64x128xf32>
    %412 = tpu.matmul %409, %411, %cst_434 {dimension_numbers = #tpu.dot_dimension_numbers<[1], [0], [0], [1], [0, 0, 1, 1], [], []>} : vector<64x128xbf16>, vector<128x128xbf16>, vector<64x128xf32> -> vector<64x128xf32>
    %413 = arith.addf %407, %412 : vector<64x128xf32>
    %414 = vector.extract_strided_slice %401 {offsets = [16, 0, 0], sizes = [8, 8, 128], strides = [1, 1, 1]} : vector<24x8x128xbf16> to vector<8x8x128xbf16>
    %415 = vector.shape_cast %414 : vector<8x8x128xbf16> to vector<64x128xbf16>
    %c3_435 = arith.constant 3 : index
    %c2_436 = arith.constant 2 : index
    %c1_437 = arith.constant 1 : index
    %c0_438 = arith.constant 0 : index
    %c0_439 = arith.constant 0 : index
    %416 = vector.load %arg8[%c3_435, %c2_436, %c1_437, %c0_438, %c0_439] : memref<4x3x3x128x128xbf16, #tpu.memory_space<vmem>>, vector<1x1x1x128x128xbf16>
    %417 = vector.shape_cast %416 : vector<1x1x1x128x128xbf16> to vector<128x128xbf16>
    %cst_440 = arith.constant dense<0.000000e+00> : vector<64x128xf32>
    %418 = tpu.matmul %415, %417, %cst_440 {dimension_numbers = #tpu.dot_dimension_numbers<[1], [0], [0], [1], [0, 0, 1, 1], [], []>} : vector<64x128xbf16>, vector<128x128xbf16>, vector<64x128xf32> -> vector<64x128xf32>
    %419 = arith.addf %413, %418 : vector<64x128xf32>
    %c0_441 = arith.constant 0 : index
    %c24_442 = arith.constant 24 : index
    %c0_443 = arith.constant 0 : index
    %420 = vector.load %arg14[%c0_441, %c24_442, %c0_443] : memref<24x32x128xbf16, #tpu.memory_space<vmem>>, vector<24x8x128xbf16>
    %421 = vector.extract_strided_slice %420 {offsets = [0, 0, 0], sizes = [8, 8, 128], strides = [1, 1, 1]} : vector<24x8x128xbf16> to vector<8x8x128xbf16>
    %422 = vector.shape_cast %421 : vector<8x8x128xbf16> to vector<64x128xbf16>
    %c3_444 = arith.constant 3 : index
    %c0_445 = arith.constant 0 : index
    %c2_446 = arith.constant 2 : index
    %c0_447 = arith.constant 0 : index
    %c0_448 = arith.constant 0 : index
    %423 = vector.load %arg8[%c3_444, %c0_445, %c2_446, %c0_447, %c0_448] : memref<4x3x3x128x128xbf16, #tpu.memory_space<vmem>>, vector<1x1x1x128x128xbf16>
    %424 = vector.shape_cast %423 : vector<1x1x1x128x128xbf16> to vector<128x128xbf16>
    %cst_449 = arith.constant dense<0.000000e+00> : vector<64x128xf32>
    %425 = tpu.matmul %422, %424, %cst_449 {dimension_numbers = #tpu.dot_dimension_numbers<[1], [0], [0], [1], [0, 0, 1, 1], [], []>} : vector<64x128xbf16>, vector<128x128xbf16>, vector<64x128xf32> -> vector<64x128xf32>
    %426 = arith.addf %419, %425 : vector<64x128xf32>
    %427 = vector.extract_strided_slice %420 {offsets = [8, 0, 0], sizes = [8, 8, 128], strides = [1, 1, 1]} : vector<24x8x128xbf16> to vector<8x8x128xbf16>
    %428 = vector.shape_cast %427 : vector<8x8x128xbf16> to vector<64x128xbf16>
    %c3_450 = arith.constant 3 : index
    %c1_451 = arith.constant 1 : index
    %c2_452 = arith.constant 2 : index
    %c0_453 = arith.constant 0 : index
    %c0_454 = arith.constant 0 : index
    %429 = vector.load %arg8[%c3_450, %c1_451, %c2_452, %c0_453, %c0_454] : memref<4x3x3x128x128xbf16, #tpu.memory_space<vmem>>, vector<1x1x1x128x128xbf16>
    %430 = vector.shape_cast %429 : vector<1x1x1x128x128xbf16> to vector<128x128xbf16>
    %cst_455 = arith.constant dense<0.000000e+00> : vector<64x128xf32>
    %431 = tpu.matmul %428, %430, %cst_455 {dimension_numbers = #tpu.dot_dimension_numbers<[1], [0], [0], [1], [0, 0, 1, 1], [], []>} : vector<64x128xbf16>, vector<128x128xbf16>, vector<64x128xf32> -> vector<64x128xf32>
    %432 = arith.addf %426, %431 : vector<64x128xf32>
    %433 = vector.extract_strided_slice %420 {offsets = [16, 0, 0], sizes = [8, 8, 128], strides = [1, 1, 1]} : vector<24x8x128xbf16> to vector<8x8x128xbf16>
    %434 = vector.shape_cast %433 : vector<8x8x128xbf16> to vector<64x128xbf16>
    %c3_456 = arith.constant 3 : index
    %c2_457 = arith.constant 2 : index
    %c2_458 = arith.constant 2 : index
    %c0_459 = arith.constant 0 : index
    %c0_460 = arith.constant 0 : index
    %435 = vector.load %arg8[%c3_456, %c2_457, %c2_458, %c0_459, %c0_460] : memref<4x3x3x128x128xbf16, #tpu.memory_space<vmem>>, vector<1x1x1x128x128xbf16>
    %436 = vector.shape_cast %435 : vector<1x1x1x128x128xbf16> to vector<128x128xbf16>
    %cst_461 = arith.constant dense<0.000000e+00> : vector<64x128xf32>
    %437 = tpu.matmul %434, %436, %cst_461 {dimension_numbers = #tpu.dot_dimension_numbers<[1], [0], [0], [1], [0, 0, 1, 1], [], []>} : vector<64x128xbf16>, vector<128x128xbf16>, vector<64x128xf32> -> vector<64x128xf32>
    %438 = arith.addf %432, %437 : vector<64x128xf32>
    %439 = vector.broadcast %382 : vector<1x128xf32> to vector<64x128xf32>
    %440 = arith.addf %438, %439 : vector<64x128xf32>
    %cst_462 = arith.constant 0.000000e+00 : f32
    %441 = vector.broadcast %cst_462 : f32 to vector<64x128xf32>
    %442 = arith.maximumf %440, %441 : vector<64x128xf32>
    %443 = arith.truncf %442 : vector<64x128xf32> to vector<64x128xbf16>
    %c3_463 = arith.constant 3 : index
    %c0_464 = arith.constant 0 : index
    %c0_465 = arith.constant 0 : index
    %444 = vector.load %arg10[%c3_463, %c0_464, %c0_465] : memref<4x128x128xbf16, #tpu.memory_space<vmem>>, vector<1x128x128xbf16>
    %445 = vector.shape_cast %444 : vector<1x128x128xbf16> to vector<128x128xbf16>
    %cst_466 = arith.constant dense<0.000000e+00> : vector<64x128xf32>
    %446 = tpu.matmul %443, %445, %cst_466 {dimension_numbers = #tpu.dot_dimension_numbers<[1], [0], [0], [1], [0, 0, 1, 1], [], []>} : vector<64x128xbf16>, vector<128x128xbf16>, vector<64x128xf32> -> vector<64x128xf32>
    %c3_467 = arith.constant 3 : index
    %c0_468 = arith.constant 0 : index
    %c0_469 = arith.constant 0 : index
    %447 = vector.load %arg11[%c3_467, %c0_468, %c0_469] : memref<4x1x128xf32, #tpu.memory_space<vmem>>, vector<1x1x128xf32>
    %448 = vector.shape_cast %447 : vector<1x1x128xf32> to vector<1x128xf32>
    %449 = vector.broadcast %448 : vector<1x128xf32> to vector<64x128xf32>
    %450 = arith.addf %446, %449 : vector<64x128xf32>
    %cst_470 = arith.constant 0.000000e+00 : f32
    %451 = vector.broadcast %cst_470 : f32 to vector<64x128xf32>
    %452 = arith.maximumf %450, %451 : vector<64x128xf32>
    %c0_471 = arith.constant 0 : index
    %c0_472 = arith.constant 0 : index
    %c0_473 = arith.constant 0 : index
    %c0_474 = arith.constant 0 : index
    %453 = vector.load %arg12[%c0_471, %c0_472, %c0_473, %c0_474] : memref<1x8x8x128xbf16, #tpu.memory_space<vmem>>, vector<1x8x8x128xbf16>
    %454 = vector.shape_cast %453 : vector<1x8x8x128xbf16> to vector<64x128xbf16>
    %455 = arith.extf %454 : vector<64x128xbf16> to vector<64x128xf32>
    %456 = arith.addf %452, %455 : vector<64x128xf32>
    %457 = vector.shape_cast %456 : vector<64x128xf32> to vector<1x8x8x128xf32>
    %458 = arith.truncf %457 : vector<1x8x8x128xf32> to vector<1x8x8x128xbf16>
    %c0_475 = arith.constant 0 : index
    %c0_476 = arith.constant 0 : index
    %c0_477 = arith.constant 0 : index
    %c0_478 = arith.constant 0 : index
    %459 = vector.load %arg12[%c0_475, %c0_476, %c0_477, %c0_478] : memref<1x8x8x128xbf16, #tpu.memory_space<vmem>>, vector<1x8x8x128xbf16>
    tpu.vector_store %arg12[%c0_475, %c0_476, %c0_477, %c0_478], %458 {strides = array<i32>} : memref<1x8x8x128xbf16, #tpu.memory_space<vmem>>, vector<1x8x8x128xbf16>,
    return
  }
  func.func @transform_0(%arg0: i32) -> (i32, i32, i32, i32) {
    %c0_i32 = arith.constant 0 : i32
    %c0_i32_0 = arith.constant 0 : i32
    %c0_i32_1 = arith.constant 0 : i32
    %c0_i32_2 = arith.constant 0 : i32
    return %arg0, %c0_i32, %c0_i32_0, %c0_i32_1 : i32, i32, i32, i32
  }
  func.func @transform_1(%arg0: i32) -> (i32, i32) {
    %c0_i32 = arith.constant 0 : i32
    %c0_i32_0 = arith.constant 0 : i32
    %c0_i32_1 = arith.constant 0 : i32
    return %c0_i32, %c0_i32_0 : i32, i32
  }
  func.func @transform_2(%arg0: i32) -> (i32, i32) {
    %c0_i32 = arith.constant 0 : i32
    %c0_i32_0 = arith.constant 0 : i32
    %c0_i32_1 = arith.constant 0 : i32
    return %c0_i32, %c0_i32_0 : i32, i32
  }
  func.func @transform_3(%arg0: i32) -> (i32, i32, i32, i32) {
    %c0_i32 = arith.constant 0 : i32
    %c0_i32_0 = arith.constant 0 : i32
    %c0_i32_1 = arith.constant 0 : i32
    %c0_i32_2 = arith.constant 0 : i32
    %c0_i32_3 = arith.constant 0 : i32
    return %c0_i32, %c0_i32_0, %c0_i32_1, %c0_i32_2 : i32, i32, i32, i32
  }
  func.func @transform_4(%arg0: i32) -> (i32, i32) {
    %c0_i32 = arith.constant 0 : i32
    %c0_i32_0 = arith.constant 0 : i32
    %c0_i32_1 = arith.constant 0 : i32
    return %c0_i32, %c0_i32_0 : i32, i32
  }
  func.func @transform_5(%arg0: i32) -> (i32, i32, i32) {
    %c0_i32 = arith.constant 0 : i32
    %c0_i32_0 = arith.constant 0 : i32
    %c0_i32_1 = arith.constant 0 : i32
    %c0_i32_2 = arith.constant 0 : i32
    return %c0_i32, %c0_i32_0, %c0_i32_1 : i32, i32, i32
  }
  func.func @transform_6(%arg0: i32) -> (i32, i32, i32) {
    %c0_i32 = arith.constant 0 : i32
    %c0_i32_0 = arith.constant 0 : i32
    %c0_i32_1 = arith.constant 0 : i32
    %c0_i32_2 = arith.constant 0 : i32
    return %c0_i32, %c0_i32_0, %c0_i32_1 : i32, i32, i32
  }
  func.func @transform_7(%arg0: i32) -> (i32, i32, i32, i32, i32) {
    %c0_i32 = arith.constant 0 : i32
    %c0_i32_0 = arith.constant 0 : i32
    %c0_i32_1 = arith.constant 0 : i32
    %c0_i32_2 = arith.constant 0 : i32
    %c0_i32_3 = arith.constant 0 : i32
    %c0_i32_4 = arith.constant 0 : i32
    return %c0_i32, %c0_i32_0, %c0_i32_1, %c0_i32_2, %c0_i32_3 : i32, i32, i32, i32, i32
  }
  func.func @transform_8(%arg0: i32) -> (i32, i32, i32) {
    %c0_i32 = arith.constant 0 : i32
    %c0_i32_0 = arith.constant 0 : i32
    %c0_i32_1 = arith.constant 0 : i32
    %c0_i32_2 = arith.constant 0 : i32
    return %c0_i32, %c0_i32_0, %c0_i32_1 : i32, i32, i32
  }
  func.func @transform_9(%arg0: i32) -> (i32, i32, i32) {
    %c0_i32 = arith.constant 0 : i32
    %c0_i32_0 = arith.constant 0 : i32
    %c0_i32_1 = arith.constant 0 : i32
    %c0_i32_2 = arith.constant 0 : i32
    return %c0_i32, %c0_i32_0, %c0_i32_1 : i32, i32, i32
  }
  func.func @transform_10(%arg0: i32) -> (i32, i32, i32) {
    %c0_i32 = arith.constant 0 : i32
    %c0_i32_0 = arith.constant 0 : i32
    %c0_i32_1 = arith.constant 0 : i32
    %c0_i32_2 = arith.constant 0 : i32
    return %c0_i32, %c0_i32_0, %c0_i32_1 : i32, i32, i32
  }
  func.func @transform_11(%arg0: i32) -> (i32, i32, i32, i32) {
    %c0_i32 = arith.constant 0 : i32
    %c0_i32_0 = arith.constant 0 : i32
    %c0_i32_1 = arith.constant 0 : i32
    %c0_i32_2 = arith.constant 0 : i32
    return %arg0, %c0_i32, %c0_i32_0, %c0_i32_1 : i32, i32, i32, i32
  }
}

</mosaic_0001>

<llo_original>
// kernel: tpu_custom_call.1
$region0: #{tpu_custom_call.1}
  #allocation0 [shape = 'u32[]', space=smem, size = 0x4, offset = 0x4, fixed_abs, tag = 'smem constant byte address 0x4 - core index']
  #allocation1 [shape = 'u32[72,128]{1,0:T(1,128)}', space=vmem, size = 0x9000, scoped, tag = 'internal scratch']
  #allocation2 [shape = 'bf16[10,25,128]{2,1,0:T(8,128)(2,1)}', space=vmem, size = 0x14000, scoped, tag = 'scratch operand']
  #allocation3 [shape = 'bf16[24,32,128]{2,1,0:T(8,128)(2,1)}', space=vmem, size = 0x30000, scoped, tag = 'scratch operand']
  %s0 = inlined_call_operand.hbm [shape: bf16[4,8,8,64], index: 0, kind: input, shape index: {}]
  %s1 = inlined_call_operand.hbm [shape: bf16[64,128], index: 1, kind: input, shape index: {}]
  %s2 = inlined_call_operand.hbm [shape: f32[1,128], index: 2, kind: input, shape index: {}]
  %s3 = inlined_call_operand.hbm [shape: bf16[3,3,128,128], index: 3, kind: input, shape index: {}]
  %s4 = inlined_call_operand.hbm [shape: f32[1,128], index: 4, kind: input, shape index: {}]
  %s5 = inlined_call_operand.hbm [shape: bf16[4,128,128], index: 5, kind: input, shape index: {}]
  %s6 = inlined_call_operand.hbm [shape: f32[4,1,128], index: 6, kind: input, shape index: {}]
  %s7 = inlined_call_operand.hbm [shape: bf16[4,3,3,128,128], index: 7, kind: input, shape index: {}]
  %s8 = inlined_call_operand.hbm [shape: f32[4,1,128], index: 8, kind: input, shape index: {}]
  %s9 = inlined_call_operand.hbm [shape: bf16[4,128,128], index: 9, kind: input, shape index: {}]
  %s10 = inlined_call_operand.hbm [shape: f32[4,1,128], index: 10, kind: input, shape index: {}]
  %s11 = inlined_call_operand.hbm [shape: bf16[4,8,8,128], index: 11, kind: output, shape index: {}]
  %s12 = sld [smem:[#allocation0]]
  $region121: #{tpu_custom_call.1} parent=0
    _
  %s14 = ssub.s32 1, %s12
  %s15 = scalar_select 0, %s14, %s12
  $region1: #{tpu_custom_call.1} parent=0
    #allocation4 [shape = 'u8[32768]{0}', space=vmem, size = 0x8000, scoped, tag = 'input window, operand 0']
    #allocation5 [shape = 's32[2]{0}', space=sflag, size = 0x8, scoped, tag = 'scoped memory for tpu_custom_call.1']
    #allocation6 [shape = 's32[2]{0}', space=sflag, size = 0x8, scoped, tag = 'scoped memory for tpu_custom_call.1']
    #allocation7 [shape = 'u8[16384]{0}', space=vmem, size = 0x4000, scoped, tag = 'input window, operand 1, single buffered']
    #allocation8 [shape = 's32[1]{0}', space=sflag, size = 0x4, scoped, tag = 'scoped memory for tpu_custom_call.1']
    #allocation9 [shape = 'u8[512]{0}', space=vmem, size = 0x400, scoped, tag = 'input window, operand 2, single buffered']
    #allocation10 [shape = 'u8[294912]{0}', space=vmem, size = 0x48000, scoped, tag = 'input window, operand 3, single buffered']
    #allocation11 [shape = 's32[1]{0}', space=sflag, size = 0x4, scoped, tag = 'scoped memory for tpu_custom_call.1']
    #allocation12 [shape = 'u8[512]{0}', space=vmem, size = 0x400, scoped, tag = 'input window, operand 4, single buffered']
    #allocation13 [shape = 'u8[131072]{0}', space=vmem, size = 0x20000, scoped, tag = 'input window, operand 5, single buffered']
    #allocation14 [shape = 's32[1]{0}', space=sflag, size = 0x4, scoped, tag = 'scoped memory for tpu_custom_call.1']
    #allocation15 [shape = 'u8[2048]{0}', space=vmem, size = 0x800, scoped, tag = 'input window, operand 6, single buffered']
    #allocation16 [shape = 'u8[1179648]{0}', space=vmem, size = 0x120000, scoped, tag = 'input window, operand 7, single buffered']
    #allocation17 [shape = 's32[1]{0}', space=sflag, size = 0x4, scoped, tag = 'scoped memory for tpu_custom_call.1']
    #allocation18 [shape = 'u8[2048]{0}', space=vmem, size = 0x800, scoped, tag = 'input window, operand 8, single buffered']
    #allocation19 [shape = 'u8[131072]{0}', space=vmem, size = 0x20000, scoped, tag = 'input window, operand 9, single buffered']
    #allocation20 [shape = 's32[1]{0}', space=sflag, size = 0x4, scoped, tag = 'scoped memory for tpu_custom_call.1']
    #allocation21 [shape = 'u8[2048]{0}', space=vmem, size = 0x800, scoped, tag = 'input window, operand 10, single buffered']
    #allocation22 [shape = 'u8[32768]{0}', space=vmem, size = 0x8000, scoped, tag = 'output window, operand 0']
    %16 = vsyncpa [#allocation5], 0
    %s17 = scalar_lea.sflag [#allocation5], 1
    %18 = vsyncpa %s17, 0
    %19 = vsyncpa [#allocation8], 0
    %20 = vsyncpa [#allocation11], 0
    %21 = vsyncpa [#allocation14], 0
    %22 = vsyncpa [#allocation17], 0
    %23 = vsyncpa [#allocation20], 0
    %24 = vsyncpa [#allocation6], 0
    %s25 = scalar_lea.sflag [#allocation6], 1
    %26 = vsyncpa %s25, 0
    loop: start=0, step=1, limit=6
    $region2: #{tpu_custom_call.1} parent=1 // loop_pre_header
      _
    $region3: #{tpu_custom_call.1} parent=1 // loop_header
      %s28 = sphi 0, %s32
      %p29 = scmp.ge.s32.totalorder %s28, 6
      %s38 = sphi 0, %s40
      %s41 = sphi 0, %s38
      %s42 = sphi 0, %s41
      %s58 = sphi 0, %s42
      %s62 = sphi 0, %s62
      %s64 = sphi 0, %s62
      %s65 = sphi 0, %s64
      %s79 = sphi 0, %s65
      %s83 = sphi 0, %s83
      %s85 = sphi 0, %s83
      %s86 = sphi 0, %s85
      %s100 = sphi 0, %s86
      %s104 = sphi 0, %s104
      %s106 = sphi 0, %s104
      %s107 = sphi 0, %s106
      %s121 = sphi 0, %s107
      %s125 = sphi 0, %s125
      %s127 = sphi 0, %s125
      %s128 = sphi 0, %s127
      %s142 = sphi 0, %s128
      %s146 = sphi 0, %s146
      %s148 = sphi 0, %s146
      %s149 = sphi 0, %s148
      %s163 = sphi 0, %s149
      %s167 = sphi 0, %s167
      %s169 = sphi 0, %s167
      %s170 = sphi 0, %s169
      %s184 = sphi 0, %s170
      %s188 = sphi 0, %s188
      %s190 = sphi 0, %s188
      %s191 = sphi 0, %s190
      %s205 = sphi 0, %s191
      %s209 = sphi 0, %s209
      %s211 = sphi 0, %s209
      %s212 = sphi 0, %s211
      %s226 = sphi 0, %s212
      %s230 = sphi 0, %s230
      %s232 = sphi 0, %s230
      %s233 = sphi 0, %s232
      %s247 = sphi 0, %s233
      %s251 = sphi 0, %s251
      %s253 = sphi 0, %s251
      %s254 = sphi 0, %s253
      %s268 = sphi 0, %s254
      %s274 = sphi 0, %s276
      %s277 = sphi 0, %s274
      %s278 = sphi 0, %s277
      %s294 = sphi 0, %s278
    $region4: #{tpu_custom_call.1} parent=1 // loop_header_branch
      %31 = sbr.rel (%p29) target = $region8
    $region5: #{tpu_custom_call.1} parent=1 // loop_body
      %s33 = ssub.s32 %s28, 1
      %s34 = ssub.s32 %s28, 2
      %s35 = sadd.s32 %s28, 1
      %s36 = ssub.s32 %s28, %s35
      %p37 = scmp.eq.s32.totalorder %s36, 0
      %s39 = sadd.s32 %s38, 1
      %s40 = scalar_select %p37, %s38, %s39
      %p43 = pneg %p37
      %p44 = scmp.eq.s32.totalorder %s28, 3
      %p45 = por %p43, %p44
      %p46 = scmp.ne.s32.totalorder %s38, %s41
      %p47 = scmp.eq.s32.totalorder %s28, 0
      %p48 = por %p46, %p47
      %p49 = scmp.ne.s32.totalorder %s38, %s41
      %p50 = scmp.eq.s32.totalorder %s33, 3
      %p51 = por %p49, %p50
      %p52 = scmp.ne.s32.totalorder %s41, %s42
      %p53 = scmp.eq.s32.totalorder %s33, 0
      %p54 = por %p52, %p53
      %p55 = scmp.ne.s32.totalorder %s41, %s42
      %p56 = scmp.eq.s32.totalorder %s34, 3
      %p57 = por %p55, %p56
      %p59 = scmp.ne.s32.totalorder %s42, %s58
      %p60 = scmp.eq.s32.totalorder %s34, 0
      %p61 = por %p59, %p60
      %s63 = sadd.s32 %s62, 1
      %p66 = scmp.eq.s32.totalorder %s28, 3
      %p67 = scmp.ne.s32.totalorder %s62, %s64
      %p68 = scmp.eq.s32.totalorder %s28, 0
      %p69 = por %p67, %p68
      %p70 = scmp.ne.s32.totalorder %s62, %s64
      %p71 = scmp.eq.s32.totalorder %s33, 3
      %p72 = por %p70, %p71
      %p73 = scmp.ne.s32.totalorder %s64, %s65
      %p74 = scmp.eq.s32.totalorder %s33, 0
      %p75 = por %p73, %p74
      %p76 = scmp.ne.s32.totalorder %s64, %s65
      %p77 = scmp.eq.s32.totalorder %s34, 3
      %p78 = por %p76, %p77
      %p80 = scmp.ne.s32.totalorder %s65, %s79
      %p81 = scmp.eq.s32.totalorder %s34, 0
      %p82 = por %p80, %p81
      %s84 = sadd.s32 %s83, 1
      %p87 = scmp.eq.s32.totalorder %s28, 3
      %p88 = scmp.ne.s32.totalorder %s83, %s85
      %p89 = scmp.eq.s32.totalorder %s28, 0
      %p90 = por %p88, %p89
      %p91 = scmp.ne.s32.totalorder %s83, %s85
      %p92 = scmp.eq.s32.totalorder %s33, 3
      %p93 = por %p91, %p92
      %p94 = scmp.ne.s32.totalorder %s85, %s86
      %p95 = scmp.eq.s32.totalorder %s33, 0
      %p96 = por %p94, %p95
      %p97 = scmp.ne.s32.totalorder %s85, %s86
      %p98 = scmp.eq.s32.totalorder %s34, 3
      %p99 = por %p97, %p98
      %p101 = scmp.ne.s32.totalorder %s86, %s100
      %p102 = scmp.eq.s32.totalorder %s34, 0
      %p103 = por %p101, %p102
      %s105 = sadd.s32 %s104, 1
      %p108 = scmp.eq.s32.totalorder %s28, 3
      %p109 = scmp.ne.s32.totalorder %s104, %s106
      %p110 = scmp.eq.s32.totalorder %s28, 0
      %p111 = por %p109, %p110
      %p112 = scmp.ne.s32.totalorder %s104, %s106
      %p113 = scmp.eq.s32.totalorder %s33, 3
      %p114 = por %p112, %p113
      %p115 = scmp.ne.s32.totalorder %s106, %s107
      %p116 = scmp.eq.s32.totalorder %s33, 0
      %p117 = por %p115, %p116
      %p118 = scmp.ne.s32.totalorder %s106, %s107
      %p119 = scmp.eq.s32.totalorder %s34, 3
      %p120 = por %p118, %p119
      %p122 = scmp.ne.s32.totalorder %s107, %s121
      %p123 = scmp.eq.s32.totalorder %s34, 0
      %p124 = por %p122, %p123
      %s126 = sadd.s32 %s125, 1
      %p129 = scmp.eq.s32.totalorder %s28, 3
      %p130 = scmp.ne.s32.totalorder %s125, %s127
      %p131 = scmp.eq.s32.totalorder %s28, 0
      %p132 = por %p130, %p131
      %p133 = scmp.ne.s32.totalorder %s125, %s127
      %p134 = scmp.eq.s32.totalorder %s33, 3
      %p135 = por %p133, %p134
      %p136 = scmp.ne.s32.totalorder %s127, %s128
      %p137 = scmp.eq.s32.totalorder %s33, 0
      %p138 = por %p136, %p137
      %p139 = scmp.ne.s32.totalorder %s127, %s128
      %p140 = scmp.eq.s32.totalorder %s34, 3
      %p141 = por %p139, %p140
      %p143 = scmp.ne.s32.totalorder %s128, %s142
      %p144 = scmp.eq.s32.totalorder %s34, 0
      %p145 = por %p143, %p144
      %s147 = sadd.s32 %s146, 1
      %p150 = scmp.eq.s32.totalorder %s28, 3
      %p151 = scmp.ne.s32.totalorder %s146, %s148
      %p152 = scmp.eq.s32.totalorder %s28, 0
      %p153 = por %p151, %p152
      %p154 = scmp.ne.s32.totalorder %s146, %s148
      %p155 = scmp.eq.s32.totalorder %s33, 3
      %p156 = por %p154, %p155
      %p157 = scmp.ne.s32.totalorder %s148, %s149
      %p158 = scmp.eq.s32.totalorder %s33, 0
      %p159 = por %p157, %p158
      %p160 = scmp.ne.s32.totalorder %s148, %s149
      %p161 = scmp.eq.s32.totalorder %s34, 3
      %p162 = por %p160, %p161
      %p164 = scmp.ne.s32.totalorder %s149, %s163
      %p165 = scmp.eq.s32.totalorder %s34, 0
      %p166 = por %p164, %p165
      %s168 = sadd.s32 %s167, 1
      %p171 = scmp.eq.s32.totalorder %s28, 3
      %p172 = scmp.ne.s32.totalorder %s167, %s169
      %p173 = scmp.eq.s32.totalorder %s28, 0
      %p174 = por %p172, %p173
      %p175 = scmp.ne.s32.totalorder %s167, %s169
      %p176 = scmp.eq.s32.totalorder %s33, 3
      %p177 = por %p175, %p176
      %p178 = scmp.ne.s32.totalorder %s169, %s170
      %p179 = scmp.eq.s32.totalorder %s33, 0
      %p180 = por %p178, %p179
      %p181 = scmp.ne.s32.totalorder %s169, %s170
      %p182 = scmp.eq.s32.totalorder %s34, 3
      %p183 = por %p181, %p182
      %p185 = scmp.ne.s32.totalorder %s170, %s184
      %p186 = scmp.eq.s32.totalorder %s34, 0
      %p187 = por %p185, %p186
      %s189 = sadd.s32 %s188, 1
      %p192 = scmp.eq.s32.totalorder %s28, 3
      %p193 = scmp.ne.s32.totalorder %s188, %s190
      %p194 = scmp.eq.s32.totalorder %s28, 0
      %p195 = por %p193, %p194
      %p196 = scmp.ne.s32.totalorder %s188, %s190
      %p197 = scmp.eq.s32.totalorder %s33, 3
      %p198 = por %p196, %p197
      %p199 = scmp.ne.s32.totalorder %s190, %s191
      %p200 = scmp.eq.s32.totalorder %s33, 0
      %p201 = por %p199, %p200
      %p202 = scmp.ne.s32.totalorder %s190, %s191
      %p203 = scmp.eq.s32.totalorder %s34, 3
      %p204 = por %p202, %p203
      %p206 = scmp.ne.s32.totalorder %s191, %s205
      %p207 = scmp.eq.s32.totalorder %s34, 0
      %p208 = por %p206, %p207
      %s210 = sadd.s32 %s209, 1
      %p213 = scmp.eq.s32.totalorder %s28, 3
      %p214 = scmp.ne.s32.totalorder %s209, %s211
      %p215 = scmp.eq.s32.totalorder %s28, 0
      %p216 = por %p214, %p215
      %p217 = scmp.ne.s32.totalorder %s209, %s211
      %p218 = scmp.eq.s32.totalorder %s33, 3
      %p219 = por %p217, %p218
      %p220 = scmp.ne.s32.totalorder %s211, %s212
      %p221 = scmp.eq.s32.totalorder %s33, 0
      %p222 = por %p220, %p221
      %p223 = scmp.ne.s32.totalorder %s211, %s212
      %p224 = scmp.eq.s32.totalorder %s34, 3
      %p225 = por %p223, %p224
      %p227 = scmp.ne.s32.totalorder %s212, %s226
      %p228 = scmp.eq.s32.totalorder %s34, 0
      %p229 = por %p227, %p228
      %s231 = sadd.s32 %s230, 1
      %p234 = scmp.eq.s32.totalorder %s28, 3
      %p235 = scmp.ne.s32.totalorder %s230, %s232
      %p236 = scmp.eq.s32.totalorder %s28, 0
      %p237 = por %p235, %p236
      %p238 = scmp.ne.s32.totalorder %s230, %s232
      %p239 = scmp.eq.s32.totalorder %s33, 3
      %p240 = por %p238, %p239
      %p241 = scmp.ne.s32.totalorder %s232, %s233
      %p242 = scmp.eq.s32.totalorder %s33, 0
      %p243 = por %p241, %p242
      %p244 = scmp.ne.s32.totalorder %s232, %s233
      %p245 = scmp.eq.s32.totalorder %s34, 3
      %p246 = por %p244, %p245
      %p248 = scmp.ne.s32.totalorder %s233, %s247
      %p249 = scmp.eq.s32.totalorder %s34, 0
      %p250 = por %p248, %p249
      %s252 = sadd.s32 %s251, 1
      %p255 = scmp.eq.s32.totalorder %s28, 3
      %p256 = scmp.ne.s32.totalorder %s251, %s253
      %p257 = scmp.eq.s32.totalorder %s28, 0
      %p258 = por %p256, %p257
      %p259 = scmp.ne.s32.totalorder %s251, %s253
      %p260 = scmp.eq.s32.totalorder %s33, 3
      %p261 = por %p259, %p260
      %p262 = scmp.ne.s32.totalorder %s253, %s254
      %p263 = scmp.eq.s32.totalorder %s33, 0
      %p264 = por %p262, %p263
      %p265 = scmp.ne.s32.totalorder %s253, %s254
      %p266 = scmp.eq.s32.totalorder %s34, 3
      %p267 = por %p265, %p266
      %p269 = scmp.ne.s32.totalorder %s254, %s268
      %p270 = scmp.eq.s32.totalorder %s34, 0
      %p271 = por %p269, %p270
      %s272 = ssub.s32 %s28, %s35
      %p273 = scmp.eq.s32.totalorder %s272, 0
      %s275 = sadd.s32 %s274, 1
      %s276 = scalar_select %p273, %s274, %s275
      %p279 = pneg %p273
      %p280 = scmp.eq.s32.totalorder %s28, 3
      %p281 = por %p279, %p280
      %p282 = scmp.ne.s32.totalorder %s274, %s277
      %p283 = scmp.eq.s32.totalorder %s28, 0
      %p284 = por %p282, %p283
      %p285 = scmp.ne.s32.totalorder %s274, %s277
      %p286 = scmp.eq.s32.totalorder %s33, 3
      %p287 = por %p285, %p286
      %p288 = scmp.ne.s32.totalorder %s277, %s278
      %p289 = scmp.eq.s32.totalorder %s33, 0
      %p290 = por %p288, %p289
      %p291 = scmp.ne.s32.totalorder %s277, %s278
      %p292 = scmp.eq.s32.totalorder %s34, 3
      %p293 = por %p291, %p292
      %p295 = scmp.ne.s32.totalorder %s278, %s294
      %p296 = scmp.eq.s32.totalorder %s34, 0
      %p297 = por %p295, %p296
      %p298 = scmp.le.s32.totalorder 1, %s28
      %p299 = scmp.lt.s32.totalorder %s28, 5
      %p300 = pnand %p298, %p299
      %p301 = pneg %p300
      // Predicated region
      $region9: #{tpu_custom_call.1} parent=5 // pred_check
        _
      $region10: #{tpu_custom_call.1} parent=5 // pred_check_branch
        %303 = sbr.rel (%p300) target = $region12
      $region11: #{tpu_custom_call.1} parent=5 // pred_region
        %s304 = ssub.s32 %s28, 1
        // Predicated region
        $region13: #{tpu_custom_call.1} parent=11 // pred_check
          %p305 = pneg %p75
        $region14: #{tpu_custom_call.1} parent=11 // pred_check_branch
          %307 = sbr.rel (%p305) target = $region16
        $region15: #{tpu_custom_call.1} parent=11 // pred_region
          %309 = vsyncadd [#allocation8], 0
          %s310 = sshll.u32 %s1, 4
          %s311 = int_to_ptr.hbm [resolvable:$true] %s310
          %s312 = sshll.u32 [#allocation7], 4
          %s313 = int_to_ptr.vmem [resolvable:$true] %s312
          %318 = dma.hbm_to_vmem [thread:$0]  %s311, 512, %s313, [#allocation8], 64, 64, 4
        $region16: #{tpu_custom_call.1} parent=11 // pred_fallthru
          _
        // Predicated region
        $region17: #{tpu_custom_call.1} parent=11 // pred_check
          %p319 = pneg %p96
        $region18: #{tpu_custom_call.1} parent=11 // pred_check_branch
          %321 = sbr.rel (%p319) target = $region20
        $region19: #{tpu_custom_call.1} parent=11 // pred_region
          %323 = vsyncadd [#allocation8], 0
          %s325 = sshll.u32 %s2, 4
          %s326 = int_to_ptr.hbm [resolvable:$true] %s325
          %s327 = sshll.u32 [#allocation9], 4
          %s328 = int_to_ptr.vmem [resolvable:$true] %s327
          %330 = dma.hbm_to_vmem [thread:$0]  %s326, 16, %s328, [#allocation8]
        $region20: #{tpu_custom_call.1} parent=11 // pred_fallthru
          _
        // Predicated region
        $region21: #{tpu_custom_call.1} parent=11 // pred_check
          %p331 = pneg %p117
        $region22: #{tpu_custom_call.1} parent=11 // pred_check_branch
          %333 = sbr.rel (%p331) target = $region24
        $region23: #{tpu_custom_call.1} parent=11 // pred_region
          %335 = vsyncadd [#allocation11], 0
          %s336 = sshll.u32 %s3, 4
          %s337 = int_to_ptr.hbm [resolvable:$true] %s336
          %s338 = sshll.u32 [#allocation10], 4
          %s339 = int_to_ptr.vmem [resolvable:$true] %s338
          %344 = dma.hbm_to_vmem [thread:$0]  %s337, 9216, %s339, [#allocation11], 64, 64, 4
        $region24: #{tpu_custom_call.1} parent=11 // pred_fallthru
          _
        // Predicated region
        $region25: #{tpu_custom_call.1} parent=11 // pred_check
          %p345 = pneg %p138
        $region26: #{tpu_custom_call.1} parent=11 // pred_check_branch
          %347 = sbr.rel (%p345) target = $region28
        $region27: #{tpu_custom_call.1} parent=11 // pred_region
          %349 = vsyncadd [#allocation11], 0
          %s351 = sshll.u32 %s4, 4
          %s352 = int_to_ptr.hbm [resolvable:$true] %s351
          %s353 = sshll.u32 [#allocation12], 4
          %s354 = int_to_ptr.vmem [resolvable:$true] %s353
          %356 = dma.hbm_to_vmem [thread:$0]  %s352, 16, %s354, [#allocation11]
        $region28: #{tpu_custom_call.1} parent=11 // pred_fallthru
          _
        // Predicated region
        $region29: #{tpu_custom_call.1} parent=11 // pred_check
          %p357 = pneg %p159
        $region30: #{tpu_custom_call.1} parent=11 // pred_check_branch
          %359 = sbr.rel (%p357) target = $region32
        $region31: #{tpu_custom_call.1} parent=11 // pred_region
          %361 = vsyncadd [#allocation14], 0
          %s362 = sshll.u32 %s5, 4
          %s363 = int_to_ptr.hbm [resolvable:$true] %s362
          %s364 = sshll.u32 [#allocation13], 4
          %s365 = int_to_ptr.vmem [resolvable:$true] %s364
          %370 = dma.hbm_to_vmem [thread:$0]  %s363, 4096, %s365, [#allocation14], 64, 64, 4
        $region32: #{tpu_custom_call.1} parent=11 // pred_fallthru
          _
        // Predicated region
        $region33: #{tpu_custom_call.1} parent=11 // pred_check
          %p371 = pneg %p180
        $region34: #{tpu_custom_call.1} parent=11 // pred_check_branch
          %373 = sbr.rel (%p371) target = $region36
        $region35: #{tpu_custom_call.1} parent=11 // pred_region
          %375 = vsyncadd [#allocation14], 0
          %s376 = sshll.u32 %s6, 4
          %s377 = int_to_ptr.hbm [resolvable:$true] %s376
          %s378 = sshll.u32 [#allocation15], 4
          %s379 = int_to_ptr.vmem [resolvable:$true] %s378
          %384 = dma.hbm_to_vmem [thread:$0]  %s377, 64, %s379, [#allocation14], 16, 16, 1
        $region36: #{tpu_custom_call.1} parent=11 // pred_fallthru
          _
        // Predicated region
        $region37: #{tpu_custom_call.1} parent=11 // pred_check
          %p385 = pneg %p201
        $region38: #{tpu_custom_call.1} parent=11 // pred_check_branch
          %387 = sbr.rel (%p385) target = $region40
        $region39: #{tpu_custom_call.1} parent=11 // pred_region
          %389 = vsyncadd [#allocation17], 0
          %s390 = sshll.u32 %s7, 4
          %s391 = int_to_ptr.hbm [resolvable:$true] %s390
          %s392 = sshll.u32 [#allocation16], 4
          %s393 = int_to_ptr.vmem [resolvable:$true] %s392
          %398 = dma.hbm_to_vmem [thread:$0]  %s391, 36864, %s393, [#allocation17], 64, 64, 4
        $region40: #{tpu_custom_call.1} parent=11 // pred_fallthru
          _
        // Predicated region
        $region41: #{tpu_custom_call.1} parent=11 // pred_check
          %p399 = pneg %p222
        $region42: #{tpu_custom_call.1} parent=11 // pred_check_branch
          %401 = sbr.rel (%p399) target = $region44
        $region43: #{tpu_custom_call.1} parent=11 // pred_region
          %403 = vsyncadd [#allocation17], 0
          %s404 = sshll.u32 %s8, 4
          %s405 = int_to_ptr.hbm [resolvable:$true] %s404
          %s406 = sshll.u32 [#allocation18], 4
          %s407 = int_to_ptr.vmem [resolvable:$true] %s406
          %412 = dma.hbm_to_vmem [thread:$0]  %s405, 64, %s407, [#allocation17], 16, 16, 1
        $region44: #{tpu_custom_call.1} parent=11 // pred_fallthru
          _
        // Predicated region
        $region45: #{tpu_custom_call.1} parent=11 // pred_check
          %p413 = pneg %p243
        $region46: #{tpu_custom_call.1} parent=11 // pred_check_branch
          %415 = sbr.rel (%p413) target = $region48
        $region47: #{tpu_custom_call.1} parent=11 // pred_region
          %417 = vsyncadd [#allocation20], 0
          %s418 = sshll.u32 %s9, 4
          %s419 = int_to_ptr.hbm [resolvable:$true] %s418
          %s420 = sshll.u32 [#allocation19], 4
          %s421 = int_to_ptr.vmem [resolvable:$true] %s420
          %426 = dma.hbm_to_vmem [thread:$0]  %s419, 4096, %s421, [#allocation20], 64, 64, 4
        $region48: #{tpu_custom_call.1} parent=11 // pred_fallthru
          _
        // Predicated region
        $region49: #{tpu_custom_call.1} parent=11 // pred_check
          %p427 = pneg %p264
        $region50: #{tpu_custom_call.1} parent=11 // pred_check_branch
          %429 = sbr.rel (%p427) target = $region52
        $region51: #{tpu_custom_call.1} parent=11 // pred_region
          %431 = vsyncadd [#allocation20], 0
          %s432 = sshll.u32 %s10, 4
          %s433 = int_to_ptr.hbm [resolvable:$true] %s432
          %s434 = sshll.u32 [#allocation21], 4
          %s435 = int_to_ptr.vmem [resolvable:$true] %s434
          %440 = dma.hbm_to_vmem [thread:$0]  %s433, 64, %s435, [#allocation20], 16, 16, 1
        $region52: #{tpu_custom_call.1} parent=11 // pred_fallthru
          _
      $region12: #{tpu_custom_call.1} parent=5 // pred_fallthru
        _
      %p441 = scmp.lt.s32.totalorder %s28, 4
      // Predicated region
      $region53: #{tpu_custom_call.1} parent=5 // pred_check
        %p442 = pneg %p441
      $region54: #{tpu_custom_call.1} parent=5 // pred_check_branch
        %444 = sbr.rel (%p442) target = $region56
      $region55: #{tpu_custom_call.1} parent=5 // pred_region
        // Predicated region
        $region57: #{tpu_custom_call.1} parent=55 // pred_check
          %p445 = pneg %p48
        $region58: #{tpu_custom_call.1} parent=55 // pred_check_branch
          %447 = sbr.rel (%p445) target = $region60
        $region59: #{tpu_custom_call.1} parent=55 // pred_region
          %s448 = sand.u32 %s38, 1
          %s449 = scalar_lea.sflag [#allocation5], %s448
          %s450 = sand.u32 %s38, 1
          %s451 = smul.addr %s450, 32
          %s452 = scalar_lea.vmem [#allocation4], %s451
          %454 = vsyncadd %s449, 0
          %s455 = smul.addr %s28, 8
          %s456 = smul.addr %s455, 4
          %s457 = scalar_lea.hbm %s0, %s456
          %s458 = sshll.u32 %s457, 4
          %s459 = int_to_ptr.hbm [resolvable:$true] %s458
          %s460 = sshll.u32 %s452, 4
          %s461 = int_to_ptr.vmem [resolvable:$true] %s460
          %466 = dma.hbm_to_vmem [thread:$0]  %s459, 512, %s461, %s449, 64, 64, 4
        $region60: #{tpu_custom_call.1} parent=55 // pred_fallthru
          _
      $region56: #{tpu_custom_call.1} parent=5 // pred_fallthru
        _
      %p467 = scmp.le.s32.totalorder 1, %s28
      %p468 = scmp.lt.s32.totalorder %s28, 5
      %p469 = pnand %p467, %p468
      %p470 = pneg %p469
      // Predicated region
      $region61: #{tpu_custom_call.1} parent=5 // pred_check
        _
      $region62: #{tpu_custom_call.1} parent=5 // pred_check_branch
        %472 = sbr.rel (%p469) target = $region64
      $region63: #{tpu_custom_call.1} parent=5 // pred_region
        %s473 = ssub.s32 %s28, 1
        %s474 = sand.u32 %s41, 1
        %s475 = scalar_lea.sflag [#allocation5], %s474
        %s476 = sand.u32 %s41, 1
        %s477 = smul.addr %s476, 32
        %s478 = scalar_lea.vmem [#allocation4], %s477
        // Predicated region
        $region65: #{tpu_custom_call.1} parent=63 // pred_check
          %p479 = pneg %p54
        $region66: #{tpu_custom_call.1} parent=63 // pred_check_branch
          %481 = sbr.rel (%p479) target = $region68
        $region67: #{tpu_custom_call.1} parent=63 // pred_region
          %483 = dma.done %s475, 512
        $region68: #{tpu_custom_call.1} parent=63 // pred_fallthru
          _
        // Predicated region
        $region69: #{tpu_custom_call.1} parent=63 // pred_check
          %p484 = pneg %p75
        $region70: #{tpu_custom_call.1} parent=63 // pred_check_branch
          %486 = sbr.rel (%p484) target = $region72
        $region71: #{tpu_custom_call.1} parent=63 // pred_region
          %488 = dma.done [#allocation8], 512
        $region72: #{tpu_custom_call.1} parent=63 // pred_fallthru
          _
        // Predicated region
        $region73: #{tpu_custom_call.1} parent=63 // pred_check
          %p489 = pneg %p96
        $region74: #{tpu_custom_call.1} parent=63 // pred_check_branch
          %491 = sbr.rel (%p489) target = $region76
        $region75: #{tpu_custom_call.1} parent=63 // pred_region
          %493 = dma.done [#allocation8], 16
        $region76: #{tpu_custom_call.1} parent=63 // pred_fallthru
          _
        // Predicated region
        $region77: #{tpu_custom_call.1} parent=63 // pred_check
          %p494 = pneg %p117
        $region78: #{tpu_custom_call.1} parent=63 // pred_check_branch
          %496 = sbr.rel (%p494) target = $region80
        $region79: #{tpu_custom_call.1} parent=63 // pred_region
          %498 = dma.done [#allocation11], 9216
        $region80: #{tpu_custom_call.1} parent=63 // pred_fallthru
          _
        // Predicated region
        $region81: #{tpu_custom_call.1} parent=63 // pred_check
          %p499 = pneg %p138
        $region82: #{tpu_custom_call.1} parent=63 // pred_check_branch
          %501 = sbr.rel (%p499) target = $region84
        $region83: #{tpu_custom_call.1} parent=63 // pred_region
          %503 = dma.done [#allocation11], 16
        $region84: #{tpu_custom_call.1} parent=63 // pred_fallthru
          _
        // Predicated region
        $region85: #{tpu_custom_call.1} parent=63 // pred_check
          %p504 = pneg %p159
        $region86: #{tpu_custom_call.1} parent=63 // pred_check_branch
          %506 = sbr.rel (%p504) target = $region88
        $region87: #{tpu_custom_call.1} parent=63 // pred_region
          %508 = dma.done [#allocation14], 4096
        $region88: #{tpu_custom_call.1} parent=63 // pred_fallthru
          _
        // Predicated region
        $region89: #{tpu_custom_call.1} parent=63 // pred_check
          %p509 = pneg %p180
        $region90: #{tpu_custom_call.1} parent=63 // pred_check_branch
          %511 = sbr.rel (%p509) target = $region92
        $region91: #{tpu_custom_call.1} parent=63 // pred_region
          %513 = dma.done [#allocation14], 64
        $region92: #{tpu_custom_call.1} parent=63 // pred_fallthru
          _
        // Predicated region
        $region93: #{tpu_custom_call.1} parent=63 // pred_check
          %p514 = pneg %p201
        $region94: #{tpu_custom_call.1} parent=63 // pred_check_branch
          %516 = sbr.rel (%p514) target = $region96
        $region95: #{tpu_custom_call.1} parent=63 // pred_region
          %518 = dma.done [#allocation17], 36864
        $region96: #{tpu_custom_call.1} parent=63 // pred_fallthru
          _
        // Predicated region
        $region97: #{tpu_custom_call.1} parent=63 // pred_check
          %p519 = pneg %p222
        $region98: #{tpu_custom_call.1} parent=63 // pred_check_branch
          %521 = sbr.rel (%p519) target = $region100
        $region99: #{tpu_custom_call.1} parent=63 // pred_region
          %523 = dma.done [#allocation17], 64
        $region100: #{tpu_custom_call.1} parent=63 // pred_fallthru
          _
        // Predicated region
        $region101: #{tpu_custom_call.1} parent=63 // pred_check
          %p524 = pneg %p243
        $region102: #{tpu_custom_call.1} parent=63 // pred_check_branch
          %526 = sbr.rel (%p524) target = $region104
        $region103: #{tpu_custom_call.1} parent=63 // pred_region
          %528 = dma.done [#allocation20], 4096
        $region104: #{tpu_custom_call.1} parent=63 // pred_fallthru
          _
        // Predicated region
        $region105: #{tpu_custom_call.1} parent=63 // pred_check
          %p529 = pneg %p264
        $region106: #{tpu_custom_call.1} parent=63 // pred_check_branch
          %531 = sbr.rel (%p529) target = $region108
        $region107: #{tpu_custom_call.1} parent=63 // pred_region
          %533 = dma.done [#allocation20], 64
        $region108: #{tpu_custom_call.1} parent=63 // pred_fallthru
          _
        %s534 = sand.u32 %s41, 1
        %s535 = scalar_lea.sflag [#allocation5], %s534
        %s536 = sand.u32 %s41, 1
        %s537 = smul.addr %s536, 32
        %s538 = scalar_lea.vmem [#allocation4], %s537
        %p539 = pneg %p54
        %p540 = pneg %p51
        %p541 = pneg %p75
        %p542 = pneg %p72
        %p543 = pneg %p96
        %p544 = pneg %p93
        %p545 = pneg %p117
        %p546 = pneg %p114
        %p547 = pneg %p138
        %p548 = pneg %p135
        %p549 = pneg %p159
        %p550 = pneg %p156
        %p551 = pneg %p180
        %p552 = pneg %p177
        %p553 = pneg %p201
        %p554 = pneg %p198
        %p555 = pneg %p222
        %p556 = pneg %p219
        %p557 = pneg %p243
        %p558 = pneg %p240
        %p559 = pneg %p264
        %p560 = pneg %p261
        %p561 = pneg %p290
        %p562 = pneg %p287
        %s563 = sand.u32 %s277, 1
        %s564 = scalar_lea.sflag [#allocation6], %s563
        %s565 = sand.u32 %s277, 1
        %s566 = smul.addr %s565, 32
        %s567 = scalar_lea.vmem [#allocation22], %s566
        %569 = vst [vmem:[#allocation2] sm:$0xf] 0
        %570 = vst [vmem:[#allocation2 + $0x4] sm:$0xf] 0
        %571 = vst [vmem:[#allocation2 + $0x8] sm:$0xf] 0
        %vm572 = vcmask 1040384
        %vm573 = vsmask.f32 256
        %vm574 = vmand %vm572, %vm573
        %v575 = vld [vmem:[#allocation2 + $0xc] sm:$0x1]
        %v576 = vsel %vm574, 0, %v575
        %577 = vst [vmem:[#allocation2 + $0xc] sm:$0x1] %v576
        %s578 = scalar_lea.vmem [#allocation2], 144
        %579 = vst [vmem:[%s578] sm:$0xf] 0
        %580 = vst [vmem:[%s578 + $0x4] sm:$0xf] 0
        %581 = vst [vmem:[%s578 + $0x8] sm:$0xf] 0
        %v582 = vld [vmem:[%s578 + $0xc] sm:$0x1]
        %v583 = vsel %vm574, 0, %v582
        %584 = vst [vmem:[%s578 + $0xc] sm:$0x1] %v583
        %s585 = scalar_lea.vmem [#allocation2], 16
        %586 = vst [vmem:[%s585] sm:$0xf] 0
        %587 = vst [vmem:[%s585 + $0x4] sm:$0xf] 0
        %588 = vst [vmem:[%s585 + $0x10] sm:$0xf] 0
        %589 = vst [vmem:[%s585 + $0x14] sm:$0xf] 0
        %590 = vst [vmem:[%s585 + $0x20] sm:$0xf] 0
        %591 = vst [vmem:[%s585 + $0x24] sm:$0xf] 0
        %592 = vst [vmem:[%s585 + $0x30] sm:$0xf] 0
        %593 = vst [vmem:[%s585 + $0x34] sm:$0xf] 0
        %594 = vst [vmem:[%s585 + $0x40] sm:$0xf] 0
        %595 = vst [vmem:[%s585 + $0x44] sm:$0xf] 0
        %596 = vst [vmem:[%s585 + $0x50] sm:$0xf] 0
        %597 = vst [vmem:[%s585 + $0x54] sm:$0xf] 0
        %598 = vst [vmem:[%s585 + $0x60] sm:$0xf] 0
        %599 = vst [vmem:[%s585 + $0x64] sm:$0xf] 0
        %600 = vst [vmem:[%s585 + $0x70] sm:$0xf] 0
        %601 = vst [vmem:[%s585 + $0x74] sm:$0xf] 0
        %v602 = vld [vmem:[%s585 + $0xc] sm:$0x1]
        %v603 = vsel %vm574, 0, %v602
        %604 = vst [vmem:[%s585 + $0xc] sm:$0x1] %v603
        %v605 = vld [vmem:[%s585 + $0x1c] sm:$0x1]
        %v606 = vsel %vm574, 0, %v605
        %607 = vst [vmem:[%s585 + $0x1c] sm:$0x1] %v606
        %v608 = vld [vmem:[%s585 + $0x2c] sm:$0x1]
        %v609 = vsel %vm574, 0, %v608
        %610 = vst [vmem:[%s585 + $0x2c] sm:$0x1] %v609
        %v611 = vld [vmem:[%s585 + $0x3c] sm:$0x1]
        %v612 = vsel %vm574, 0, %v611
        %613 = vst [vmem:[%s585 + $0x3c] sm:$0x1] %v612
        %v614 = vld [vmem:[%s585 + $0x4c] sm:$0x1]
        %v615 = vsel %vm574, 0, %v614
        %616 = vst [vmem:[%s585 + $0x4c] sm:$0x1] %v615
        %v617 = vld [vmem:[%s585 + $0x5c] sm:$0x1]
        %v618 = vsel %vm574, 0, %v617
        %619 = vst [vmem:[%s585 + $0x5c] sm:$0x1] %v618
        %v620 = vld [vmem:[%s585 + $0x6c] sm:$0x1]
        %v621 = vsel %vm574, 0, %v620
        %622 = vst [vmem:[%s585 + $0x6c] sm:$0x1] %v621
        %v623 = vld [vmem:[%s585 + $0x7c] sm:$0x1]
        %v624 = vsel %vm574, 0, %v623
        %625 = vst [vmem:[%s585 + $0x7c] sm:$0x1] %v624
        %626 = vst [vmem:[#allocation3] sm:$0xf] 0
        %627 = vst [vmem:[#allocation3 + $0x4] sm:$0xf] 0
        %628 = vst [vmem:[#allocation3 + $0x8] sm:$0xf] 0
        %629 = vst [vmem:[#allocation3 + $0xc] sm:$0xf] 0
        %630 = vst [vmem:[#allocation3 + $0x10] sm:$0xf] 0
        %631 = vst [vmem:[#allocation3 + $0x14] sm:$0xf] 0
        %632 = vst [vmem:[#allocation3 + $0x18] sm:$0xf] 0
        %633 = vst [vmem:[#allocation3 + $0x1c] sm:$0xf] 0
        %634 = vst [vmem:[#allocation3 + $0x20] sm:$0xf] 0
        %635 = vst [vmem:[#allocation3 + $0x24] sm:$0xf] 0
        %636 = vst [vmem:[#allocation3 + $0x28] sm:$0xf] 0
        %637 = vst [vmem:[#allocation3 + $0x2c] sm:$0xf] 0
        %638 = vst [vmem:[#allocation3 + $0x30] sm:$0xf] 0
        %639 = vst [vmem:[#allocation3 + $0x34] sm:$0xf] 0
        %640 = vst [vmem:[#allocation3 + $0x38] sm:$0xf] 0
        %641 = vst [vmem:[#allocation3 + $0x3c] sm:$0xf] 0
        %642 = vst [vmem:[#allocation3 + $0x40] sm:$0xf] 0
        %643 = vst [vmem:[#allocation3 + $0x44] sm:$0xf] 0
        %644 = vst [vmem:[#allocation3 + $0x48] sm:$0xf] 0
        %645 = vst [vmem:[#allocation3 + $0x4c] sm:$0xf] 0
        %646 = vst [vmem:[#allocation3 + $0x50] sm:$0xf] 0
        %647 = vst [vmem:[#allocation3 + $0x54] sm:$0xf] 0
        %648 = vst [vmem:[#allocation3 + $0x58] sm:$0xf] 0
        %649 = vst [vmem:[#allocation3 + $0x5c] sm:$0xf] 0
        %650 = vst [vmem:[#allocation3 + $0x60] sm:$0xf] 0
        %651 = vst [vmem:[#allocation3 + $0x64] sm:$0xf] 0
        %652 = vst [vmem:[#allocation3 + $0x68] sm:$0xf] 0
        %653 = vst [vmem:[#allocation3 + $0x6c] sm:$0xf] 0
        %654 = vst [vmem:[#allocation3 + $0x70] sm:$0xf] 0
        %655 = vst [vmem:[#allocation3 + $0x74] sm:$0xf] 0
        %656 = vst [vmem:[#allocation3 + $0x78] sm:$0xf] 0
        %657 = vst [vmem:[#allocation3 + $0x7c] sm:$0xf] 0
        %s658 = scalar_lea.vmem [#allocation3], 256
        %659 = vst [vmem:[%s658] sm:$0xf] 0
        %660 = vst [vmem:[%s658 + $0x4] sm:$0xf] 0
        %661 = vst [vmem:[%s658 + $0x8] sm:$0xf] 0
        %662 = vst [vmem:[%s658 + $0xc] sm:$0xf] 0
        %663 = vst [vmem:[%s658 + $0x10] sm:$0xf] 0
        %664 = vst [vmem:[%s658 + $0x14] sm:$0xf] 0
        %665 = vst [vmem:[%s658 + $0x18] sm:$0xf] 0
        %666 = vst [vmem:[%s658 + $0x1c] sm:$0xf] 0
        %667 = vst [vmem:[%s658 + $0x20] sm:$0xf] 0
        %668 = vst [vmem:[%s658 + $0x24] sm:$0xf] 0
        %669 = vst [vmem:[%s658 + $0x28] sm:$0xf] 0
        %670 = vst [vmem:[%s658 + $0x2c] sm:$0xf] 0
        %671 = vst [vmem:[%s658 + $0x30] sm:$0xf] 0
        %672 = vst [vmem:[%s658 + $0x34] sm:$0xf] 0
        %673 = vst [vmem:[%s658 + $0x38] sm:$0xf] 0
        %674 = vst [vmem:[%s658 + $0x3c] sm:$0xf] 0
        %675 = vst [vmem:[%s658 + $0x40] sm:$0xf] 0
        %676 = vst [vmem:[%s658 + $0x44] sm:$0xf] 0
        %677 = vst [vmem:[%s658 + $0x48] sm:$0xf] 0
        %678 = vst [vmem:[%s658 + $0x4c] sm:$0xf] 0
        %679 = vst [vmem:[%s658 + $0x50] sm:$0xf] 0
        %680 = vst [vmem:[%s658 + $0x54] sm:$0xf] 0
        %681 = vst [vmem:[%s658 + $0x58] sm:$0xf] 0
        %682 = vst [vmem:[%s658 + $0x5c] sm:$0xf] 0
        %683 = vst [vmem:[%s658 + $0x60] sm:$0xf] 0
        %684 = vst [vmem:[%s658 + $0x64] sm:$0xf] 0
        %685 = vst [vmem:[%s658 + $0x68] sm:$0xf] 0
        %686 = vst [vmem:[%s658 + $0x6c] sm:$0xf] 0
        %687 = vst [vmem:[%s658 + $0x70] sm:$0xf] 0
        %688 = vst [vmem:[%s658 + $0x74] sm:$0xf] 0
        %689 = vst [vmem:[%s658 + $0x78] sm:$0xf] 0
        %690 = vst [vmem:[%s658 + $0x7c] sm:$0xf] 0
        %s691 = scalar_lea.vmem [#allocation3], 128
        %692 = vst [vmem:[%s691] sm:$0xf] 0
        %693 = vst [vmem:[%s691 + $0x4] sm:$0xf] 0
        %694 = vst [vmem:[%s691 + $0x10] sm:$0xf] 0
        %695 = vst [vmem:[%s691 + $0x14] sm:$0xf] 0
        %696 = vst [vmem:[%s691 + $0x20] sm:$0xf] 0
        %697 = vst [vmem:[%s691 + $0x24] sm:$0xf] 0
        %698 = vst [vmem:[%s691 + $0x30] sm:$0xf] 0
        %699 = vst [vmem:[%s691 + $0x34] sm:$0xf] 0
        %700 = vst [vmem:[%s691 + $0x40] sm:$0xf] 0
        %701 = vst [vmem:[%s691 + $0x44] sm:$0xf] 0
        %702 = vst [vmem:[%s691 + $0x50] sm:$0xf] 0
        %703 = vst [vmem:[%s691 + $0x54] sm:$0xf] 0
        %704 = vst [vmem:[%s691 + $0x60] sm:$0xf] 0
        %705 = vst [vmem:[%s691 + $0x64] sm:$0xf] 0
        %706 = vst [vmem:[%s691 + $0x70] sm:$0xf] 0
        %707 = vst [vmem:[%s691 + $0x74] sm:$0xf] 0
        %708 = vst [vmem:[%s691 + $0xc] sm:$0xf] 0
        %709 = vst [vmem:[%s691 + $0x1c] sm:$0xf] 0
        %710 = vst [vmem:[%s691 + $0x2c] sm:$0xf] 0
        %711 = vst [vmem:[%s691 + $0x3c] sm:$0xf] 0
        %712 = vst [vmem:[%s691 + $0x4c] sm:$0xf] 0
        %713 = vst [vmem:[%s691 + $0x5c] sm:$0xf] 0
        %714 = vst [vmem:[%s691 + $0x6c] sm:$0xf] 0
        %715 = vst [vmem:[%s691 + $0x7c] sm:$0xf] 0
        %v716 = vld [vmem:[%s478] sm:$0xf]
        %v717 = vld [vmem:[%s478 + $0x4] sm:$0xf]
        %v718 = vld [vmem:[%s478 + $0x8] sm:$0xf]
        %v719 = vld [vmem:[%s478 + $0xc] sm:$0xf]
        %v720 = vld [vmem:[%s478 + $0x10] sm:$0xf]
        %v721 = vld [vmem:[%s478 + $0x14] sm:$0xf]
        %v722 = vld [vmem:[%s478 + $0x18] sm:$0xf]
        %v723 = vld [vmem:[%s478 + $0x1c] sm:$0xf]
        %v724 = vld [vmem:[#allocation7] sm:$0xf]
        %v725 = vld [vmem:[#allocation7 + $0x4] sm:$0xf]
        %v726 = vld [vmem:[#allocation7 + $0x8] sm:$0xf]
        %v727 = vld [vmem:[#allocation7 + $0xc] sm:$0xf]
        %v728 = vld [vmem:[#allocation7 + $0x10] sm:$0xf]
        %v729 = vld [vmem:[#allocation7 + $0x14] sm:$0xf]
        %v730 = vld [vmem:[#allocation7 + $0x18] sm:$0xf]
        %v731 = vld [vmem:[#allocation7 + $0x1c] sm:$0xf]
        %v732 = vld [vmem:[#allocation9] sm:$0x1]
        %v734 = vperm.slane %v732, 0
        %v744 = vunpack.c.l.b16 %v716
        %v745 = vunpack.c.l.b16 %v717
        %v746 = vunpack.c.l.b16 %v718
        %v747 = vunpack.c.l.b16 %v719
        %v748 = vunpack.c.l.b16 %v720
        %v749 = vunpack.c.l.b16 %v721
        %v750 = vunpack.c.l.b16 %v722
        %v751 = vunpack.c.l.b16 %v723
        %v752 = vpack.c.b16 %v745, %v744
        %v753 = vpack.c.b16 %v747, %v746
        %v754 = vpack.c.b16 %v749, %v748
        %v755 = vpack.c.b16 %v751, %v750
        %v764 = vunpack.c.l.b16 %v724
        %v765 = vunpack.c.l.b16 %v725
        %v766 = vunpack.c.l.b16 %v726
        %v767 = vunpack.c.l.b16 %v727
        %v768 = vunpack.c.l.b16 %v728
        %v769 = vunpack.c.l.b16 %v729
        %v770 = vunpack.c.l.b16 %v730
        %v771 = vunpack.c.l.b16 %v731
        %v772 = vpack.c.b16 %v765, %v764
        %v773 = vpack.c.b16 %v767, %v766
        %v774 = vpack.c.b16 %v769, %v768
        %v775 = vpack.c.b16 %v771, %v770
        %vm780 = vcmask 523264
        %v782 = vsel %vm780, %v752, 0
        %v785 = vsel %vm780, %v753, 0
        %v788 = vsel %vm780, %v754, 0
        %v791 = vsel %vm780, %v755, 0
        %793 = vmatpush.bf16.msra.mxu0 0
        %794 = vmatpush.bf16.msra.mxu0 0
        %795 = vmatpush.bf16.msra.mxu0 0
        %796 = vmatpush.bf16.msra.mxu0 0
        %797 = vmatpush.bf16.msra.mxu0 %v775
        %798 = vmatpush.bf16.msra.mxu0 %v774
        %799 = vmatpush.bf16.msra.mxu0 %v773
        %800 = vmatpush.bf16.msra.mxu0 %v772
        %801 = vmatmul.bf16.gmra.mxu0 %v782
        %v802 = vpop.f32.mrf.mxu0
        %v803 = vadd.f32 %v734, %v802
        %v804 = vpop.f32.mrf.mxu0
        %v805 = vadd.f32 %v734, %v804
        %806 = vmatmul.bf16.gmra.mxu0 %v785
        %v807 = vpop.f32.mrf.mxu0
        %v808 = vadd.f32 %v734, %v807
        %v809 = vpop.f32.mrf.mxu0
        %v810 = vadd.f32 %v734, %v809
        %811 = vmatmul.bf16.gmra.mxu0 %v788
        %v812 = vpop.f32.mrf.mxu0
        %v813 = vadd.f32 %v734, %v812
        %v814 = vpop.f32.mrf.mxu0
        %v815 = vadd.f32 %v734, %v814
        %816 = vmatmul.bf16.gmra.mxu0 %v791
        %v817 = vpop.f32.mrf.mxu0
        %v818 = vadd.f32 %v734, %v817
        %v819 = vpop.f32.mrf.mxu0
        %v820 = vadd.f32 %v734, %v819
        %821 = vdwg.mxu0
        %v822 = vpack.c.bf16 %v803, %v803
        %v823 = vpack.c.bf16 %v805, %v805
        %v824 = vpack.c.bf16 %v808, %v808
        %v825 = vpack.c.bf16 %v810, %v810
        %v826 = vpack.c.bf16 %v813, %v813
        %v827 = vpack.c.bf16 %v815, %v815
        %v828 = vpack.c.bf16 %v818, %v818
        %v829 = vpack.c.bf16 %v820, %v820
        %830 = vst [vmem:[%s585 + $0x8] sm:$0xf] %v822
        %831 = vst [vmem:[%s585 + $0x18] sm:$0xf] %v823
        %832 = vst [vmem:[%s585 + $0x28] sm:$0xf] %v824
        %833 = vst [vmem:[%s585 + $0x38] sm:$0xf] %v825
        %834 = vst [vmem:[%s585 + $0x48] sm:$0xf] %v826
        %835 = vst [vmem:[%s585 + $0x58] sm:$0xf] %v827
        %836 = vst [vmem:[%s585 + $0x68] sm:$0xf] %v828
        %837 = vst [vmem:[%s585 + $0x78] sm:$0xf] %v829
        %v838 = vld [vmem:[#allocation12] sm:$0x1]
        %v839 = vld [vmem:[#allocation2 + $0x4] sm:$0x8]
        %v840 = vld [vmem:[#allocation2 + $0x8] sm:$0xf]
        %v841 = vld [vmem:[#allocation2 + $0x14] sm:$0x8]
        %v842 = vld [vmem:[#allocation2 + $0x18] sm:$0xf]
        %v843 = vld [vmem:[#allocation2 + $0x24] sm:$0x8]
        %v844 = vld [vmem:[#allocation2 + $0x28] sm:$0xf]
        %v845 = vld [vmem:[#allocation2 + $0x34] sm:$0x8]
        %v846 = vld [vmem:[#allocation2 + $0x38] sm:$0xf]
        %v847 = vld [vmem:[#allocation2 + $0x44] sm:$0x8]
        %v848 = vld [vmem:[#allocation2 + $0x48] sm:$0xf]
        %v849 = vld [vmem:[#allocation2 + $0x54] sm:$0x8]
        %v850 = vld [vmem:[#allocation2 + $0x58] sm:$0xf]
        %v851 = vld [vmem:[#allocation2 + $0x64] sm:$0x8]
        %v852 = vld [vmem:[#allocation2 + $0x68] sm:$0xf]
        %v853 = vld [vmem:[#allocation2 + $0x74] sm:$0x8]
        %v854 = vld [vmem:[#allocation2 + $0x78] sm:$0xf]
        %v855 = vld [vmem:[#allocation2 + $0x84] sm:$0x8]
        %v856 = vld [vmem:[#allocation2 + $0x88] sm:$0xf]
        %v857 = vld [vmem:[#allocation2 + $0x94] sm:$0x8]
        %v858 = vld [vmem:[#allocation2 + $0x98] sm:$0xf]
        %vm859 = vsmask.f32 4368
        %vm860 = vmor %vm573, %vm859
        %v862 = vshrl.u32 %v839, 16
        %v864 = vrot.slane %v862, 7
        %v865 = vrot.slane %v864, 4
        %v867 = vshrl.u32 %v840, 16
        %v869 = vrot.slane %v867, 7
        %v870 = vshll.u32 %v840, 16
        %v872 = vor.u32 %v869, %v870
        %v873 = vsel %vm860, %v865, %v872
        %v875 = vshrl.u32 %v841, 16
        %v877 = vrot.slane %v875, 7
        %v878 = vrot.slane %v877, 4
        %v880 = vshrl.u32 %v842, 16
        %v882 = vrot.slane %v880, 7
        %v883 = vshll.u32 %v842, 16
        %v885 = vor.u32 %v882, %v883
        %v886 = vsel %vm860, %v878, %v885
        %v888 = vshrl.u32 %v843, 16
        %v890 = vrot.slane %v888, 7
        %v891 = vrot.slane %v890, 4
        %v893 = vshrl.u32 %v844, 16
        %v895 = vrot.slane %v893, 7
        %v896 = vshll.u32 %v844, 16
        %v898 = vor.u32 %v895, %v896
        %v899 = vsel %vm860, %v891, %v898
        %v901 = vshrl.u32 %v845, 16
        %v903 = vrot.slane %v901, 7
        %v904 = vrot.slane %v903, 4
        %v906 = vshrl.u32 %v846, 16
        %v908 = vrot.slane %v906, 7
        %v909 = vshll.u32 %v846, 16
        %v911 = vor.u32 %v908, %v909
        %v912 = vsel %vm860, %v904, %v911
        %v914 = vshrl.u32 %v847, 16
        %v916 = vrot.slane %v914, 7
        %v917 = vrot.slane %v916, 4
        %v919 = vshrl.u32 %v848, 16
        %v921 = vrot.slane %v919, 7
        %v922 = vshll.u32 %v848, 16
        %v924 = vor.u32 %v921, %v922
        %v925 = vsel %vm860, %v917, %v924
        %v927 = vshrl.u32 %v849, 16
        %v929 = vrot.slane %v927, 7
        %v930 = vrot.slane %v929, 4
        %v932 = vshrl.u32 %v850, 16
        %v934 = vrot.slane %v932, 7
        %v935 = vshll.u32 %v850, 16
        %v937 = vor.u32 %v934, %v935
        %v938 = vsel %vm860, %v930, %v937
        %v940 = vshrl.u32 %v851, 16
        %v942 = vrot.slane %v940, 7
        %v943 = vrot.slane %v942, 4
        %v945 = vshrl.u32 %v852, 16
        %v947 = vrot.slane %v945, 7
        %v948 = vshll.u32 %v852, 16
        %v950 = vor.u32 %v947, %v948
        %v951 = vsel %vm860, %v943, %v950
        %v953 = vshrl.u32 %v853, 16
        %v955 = vrot.slane %v953, 7
        %v956 = vrot.slane %v955, 4
        %v958 = vshrl.u32 %v854, 16
        %v960 = vrot.slane %v958, 7
        %v961 = vshll.u32 %v854, 16
        %v963 = vor.u32 %v960, %v961
        %v964 = vsel %vm860, %v956, %v963
        %v965 = vld [vmem:[#allocation10] sm:$0xf]
        %v966 = vld [vmem:[#allocation10 + $0x4] sm:$0xf]
        %v967 = vld [vmem:[#allocation10 + $0x8] sm:$0xf]
        %v968 = vld [vmem:[#allocation10 + $0xc] sm:$0xf]
        %v969 = vld [vmem:[#allocation10 + $0x10] sm:$0xf]
        %v970 = vld [vmem:[#allocation10 + $0x14] sm:$0xf]
        %v971 = vld [vmem:[#allocation10 + $0x18] sm:$0xf]
        %v972 = vld [vmem:[#allocation10 + $0x1c] sm:$0xf]
        %v973 = vld [vmem:[#allocation10 + $0x20] sm:$0xf]
        %v974 = vld [vmem:[#allocation10 + $0x24] sm:$0xf]
        %v975 = vld [vmem:[#allocation10 + $0x28] sm:$0xf]
        %v976 = vld [vmem:[#allocation10 + $0x2c] sm:$0xf]
        %v977 = vld [vmem:[#allocation10 + $0x30] sm:$0xf]
        %v978 = vld [vmem:[#allocation10 + $0x34] sm:$0xf]
        %v979 = vld [vmem:[#allocation10 + $0x38] sm:$0xf]
        %v980 = vld [vmem:[#allocation10 + $0x3c] sm:$0xf]
        %v982 = vshrl.u32 %v855, 16
        %v984 = vrot.slane %v982, 7
        %v985 = vrot.slane %v984, 4
        %v987 = vshrl.u32 %v856, 16
        %v989 = vrot.slane %v987, 7
        %v990 = vshll.u32 %v856, 16
        %v992 = vor.u32 %v989, %v990
        %v993 = vsel %vm860, %v985, %v992
        %s994 = scalar_lea.vmem [#allocation10], 192
        %v995 = vld [vmem:[%s994] sm:$0xf]
        %v996 = vld [vmem:[%s994 + $0x4] sm:$0xf]
        %v997 = vld [vmem:[%s994 + $0x8] sm:$0xf]
        %v998 = vld [vmem:[%s994 + $0xc] sm:$0xf]
        %v999 = vld [vmem:[%s994 + $0x10] sm:$0xf]
        %v1000 = vld [vmem:[%s994 + $0x14] sm:$0xf]
        %v1001 = vld [vmem:[%s994 + $0x18] sm:$0xf]
        %v1002 = vld [vmem:[%s994 + $0x1c] sm:$0xf]
        %v1003 = vld [vmem:[%s994 + $0x20] sm:$0xf]
        %v1004 = vld [vmem:[%s994 + $0x24] sm:$0xf]
        %v1005 = vld [vmem:[%s994 + $0x28] sm:$0xf]
        %v1006 = vld [vmem:[%s994 + $0x2c] sm:$0xf]
        %v1007 = vld [vmem:[%s994 + $0x30] sm:$0xf]
        %v1008 = vld [vmem:[%s994 + $0x34] sm:$0xf]
        %v1009 = vld [vmem:[%s994 + $0x38] sm:$0xf]
        %v1010 = vld [vmem:[%s994 + $0x3c] sm:$0xf]
        %v1011 = vunpack.c.l.b16 %v886
        %v1012 = vunpack.c.l.b16 %v899
        %v1013 = vunpack.c.l.b16 %v912
        %v1014 = vunpack.c.l.b16 %v925
        %v1015 = vunpack.c.l.b16 %v938
        %v1016 = vunpack.c.l.b16 %v951
        %v1017 = vunpack.c.l.b16 %v964
        %v1018 = vunpack.c.l.b16 %v993
        %v1019 = vpack.c.b16 %v1012, %v1011
        %v1020 = vpack.c.b16 %v1014, %v1013
        %v1021 = vpack.c.b16 %v1016, %v1015
        %v1022 = vpack.c.b16 %v1018, %v1017
        %v1043 = vunpack.c.l.b16 %v995
        %v1044 = vunpack.c.l.b16 %v996
        %v1045 = vunpack.c.l.b16 %v997
        %v1046 = vunpack.c.l.b16 %v998
        %v1047 = vunpack.c.l.b16 %v999
        %v1048 = vunpack.c.l.b16 %v1000
        %v1049 = vunpack.c.l.b16 %v1001
        %v1050 = vunpack.c.l.b16 %v1002
        %v1051 = vunpack.c.l.b16 %v1003
        %v1052 = vunpack.c.l.b16 %v1004
        %v1053 = vunpack.c.l.b16 %v1005
        %v1054 = vunpack.c.l.b16 %v1006
        %v1055 = vunpack.c.l.b16 %v1007
        %v1056 = vunpack.c.l.b16 %v1008
        %v1057 = vunpack.c.l.b16 %v1009
        %v1058 = vunpack.c.l.b16 %v1010
        %v1059 = vpack.c.b16 %v1044, %v1043
        %v1060 = vpack.c.b16 %v1046, %v1045
        %v1061 = vpack.c.b16 %v1048, %v1047
        %v1062 = vpack.c.b16 %v1050, %v1049
        %v1063 = vpack.c.b16 %v1052, %v1051
        %v1064 = vpack.c.b16 %v1054, %v1053
        %v1065 = vpack.c.b16 %v1056, %v1055
        %v1066 = vpack.c.b16 %v1058, %v1057
        %1075 = vmatpush.bf16.msra.mxu0 %v1066
        %1076 = vmatpush.bf16.msra.mxu0 %v1065
        %1077 = vmatpush.bf16.msra.mxu0 %v1064
        %1078 = vmatpush.bf16.msra.mxu0 %v1063
        %1079 = vmatpush.bf16.msra.mxu0 %v1062
        %1080 = vmatpush.bf16.msra.mxu0 %v1061
        %1081 = vmatpush.bf16.msra.mxu0 %v1060
        %1082 = vmatpush.bf16.msra.mxu0 %v1059
        %1083 = vmatmul.bf16.gmra.mxu0 %v1019
        %v1084 = vpop.f32.mrf.mxu0
        %v1085 = vadd.f32 0.0, %v1084
        %v1086 = vpop.f32.mrf.mxu0
        %v1087 = vadd.f32 0.0, %v1086
        %1088 = vmatmul.bf16.gmra.mxu0 %v1020
        %v1089 = vpop.f32.mrf.mxu0
        %v1090 = vadd.f32 0.0, %v1089
        %v1091 = vpop.f32.mrf.mxu0
        %v1092 = vadd.f32 0.0, %v1091
        %1093 = vmatmul.bf16.gmra.mxu0 %v1021
        %v1094 = vpop.f32.mrf.mxu0
        %v1095 = vadd.f32 0.0, %v1094
        %v1096 = vpop.f32.mrf.mxu0
        %v1097 = vadd.f32 0.0, %v1096
        %1098 = vmatmul.bf16.gmra.mxu0 %v1022
        %v1099 = vpop.f32.mrf.mxu0
        %v1100 = vadd.f32 0.0, %v1099
        %v1101 = vpop.f32.mrf.mxu0
        %v1102 = vadd.f32 0.0, %v1101
        %1103 = vdwg.mxu0
        %v1104 = vunpack.c.l.b16 %v873
        %v1105 = vpack.c.b16 %v1011, %v1104
        %v1106 = vpack.c.b16 %v1013, %v1012
        %v1107 = vpack.c.b16 %v1015, %v1014
        %v1108 = vpack.c.b16 %v1017, %v1016
        %v1129 = vunpack.c.l.b16 %v965
        %v1130 = vunpack.c.l.b16 %v966
        %v1131 = vunpack.c.l.b16 %v967
        %v1132 = vunpack.c.l.b16 %v968
        %v1133 = vunpack.c.l.b16 %v969
        %v1134 = vunpack.c.l.b16 %v970
        %v1135 = vunpack.c.l.b16 %v971
        %v1136 = vunpack.c.l.b16 %v972
        %v1137 = vunpack.c.l.b16 %v973
        %v1138 = vunpack.c.l.b16 %v974
        %v1139 = vunpack.c.l.b16 %v975
        %v1140 = vunpack.c.l.b16 %v976
        %v1141 = vunpack.c.l.b16 %v977
        %v1142 = vunpack.c.l.b16 %v978
        %v1143 = vunpack.c.l.b16 %v979
        %v1144 = vunpack.c.l.b16 %v980
        %v1145 = vpack.c.b16 %v1130, %v1129
        %v1146 = vpack.c.b16 %v1132, %v1131
        %v1147 = vpack.c.b16 %v1134, %v1133
        %v1148 = vpack.c.b16 %v1136, %v1135
        %v1149 = vpack.c.b16 %v1138, %v1137
        %v1150 = vpack.c.b16 %v1140, %v1139
        %v1151 = vpack.c.b16 %v1142, %v1141
        %v1152 = vpack.c.b16 %v1144, %v1143
        %1161 = vmatpush.bf16.msra.mxu0 %v1152
        %1162 = vmatpush.bf16.msra.mxu0 %v1151
        %1163 = vmatpush.bf16.msra.mxu0 %v1150
        %1164 = vmatpush.bf16.msra.mxu0 %v1149
        %1165 = vmatpush.bf16.msra.mxu0 %v1148
        %1166 = vmatpush.bf16.msra.mxu0 %v1147
        %1167 = vmatpush.bf16.msra.mxu0 %v1146
        %1168 = vmatpush.bf16.msra.mxu0 %v1145
        %1169 = vmatmul.bf16.gmra.mxu0 %v1105
        %v1170 = vpop.f32.mrf.mxu0
        %v1171 = vadd.f32 %v1085, %v1170
        %v1172 = vpop.f32.mrf.mxu0
        %v1173 = vadd.f32 %v1087, %v1172
        %1174 = vmatmul.bf16.gmra.mxu0 %v1106
        %v1175 = vpop.f32.mrf.mxu0
        %v1176 = vadd.f32 %v1090, %v1175
        %v1177 = vpop.f32.mrf.mxu0
        %v1178 = vadd.f32 %v1092, %v1177
        %1179 = vmatmul.bf16.gmra.mxu0 %v1107
        %v1180 = vpop.f32.mrf.mxu0
        %v1181 = vadd.f32 %v1095, %v1180
        %v1182 = vpop.f32.mrf.mxu0
        %v1183 = vadd.f32 %v1097, %v1182
        %1184 = vmatmul.bf16.gmra.mxu0 %v1108
        %v1185 = vpop.f32.mrf.mxu0
        %v1186 = vadd.f32 %v1100, %v1185
        %v1187 = vpop.f32.mrf.mxu0
        %v1188 = vadd.f32 %v1102, %v1187
        %1189 = vdwg.mxu0
        %v1191 = vshrl.u32 %v857, 16
        %v1193 = vrot.slane %v1191, 7
        %v1194 = vrot.slane %v1193, 4
        %v1196 = vshrl.u32 %v858, 16
        %v1198 = vrot.slane %v1196, 7
        %v1199 = vshll.u32 %v858, 16
        %v1201 = vor.u32 %v1198, %v1199
        %v1202 = vsel %vm860, %v1194, %v1201
        %s1203 = scalar_lea.vmem [#allocation10], 384
        %v1204 = vld [vmem:[%s1203] sm:$0xf]
        %v1205 = vld [vmem:[%s1203 + $0x4] sm:$0xf]
        %v1206 = vld [vmem:[%s1203 + $0x8] sm:$0xf]
        %v1207 = vld [vmem:[%s1203 + $0xc] sm:$0xf]
        %v1208 = vld [vmem:[%s1203 + $0x10] sm:$0xf]
        %v1209 = vld [vmem:[%s1203 + $0x14] sm:$0xf]
        %v1210 = vld [vmem:[%s1203 + $0x18] sm:$0xf]
        %v1211 = vld [vmem:[%s1203 + $0x1c] sm:$0xf]
        %v1212 = vld [vmem:[%s1203 + $0x20] sm:$0xf]
        %v1213 = vld [vmem:[%s1203 + $0x24] sm:$0xf]
        %v1214 = vld [vmem:[%s1203 + $0x28] sm:$0xf]
        %v1215 = vld [vmem:[%s1203 + $0x2c] sm:$0xf]
        %v1216 = vld [vmem:[%s1203 + $0x30] sm:$0xf]
        %v1217 = vld [vmem:[%s1203 + $0x34] sm:$0xf]
        %v1218 = vld [vmem:[%s1203 + $0x38] sm:$0xf]
        %v1219 = vld [vmem:[%s1203 + $0x3c] sm:$0xf]
        %v1220 = vunpack.c.l.b16 %v1202
        %v1221 = vpack.c.b16 %v1220, %v1018
        %v1239 = vunpack.c.l.b16 %v1204
        %v1240 = vunpack.c.l.b16 %v1205
        %v1241 = vunpack.c.l.b16 %v1206
        %v1242 = vunpack.c.l.b16 %v1207
        %v1243 = vunpack.c.l.b16 %v1208
        %v1244 = vunpack.c.l.b16 %v1209
        %v1245 = vunpack.c.l.b16 %v1210
        %v1246 = vunpack.c.l.b16 %v1211
        %v1247 = vunpack.c.l.b16 %v1212
        %v1248 = vunpack.c.l.b16 %v1213
        %v1249 = vunpack.c.l.b16 %v1214
        %v1250 = vunpack.c.l.b16 %v1215
        %v1251 = vunpack.c.l.b16 %v1216
        %v1252 = vunpack.c.l.b16 %v1217
        %v1253 = vunpack.c.l.b16 %v1218
        %v1254 = vunpack.c.l.b16 %v1219
        %v1255 = vpack.c.b16 %v1240, %v1239
        %v1256 = vpack.c.b16 %v1242, %v1241
        %v1257 = vpack.c.b16 %v1244, %v1243
        %v1258 = vpack.c.b16 %v1246, %v1245
        %v1259 = vpack.c.b16 %v1248, %v1247
        %v1260 = vpack.c.b16 %v1250, %v1249
        %v1261 = vpack.c.b16 %v1252, %v1251
        %v1262 = vpack.c.b16 %v1254, %v1253
        %1271 = vmatpush.bf16.msra.mxu0 %v1262
        %1272 = vmatpush.bf16.msra.mxu0 %v1261
        %1273 = vmatpush.bf16.msra.mxu0 %v1260
        %1274 = vmatpush.bf16.msra.mxu0 %v1259
        %1275 = vmatpush.bf16.msra.mxu0 %v1258
        %1276 = vmatpush.bf16.msra.mxu0 %v1257
        %1277 = vmatpush.bf16.msra.mxu0 %v1256
        %1278 = vmatpush.bf16.msra.mxu0 %v1255
        %1279 = vmatmul.bf16.gmra.mxu0 %v1106
        %v1280 = vpop.f32.mrf.mxu0
        %v1281 = vadd.f32 0.0, %v1280
        %v1282 = vpop.f32.mrf.mxu0
        %v1283 = vadd.f32 0.0, %v1282
        %1284 = vmatmul.bf16.gmra.mxu0 %v1107
        %v1285 = vpop.f32.mrf.mxu0
        %v1286 = vadd.f32 0.0, %v1285
        %v1287 = vpop.f32.mrf.mxu0
        %v1288 = vadd.f32 0.0, %v1287
        %1289 = vmatmul.bf16.gmra.mxu0 %v1108
        %v1290 = vpop.f32.mrf.mxu0
        %v1291 = vadd.f32 0.0, %v1290
        %v1292 = vpop.f32.mrf.mxu0
        %v1293 = vadd.f32 0.0, %v1292
        %1294 = vmatmul.bf16.gmra.mxu0 %v1221
        %v1295 = vpop.f32.mrf.mxu0
        %v1296 = vadd.f32 0.0, %v1295
        %v1297 = vpop.f32.mrf.mxu0
        %v1298 = vadd.f32 0.0, %v1297
        %1299 = vdwg.mxu0
        %v1300 = vadd.f32 %v1171, %v1281
        %v1301 = vadd.f32 %v1173, %v1283
        %v1302 = vadd.f32 %v1176, %v1286
        %v1303 = vadd.f32 %v1178, %v1288
        %v1304 = vadd.f32 %v1181, %v1291
        %v1305 = vadd.f32 %v1183, %v1293
        %v1306 = vadd.f32 %v1186, %v1296
        %v1307 = vadd.f32 %v1188, %v1298
        %s1308 = scalar_lea.vmem [#allocation10], 64
        %v1309 = vld [vmem:[%s1308] sm:$0xf]
        %v1310 = vld [vmem:[%s1308 + $0x4] sm:$0xf]
        %v1311 = vld [vmem:[%s1308 + $0x8] sm:$0xf]
        %v1312 = vld [vmem:[%s1308 + $0xc] sm:$0xf]
        %v1313 = vld [vmem:[%s1308 + $0x10] sm:$0xf]
        %v1314 = vld [vmem:[%s1308 + $0x14] sm:$0xf]
        %v1315 = vld [vmem:[%s1308 + $0x18] sm:$0xf]
        %v1316 = vld [vmem:[%s1308 + $0x1c] sm:$0xf]
        %v1317 = vld [vmem:[%s1308 + $0x20] sm:$0xf]
        %v1318 = vld [vmem:[%s1308 + $0x24] sm:$0xf]
        %v1319 = vld [vmem:[%s1308 + $0x28] sm:$0xf]
        %v1320 = vld [vmem:[%s1308 + $0x2c] sm:$0xf]
        %v1321 = vld [vmem:[%s1308 + $0x30] sm:$0xf]
        %v1322 = vld [vmem:[%s1308 + $0x34] sm:$0xf]
        %v1323 = vld [vmem:[%s1308 + $0x38] sm:$0xf]
        %v1324 = vld [vmem:[%s1308 + $0x3c] sm:$0xf]
        %v1333 = vunpack.c.l.b16 %v840
        %v1334 = vunpack.c.l.b16 %v842
        %v1335 = vunpack.c.l.b16 %v844
        %v1336 = vunpack.c.l.b16 %v846
        %v1337 = vunpack.c.l.b16 %v848
        %v1338 = vunpack.c.l.b16 %v850
        %v1339 = vunpack.c.l.b16 %v852
        %v1340 = vunpack.c.l.b16 %v854
        %v1341 = vpack.c.b16 %v1334, %v1333
        %v1342 = vpack.c.b16 %v1336, %v1335
        %v1343 = vpack.c.b16 %v1338, %v1337
        %v1344 = vpack.c.b16 %v1340, %v1339
        %v1365 = vunpack.c.l.b16 %v1309
        %v1366 = vunpack.c.l.b16 %v1310
        %v1367 = vunpack.c.l.b16 %v1311
        %v1368 = vunpack.c.l.b16 %v1312
        %v1369 = vunpack.c.l.b16 %v1313
        %v1370 = vunpack.c.l.b16 %v1314
        %v1371 = vunpack.c.l.b16 %v1315
        %v1372 = vunpack.c.l.b16 %v1316
        %v1373 = vunpack.c.l.b16 %v1317
        %v1374 = vunpack.c.l.b16 %v1318
        %v1375 = vunpack.c.l.b16 %v1319
        %v1376 = vunpack.c.l.b16 %v1320
        %v1377 = vunpack.c.l.b16 %v1321
        %v1378 = vunpack.c.l.b16 %v1322
        %v1379 = vunpack.c.l.b16 %v1323
        %v1380 = vunpack.c.l.b16 %v1324
        %v1381 = vpack.c.b16 %v1366, %v1365
        %v1382 = vpack.c.b16 %v1368, %v1367
        %v1383 = vpack.c.b16 %v1370, %v1369
        %v1384 = vpack.c.b16 %v1372, %v1371
        %v1385 = vpack.c.b16 %v1374, %v1373
        %v1386 = vpack.c.b16 %v1376, %v1375
        %v1387 = vpack.c.b16 %v1378, %v1377
        %v1388 = vpack.c.b16 %v1380, %v1379
        %1397 = vmatpush.bf16.msra.mxu0 %v1388
        %1398 = vmatpush.bf16.msra.mxu0 %v1387
        %1399 = vmatpush.bf16.msra.mxu0 %v1386
        %1400 = vmatpush.bf16.msra.mxu0 %v1385
        %1401 = vmatpush.bf16.msra.mxu0 %v1384
        %1402 = vmatpush.bf16.msra.mxu0 %v1383
        %1403 = vmatpush.bf16.msra.mxu0 %v1382
        %1404 = vmatpush.bf16.msra.mxu0 %v1381
        %1405 = vmatmul.bf16.gmra.mxu0 %v1341
        %v1406 = vpop.f32.mrf.mxu0
        %v1407 = vadd.f32 0.0, %v1406
        %v1408 = vpop.f32.mrf.mxu0
        %v1409 = vadd.f32 0.0, %v1408
        %1410 = vmatmul.bf16.gmra.mxu0 %v1342
        %v1411 = vpop.f32.mrf.mxu0
        %v1412 = vadd.f32 0.0, %v1411
        %v1413 = vpop.f32.mrf.mxu0
        %v1414 = vadd.f32 0.0, %v1413
        %1415 = vmatmul.bf16.gmra.mxu0 %v1343
        %v1416 = vpop.f32.mrf.mxu0
        %v1417 = vadd.f32 0.0, %v1416
        %v1418 = vpop.f32.mrf.mxu0
        %v1419 = vadd.f32 0.0, %v1418
        %1420 = vmatmul.bf16.gmra.mxu0 %v1344
        %v1421 = vpop.f32.mrf.mxu0
        %v1422 = vadd.f32 0.0, %v1421
        %v1423 = vpop.f32.mrf.mxu0
        %v1424 = vadd.f32 0.0, %v1423
        %1425 = vdwg.mxu0
        %v1426 = vadd.f32 %v1300, %v1407
        %v1427 = vadd.f32 %v1301, %v1409
        %v1428 = vadd.f32 %v1302, %v1412
        %v1429 = vadd.f32 %v1303, %v1414
        %v1430 = vadd.f32 %v1304, %v1417
        %v1431 = vadd.f32 %v1305, %v1419
        %v1432 = vadd.f32 %v1306, %v1422
        %v1433 = vadd.f32 %v1307, %v1424
        %s1434 = scalar_lea.vmem [#allocation10], 256
        %v1435 = vld [vmem:[%s1434] sm:$0xf]
        %v1436 = vld [vmem:[%s1434 + $0x4] sm:$0xf]
        %v1437 = vld [vmem:[%s1434 + $0x8] sm:$0xf]
        %v1438 = vld [vmem:[%s1434 + $0xc] sm:$0xf]
        %v1439 = vld [vmem:[%s1434 + $0x10] sm:$0xf]
        %v1440 = vld [vmem:[%s1434 + $0x14] sm:$0xf]
        %v1441 = vld [vmem:[%s1434 + $0x18] sm:$0xf]
        %v1442 = vld [vmem:[%s1434 + $0x1c] sm:$0xf]
        %v1443 = vld [vmem:[%s1434 + $0x20] sm:$0xf]
        %v1444 = vld [vmem:[%s1434 + $0x24] sm:$0xf]
        %v1445 = vld [vmem:[%s1434 + $0x28] sm:$0xf]
        %v1446 = vld [vmem:[%s1434 + $0x2c] sm:$0xf]
        %v1447 = vld [vmem:[%s1434 + $0x30] sm:$0xf]
        %v1448 = vld [vmem:[%s1434 + $0x34] sm:$0xf]
        %v1449 = vld [vmem:[%s1434 + $0x38] sm:$0xf]
        %v1450 = vld [vmem:[%s1434 + $0x3c] sm:$0xf]
        %v1452 = vunpack.c.l.b16 %v856
        %v1453 = vpack.c.b16 %v1335, %v1334
        %v1454 = vpack.c.b16 %v1337, %v1336
        %v1455 = vpack.c.b16 %v1339, %v1338
        %v1456 = vpack.c.b16 %v1452, %v1340
        %v1477 = vunpack.c.l.b16 %v1435
        %v1478 = vunpack.c.l.b16 %v1436
        %v1479 = vunpack.c.l.b16 %v1437
        %v1480 = vunpack.c.l.b16 %v1438
        %v1481 = vunpack.c.l.b16 %v1439
        %v1482 = vunpack.c.l.b16 %v1440
        %v1483 = vunpack.c.l.b16 %v1441
        %v1484 = vunpack.c.l.b16 %v1442
        %v1485 = vunpack.c.l.b16 %v1443
        %v1486 = vunpack.c.l.b16 %v1444
        %v1487 = vunpack.c.l.b16 %v1445
        %v1488 = vunpack.c.l.b16 %v1446
        %v1489 = vunpack.c.l.b16 %v1447
        %v1490 = vunpack.c.l.b16 %v1448
        %v1491 = vunpack.c.l.b16 %v1449
        %v1492 = vunpack.c.l.b16 %v1450
        %v1493 = vpack.c.b16 %v1478, %v1477
        %v1494 = vpack.c.b16 %v1480, %v1479
        %v1495 = vpack.c.b16 %v1482, %v1481
        %v1496 = vpack.c.b16 %v1484, %v1483
        %v1497 = vpack.c.b16 %v1486, %v1485
        %v1498 = vpack.c.b16 %v1488, %v1487
        %v1499 = vpack.c.b16 %v1490, %v1489
        %v1500 = vpack.c.b16 %v1492, %v1491
        %1509 = vmatpush.bf16.msra.mxu0 %v1500
        %1510 = vmatpush.bf16.msra.mxu0 %v1499
        %1511 = vmatpush.bf16.msra.mxu0 %v1498
        %1512 = vmatpush.bf16.msra.mxu0 %v1497
        %1513 = vmatpush.bf16.msra.mxu0 %v1496
        %1514 = vmatpush.bf16.msra.mxu0 %v1495
        %1515 = vmatpush.bf16.msra.mxu0 %v1494
        %1516 = vmatpush.bf16.msra.mxu0 %v1493
        %1517 = vmatmul.bf16.gmra.mxu0 %v1453
        %v1518 = vpop.f32.mrf.mxu0
        %v1519 = vadd.f32 0.0, %v1518
        %v1520 = vpop.f32.mrf.mxu0
        %v1521 = vadd.f32 0.0, %v1520
        %1522 = vmatmul.bf16.gmra.mxu0 %v1454
        %v1523 = vpop.f32.mrf.mxu0
        %v1524 = vadd.f32 0.0, %v1523
        %v1525 = vpop.f32.mrf.mxu0
        %v1526 = vadd.f32 0.0, %v1525
        %1527 = vmatmul.bf16.gmra.mxu0 %v1455
        %v1528 = vpop.f32.mrf.mxu0
        %v1529 = vadd.f32 0.0, %v1528
        %v1530 = vpop.f32.mrf.mxu0
        %v1531 = vadd.f32 0.0, %v1530
        %1532 = vmatmul.bf16.gmra.mxu0 %v1456
        %v1533 = vpop.f32.mrf.mxu0
        %v1534 = vadd.f32 0.0, %v1533
        %v1535 = vpop.f32.mrf.mxu0
        %v1536 = vadd.f32 0.0, %v1535
        %1537 = vdwg.mxu0
        %v1538 = vadd.f32 %v1426, %v1519
        %v1539 = vadd.f32 %v1427, %v1521
        %v1540 = vadd.f32 %v1428, %v1524
        %v1541 = vadd.f32 %v1429, %v1526
        %v1542 = vadd.f32 %v1430, %v1529
        %v1543 = vadd.f32 %v1431, %v1531
        %v1544 = vadd.f32 %v1432, %v1534
        %v1545 = vadd.f32 %v1433, %v1536
        %s1546 = scalar_lea.vmem [#allocation10], 448
        %v1547 = vld [vmem:[%s1546] sm:$0xf]
        %v1548 = vld [vmem:[%s1546 + $0x4] sm:$0xf]
        %v1549 = vld [vmem:[%s1546 + $0x8] sm:$0xf]
        %v1550 = vld [vmem:[%s1546 + $0xc] sm:$0xf]
        %v1551 = vld [vmem:[%s1546 + $0x10] sm:$0xf]
        %v1552 = vld [vmem:[%s1546 + $0x14] sm:$0xf]
        %v1553 = vld [vmem:[%s1546 + $0x18] sm:$0xf]
        %v1554 = vld [vmem:[%s1546 + $0x1c] sm:$0xf]
        %v1555 = vld [vmem:[%s1546 + $0x20] sm:$0xf]
        %v1556 = vld [vmem:[%s1546 + $0x24] sm:$0xf]
        %v1557 = vld [vmem:[%s1546 + $0x28] sm:$0xf]
        %v1558 = vld [vmem:[%s1546 + $0x2c] sm:$0xf]
        %v1559 = vld [vmem:[%s1546 + $0x30] sm:$0xf]
        %v1560 = vld [vmem:[%s1546 + $0x34] sm:$0xf]
        %v1561 = vld [vmem:[%s1546 + $0x38] sm:$0xf]
        %v1562 = vld [vmem:[%s1546 + $0x3c] sm:$0xf]
        %v1564 = vunpack.c.l.b16 %v858
        %v1565 = vpack.c.b16 %v1564, %v1452
        %v1583 = vunpack.c.l.b16 %v1547
        %v1584 = vunpack.c.l.b16 %v1548
        %v1585 = vunpack.c.l.b16 %v1549
        %v1586 = vunpack.c.l.b16 %v1550
        %v1587 = vunpack.c.l.b16 %v1551
        %v1588 = vunpack.c.l.b16 %v1552
        %v1589 = vunpack.c.l.b16 %v1553
        %v1590 = vunpack.c.l.b16 %v1554
        %v1591 = vunpack.c.l.b16 %v1555
        %v1592 = vunpack.c.l.b16 %v1556
        %v1593 = vunpack.c.l.b16 %v1557
        %v1594 = vunpack.c.l.b16 %v1558
        %v1595 = vunpack.c.l.b16 %v1559
        %v1596 = vunpack.c.l.b16 %v1560
        %v1597 = vunpack.c.l.b16 %v1561
        %v1598 = vunpack.c.l.b16 %v1562
        %v1599 = vpack.c.b16 %v1584, %v1583
        %v1600 = vpack.c.b16 %v1586, %v1585
        %v1601 = vpack.c.b16 %v1588, %v1587
        %v1602 = vpack.c.b16 %v1590, %v1589
        %v1603 = vpack.c.b16 %v1592, %v1591
        %v1604 = vpack.c.b16 %v1594, %v1593
        %v1605 = vpack.c.b16 %v1596, %v1595
        %v1606 = vpack.c.b16 %v1598, %v1597
        %1615 = vmatpush.bf16.msra.mxu0 %v1606
        %1616 = vmatpush.bf16.msra.mxu0 %v1605
        %1617 = vmatpush.bf16.msra.mxu0 %v1604
        %1618 = vmatpush.bf16.msra.mxu0 %v1603
        %1619 = vmatpush.bf16.msra.mxu0 %v1602
        %1620 = vmatpush.bf16.msra.mxu0 %v1601
        %1621 = vmatpush.bf16.msra.mxu0 %v1600
        %1622 = vmatpush.bf16.msra.mxu0 %v1599
        %1623 = vmatmul.bf16.gmra.mxu0 %v1342
        %v1624 = vpop.f32.mrf.mxu0
        %v1625 = vadd.f32 0.0, %v1624
        %v1626 = vpop.f32.mrf.mxu0
        %v1627 = vadd.f32 0.0, %v1626
        %1628 = vmatmul.bf16.gmra.mxu0 %v1343
        %v1629 = vpop.f32.mrf.mxu0
        %v1630 = vadd.f32 0.0, %v1629
        %v1631 = vpop.f32.mrf.mxu0
        %v1632 = vadd.f32 0.0, %v1631
        %1633 = vmatmul.bf16.gmra.mxu0 %v1344
        %v1634 = vpop.f32.mrf.mxu0
        %v1635 = vadd.f32 0.0, %v1634
        %v1636 = vpop.f32.mrf.mxu0
        %v1637 = vadd.f32 0.0, %v1636
        %1638 = vmatmul.bf16.gmra.mxu0 %v1565
        %v1639 = vpop.f32.mrf.mxu0
        %v1640 = vadd.f32 0.0, %v1639
        %v1641 = vpop.f32.mrf.mxu0
        %v1642 = vadd.f32 0.0, %v1641
        %1643 = vdwg.mxu0
        %v1644 = vadd.f32 %v1538, %v1625
        %v1645 = vadd.f32 %v1539, %v1627
        %v1646 = vadd.f32 %v1540, %v1630
        %v1647 = vadd.f32 %v1541, %v1632
        %v1648 = vadd.f32 %v1542, %v1635
        %v1649 = vadd.f32 %v1543, %v1637
        %v1650 = vadd.f32 %v1544, %v1640
        %v1651 = vadd.f32 %v1545, %v1642
        %v1652 = vld [vmem:[#allocation2 + $0x8] sm:$0xf]
        %v1653 = vld [vmem:[#allocation2 + $0xc] sm:$0x1]
        %v1654 = vld [vmem:[#allocation2 + $0x18] sm:$0xf]
        %v1655 = vld [vmem:[#allocation2 + $0x1c] sm:$0x1]
        %v1656 = vld [vmem:[#allocation2 + $0x28] sm:$0xf]
        %v1657 = vld [vmem:[#allocation2 + $0x2c] sm:$0x1]
        %v1658 = vld [vmem:[#allocation2 + $0x38] sm:$0xf]
        %v1659 = vld [vmem:[#allocation2 + $0x3c] sm:$0x1]
        %v1660 = vld [vmem:[#allocation2 + $0x48] sm:$0xf]
        %v1661 = vld [vmem:[#allocation2 + $0x4c] sm:$0x1]
        %v1662 = vld [vmem:[#allocation2 + $0x58] sm:$0xf]
        %v1663 = vld [vmem:[#allocation2 + $0x5c] sm:$0x1]
        %v1664 = vld [vmem:[#allocation2 + $0x68] sm:$0xf]
        %v1665 = vld [vmem:[#allocation2 + $0x6c] sm:$0x1]
        %v1666 = vld [vmem:[#allocation2 + $0x78] sm:$0xf]
        %v1667 = vld [vmem:[#allocation2 + $0x7c] sm:$0x1]
        %v1668 = vld [vmem:[#allocation2 + $0x88] sm:$0xf]
        %v1669 = vld [vmem:[#allocation2 + $0x8c] sm:$0x1]
        %v1670 = vld [vmem:[#allocation2 + $0x98] sm:$0xf]
        %v1671 = vld [vmem:[#allocation2 + $0x9c] sm:$0x1]
        %vm1672 = vsmask.f32 3328
        %vm1673 = vsmask.f32 7440
        %vm1674 = vmor %vm1672, %vm1673
        %v1676 = vshrl.u32 %v1652, 16
        %v1678 = vrot.slane %v1676, 4
        %v1679 = vshll.u32 %v1652, 16
        %v1681 = vrot.slane %v1679, 5
        %v1682 = vor.u32 %v1678, %v1681
        %v1683 = vrot.slane %v1682, 4
        %v1685 = vshll.u32 %v1653, 16
        %v1687 = vrot.slane %v1685, 5
        %v1688 = vsel %vm1674, %v1683, %v1687
        %v1690 = vshrl.u32 %v1654, 16
        %v1692 = vrot.slane %v1690, 4
        %v1693 = vshll.u32 %v1654, 16
        %v1695 = vrot.slane %v1693, 5
        %v1696 = vor.u32 %v1692, %v1695
        %v1697 = vrot.slane %v1696, 4
        %v1699 = vshll.u32 %v1655, 16
        %v1701 = vrot.slane %v1699, 5
        %v1702 = vsel %vm1674, %v1697, %v1701
        %v1704 = vshrl.u32 %v1656, 16
        %v1706 = vrot.slane %v1704, 4
        %v1707 = vshll.u32 %v1656, 16
        %v1709 = vrot.slane %v1707, 5
        %v1710 = vor.u32 %v1706, %v1709
        %v1711 = vrot.slane %v1710, 4
        %v1713 = vshll.u32 %v1657, 16
        %v1715 = vrot.slane %v1713, 5
        %v1716 = vsel %vm1674, %v1711, %v1715
        %v1718 = vshrl.u32 %v1658, 16
        %v1720 = vrot.slane %v1718, 4
        %v1721 = vshll.u32 %v1658, 16
        %v1723 = vrot.slane %v1721, 5
        %v1724 = vor.u32 %v1720, %v1723
        %v1725 = vrot.slane %v1724, 4
        %v1727 = vshll.u32 %v1659, 16
        %v1729 = vrot.slane %v1727, 5
        %v1730 = vsel %vm1674, %v1725, %v1729
        %v1732 = vshrl.u32 %v1660, 16
        %v1734 = vrot.slane %v1732, 4
        %v1735 = vshll.u32 %v1660, 16
        %v1737 = vrot.slane %v1735, 5
        %v1738 = vor.u32 %v1734, %v1737
        %v1739 = vrot.slane %v1738, 4
        %v1741 = vshll.u32 %v1661, 16
        %v1743 = vrot.slane %v1741, 5
        %v1744 = vsel %vm1674, %v1739, %v1743
        %v1746 = vshrl.u32 %v1662, 16
        %v1748 = vrot.slane %v1746, 4
        %v1749 = vshll.u32 %v1662, 16
        %v1751 = vrot.slane %v1749, 5
        %v1752 = vor.u32 %v1748, %v1751
        %v1753 = vrot.slane %v1752, 4
        %v1755 = vshll.u32 %v1663, 16
        %v1757 = vrot.slane %v1755, 5
        %v1758 = vsel %vm1674, %v1753, %v1757
        %v1760 = vshrl.u32 %v1664, 16
        %v1762 = vrot.slane %v1760, 4
        %v1763 = vshll.u32 %v1664, 16
        %v1765 = vrot.slane %v1763, 5
        %v1766 = vor.u32 %v1762, %v1765
        %v1767 = vrot.slane %v1766, 4
        %v1769 = vshll.u32 %v1665, 16
        %v1771 = vrot.slane %v1769, 5
        %v1772 = vsel %vm1674, %v1767, %v1771
        %v1774 = vshrl.u32 %v1666, 16
        %v1776 = vrot.slane %v1774, 4
        %v1777 = vshll.u32 %v1666, 16
        %v1779 = vrot.slane %v1777, 5
        %v1780 = vor.u32 %v1776, %v1779
        %v1781 = vrot.slane %v1780, 4
        %v1783 = vshll.u32 %v1667, 16
        %v1785 = vrot.slane %v1783, 5
        %v1786 = vsel %vm1674, %v1781, %v1785
        %s1787 = scalar_lea.vmem [#allocation10], 128
        %v1788 = vld [vmem:[%s1787] sm:$0xf]
        %v1789 = vld [vmem:[%s1787 + $0x4] sm:$0xf]
        %v1790 = vld [vmem:[%s1787 + $0x8] sm:$0xf]
        %v1791 = vld [vmem:[%s1787 + $0xc] sm:$0xf]
        %v1792 = vld [vmem:[%s1787 + $0x10] sm:$0xf]
        %v1793 = vld [vmem:[%s1787 + $0x14] sm:$0xf]
        %v1794 = vld [vmem:[%s1787 + $0x18] sm:$0xf]
        %v1795 = vld [vmem:[%s1787 + $0x1c] sm:$0xf]
        %v1796 = vld [vmem:[%s1787 + $0x20] sm:$0xf]
        %v1797 = vld [vmem:[%s1787 + $0x24] sm:$0xf]
        %v1798 = vld [vmem:[%s1787 + $0x28] sm:$0xf]
        %v1799 = vld [vmem:[%s1787 + $0x2c] sm:$0xf]
        %v1800 = vld [vmem:[%s1787 + $0x30] sm:$0xf]
        %v1801 = vld [vmem:[%s1787 + $0x34] sm:$0xf]
        %v1802 = vld [vmem:[%s1787 + $0x38] sm:$0xf]
        %v1803 = vld [vmem:[%s1787 + $0x3c] sm:$0xf]
        %v1804 = vunpack.c.l.b16 %v1688
        %v1805 = vunpack.c.l.b16 %v1702
        %v1806 = vunpack.c.l.b16 %v1716
        %v1807 = vunpack.c.l.b16 %v1730
        %v1808 = vunpack.c.l.b16 %v1744
        %v1809 = vunpack.c.l.b16 %v1758
        %v1810 = vunpack.c.l.b16 %v1772
        %v1811 = vunpack.c.l.b16 %v1786
        %v1812 = vpack.c.b16 %v1805, %v1804
        %v1813 = vpack.c.b16 %v1807, %v1806
        %v1814 = vpack.c.b16 %v1809, %v1808
        %v1815 = vpack.c.b16 %v1811, %v1810
        %v1836 = vunpack.c.l.b16 %v1788
        %v1837 = vunpack.c.l.b16 %v1789
        %v1838 = vunpack.c.l.b16 %v1790
        %v1839 = vunpack.c.l.b16 %v1791
        %v1840 = vunpack.c.l.b16 %v1792
        %v1841 = vunpack.c.l.b16 %v1793
        %v1842 = vunpack.c.l.b16 %v1794
        %v1843 = vunpack.c.l.b16 %v1795
        %v1844 = vunpack.c.l.b16 %v1796
        %v1845 = vunpack.c.l.b16 %v1797
        %v1846 = vunpack.c.l.b16 %v1798
        %v1847 = vunpack.c.l.b16 %v1799
        %v1848 = vunpack.c.l.b16 %v1800
        %v1849 = vunpack.c.l.b16 %v1801
        %v1850 = vunpack.c.l.b16 %v1802
        %v1851 = vunpack.c.l.b16 %v1803
        %v1852 = vpack.c.b16 %v1837, %v1836
        %v1853 = vpack.c.b16 %v1839, %v1838
        %v1854 = vpack.c.b16 %v1841, %v1840
        %v1855 = vpack.c.b16 %v1843, %v1842
        %v1856 = vpack.c.b16 %v1845, %v1844
        %v1857 = vpack.c.b16 %v1847, %v1846
        %v1858 = vpack.c.b16 %v1849, %v1848
        %v1859 = vpack.c.b16 %v1851, %v1850
        %1868 = vmatpush.bf16.msra.mxu0 %v1859
        %1869 = vmatpush.bf16.msra.mxu0 %v1858
        %1870 = vmatpush.bf16.msra.mxu0 %v1857
        %1871 = vmatpush.bf16.msra.mxu0 %v1856
        %1872 = vmatpush.bf16.msra.mxu0 %v1855
        %1873 = vmatpush.bf16.msra.mxu0 %v1854
        %1874 = vmatpush.bf16.msra.mxu0 %v1853
        %1875 = vmatpush.bf16.msra.mxu0 %v1852
        %1876 = vmatmul.bf16.gmra.mxu0 %v1812
        %v1877 = vpop.f32.mrf.mxu0
        %v1878 = vadd.f32 0.0, %v1877
        %v1879 = vpop.f32.mrf.mxu0
        %v1880 = vadd.f32 0.0, %v1879
        %1881 = vmatmul.bf16.gmra.mxu0 %v1813
        %v1882 = vpop.f32.mrf.mxu0
        %v1883 = vadd.f32 0.0, %v1882
        %v1884 = vpop.f32.mrf.mxu0
        %v1885 = vadd.f32 0.0, %v1884
        %1886 = vmatmul.bf16.gmra.mxu0 %v1814
        %v1887 = vpop.f32.mrf.mxu0
        %v1888 = vadd.f32 0.0, %v1887
        %v1889 = vpop.f32.mrf.mxu0
        %v1890 = vadd.f32 0.0, %v1889
        %1891 = vmatmul.bf16.gmra.mxu0 %v1815
        %v1892 = vpop.f32.mrf.mxu0
        %v1893 = vadd.f32 0.0, %v1892
        %v1894 = vpop.f32.mrf.mxu0
        %v1895 = vadd.f32 0.0, %v1894
        %1896 = vdwg.mxu0
        %v1897 = vadd.f32 %v1644, %v1878
        %v1898 = vadd.f32 %v1645, %v1880
        %v1899 = vadd.f32 %v1646, %v1883
        %v1900 = vadd.f32 %v1647, %v1885
        %v1901 = vadd.f32 %v1648, %v1888
        %v1902 = vadd.f32 %v1649, %v1890
        %v1903 = vadd.f32 %v1650, %v1893
        %v1904 = vadd.f32 %v1651, %v1895
        %v1906 = vshrl.u32 %v1668, 16
        %v1908 = vrot.slane %v1906, 4
        %v1909 = vshll.u32 %v1668, 16
        %v1911 = vrot.slane %v1909, 5
        %v1912 = vor.u32 %v1908, %v1911
        %v1913 = vrot.slane %v1912, 4
        %v1915 = vshll.u32 %v1669, 16
        %v1917 = vrot.slane %v1915, 5
        %v1918 = vsel %vm1674, %v1913, %v1917
        %s1919 = scalar_lea.vmem [#allocation10], 320
        %v1920 = vld [vmem:[%s1919] sm:$0xf]
        %v1921 = vld [vmem:[%s1919 + $0x4] sm:$0xf]
        %v1922 = vld [vmem:[%s1919 + $0x8] sm:$0xf]
        %v1923 = vld [vmem:[%s1919 + $0xc] sm:$0xf]
        %v1924 = vld [vmem:[%s1919 + $0x10] sm:$0xf]
        %v1925 = vld [vmem:[%s1919 + $0x14] sm:$0xf]
        %v1926 = vld [vmem:[%s1919 + $0x18] sm:$0xf]
        %v1927 = vld [vmem:[%s1919 + $0x1c] sm:$0xf]
        %v1928 = vld [vmem:[%s1919 + $0x20] sm:$0xf]
        %v1929 = vld [vmem:[%s1919 + $0x24] sm:$0xf]
        %v1930 = vld [vmem:[%s1919 + $0x28] sm:$0xf]
        %v1931 = vld [vmem:[%s1919 + $0x2c] sm:$0xf]
        %v1932 = vld [vmem:[%s1919 + $0x30] sm:$0xf]
        %v1933 = vld [vmem:[%s1919 + $0x34] sm:$0xf]
        %v1934 = vld [vmem:[%s1919 + $0x38] sm:$0xf]
        %v1935 = vld [vmem:[%s1919 + $0x3c] sm:$0xf]
        %v1936 = vunpack.c.l.b16 %v1918
        %v1937 = vpack.c.b16 %v1806, %v1805
        %v1938 = vpack.c.b16 %v1808, %v1807
        %v1939 = vpack.c.b16 %v1810, %v1809
        %v1940 = vpack.c.b16 %v1936, %v1811
        %v1961 = vunpack.c.l.b16 %v1920
        %v1962 = vunpack.c.l.b16 %v1921
        %v1963 = vunpack.c.l.b16 %v1922
        %v1964 = vunpack.c.l.b16 %v1923
        %v1965 = vunpack.c.l.b16 %v1924
        %v1966 = vunpack.c.l.b16 %v1925
        %v1967 = vunpack.c.l.b16 %v1926
        %v1968 = vunpack.c.l.b16 %v1927
        %v1969 = vunpack.c.l.b16 %v1928
        %v1970 = vunpack.c.l.b16 %v1929
        %v1971 = vunpack.c.l.b16 %v1930
        %v1972 = vunpack.c.l.b16 %v1931
        %v1973 = vunpack.c.l.b16 %v1932
        %v1974 = vunpack.c.l.b16 %v1933
        %v1975 = vunpack.c.l.b16 %v1934
        %v1976 = vunpack.c.l.b16 %v1935
        %v1977 = vpack.c.b16 %v1962, %v1961
        %v1978 = vpack.c.b16 %v1964, %v1963
        %v1979 = vpack.c.b16 %v1966, %v1965
        %v1980 = vpack.c.b16 %v1968, %v1967
        %v1981 = vpack.c.b16 %v1970, %v1969
        %v1982 = vpack.c.b16 %v1972, %v1971
        %v1983 = vpack.c.b16 %v1974, %v1973
        %v1984 = vpack.c.b16 %v1976, %v1975
        %1993 = vmatpush.bf16.msra.mxu0 %v1984
        %1994 = vmatpush.bf16.msra.mxu0 %v1983
        %1995 = vmatpush.bf16.msra.mxu0 %v1982
        %1996 = vmatpush.bf16.msra.mxu0 %v1981
        %1997 = vmatpush.bf16.msra.mxu0 %v1980
        %1998 = vmatpush.bf16.msra.mxu0 %v1979
        %1999 = vmatpush.bf16.msra.mxu0 %v1978
        %2000 = vmatpush.bf16.msra.mxu0 %v1977
        %2001 = vmatmul.bf16.gmra.mxu0 %v1937
        %v2002 = vpop.f32.mrf.mxu0
        %v2003 = vadd.f32 0.0, %v2002
        %v2004 = vpop.f32.mrf.mxu0
        %v2005 = vadd.f32 0.0, %v2004
        %2006 = vmatmul.bf16.gmra.mxu0 %v1938
        %v2007 = vpop.f32.mrf.mxu0
        %v2008 = vadd.f32 0.0, %v2007
        %v2009 = vpop.f32.mrf.mxu0
        %v2010 = vadd.f32 0.0, %v2009
        %2011 = vmatmul.bf16.gmra.mxu0 %v1939
        %v2012 = vpop.f32.mrf.mxu0
        %v2013 = vadd.f32 0.0, %v2012
        %v2014 = vpop.f32.mrf.mxu0
        %v2015 = vadd.f32 0.0, %v2014
        %2016 = vmatmul.bf16.gmra.mxu0 %v1940
        %v2017 = vpop.f32.mrf.mxu0
        %v2018 = vadd.f32 0.0, %v2017
        %v2019 = vpop.f32.mrf.mxu0
        %v2020 = vadd.f32 0.0, %v2019
        %2021 = vdwg.mxu0
        %v2022 = vadd.f32 %v1897, %v2003
        %v2023 = vadd.f32 %v1898, %v2005
        %v2024 = vadd.f32 %v1899, %v2008
        %v2025 = vadd.f32 %v1900, %v2010
        %v2026 = vadd.f32 %v1901, %v2013
        %v2027 = vadd.f32 %v1902, %v2015
        %v2028 = vadd.f32 %v1903, %v2018
        %v2029 = vadd.f32 %v1904, %v2020
        %v2031 = vshrl.u32 %v1670, 16
        %v2033 = vrot.slane %v2031, 4
        %v2034 = vshll.u32 %v1670, 16
        %v2036 = vrot.slane %v2034, 5
        %v2037 = vor.u32 %v2033, %v2036
        %v2038 = vrot.slane %v2037, 4
        %v2040 = vshll.u32 %v1671, 16
        %v2042 = vrot.slane %v2040, 5
        %v2043 = vsel %vm1674, %v2038, %v2042
        %s2044 = scalar_lea.vmem [#allocation10], 512
        %v2045 = vld [vmem:[%s2044] sm:$0xf]
        %v2046 = vld [vmem:[%s2044 + $0x4] sm:$0xf]
        %v2047 = vld [vmem:[%s2044 + $0x8] sm:$0xf]
        %v2048 = vld [vmem:[%s2044 + $0xc] sm:$0xf]
        %v2049 = vld [vmem:[%s2044 + $0x10] sm:$0xf]
        %v2050 = vld [vmem:[%s2044 + $0x14] sm:$0xf]
        %v2051 = vld [vmem:[%s2044 + $0x18] sm:$0xf]
        %v2052 = vld [vmem:[%s2044 + $0x1c] sm:$0xf]
        %v2053 = vld [vmem:[%s2044 + $0x20] sm:$0xf]
        %v2054 = vld [vmem:[%s2044 + $0x24] sm:$0xf]
        %v2055 = vld [vmem:[%s2044 + $0x28] sm:$0xf]
        %v2056 = vld [vmem:[%s2044 + $0x2c] sm:$0xf]
        %v2057 = vld [vmem:[%s2044 + $0x30] sm:$0xf]
        %v2058 = vld [vmem:[%s2044 + $0x34] sm:$0xf]
        %v2059 = vld [vmem:[%s2044 + $0x38] sm:$0xf]
        %v2060 = vld [vmem:[%s2044 + $0x3c] sm:$0xf]
        %v2061 = vunpack.c.l.b16 %v2043
        %v2062 = vpack.c.b16 %v2061, %v1936
        %v2080 = vunpack.c.l.b16 %v2045
        %v2081 = vunpack.c.l.b16 %v2046
        %v2082 = vunpack.c.l.b16 %v2047
        %v2083 = vunpack.c.l.b16 %v2048
        %v2084 = vunpack.c.l.b16 %v2049
        %v2085 = vunpack.c.l.b16 %v2050
        %v2086 = vunpack.c.l.b16 %v2051
        %v2087 = vunpack.c.l.b16 %v2052
        %v2088 = vunpack.c.l.b16 %v2053
        %v2089 = vunpack.c.l.b16 %v2054
        %v2090 = vunpack.c.l.b16 %v2055
        %v2091 = vunpack.c.l.b16 %v2056
        %v2092 = vunpack.c.l.b16 %v2057
        %v2093 = vunpack.c.l.b16 %v2058
        %v2094 = vunpack.c.l.b16 %v2059
        %v2095 = vunpack.c.l.b16 %v2060
        %v2096 = vpack.c.b16 %v2081, %v2080
        %v2097 = vpack.c.b16 %v2083, %v2082
        %v2098 = vpack.c.b16 %v2085, %v2084
        %v2099 = vpack.c.b16 %v2087, %v2086
        %v2100 = vpack.c.b16 %v2089, %v2088
        %v2101 = vpack.c.b16 %v2091, %v2090
        %v2102 = vpack.c.b16 %v2093, %v2092
        %v2103 = vpack.c.b16 %v2095, %v2094
        %2112 = vmatpush.bf16.msra.mxu0 %v2103
        %2113 = vmatpush.bf16.msra.mxu0 %v2102
        %2114 = vmatpush.bf16.msra.mxu0 %v2101
        %2115 = vmatpush.bf16.msra.mxu0 %v2100
        %2116 = vmatpush.bf16.msra.mxu0 %v2099
        %2117 = vmatpush.bf16.msra.mxu0 %v2098
        %2118 = vmatpush.bf16.msra.mxu0 %v2097
        %2119 = vmatpush.bf16.msra.mxu0 %v2096
        %2120 = vmatmul.bf16.gmra.mxu0 %v1813
        %v2121 = vpop.f32.mrf.mxu0
        %v2122 = vadd.f32 0.0, %v2121
        %v2123 = vpop.f32.mrf.mxu0
        %v2124 = vadd.f32 0.0, %v2123
        %2125 = vmatmul.bf16.gmra.mxu0 %v1814
        %v2126 = vpop.f32.mrf.mxu0
        %v2127 = vadd.f32 0.0, %v2126
        %v2128 = vpop.f32.mrf.mxu0
        %v2129 = vadd.f32 0.0, %v2128
        %2130 = vmatmul.bf16.gmra.mxu0 %v1815
        %v2131 = vpop.f32.mrf.mxu0
        %v2132 = vadd.f32 0.0, %v2131
        %v2133 = vpop.f32.mrf.mxu0
        %v2134 = vadd.f32 0.0, %v2133
        %2135 = vmatmul.bf16.gmra.mxu0 %v2062
        %v2136 = vpop.f32.mrf.mxu0
        %v2137 = vadd.f32 0.0, %v2136
        %v2138 = vpop.f32.mrf.mxu0
        %v2139 = vadd.f32 0.0, %v2138
        %2140 = vdwg.mxu0
        %v2141 = vadd.f32 %v2022, %v2122
        %v2142 = vadd.f32 %v2023, %v2124
        %v2143 = vadd.f32 %v2024, %v2127
        %v2144 = vadd.f32 %v2025, %v2129
        %v2145 = vadd.f32 %v2026, %v2132
        %v2146 = vadd.f32 %v2027, %v2134
        %v2147 = vadd.f32 %v2028, %v2137
        %v2148 = vadd.f32 %v2029, %v2139
        %v2150 = vperm.slane %v838, 0
        %v2152 = vadd.f32 %v2141, %v2150
        %v2153 = vadd.f32 %v2142, %v2150
        %v2154 = vadd.f32 %v2143, %v2150
        %v2155 = vadd.f32 %v2144, %v2150
        %v2156 = vadd.f32 %v2145, %v2150
        %v2157 = vadd.f32 %v2146, %v2150
        %v2158 = vadd.f32 %v2147, %v2150
        %v2159 = vadd.f32 %v2148, %v2150
        %v2160 = vpack.c.bf16 %v2152, %v2152
        %v2161 = vpack.c.bf16 %v2153, %v2153
        %v2162 = vpack.c.bf16 %v2154, %v2154
        %v2163 = vpack.c.bf16 %v2155, %v2155
        %v2164 = vpack.c.bf16 %v2156, %v2156
        %v2165 = vpack.c.bf16 %v2157, %v2157
        %v2166 = vpack.c.bf16 %v2158, %v2158
        %v2167 = vpack.c.bf16 %v2159, %v2159
        %2168 = vst [vmem:[%s567] sm:$0xf] %v2160
        %2169 = vst [vmem:[%s567 + $0x4] sm:$0xf] %v2161
        %2170 = vst [vmem:[%s567 + $0x8] sm:$0xf] %v2162
        %2171 = vst [vmem:[%s567 + $0xc] sm:$0xf] %v2163
        %2172 = vst [vmem:[%s567 + $0x10] sm:$0xf] %v2164
        %2173 = vst [vmem:[%s567 + $0x14] sm:$0xf] %v2165
        %2174 = vst [vmem:[%s567 + $0x18] sm:$0xf] %v2166
        %2175 = vst [vmem:[%s567 + $0x1c] sm:$0xf] %v2167
        %v2176 = vld [vmem:[%s567] sm:$0xf]
        %v2177 = vld [vmem:[%s567 + $0x4] sm:$0xf]
        %v2178 = vld [vmem:[%s567 + $0x8] sm:$0xf]
        %v2179 = vld [vmem:[%s567 + $0xc] sm:$0xf]
        %v2180 = vld [vmem:[%s567 + $0x10] sm:$0xf]
        %v2181 = vld [vmem:[%s567 + $0x14] sm:$0xf]
        %v2182 = vld [vmem:[%s567 + $0x18] sm:$0xf]
        %v2183 = vld [vmem:[%s567 + $0x1c] sm:$0xf]
        %v2184 = vld [vmem:[#allocation13] sm:$0xf]
        %v2185 = vld [vmem:[#allocation13 + $0x4] sm:$0xf]
        %v2186 = vld [vmem:[#allocation13 + $0x8] sm:$0xf]
        %v2187 = vld [vmem:[#allocation13 + $0xc] sm:$0xf]
        %v2188 = vld [vmem:[#allocation13 + $0x10] sm:$0xf]
        %v2189 = vld [vmem:[#allocation13 + $0x14] sm:$0xf]
        %v2190 = vld [vmem:[#allocation13 + $0x18] sm:$0xf]
        %v2191 = vld [vmem:[#allocation13 + $0x1c] sm:$0xf]
        %v2192 = vld [vmem:[#allocation13 + $0x20] sm:$0xf]
        %v2193 = vld [vmem:[#allocation13 + $0x24] sm:$0xf]
        %v2194 = vld [vmem:[#allocation13 + $0x28] sm:$0xf]
        %v2195 = vld [vmem:[#allocation13 + $0x2c] sm:$0xf]
        %v2196 = vld [vmem:[#allocation13 + $0x30] sm:$0xf]
        %v2197 = vld [vmem:[#allocation13 + $0x34] sm:$0xf]
        %v2198 = vld [vmem:[#allocation13 + $0x38] sm:$0xf]
        %v2199 = vld [vmem:[#allocation13 + $0x3c] sm:$0xf]
        %v2200 = vld [vmem:[#allocation15] sm:$0x1]
        %v2202 = vperm.slane %v2200, 0
        %v2212 = vunpack.c.l.b16 %v2176
        %v2213 = vunpack.c.l.b16 %v2177
        %v2214 = vunpack.c.l.b16 %v2178
        %v2215 = vunpack.c.l.b16 %v2179
        %v2216 = vunpack.c.l.b16 %v2180
        %v2217 = vunpack.c.l.b16 %v2181
        %v2218 = vunpack.c.l.b16 %v2182
        %v2219 = vunpack.c.l.b16 %v2183
        %v2220 = vpack.c.b16 %v2213, %v2212
        %v2221 = vpack.c.b16 %v2215, %v2214
        %v2222 = vpack.c.b16 %v2217, %v2216
        %v2223 = vpack.c.b16 %v2219, %v2218
        %v2244 = vunpack.c.l.b16 %v2184
        %v2245 = vunpack.c.l.b16 %v2185
        %v2246 = vunpack.c.l.b16 %v2186
        %v2247 = vunpack.c.l.b16 %v2187
        %v2248 = vunpack.c.l.b16 %v2188
        %v2249 = vunpack.c.l.b16 %v2189
        %v2250 = vunpack.c.l.b16 %v2190
        %v2251 = vunpack.c.l.b16 %v2191
        %v2252 = vunpack.c.l.b16 %v2192
        %v2253 = vunpack.c.l.b16 %v2193
        %v2254 = vunpack.c.l.b16 %v2194
        %v2255 = vunpack.c.l.b16 %v2195
        %v2256 = vunpack.c.l.b16 %v2196
        %v2257 = vunpack.c.l.b16 %v2197
        %v2258 = vunpack.c.l.b16 %v2198
        %v2259 = vunpack.c.l.b16 %v2199
        %v2260 = vpack.c.b16 %v2245, %v2244
        %v2261 = vpack.c.b16 %v2247, %v2246
        %v2262 = vpack.c.b16 %v2249, %v2248
        %v2263 = vpack.c.b16 %v2251, %v2250
        %v2264 = vpack.c.b16 %v2253, %v2252
        %v2265 = vpack.c.b16 %v2255, %v2254
        %v2266 = vpack.c.b16 %v2257, %v2256
        %v2267 = vpack.c.b16 %v2259, %v2258
        %2276 = vmatpush.bf16.msra.mxu0 %v2267
        %2277 = vmatpush.bf16.msra.mxu0 %v2266
        %2278 = vmatpush.bf16.msra.mxu0 %v2265
        %2279 = vmatpush.bf16.msra.mxu0 %v2264
        %2280 = vmatpush.bf16.msra.mxu0 %v2263
        %2281 = vmatpush.bf16.msra.mxu0 %v2262
        %2282 = vmatpush.bf16.msra.mxu0 %v2261
        %2283 = vmatpush.bf16.msra.mxu0 %v2260
        %2284 = vmatmul.bf16.gmra.mxu0 %v2220
        %v2285 = vpop.f32.mrf.mxu0
        %v2286 = vadd.f32 %v2202, %v2285
        %v2287 = vpop.f32.mrf.mxu0
        %v2288 = vadd.f32 %v2202, %v2287
        %2289 = vmatmul.bf16.gmra.mxu0 %v2221
        %v2290 = vpop.f32.mrf.mxu0
        %v2291 = vadd.f32 %v2202, %v2290
        %v2292 = vpop.f32.mrf.mxu0
        %v2293 = vadd.f32 %v2202, %v2292
        %2294 = vmatmul.bf16.gmra.mxu0 %v2222
        %v2295 = vpop.f32.mrf.mxu0
        %v2296 = vadd.f32 %v2202, %v2295
        %v2297 = vpop.f32.mrf.mxu0
        %v2298 = vadd.f32 %v2202, %v2297
        %2299 = vmatmul.bf16.gmra.mxu0 %v2223
        %v2300 = vpop.f32.mrf.mxu0
        %v2301 = vadd.f32 %v2202, %v2300
        %v2302 = vpop.f32.mrf.mxu0
        %v2303 = vadd.f32 %v2202, %v2302
        %2304 = vdwg.mxu0
        %v2305 = vmax.f32 %v2286, 0.0
        %v2306 = vmax.f32 %v2288, 0.0
        %v2307 = vmax.f32 %v2291, 0.0
        %v2308 = vmax.f32 %v2293, 0.0
        %v2309 = vmax.f32 %v2296, 0.0
        %v2310 = vmax.f32 %v2298, 0.0
        %v2311 = vmax.f32 %v2301, 0.0
        %v2312 = vmax.f32 %v2303, 0.0
        %v2313 = vpack.c.bf16 %v2305, %v2305
        %v2314 = vpack.c.bf16 %v2306, %v2306
        %v2315 = vpack.c.bf16 %v2307, %v2307
        %v2316 = vpack.c.bf16 %v2308, %v2308
        %v2317 = vpack.c.bf16 %v2309, %v2309
        %v2318 = vpack.c.bf16 %v2310, %v2310
        %v2319 = vpack.c.bf16 %v2311, %v2311
        %v2320 = vpack.c.bf16 %v2312, %v2312
        %2321 = vst [vmem:[%s691 + $0x8] sm:$0xf] %v2313
        %2322 = vst [vmem:[%s691 + $0x18] sm:$0xf] %v2314
        %2323 = vst [vmem:[%s691 + $0x28] sm:$0xf] %v2315
        %2324 = vst [vmem:[%s691 + $0x38] sm:$0xf] %v2316
        %2325 = vst [vmem:[%s691 + $0x48] sm:$0xf] %v2317
        %2326 = vst [vmem:[%s691 + $0x58] sm:$0xf] %v2318
        %2327 = vst [vmem:[%s691 + $0x68] sm:$0xf] %v2319
        %2328 = vst [vmem:[%s691 + $0x78] sm:$0xf] %v2320
        %v2329 = vld [vmem:[#allocation18] sm:$0x1]
        %v2330 = vld [vmem:[#allocation3 + $0x64] sm:$0x8]
        %v2331 = vld [vmem:[#allocation3 + $0x68] sm:$0x7]
        %v2332 = vld [vmem:[#allocation3 + $0x74] sm:$0x8]
        %v2333 = vld [vmem:[#allocation3 + $0x78] sm:$0x7]
        %v2334 = vld [vmem:[#allocation3 + $0x84] sm:$0x8]
        %v2335 = vld [vmem:[#allocation3 + $0x88] sm:$0x7]
        %v2336 = vld [vmem:[#allocation3 + $0x94] sm:$0x8]
        %v2337 = vld [vmem:[#allocation3 + $0x98] sm:$0x7]
        %v2338 = vld [vmem:[#allocation3 + $0xa4] sm:$0x8]
        %v2339 = vld [vmem:[#allocation3 + $0xa8] sm:$0x7]
        %v2340 = vld [vmem:[#allocation3 + $0xb4] sm:$0x8]
        %v2341 = vld [vmem:[#allocation3 + $0xb8] sm:$0x7]
        %v2342 = vld [vmem:[#allocation3 + $0xc4] sm:$0x8]
        %v2343 = vld [vmem:[#allocation3 + $0xc8] sm:$0x7]
        %v2344 = vld [vmem:[#allocation3 + $0xd4] sm:$0x8]
        %v2345 = vld [vmem:[#allocation3 + $0xd8] sm:$0x7]
        %v2346 = vld [vmem:[#allocation3 + $0xe4] sm:$0x8]
        %v2347 = vld [vmem:[#allocation3 + $0xe8] sm:$0x7]
        %v2348 = vld [vmem:[#allocation3 + $0xf4] sm:$0x8]
        %v2349 = vld [vmem:[#allocation3 + $0xf8] sm:$0x7]
        %v2350 = vld [vmem:[#allocation3 + $0x104] sm:$0x8]
        %v2351 = vld [vmem:[#allocation3 + $0x108] sm:$0x7]
        %v2352 = vld [vmem:[#allocation3 + $0x114] sm:$0x8]
        %v2353 = vld [vmem:[#allocation3 + $0x118] sm:$0x7]
        %vm2370 = vcmask 1044484
        %vm2371 = vmor %vm572, %vm2370
        %v2372 = vrot.slane %v2330, 7
        %v2373 = vrot.slane %v2372, 4
        %v2374 = vrot.slane %v2331, 7
        %v2375 = vsel %vm2371, %v2373, %v2374
        %v2376 = vrot.slane %v2332, 7
        %v2377 = vrot.slane %v2376, 4
        %v2378 = vrot.slane %v2333, 7
        %v2379 = vsel %vm2371, %v2377, %v2378
        %v2380 = vrot.slane %v2334, 7
        %v2381 = vrot.slane %v2380, 4
        %v2382 = vrot.slane %v2335, 7
        %v2383 = vsel %vm2371, %v2381, %v2382
        %v2384 = vrot.slane %v2336, 7
        %v2385 = vrot.slane %v2384, 4
        %v2386 = vrot.slane %v2337, 7
        %v2387 = vsel %vm2371, %v2385, %v2386
        %v2388 = vrot.slane %v2338, 7
        %v2389 = vrot.slane %v2388, 4
        %v2390 = vrot.slane %v2339, 7
        %v2391 = vsel %vm2371, %v2389, %v2390
        %v2392 = vrot.slane %v2340, 7
        %v2393 = vrot.slane %v2392, 4
        %v2394 = vrot.slane %v2341, 7
        %v2395 = vsel %vm2371, %v2393, %v2394
        %v2396 = vrot.slane %v2342, 7
        %v2397 = vrot.slane %v2396, 4
        %v2398 = vrot.slane %v2343, 7
        %v2399 = vsel %vm2371, %v2397, %v2398
        %v2400 = vrot.slane %v2344, 7
        %v2401 = vrot.slane %v2400, 4
        %v2402 = vrot.slane %v2345, 7
        %v2403 = vsel %vm2371, %v2401, %v2402
        %v2404 = vld [vmem:[#allocation16] sm:$0xf]
        %v2405 = vld [vmem:[#allocation16 + $0x4] sm:$0xf]
        %v2406 = vld [vmem:[#allocation16 + $0x8] sm:$0xf]
        %v2407 = vld [vmem:[#allocation16 + $0xc] sm:$0xf]
        %v2408 = vld [vmem:[#allocation16 + $0x10] sm:$0xf]
        %v2409 = vld [vmem:[#allocation16 + $0x14] sm:$0xf]
        %v2410 = vld [vmem:[#allocation16 + $0x18] sm:$0xf]
        %v2411 = vld [vmem:[#allocation16 + $0x1c] sm:$0xf]
        %v2412 = vld [vmem:[#allocation16 + $0x20] sm:$0xf]
        %v2413 = vld [vmem:[#allocation16 + $0x24] sm:$0xf]
        %v2414 = vld [vmem:[#allocation16 + $0x28] sm:$0xf]
        %v2415 = vld [vmem:[#allocation16 + $0x2c] sm:$0xf]
        %v2416 = vld [vmem:[#allocation16 + $0x30] sm:$0xf]
        %v2417 = vld [vmem:[#allocation16 + $0x34] sm:$0xf]
        %v2418 = vld [vmem:[#allocation16 + $0x38] sm:$0xf]
        %v2419 = vld [vmem:[#allocation16 + $0x3c] sm:$0xf]
        %v2424 = vrot.slane %v2346, 7
        %v2425 = vrot.slane %v2424, 4
        %v2426 = vrot.slane %v2347, 7
        %v2427 = vsel %vm2371, %v2425, %v2426
        %v2428 = vrot.slane %v2348, 7
        %v2429 = vrot.slane %v2428, 4
        %v2430 = vrot.slane %v2349, 7
        %v2431 = vsel %vm2371, %v2429, %v2430
        %s2432 = scalar_lea.vmem [#allocation16], 192
        %v2433 = vld [vmem:[%s2432] sm:$0xf]
        %v2434 = vld [vmem:[%s2432 + $0x4] sm:$0xf]
        %v2435 = vld [vmem:[%s2432 + $0x8] sm:$0xf]
        %v2436 = vld [vmem:[%s2432 + $0xc] sm:$0xf]
        %v2437 = vld [vmem:[%s2432 + $0x10] sm:$0xf]
        %v2438 = vld [vmem:[%s2432 + $0x14] sm:$0xf]
        %v2439 = vld [vmem:[%s2432 + $0x18] sm:$0xf]
        %v2440 = vld [vmem:[%s2432 + $0x1c] sm:$0xf]
        %v2441 = vld [vmem:[%s2432 + $0x20] sm:$0xf]
        %v2442 = vld [vmem:[%s2432 + $0x24] sm:$0xf]
        %v2443 = vld [vmem:[%s2432 + $0x28] sm:$0xf]
        %v2444 = vld [vmem:[%s2432 + $0x2c] sm:$0xf]
        %v2445 = vld [vmem:[%s2432 + $0x30] sm:$0xf]
        %v2446 = vld [vmem:[%s2432 + $0x34] sm:$0xf]
        %v2447 = vld [vmem:[%s2432 + $0x38] sm:$0xf]
        %v2448 = vld [vmem:[%s2432 + $0x3c] sm:$0xf]
        %v2449 = vunpack.c.l.b16 %v2383
        %v2450 = vunpack.c.l.b16 %v2387
        %v2451 = vunpack.c.l.b16 %v2391
        %v2452 = vunpack.c.l.b16 %v2395
        %v2453 = vunpack.c.l.b16 %v2399
        %v2454 = vunpack.c.l.b16 %v2403
        %v2455 = vunpack.c.l.b16 %v2427
        %v2456 = vunpack.c.l.b16 %v2431
        %v2457 = vpack.c.b16 %v2450, %v2449
        %v2458 = vpack.c.b16 %v2452, %v2451
        %v2459 = vpack.c.b16 %v2454, %v2453
        %v2460 = vpack.c.b16 %v2456, %v2455
        %v2481 = vunpack.c.l.b16 %v2433
        %v2482 = vunpack.c.l.b16 %v2434
        %v2483 = vunpack.c.l.b16 %v2435
        %v2484 = vunpack.c.l.b16 %v2436
        %v2485 = vunpack.c.l.b16 %v2437
        %v2486 = vunpack.c.l.b16 %v2438
        %v2487 = vunpack.c.l.b16 %v2439
        %v2488 = vunpack.c.l.b16 %v2440
        %v2489 = vunpack.c.l.b16 %v2441
        %v2490 = vunpack.c.l.b16 %v2442
        %v2491 = vunpack.c.l.b16 %v2443
        %v2492 = vunpack.c.l.b16 %v2444
        %v2493 = vunpack.c.l.b16 %v2445
        %v2494 = vunpack.c.l.b16 %v2446
        %v2495 = vunpack.c.l.b16 %v2447
        %v2496 = vunpack.c.l.b16 %v2448
        %v2497 = vpack.c.b16 %v2482, %v2481
        %v2498 = vpack.c.b16 %v2484, %v2483
        %v2499 = vpack.c.b16 %v2486, %v2485
        %v2500 = vpack.c.b16 %v2488, %v2487
        %v2501 = vpack.c.b16 %v2490, %v2489
        %v2502 = vpack.c.b16 %v2492, %v2491
        %v2503 = vpack.c.b16 %v2494, %v2493
        %v2504 = vpack.c.b16 %v2496, %v2495
        %2513 = vmatpush.bf16.msra.mxu0 %v2504
        %2514 = vmatpush.bf16.msra.mxu0 %v2503
        %2515 = vmatpush.bf16.msra.mxu0 %v2502
        %2516 = vmatpush.bf16.msra.mxu0 %v2501
        %2517 = vmatpush.bf16.msra.mxu0 %v2500
        %2518 = vmatpush.bf16.msra.mxu0 %v2499
        %2519 = vmatpush.bf16.msra.mxu0 %v2498
        %2520 = vmatpush.bf16.msra.mxu0 %v2497
        %2521 = vmatmul.bf16.gmra.mxu0 %v2457
        %v2522 = vpop.f32.mrf.mxu0
        %v2523 = vadd.f32 0.0, %v2522
        %v2524 = vpop.f32.mrf.mxu0
        %v2525 = vadd.f32 0.0, %v2524
        %2526 = vmatmul.bf16.gmra.mxu0 %v2458
        %v2527 = vpop.f32.mrf.mxu0
        %v2528 = vadd.f32 0.0, %v2527
        %v2529 = vpop.f32.mrf.mxu0
        %v2530 = vadd.f32 0.0, %v2529
        %2531 = vmatmul.bf16.gmra.mxu0 %v2459
        %v2532 = vpop.f32.mrf.mxu0
        %v2533 = vadd.f32 0.0, %v2532
        %v2534 = vpop.f32.mrf.mxu0
        %v2535 = vadd.f32 0.0, %v2534
        %2536 = vmatmul.bf16.gmra.mxu0 %v2460
        %v2537 = vpop.f32.mrf.mxu0
        %v2538 = vadd.f32 0.0, %v2537
        %v2539 = vpop.f32.mrf.mxu0
        %v2540 = vadd.f32 0.0, %v2539
        %2541 = vdwg.mxu0
        %v2542 = vunpack.c.l.b16 %v2375
        %v2543 = vunpack.c.l.b16 %v2379
        %v2544 = vpack.c.b16 %v2543, %v2542
        %v2562 = vunpack.c.l.b16 %v2404
        %v2563 = vunpack.c.l.b16 %v2405
        %v2564 = vunpack.c.l.b16 %v2406
        %v2565 = vunpack.c.l.b16 %v2407
        %v2566 = vunpack.c.l.b16 %v2408
        %v2567 = vunpack.c.l.b16 %v2409
        %v2568 = vunpack.c.l.b16 %v2410
        %v2569 = vunpack.c.l.b16 %v2411
        %v2570 = vunpack.c.l.b16 %v2412
        %v2571 = vunpack.c.l.b16 %v2413
        %v2572 = vunpack.c.l.b16 %v2414
        %v2573 = vunpack.c.l.b16 %v2415
        %v2574 = vunpack.c.l.b16 %v2416
        %v2575 = vunpack.c.l.b16 %v2417
        %v2576 = vunpack.c.l.b16 %v2418
        %v2577 = vunpack.c.l.b16 %v2419
        %v2578 = vpack.c.b16 %v2563, %v2562
        %v2579 = vpack.c.b16 %v2565, %v2564
        %v2580 = vpack.c.b16 %v2567, %v2566
        %v2581 = vpack.c.b16 %v2569, %v2568
        %v2582 = vpack.c.b16 %v2571, %v2570
        %v2583 = vpack.c.b16 %v2573, %v2572
        %v2584 = vpack.c.b16 %v2575, %v2574
        %v2585 = vpack.c.b16 %v2577, %v2576
        %2594 = vmatpush.bf16.msra.mxu0 %v2585
        %2595 = vmatpush.bf16.msra.mxu0 %v2584
        %2596 = vmatpush.bf16.msra.mxu0 %v2583
        %2597 = vmatpush.bf16.msra.mxu0 %v2582
        %2598 = vmatpush.bf16.msra.mxu0 %v2581
        %2599 = vmatpush.bf16.msra.mxu0 %v2580
        %2600 = vmatpush.bf16.msra.mxu0 %v2579
        %2601 = vmatpush.bf16.msra.mxu0 %v2578
        %2602 = vmatmul.bf16.gmra.mxu0 %v2544
        %v2603 = vpop.f32.mrf.mxu0
        %v2604 = vadd.f32 %v2523, %v2603
        %v2605 = vpop.f32.mrf.mxu0
        %v2606 = vadd.f32 %v2525, %v2605
        %2607 = vmatmul.bf16.gmra.mxu0 %v2457
        %v2608 = vpop.f32.mrf.mxu0
        %v2609 = vadd.f32 %v2528, %v2608
        %v2610 = vpop.f32.mrf.mxu0
        %v2611 = vadd.f32 %v2530, %v2610
        %2612 = vmatmul.bf16.gmra.mxu0 %v2458
        %v2613 = vpop.f32.mrf.mxu0
        %v2614 = vadd.f32 %v2533, %v2613
        %v2615 = vpop.f32.mrf.mxu0
        %v2616 = vadd.f32 %v2535, %v2615
        %2617 = vmatmul.bf16.gmra.mxu0 %v2459
        %v2618 = vpop.f32.mrf.mxu0
        %v2619 = vadd.f32 %v2538, %v2618
        %v2620 = vpop.f32.mrf.mxu0
        %v2621 = vadd.f32 %v2540, %v2620
        %2622 = vdwg.mxu0
        %v2627 = vrot.slane %v2350, 7
        %v2628 = vrot.slane %v2627, 4
        %v2629 = vrot.slane %v2351, 7
        %v2630 = vsel %vm2371, %v2628, %v2629
        %v2631 = vrot.slane %v2352, 7
        %v2632 = vrot.slane %v2631, 4
        %v2633 = vrot.slane %v2353, 7
        %v2634 = vsel %vm2371, %v2632, %v2633
        %s2635 = scalar_lea.vmem [#allocation16], 384
        %v2636 = vld [vmem:[%s2635] sm:$0xf]
        %v2637 = vld [vmem:[%s2635 + $0x4] sm:$0xf]
        %v2638 = vld [vmem:[%s2635 + $0x8] sm:$0xf]
        %v2639 = vld [vmem:[%s2635 + $0xc] sm:$0xf]
        %v2640 = vld [vmem:[%s2635 + $0x10] sm:$0xf]
        %v2641 = vld [vmem:[%s2635 + $0x14] sm:$0xf]
        %v2642 = vld [vmem:[%s2635 + $0x18] sm:$0xf]
        %v2643 = vld [vmem:[%s2635 + $0x1c] sm:$0xf]
        %v2644 = vld [vmem:[%s2635 + $0x20] sm:$0xf]
        %v2645 = vld [vmem:[%s2635 + $0x24] sm:$0xf]
        %v2646 = vld [vmem:[%s2635 + $0x28] sm:$0xf]
        %v2647 = vld [vmem:[%s2635 + $0x2c] sm:$0xf]
        %v2648 = vld [vmem:[%s2635 + $0x30] sm:$0xf]
        %v2649 = vld [vmem:[%s2635 + $0x34] sm:$0xf]
        %v2650 = vld [vmem:[%s2635 + $0x38] sm:$0xf]
        %v2651 = vld [vmem:[%s2635 + $0x3c] sm:$0xf]
        %v2652 = vunpack.c.l.b16 %v2630
        %v2653 = vunpack.c.l.b16 %v2634
        %v2654 = vpack.c.b16 %v2653, %v2652
        %v2672 = vunpack.c.l.b16 %v2636
        %v2673 = vunpack.c.l.b16 %v2637
        %v2674 = vunpack.c.l.b16 %v2638
        %v2675 = vunpack.c.l.b16 %v2639
        %v2676 = vunpack.c.l.b16 %v2640
        %v2677 = vunpack.c.l.b16 %v2641
        %v2678 = vunpack.c.l.b16 %v2642
        %v2679 = vunpack.c.l.b16 %v2643
        %v2680 = vunpack.c.l.b16 %v2644
        %v2681 = vunpack.c.l.b16 %v2645
        %v2682 = vunpack.c.l.b16 %v2646
        %v2683 = vunpack.c.l.b16 %v2647
        %v2684 = vunpack.c.l.b16 %v2648
        %v2685 = vunpack.c.l.b16 %v2649
        %v2686 = vunpack.c.l.b16 %v2650
        %v2687 = vunpack.c.l.b16 %v2651
        %v2688 = vpack.c.b16 %v2673, %v2672
        %v2689 = vpack.c.b16 %v2675, %v2674
        %v2690 = vpack.c.b16 %v2677, %v2676
        %v2691 = vpack.c.b16 %v2679, %v2678
        %v2692 = vpack.c.b16 %v2681, %v2680
        %v2693 = vpack.c.b16 %v2683, %v2682
        %v2694 = vpack.c.b16 %v2685, %v2684
        %v2695 = vpack.c.b16 %v2687, %v2686
        %2704 = vmatpush.bf16.msra.mxu0 %v2695
        %2705 = vmatpush.bf16.msra.mxu0 %v2694
        %2706 = vmatpush.bf16.msra.mxu0 %v2693
        %2707 = vmatpush.bf16.msra.mxu0 %v2692
        %2708 = vmatpush.bf16.msra.mxu0 %v2691
        %2709 = vmatpush.bf16.msra.mxu0 %v2690
        %2710 = vmatpush.bf16.msra.mxu0 %v2689
        %2711 = vmatpush.bf16.msra.mxu0 %v2688
        %2712 = vmatmul.bf16.gmra.mxu0 %v2458
        %v2713 = vpop.f32.mrf.mxu0
        %v2714 = vadd.f32 0.0, %v2713
        %v2715 = vpop.f32.mrf.mxu0
        %v2716 = vadd.f32 0.0, %v2715
        %2717 = vmatmul.bf16.gmra.mxu0 %v2459
        %v2718 = vpop.f32.mrf.mxu0
        %v2719 = vadd.f32 0.0, %v2718
        %v2720 = vpop.f32.mrf.mxu0
        %v2721 = vadd.f32 0.0, %v2720
        %2722 = vmatmul.bf16.gmra.mxu0 %v2460
        %v2723 = vpop.f32.mrf.mxu0
        %v2724 = vadd.f32 0.0, %v2723
        %v2725 = vpop.f32.mrf.mxu0
        %v2726 = vadd.f32 0.0, %v2725
        %2727 = vmatmul.bf16.gmra.mxu0 %v2654
        %v2728 = vpop.f32.mrf.mxu0
        %v2729 = vadd.f32 0.0, %v2728
        %v2730 = vpop.f32.mrf.mxu0
        %v2731 = vadd.f32 0.0, %v2730
        %2732 = vdwg.mxu0
        %v2733 = vadd.f32 %v2604, %v2714
        %v2734 = vadd.f32 %v2606, %v2716
        %v2735 = vadd.f32 %v2609, %v2719
        %v2736 = vadd.f32 %v2611, %v2721
        %v2737 = vadd.f32 %v2614, %v2724
        %v2738 = vadd.f32 %v2616, %v2726
        %v2739 = vadd.f32 %v2619, %v2729
        %v2740 = vadd.f32 %v2621, %v2731
        %v2741 = vld [vmem:[#allocation3 + $0x68] sm:$0xf]
        %v2742 = vld [vmem:[#allocation3 + $0x78] sm:$0xf]
        %v2743 = vld [vmem:[#allocation3 + $0x88] sm:$0xf]
        %v2744 = vld [vmem:[#allocation3 + $0x98] sm:$0xf]
        %v2745 = vld [vmem:[#allocation3 + $0xa8] sm:$0xf]
        %v2746 = vld [vmem:[#allocation3 + $0xb8] sm:$0xf]
        %v2747 = vld [vmem:[#allocation3 + $0xc8] sm:$0xf]
        %v2748 = vld [vmem:[#allocation3 + $0xd8] sm:$0xf]
        %v2749 = vld [vmem:[#allocation3 + $0xe8] sm:$0xf]
        %v2750 = vld [vmem:[#allocation3 + $0xf8] sm:$0xf]
        %v2751 = vld [vmem:[#allocation3 + $0x108] sm:$0xf]
        %v2752 = vld [vmem:[#allocation3 + $0x118] sm:$0xf]
        %s2753 = scalar_lea.vmem [#allocation16], 64
        %v2754 = vld [vmem:[%s2753] sm:$0xf]
        %v2755 = vld [vmem:[%s2753 + $0x4] sm:$0xf]
        %v2756 = vld [vmem:[%s2753 + $0x8] sm:$0xf]
        %v2757 = vld [vmem:[%s2753 + $0xc] sm:$0xf]
        %v2758 = vld [vmem:[%s2753 + $0x10] sm:$0xf]
        %v2759 = vld [vmem:[%s2753 + $0x14] sm:$0xf]
        %v2760 = vld [vmem:[%s2753 + $0x18] sm:$0xf]
        %v2761 = vld [vmem:[%s2753 + $0x1c] sm:$0xf]
        %v2762 = vld [vmem:[%s2753 + $0x20] sm:$0xf]
        %v2763 = vld [vmem:[%s2753 + $0x24] sm:$0xf]
        %v2764 = vld [vmem:[%s2753 + $0x28] sm:$0xf]
        %v2765 = vld [vmem:[%s2753 + $0x2c] sm:$0xf]
        %v2766 = vld [vmem:[%s2753 + $0x30] sm:$0xf]
        %v2767 = vld [vmem:[%s2753 + $0x34] sm:$0xf]
        %v2768 = vld [vmem:[%s2753 + $0x38] sm:$0xf]
        %v2769 = vld [vmem:[%s2753 + $0x3c] sm:$0xf]
        %v2778 = vunpack.c.l.b16 %v2741
        %v2779 = vunpack.c.l.b16 %v2742
        %v2780 = vunpack.c.l.b16 %v2743
        %v2781 = vunpack.c.l.b16 %v2744
        %v2782 = vunpack.c.l.b16 %v2745
        %v2783 = vunpack.c.l.b16 %v2746
        %v2784 = vunpack.c.l.b16 %v2747
        %v2785 = vunpack.c.l.b16 %v2748
        %v2786 = vpack.c.b16 %v2779, %v2778
        %v2787 = vpack.c.b16 %v2781, %v2780
        %v2788 = vpack.c.b16 %v2783, %v2782
        %v2789 = vpack.c.b16 %v2785, %v2784
        %v2810 = vunpack.c.l.b16 %v2754
        %v2811 = vunpack.c.l.b16 %v2755
        %v2812 = vunpack.c.l.b16 %v2756
        %v2813 = vunpack.c.l.b16 %v2757
        %v2814 = vunpack.c.l.b16 %v2758
        %v2815 = vunpack.c.l.b16 %v2759
        %v2816 = vunpack.c.l.b16 %v2760
        %v2817 = vunpack.c.l.b16 %v2761
        %v2818 = vunpack.c.l.b16 %v2762
        %v2819 = vunpack.c.l.b16 %v2763
        %v2820 = vunpack.c.l.b16 %v2764
        %v2821 = vunpack.c.l.b16 %v2765
        %v2822 = vunpack.c.l.b16 %v2766
        %v2823 = vunpack.c.l.b16 %v2767
        %v2824 = vunpack.c.l.b16 %v2768
        %v2825 = vunpack.c.l.b16 %v2769
        %v2826 = vpack.c.b16 %v2811, %v2810
        %v2827 = vpack.c.b16 %v2813, %v2812
        %v2828 = vpack.c.b16 %v2815, %v2814
        %v2829 = vpack.c.b16 %v2817, %v2816
        %v2830 = vpack.c.b16 %v2819, %v2818
        %v2831 = vpack.c.b16 %v2821, %v2820
        %v2832 = vpack.c.b16 %v2823, %v2822
        %v2833 = vpack.c.b16 %v2825, %v2824
        %2842 = vmatpush.bf16.msra.mxu0 %v2833
        %2843 = vmatpush.bf16.msra.mxu0 %v2832
        %2844 = vmatpush.bf16.msra.mxu0 %v2831
        %2845 = vmatpush.bf16.msra.mxu0 %v2830
        %2846 = vmatpush.bf16.msra.mxu0 %v2829
        %2847 = vmatpush.bf16.msra.mxu0 %v2828
        %2848 = vmatpush.bf16.msra.mxu0 %v2827
        %2849 = vmatpush.bf16.msra.mxu0 %v2826
        %2850 = vmatmul.bf16.gmra.mxu0 %v2786
        %v2851 = vpop.f32.mrf.mxu0
        %v2852 = vadd.f32 0.0, %v2851
        %v2853 = vpop.f32.mrf.mxu0
        %v2854 = vadd.f32 0.0, %v2853
        %2855 = vmatmul.bf16.gmra.mxu0 %v2787
        %v2856 = vpop.f32.mrf.mxu0
        %v2857 = vadd.f32 0.0, %v2856
        %v2858 = vpop.f32.mrf.mxu0
        %v2859 = vadd.f32 0.0, %v2858
        %2860 = vmatmul.bf16.gmra.mxu0 %v2788
        %v2861 = vpop.f32.mrf.mxu0
        %v2862 = vadd.f32 0.0, %v2861
        %v2863 = vpop.f32.mrf.mxu0
        %v2864 = vadd.f32 0.0, %v2863
        %2865 = vmatmul.bf16.gmra.mxu0 %v2789
        %v2866 = vpop.f32.mrf.mxu0
        %v2867 = vadd.f32 0.0, %v2866
        %v2868 = vpop.f32.mrf.mxu0
        %v2869 = vadd.f32 0.0, %v2868
        %2870 = vdwg.mxu0
        %v2871 = vadd.f32 %v2733, %v2852
        %v2872 = vadd.f32 %v2734, %v2854
        %v2873 = vadd.f32 %v2735, %v2857
        %v2874 = vadd.f32 %v2736, %v2859
        %v2875 = vadd.f32 %v2737, %v2862
        %v2876 = vadd.f32 %v2738, %v2864
        %v2877 = vadd.f32 %v2739, %v2867
        %v2878 = vadd.f32 %v2740, %v2869
        %s2879 = scalar_lea.vmem [#allocation16], 256
        %v2880 = vld [vmem:[%s2879] sm:$0xf]
        %v2881 = vld [vmem:[%s2879 + $0x4] sm:$0xf]
        %v2882 = vld [vmem:[%s2879 + $0x8] sm:$0xf]
        %v2883 = vld [vmem:[%s2879 + $0xc] sm:$0xf]
        %v2884 = vld [vmem:[%s2879 + $0x10] sm:$0xf]
        %v2885 = vld [vmem:[%s2879 + $0x14] sm:$0xf]
        %v2886 = vld [vmem:[%s2879 + $0x18] sm:$0xf]
        %v2887 = vld [vmem:[%s2879 + $0x1c] sm:$0xf]
        %v2888 = vld [vmem:[%s2879 + $0x20] sm:$0xf]
        %v2889 = vld [vmem:[%s2879 + $0x24] sm:$0xf]
        %v2890 = vld [vmem:[%s2879 + $0x28] sm:$0xf]
        %v2891 = vld [vmem:[%s2879 + $0x2c] sm:$0xf]
        %v2892 = vld [vmem:[%s2879 + $0x30] sm:$0xf]
        %v2893 = vld [vmem:[%s2879 + $0x34] sm:$0xf]
        %v2894 = vld [vmem:[%s2879 + $0x38] sm:$0xf]
        %v2895 = vld [vmem:[%s2879 + $0x3c] sm:$0xf]
        %v2898 = vunpack.c.l.b16 %v2749
        %v2899 = vunpack.c.l.b16 %v2750
        %v2900 = vpack.c.b16 %v2899, %v2898
        %v2918 = vunpack.c.l.b16 %v2880
        %v2919 = vunpack.c.l.b16 %v2881
        %v2920 = vunpack.c.l.b16 %v2882
        %v2921 = vunpack.c.l.b16 %v2883
        %v2922 = vunpack.c.l.b16 %v2884
        %v2923 = vunpack.c.l.b16 %v2885
        %v2924 = vunpack.c.l.b16 %v2886
        %v2925 = vunpack.c.l.b16 %v2887
        %v2926 = vunpack.c.l.b16 %v2888
        %v2927 = vunpack.c.l.b16 %v2889
        %v2928 = vunpack.c.l.b16 %v2890
        %v2929 = vunpack.c.l.b16 %v2891
        %v2930 = vunpack.c.l.b16 %v2892
        %v2931 = vunpack.c.l.b16 %v2893
        %v2932 = vunpack.c.l.b16 %v2894
        %v2933 = vunpack.c.l.b16 %v2895
        %v2934 = vpack.c.b16 %v2919, %v2918
        %v2935 = vpack.c.b16 %v2921, %v2920
        %v2936 = vpack.c.b16 %v2923, %v2922
        %v2937 = vpack.c.b16 %v2925, %v2924
        %v2938 = vpack.c.b16 %v2927, %v2926
        %v2939 = vpack.c.b16 %v2929, %v2928
        %v2940 = vpack.c.b16 %v2931, %v2930
        %v2941 = vpack.c.b16 %v2933, %v2932
        %2950 = vmatpush.bf16.msra.mxu0 %v2941
        %2951 = vmatpush.bf16.msra.mxu0 %v2940
        %2952 = vmatpush.bf16.msra.mxu0 %v2939
        %2953 = vmatpush.bf16.msra.mxu0 %v2938
        %2954 = vmatpush.bf16.msra.mxu0 %v2937
        %2955 = vmatpush.bf16.msra.mxu0 %v2936
        %2956 = vmatpush.bf16.msra.mxu0 %v2935
        %2957 = vmatpush.bf16.msra.mxu0 %v2934
        %2958 = vmatmul.bf16.gmra.mxu0 %v2787
        %v2959 = vpop.f32.mrf.mxu0
        %v2960 = vadd.f32 0.0, %v2959
        %v2961 = vpop.f32.mrf.mxu0
        %v2962 = vadd.f32 0.0, %v2961
        %2963 = vmatmul.bf16.gmra.mxu0 %v2788
        %v2964 = vpop.f32.mrf.mxu0
        %v2965 = vadd.f32 0.0, %v2964
        %v2966 = vpop.f32.mrf.mxu0
        %v2967 = vadd.f32 0.0, %v2966
        %2968 = vmatmul.bf16.gmra.mxu0 %v2789
        %v2969 = vpop.f32.mrf.mxu0
        %v2970 = vadd.f32 0.0, %v2969
        %v2971 = vpop.f32.mrf.mxu0
        %v2972 = vadd.f32 0.0, %v2971
        %2973 = vmatmul.bf16.gmra.mxu0 %v2900
        %v2974 = vpop.f32.mrf.mxu0
        %v2975 = vadd.f32 0.0, %v2974
        %v2976 = vpop.f32.mrf.mxu0
        %v2977 = vadd.f32 0.0, %v2976
        %2978 = vdwg.mxu0
        %v2979 = vadd.f32 %v2871, %v2960
        %v2980 = vadd.f32 %v2872, %v2962
        %v2981 = vadd.f32 %v2873, %v2965
        %v2982 = vadd.f32 %v2874, %v2967
        %v2983 = vadd.f32 %v2875, %v2970
        %v2984 = vadd.f32 %v2876, %v2972
        %v2985 = vadd.f32 %v2877, %v2975
        %v2986 = vadd.f32 %v2878, %v2977
        %s2987 = scalar_lea.vmem [#allocation16], 448
        %v2988 = vld [vmem:[%s2987] sm:$0xf]
        %v2989 = vld [vmem:[%s2987 + $0x4] sm:$0xf]
        %v2990 = vld [vmem:[%s2987 + $0x8] sm:$0xf]
        %v2991 = vld [vmem:[%s2987 + $0xc] sm:$0xf]
        %v2992 = vld [vmem:[%s2987 + $0x10] sm:$0xf]
        %v2993 = vld [vmem:[%s2987 + $0x14] sm:$0xf]
        %v2994 = vld [vmem:[%s2987 + $0x18] sm:$0xf]
        %v2995 = vld [vmem:[%s2987 + $0x1c] sm:$0xf]
        %v2996 = vld [vmem:[%s2987 + $0x20] sm:$0xf]
        %v2997 = vld [vmem:[%s2987 + $0x24] sm:$0xf]
        %v2998 = vld [vmem:[%s2987 + $0x28] sm:$0xf]
        %v2999 = vld [vmem:[%s2987 + $0x2c] sm:$0xf]
        %v3000 = vld [vmem:[%s2987 + $0x30] sm:$0xf]
        %v3001 = vld [vmem:[%s2987 + $0x34] sm:$0xf]
        %v3002 = vld [vmem:[%s2987 + $0x38] sm:$0xf]
        %v3003 = vld [vmem:[%s2987 + $0x3c] sm:$0xf]
        %v3006 = vunpack.c.l.b16 %v2751
        %v3007 = vunpack.c.l.b16 %v2752
        %v3008 = vpack.c.b16 %v3007, %v3006
        %v3026 = vunpack.c.l.b16 %v2988
        %v3027 = vunpack.c.l.b16 %v2989
        %v3028 = vunpack.c.l.b16 %v2990
        %v3029 = vunpack.c.l.b16 %v2991
        %v3030 = vunpack.c.l.b16 %v2992
        %v3031 = vunpack.c.l.b16 %v2993
        %v3032 = vunpack.c.l.b16 %v2994
        %v3033 = vunpack.c.l.b16 %v2995
        %v3034 = vunpack.c.l.b16 %v2996
        %v3035 = vunpack.c.l.b16 %v2997
        %v3036 = vunpack.c.l.b16 %v2998
        %v3037 = vunpack.c.l.b16 %v2999
        %v3038 = vunpack.c.l.b16 %v3000
        %v3039 = vunpack.c.l.b16 %v3001
        %v3040 = vunpack.c.l.b16 %v3002
        %v3041 = vunpack.c.l.b16 %v3003
        %v3042 = vpack.c.b16 %v3027, %v3026
        %v3043 = vpack.c.b16 %v3029, %v3028
        %v3044 = vpack.c.b16 %v3031, %v3030
        %v3045 = vpack.c.b16 %v3033, %v3032
        %v3046 = vpack.c.b16 %v3035, %v3034
        %v3047 = vpack.c.b16 %v3037, %v3036
        %v3048 = vpack.c.b16 %v3039, %v3038
        %v3049 = vpack.c.b16 %v3041, %v3040
        %3058 = vmatpush.bf16.msra.mxu0 %v3049
        %3059 = vmatpush.bf16.msra.mxu0 %v3048
        %3060 = vmatpush.bf16.msra.mxu0 %v3047
        %3061 = vmatpush.bf16.msra.mxu0 %v3046
        %3062 = vmatpush.bf16.msra.mxu0 %v3045
        %3063 = vmatpush.bf16.msra.mxu0 %v3044
        %3064 = vmatpush.bf16.msra.mxu0 %v3043
        %3065 = vmatpush.bf16.msra.mxu0 %v3042
        %3066 = vmatmul.bf16.gmra.mxu0 %v2788
        %v3067 = vpop.f32.mrf.mxu0
        %v3068 = vadd.f32 0.0, %v3067
        %v3069 = vpop.f32.mrf.mxu0
        %v3070 = vadd.f32 0.0, %v3069
        %3071 = vmatmul.bf16.gmra.mxu0 %v2789
        %v3072 = vpop.f32.mrf.mxu0
        %v3073 = vadd.f32 0.0, %v3072
        %v3074 = vpop.f32.mrf.mxu0
        %v3075 = vadd.f32 0.0, %v3074
        %3076 = vmatmul.bf16.gmra.mxu0 %v2900
        %v3077 = vpop.f32.mrf.mxu0
        %v3078 = vadd.f32 0.0, %v3077
        %v3079 = vpop.f32.mrf.mxu0
        %v3080 = vadd.f32 0.0, %v3079
        %3081 = vmatmul.bf16.gmra.mxu0 %v3008
        %v3082 = vpop.f32.mrf.mxu0
        %v3083 = vadd.f32 0.0, %v3082
        %v3084 = vpop.f32.mrf.mxu0
        %v3085 = vadd.f32 0.0, %v3084
        %3086 = vdwg.mxu0
        %v3087 = vadd.f32 %v2979, %v3068
        %v3088 = vadd.f32 %v2980, %v3070
        %v3089 = vadd.f32 %v2981, %v3073
        %v3090 = vadd.f32 %v2982, %v3075
        %v3091 = vadd.f32 %v2983, %v3078
        %v3092 = vadd.f32 %v2984, %v3080
        %v3093 = vadd.f32 %v2985, %v3083
        %v3094 = vadd.f32 %v2986, %v3085
        %v3095 = vld [vmem:[#allocation3 + $0x68] sm:$0xe]
        %v3096 = vld [vmem:[#allocation3 + $0x6c] sm:$0x1]
        %v3097 = vld [vmem:[#allocation3 + $0x78] sm:$0xe]
        %v3098 = vld [vmem:[#allocation3 + $0x7c] sm:$0x1]
        %v3099 = vld [vmem:[#allocation3 + $0x88] sm:$0xe]
        %v3100 = vld [vmem:[#allocation3 + $0x8c] sm:$0x1]
        %v3101 = vld [vmem:[#allocation3 + $0x98] sm:$0xe]
        %v3102 = vld [vmem:[#allocation3 + $0x9c] sm:$0x1]
        %v3103 = vld [vmem:[#allocation3 + $0xa8] sm:$0xe]
        %v3104 = vld [vmem:[#allocation3 + $0xac] sm:$0x1]
        %v3105 = vld [vmem:[#allocation3 + $0xb8] sm:$0xe]
        %v3106 = vld [vmem:[#allocation3 + $0xbc] sm:$0x1]
        %v3107 = vld [vmem:[#allocation3 + $0xc8] sm:$0xe]
        %v3108 = vld [vmem:[#allocation3 + $0xcc] sm:$0x1]
        %v3109 = vld [vmem:[#allocation3 + $0xd8] sm:$0xe]
        %v3110 = vld [vmem:[#allocation3 + $0xdc] sm:$0x1]
        %v3111 = vld [vmem:[#allocation3 + $0xe8] sm:$0xe]
        %v3112 = vld [vmem:[#allocation3 + $0xec] sm:$0x1]
        %v3113 = vld [vmem:[#allocation3 + $0xf8] sm:$0xe]
        %v3114 = vld [vmem:[#allocation3 + $0xfc] sm:$0x1]
        %v3115 = vld [vmem:[#allocation3 + $0x108] sm:$0xe]
        %v3116 = vld [vmem:[#allocation3 + $0x10c] sm:$0x1]
        %v3117 = vld [vmem:[#allocation3 + $0x118] sm:$0xe]
        %v3118 = vld [vmem:[#allocation3 + $0x11c] sm:$0x1]
        %vm3135 = vcmask 1042432
        %vm3136 = vcmask 1046532
        %vm3137 = vmor %vm3135, %vm3136
        %v3138 = vrot.slane %v3095, 5
        %v3139 = vrot.slane %v3138, 4
        %v3140 = vrot.slane %v3096, 5
        %v3141 = vsel %vm3137, %v3139, %v3140
        %v3142 = vrot.slane %v3097, 5
        %v3143 = vrot.slane %v3142, 4
        %v3144 = vrot.slane %v3098, 5
        %v3145 = vsel %vm3137, %v3143, %v3144
        %v3146 = vrot.slane %v3099, 5
        %v3147 = vrot.slane %v3146, 4
        %v3148 = vrot.slane %v3100, 5
        %v3149 = vsel %vm3137, %v3147, %v3148
        %v3150 = vrot.slane %v3101, 5
        %v3151 = vrot.slane %v3150, 4
        %v3152 = vrot.slane %v3102, 5
        %v3153 = vsel %vm3137, %v3151, %v3152
        %v3154 = vrot.slane %v3103, 5
        %v3155 = vrot.slane %v3154, 4
        %v3156 = vrot.slane %v3104, 5
        %v3157 = vsel %vm3137, %v3155, %v3156
        %v3158 = vrot.slane %v3105, 5
        %v3159 = vrot.slane %v3158, 4
        %v3160 = vrot.slane %v3106, 5
        %v3161 = vsel %vm3137, %v3159, %v3160
        %v3162 = vrot.slane %v3107, 5
        %v3163 = vrot.slane %v3162, 4
        %v3164 = vrot.slane %v3108, 5
        %v3165 = vsel %vm3137, %v3163, %v3164
        %v3166 = vrot.slane %v3109, 5
        %v3167 = vrot.slane %v3166, 4
        %v3168 = vrot.slane %v3110, 5
        %v3169 = vsel %vm3137, %v3167, %v3168
        %s3170 = scalar_lea.vmem [#allocation16], 128
        %v3171 = vld [vmem:[%s3170] sm:$0xf]
        %v3172 = vld [vmem:[%s3170 + $0x4] sm:$0xf]
        %v3173 = vld [vmem:[%s3170 + $0x8] sm:$0xf]
        %v3174 = vld [vmem:[%s3170 + $0xc] sm:$0xf]
        %v3175 = vld [vmem:[%s3170 + $0x10] sm:$0xf]
        %v3176 = vld [vmem:[%s3170 + $0x14] sm:$0xf]
        %v3177 = vld [vmem:[%s3170 + $0x18] sm:$0xf]
        %v3178 = vld [vmem:[%s3170 + $0x1c] sm:$0xf]
        %v3179 = vld [vmem:[%s3170 + $0x20] sm:$0xf]
        %v3180 = vld [vmem:[%s3170 + $0x24] sm:$0xf]
        %v3181 = vld [vmem:[%s3170 + $0x28] sm:$0xf]
        %v3182 = vld [vmem:[%s3170 + $0x2c] sm:$0xf]
        %v3183 = vld [vmem:[%s3170 + $0x30] sm:$0xf]
        %v3184 = vld [vmem:[%s3170 + $0x34] sm:$0xf]
        %v3185 = vld [vmem:[%s3170 + $0x38] sm:$0xf]
        %v3186 = vld [vmem:[%s3170 + $0x3c] sm:$0xf]
        %v3187 = vunpack.c.l.b16 %v3141
        %v3188 = vunpack.c.l.b16 %v3145
        %v3189 = vunpack.c.l.b16 %v3149
        %v3190 = vunpack.c.l.b16 %v3153
        %v3191 = vunpack.c.l.b16 %v3157
        %v3192 = vunpack.c.l.b16 %v3161
        %v3193 = vunpack.c.l.b16 %v3165
        %v3194 = vunpack.c.l.b16 %v3169
        %v3195 = vpack.c.b16 %v3188, %v3187
        %v3196 = vpack.c.b16 %v3190, %v3189
        %v3197 = vpack.c.b16 %v3192, %v3191
        %v3198 = vpack.c.b16 %v3194, %v3193
        %v3219 = vunpack.c.l.b16 %v3171
        %v3220 = vunpack.c.l.b16 %v3172
        %v3221 = vunpack.c.l.b16 %v3173
        %v3222 = vunpack.c.l.b16 %v3174
        %v3223 = vunpack.c.l.b16 %v3175
        %v3224 = vunpack.c.l.b16 %v3176
        %v3225 = vunpack.c.l.b16 %v3177
        %v3226 = vunpack.c.l.b16 %v3178
        %v3227 = vunpack.c.l.b16 %v3179
        %v3228 = vunpack.c.l.b16 %v3180
        %v3229 = vunpack.c.l.b16 %v3181
        %v3230 = vunpack.c.l.b16 %v3182
        %v3231 = vunpack.c.l.b16 %v3183
        %v3232 = vunpack.c.l.b16 %v3184
        %v3233 = vunpack.c.l.b16 %v3185
        %v3234 = vunpack.c.l.b16 %v3186
        %v3235 = vpack.c.b16 %v3220, %v3219
        %v3236 = vpack.c.b16 %v3222, %v3221
        %v3237 = vpack.c.b16 %v3224, %v3223
        %v3238 = vpack.c.b16 %v3226, %v3225
        %v3239 = vpack.c.b16 %v3228, %v3227
        %v3240 = vpack.c.b16 %v3230, %v3229
        %v3241 = vpack.c.b16 %v3232, %v3231
        %v3242 = vpack.c.b16 %v3234, %v3233
        %3251 = vmatpush.bf16.msra.mxu0 %v3242
        %3252 = vmatpush.bf16.msra.mxu0 %v3241
        %3253 = vmatpush.bf16.msra.mxu0 %v3240
        %3254 = vmatpush.bf16.msra.mxu0 %v3239
        %3255 = vmatpush.bf16.msra.mxu0 %v3238
        %3256 = vmatpush.bf16.msra.mxu0 %v3237
        %3257 = vmatpush.bf16.msra.mxu0 %v3236
        %3258 = vmatpush.bf16.msra.mxu0 %v3235
        %3259 = vmatmul.bf16.gmra.mxu0 %v3195
        %v3260 = vpop.f32.mrf.mxu0
        %v3261 = vadd.f32 0.0, %v3260
        %v3262 = vpop.f32.mrf.mxu0
        %v3263 = vadd.f32 0.0, %v3262
        %3264 = vmatmul.bf16.gmra.mxu0 %v3196
        %v3265 = vpop.f32.mrf.mxu0
        %v3266 = vadd.f32 0.0, %v3265
        %v3267 = vpop.f32.mrf.mxu0
        %v3268 = vadd.f32 0.0, %v3267
        %3269 = vmatmul.bf16.gmra.mxu0 %v3197
        %v3270 = vpop.f32.mrf.mxu0
        %v3271 = vadd.f32 0.0, %v3270
        %v3272 = vpop.f32.mrf.mxu0
        %v3273 = vadd.f32 0.0, %v3272
        %3274 = vmatmul.bf16.gmra.mxu0 %v3198
        %v3275 = vpop.f32.mrf.mxu0
        %v3276 = vadd.f32 0.0, %v3275
        %v3277 = vpop.f32.mrf.mxu0
        %v3278 = vadd.f32 0.0, %v3277
        %3279 = vdwg.mxu0
        %v3280 = vadd.f32 %v3087, %v3261
        %v3281 = vadd.f32 %v3088, %v3263
        %v3282 = vadd.f32 %v3089, %v3266
        %v3283 = vadd.f32 %v3090, %v3268
        %v3284 = vadd.f32 %v3091, %v3271
        %v3285 = vadd.f32 %v3092, %v3273
        %v3286 = vadd.f32 %v3093, %v3276
        %v3287 = vadd.f32 %v3094, %v3278
        %v3292 = vrot.slane %v3111, 5
        %v3293 = vrot.slane %v3292, 4
        %v3294 = vrot.slane %v3112, 5
        %v3295 = vsel %vm3137, %v3293, %v3294
        %v3296 = vrot.slane %v3113, 5
        %v3297 = vrot.slane %v3296, 4
        %v3298 = vrot.slane %v3114, 5
        %v3299 = vsel %vm3137, %v3297, %v3298
        %s3300 = scalar_lea.vmem [#allocation16], 320
        %v3301 = vld [vmem:[%s3300] sm:$0xf]
        %v3302 = vld [vmem:[%s3300 + $0x4] sm:$0xf]
        %v3303 = vld [vmem:[%s3300 + $0x8] sm:$0xf]
        %v3304 = vld [vmem:[%s3300 + $0xc] sm:$0xf]
        %v3305 = vld [vmem:[%s3300 + $0x10] sm:$0xf]
        %v3306 = vld [vmem:[%s3300 + $0x14] sm:$0xf]
        %v3307 = vld [vmem:[%s3300 + $0x18] sm:$0xf]
        %v3308 = vld [vmem:[%s3300 + $0x1c] sm:$0xf]
        %v3309 = vld [vmem:[%s3300 + $0x20] sm:$0xf]
        %v3310 = vld [vmem:[%s3300 + $0x24] sm:$0xf]
        %v3311 = vld [vmem:[%s3300 + $0x28] sm:$0xf]
        %v3312 = vld [vmem:[%s3300 + $0x2c] sm:$0xf]
        %v3313 = vld [vmem:[%s3300 + $0x30] sm:$0xf]
        %v3314 = vld [vmem:[%s3300 + $0x34] sm:$0xf]
        %v3315 = vld [vmem:[%s3300 + $0x38] sm:$0xf]
        %v3316 = vld [vmem:[%s3300 + $0x3c] sm:$0xf]
        %v3317 = vunpack.c.l.b16 %v3295
        %v3318 = vunpack.c.l.b16 %v3299
        %v3319 = vpack.c.b16 %v3318, %v3317
        %v3337 = vunpack.c.l.b16 %v3301
        %v3338 = vunpack.c.l.b16 %v3302
        %v3339 = vunpack.c.l.b16 %v3303
        %v3340 = vunpack.c.l.b16 %v3304
        %v3341 = vunpack.c.l.b16 %v3305
        %v3342 = vunpack.c.l.b16 %v3306
        %v3343 = vunpack.c.l.b16 %v3307
        %v3344 = vunpack.c.l.b16 %v3308
        %v3345 = vunpack.c.l.b16 %v3309
        %v3346 = vunpack.c.l.b16 %v3310
        %v3347 = vunpack.c.l.b16 %v3311
        %v3348 = vunpack.c.l.b16 %v3312
        %v3349 = vunpack.c.l.b16 %v3313
        %v3350 = vunpack.c.l.b16 %v3314
        %v3351 = vunpack.c.l.b16 %v3315
        %v3352 = vunpack.c.l.b16 %v3316
        %v3353 = vpack.c.b16 %v3338, %v3337
        %v3354 = vpack.c.b16 %v3340, %v3339
        %v3355 = vpack.c.b16 %v3342, %v3341
        %v3356 = vpack.c.b16 %v3344, %v3343
        %v3357 = vpack.c.b16 %v3346, %v3345
        %v3358 = vpack.c.b16 %v3348, %v3347
        %v3359 = vpack.c.b16 %v3350, %v3349
        %v3360 = vpack.c.b16 %v3352, %v3351
        %3369 = vmatpush.bf16.msra.mxu0 %v3360
        %3370 = vmatpush.bf16.msra.mxu0 %v3359
        %3371 = vmatpush.bf16.msra.mxu0 %v3358
        %3372 = vmatpush.bf16.msra.mxu0 %v3357
        %3373 = vmatpush.bf16.msra.mxu0 %v3356
        %3374 = vmatpush.bf16.msra.mxu0 %v3355
        %3375 = vmatpush.bf16.msra.mxu0 %v3354
        %3376 = vmatpush.bf16.msra.mxu0 %v3353
        %3377 = vmatmul.bf16.gmra.mxu0 %v3196
        %v3378 = vpop.f32.mrf.mxu0
        %v3379 = vadd.f32 0.0, %v3378
        %v3380 = vpop.f32.mrf.mxu0
        %v3381 = vadd.f32 0.0, %v3380
        %3382 = vmatmul.bf16.gmra.mxu0 %v3197
        %v3383 = vpop.f32.mrf.mxu0
        %v3384 = vadd.f32 0.0, %v3383
        %v3385 = vpop.f32.mrf.mxu0
        %v3386 = vadd.f32 0.0, %v3385
        %3387 = vmatmul.bf16.gmra.mxu0 %v3198
        %v3388 = vpop.f32.mrf.mxu0
        %v3389 = vadd.f32 0.0, %v3388
        %v3390 = vpop.f32.mrf.mxu0
        %v3391 = vadd.f32 0.0, %v3390
        %3392 = vmatmul.bf16.gmra.mxu0 %v3319
        %v3393 = vpop.f32.mrf.mxu0
        %v3394 = vadd.f32 0.0, %v3393
        %v3395 = vpop.f32.mrf.mxu0
        %v3396 = vadd.f32 0.0, %v3395
        %3397 = vdwg.mxu0
        %v3398 = vadd.f32 %v3280, %v3379
        %v3399 = vadd.f32 %v3281, %v3381
        %v3400 = vadd.f32 %v3282, %v3384
        %v3401 = vadd.f32 %v3283, %v3386
        %v3402 = vadd.f32 %v3284, %v3389
        %v3403 = vadd.f32 %v3285, %v3391
        %v3404 = vadd.f32 %v3286, %v3394
        %v3405 = vadd.f32 %v3287, %v3396
        %v3410 = vrot.slane %v3115, 5
        %v3411 = vrot.slane %v3410, 4
        %v3412 = vrot.slane %v3116, 5
        %v3413 = vsel %vm3137, %v3411, %v3412
        %v3414 = vrot.slane %v3117, 5
        %v3415 = vrot.slane %v3414, 4
        %v3416 = vrot.slane %v3118, 5
        %v3417 = vsel %vm3137, %v3415, %v3416
        %s3418 = scalar_lea.vmem [#allocation16], 512
        %v3419 = vld [vmem:[%s3418] sm:$0xf]
        %v3420 = vld [vmem:[%s3418 + $0x4] sm:$0xf]
        %v3421 = vld [vmem:[%s3418 + $0x8] sm:$0xf]
        %v3422 = vld [vmem:[%s3418 + $0xc] sm:$0xf]
        %v3423 = vld [vmem:[%s3418 + $0x10] sm:$0xf]
        %v3424 = vld [vmem:[%s3418 + $0x14] sm:$0xf]
        %v3425 = vld [vmem:[%s3418 + $0x18] sm:$0xf]
        %v3426 = vld [vmem:[%s3418 + $0x1c] sm:$0xf]
        %v3427 = vld [vmem:[%s3418 + $0x20] sm:$0xf]
        %v3428 = vld [vmem:[%s3418 + $0x24] sm:$0xf]
        %v3429 = vld [vmem:[%s3418 + $0x28] sm:$0xf]
        %v3430 = vld [vmem:[%s3418 + $0x2c] sm:$0xf]
        %v3431 = vld [vmem:[%s3418 + $0x30] sm:$0xf]
        %v3432 = vld [vmem:[%s3418 + $0x34] sm:$0xf]
        %v3433 = vld [vmem:[%s3418 + $0x38] sm:$0xf]
        %v3434 = vld [vmem:[%s3418 + $0x3c] sm:$0xf]
        %v3435 = vunpack.c.l.b16 %v3413
        %v3436 = vunpack.c.l.b16 %v3417
        %v3437 = vpack.c.b16 %v3436, %v3435
        %v3455 = vunpack.c.l.b16 %v3419
        %v3456 = vunpack.c.l.b16 %v3420
        %v3457 = vunpack.c.l.b16 %v3421
        %v3458 = vunpack.c.l.b16 %v3422
        %v3459 = vunpack.c.l.b16 %v3423
        %v3460 = vunpack.c.l.b16 %v3424
        %v3461 = vunpack.c.l.b16 %v3425
        %v3462 = vunpack.c.l.b16 %v3426
        %v3463 = vunpack.c.l.b16 %v3427
        %v3464 = vunpack.c.l.b16 %v3428
        %v3465 = vunpack.c.l.b16 %v3429
        %v3466 = vunpack.c.l.b16 %v3430
        %v3467 = vunpack.c.l.b16 %v3431
        %v3468 = vunpack.c.l.b16 %v3432
        %v3469 = vunpack.c.l.b16 %v3433
        %v3470 = vunpack.c.l.b16 %v3434
        %v3471 = vpack.c.b16 %v3456, %v3455
        %v3472 = vpack.c.b16 %v3458, %v3457
        %v3473 = vpack.c.b16 %v3460, %v3459
        %v3474 = vpack.c.b16 %v3462, %v3461
        %v3475 = vpack.c.b16 %v3464, %v3463
        %v3476 = vpack.c.b16 %v3466, %v3465
        %v3477 = vpack.c.b16 %v3468, %v3467
        %v3478 = vpack.c.b16 %v3470, %v3469
        %3487 = vmatpush.bf16.msra.mxu0 %v3478
        %3488 = vmatpush.bf16.msra.mxu0 %v3477
        %3489 = vmatpush.bf16.msra.mxu0 %v3476
        %3490 = vmatpush.bf16.msra.mxu0 %v3475
        %3491 = vmatpush.bf16.msra.mxu0 %v3474
        %3492 = vmatpush.bf16.msra.mxu0 %v3473
        %3493 = vmatpush.bf16.msra.mxu0 %v3472
        %3494 = vmatpush.bf16.msra.mxu0 %v3471
        %3495 = vmatmul.bf16.gmra.mxu0 %v3197
        %v3496 = vpop.f32.mrf.mxu0
        %v3497 = vadd.f32 0.0, %v3496
        %v3498 = vpop.f32.mrf.mxu0
        %v3499 = vadd.f32 0.0, %v3498
        %3500 = vmatmul.bf16.gmra.mxu0 %v3198
        %v3501 = vpop.f32.mrf.mxu0
        %v3502 = vadd.f32 0.0, %v3501
        %v3503 = vpop.f32.mrf.mxu0
        %v3504 = vadd.f32 0.0, %v3503
        %3505 = vmatmul.bf16.gmra.mxu0 %v3319
        %v3506 = vpop.f32.mrf.mxu0
        %v3507 = vadd.f32 0.0, %v3506
        %v3508 = vpop.f32.mrf.mxu0
        %v3509 = vadd.f32 0.0, %v3508
        %3510 = vmatmul.bf16.gmra.mxu0 %v3437
        %v3511 = vpop.f32.mrf.mxu0
        %v3512 = vadd.f32 0.0, %v3511
        %v3513 = vpop.f32.mrf.mxu0
        %v3514 = vadd.f32 0.0, %v3513
        %3515 = vdwg.mxu0
        %v3516 = vadd.f32 %v3398, %v3497
        %v3517 = vadd.f32 %v3399, %v3499
        %v3518 = vadd.f32 %v3400, %v3502
        %v3519 = vadd.f32 %v3401, %v3504
        %v3520 = vadd.f32 %v3402, %v3507
        %v3521 = vadd.f32 %v3403, %v3509
        %v3522 = vadd.f32 %v3404, %v3512
        %v3523 = vadd.f32 %v3405, %v3514
        %v3525 = vperm.slane %v2329, 0
        %v3527 = vadd.f32 %v3516, %v3525
        %v3528 = vadd.f32 %v3517, %v3525
        %v3529 = vadd.f32 %v3518, %v3525
        %v3530 = vadd.f32 %v3519, %v3525
        %v3531 = vadd.f32 %v3520, %v3525
        %v3532 = vadd.f32 %v3521, %v3525
        %v3533 = vadd.f32 %v3522, %v3525
        %v3534 = vadd.f32 %v3523, %v3525
        %v3535 = vmax.f32 %v3527, 0.0
        %v3536 = vmax.f32 %v3528, 0.0
        %v3537 = vmax.f32 %v3529, 0.0
        %v3538 = vmax.f32 %v3530, 0.0
        %v3539 = vmax.f32 %v3531, 0.0
        %v3540 = vmax.f32 %v3532, 0.0
        %v3541 = vmax.f32 %v3533, 0.0
        %v3542 = vmax.f32 %v3534, 0.0
        %v3543 = vpack.c.bf16 %v3536, %v3535
        %v3544 = vpack.c.bf16 %v3538, %v3537
        %v3545 = vpack.c.bf16 %v3540, %v3539
        %v3546 = vpack.c.bf16 %v3542, %v3541
        %v3547 = vld [vmem:[#allocation19] sm:$0xf]
        %v3548 = vld [vmem:[#allocation19 + $0x4] sm:$0xf]
        %v3549 = vld [vmem:[#allocation19 + $0x8] sm:$0xf]
        %v3550 = vld [vmem:[#allocation19 + $0xc] sm:$0xf]
        %v3551 = vld [vmem:[#allocation19 + $0x10] sm:$0xf]
        %v3552 = vld [vmem:[#allocation19 + $0x14] sm:$0xf]
        %v3553 = vld [vmem:[#allocation19 + $0x18] sm:$0xf]
        %v3554 = vld [vmem:[#allocation19 + $0x1c] sm:$0xf]
        %v3555 = vld [vmem:[#allocation19 + $0x20] sm:$0xf]
        %v3556 = vld [vmem:[#allocation19 + $0x24] sm:$0xf]
        %v3557 = vld [vmem:[#allocation19 + $0x28] sm:$0xf]
        %v3558 = vld [vmem:[#allocation19 + $0x2c] sm:$0xf]
        %v3559 = vld [vmem:[#allocation19 + $0x30] sm:$0xf]
        %v3560 = vld [vmem:[#allocation19 + $0x34] sm:$0xf]
        %v3561 = vld [vmem:[#allocation19 + $0x38] sm:$0xf]
        %v3562 = vld [vmem:[#allocation19 + $0x3c] sm:$0xf]
        %v3563 = vld [vmem:[#allocation21] sm:$0x1]
        %v3565 = vperm.slane %v3563, 0
        %v3583 = vunpack.c.l.b16 %v3547
        %v3584 = vunpack.c.l.b16 %v3548
        %v3585 = vunpack.c.l.b16 %v3549
        %v3586 = vunpack.c.l.b16 %v3550
        %v3587 = vunpack.c.l.b16 %v3551
        %v3588 = vunpack.c.l.b16 %v3552
        %v3589 = vunpack.c.l.b16 %v3553
        %v3590 = vunpack.c.l.b16 %v3554
        %v3591 = vunpack.c.l.b16 %v3555
        %v3592 = vunpack.c.l.b16 %v3556
        %v3593 = vunpack.c.l.b16 %v3557
        %v3594 = vunpack.c.l.b16 %v3558
        %v3595 = vunpack.c.l.b16 %v3559
        %v3596 = vunpack.c.l.b16 %v3560
        %v3597 = vunpack.c.l.b16 %v3561
        %v3598 = vunpack.c.l.b16 %v3562
        %v3599 = vpack.c.b16 %v3584, %v3583
        %v3600 = vpack.c.b16 %v3586, %v3585
        %v3601 = vpack.c.b16 %v3588, %v3587
        %v3602 = vpack.c.b16 %v3590, %v3589
        %v3603 = vpack.c.b16 %v3592, %v3591
        %v3604 = vpack.c.b16 %v3594, %v3593
        %v3605 = vpack.c.b16 %v3596, %v3595
        %v3606 = vpack.c.b16 %v3598, %v3597
        %3615 = vmatpush.bf16.msra.mxu0 %v3606
        %3616 = vmatpush.bf16.msra.mxu0 %v3605
        %3617 = vmatpush.bf16.msra.mxu0 %v3604
        %3618 = vmatpush.bf16.msra.mxu0 %v3603
        %3619 = vmatpush.bf16.msra.mxu0 %v3602
        %3620 = vmatpush.bf16.msra.mxu0 %v3601
        %3621 = vmatpush.bf16.msra.mxu0 %v3600
        %3622 = vmatpush.bf16.msra.mxu0 %v3599
        %3623 = vmatmul.bf16.gmra.mxu0 %v3543
        %v3624 = vpop.f32.mrf.mxu0
        %v3625 = vadd.f32 %v3565, %v3624
        %v3626 = vpop.f32.mrf.mxu0
        %v3627 = vadd.f32 %v3565, %v3626
        %3628 = vmatmul.bf16.gmra.mxu0 %v3544
        %v3629 = vpop.f32.mrf.mxu0
        %v3630 = vadd.f32 %v3565, %v3629
        %v3631 = vpop.f32.mrf.mxu0
        %v3632 = vadd.f32 %v3565, %v3631
        %3633 = vmatmul.bf16.gmra.mxu0 %v3545
        %v3634 = vpop.f32.mrf.mxu0
        %v3635 = vadd.f32 %v3565, %v3634
        %v3636 = vpop.f32.mrf.mxu0
        %v3637 = vadd.f32 %v3565, %v3636
        %3638 = vmatmul.bf16.gmra.mxu0 %v3546
        %v3639 = vpop.f32.mrf.mxu0
        %v3640 = vadd.f32 %v3565, %v3639
        %v3641 = vpop.f32.mrf.mxu0
        %v3642 = vadd.f32 %v3565, %v3641
        %3643 = vdwg.mxu0
        %v3644 = vmax.f32 %v3625, 0.0
        %v3645 = vmax.f32 %v3627, 0.0
        %v3646 = vmax.f32 %v3630, 0.0
        %v3647 = vmax.f32 %v3632, 0.0
        %v3648 = vmax.f32 %v3635, 0.0
        %v3649 = vmax.f32 %v3637, 0.0
        %v3650 = vmax.f32 %v3640, 0.0
        %v3651 = vmax.f32 %v3642, 0.0
        %v3652 = vld [vmem:[%s567] sm:$0xf]
        %v3653 = vld [vmem:[%s567 + $0x4] sm:$0xf]
        %v3654 = vld [vmem:[%s567 + $0x8] sm:$0xf]
        %v3655 = vld [vmem:[%s567 + $0xc] sm:$0xf]
        %v3656 = vld [vmem:[%s567 + $0x10] sm:$0xf]
        %v3657 = vld [vmem:[%s567 + $0x14] sm:$0xf]
        %v3658 = vld [vmem:[%s567 + $0x18] sm:$0xf]
        %v3659 = vld [vmem:[%s567 + $0x1c] sm:$0xf]
        %v3660 = vunpack.c.l.bf16 %v3652
        %v3661 = vunpack.c.l.bf16 %v3653
        %v3662 = vunpack.c.l.bf16 %v3654
        %v3663 = vunpack.c.l.bf16 %v3655
        %v3664 = vunpack.c.l.bf16 %v3656
        %v3665 = vunpack.c.l.bf16 %v3657
        %v3666 = vunpack.c.l.bf16 %v3658
        %v3667 = vunpack.c.l.bf16 %v3659
        %v3668 = vadd.f32 %v3644, %v3660
        %v3669 = vadd.f32 %v3645, %v3661
        %v3670 = vadd.f32 %v3646, %v3662
        %v3671 = vadd.f32 %v3647, %v3663
        %v3672 = vadd.f32 %v3648, %v3664
        %v3673 = vadd.f32 %v3649, %v3665
        %v3674 = vadd.f32 %v3650, %v3666
        %v3675 = vadd.f32 %v3651, %v3667
        %v3676 = vpack.c.bf16 %v3668, %v3668
        %v3677 = vpack.c.bf16 %v3669, %v3669
        %v3678 = vpack.c.bf16 %v3670, %v3670
        %v3679 = vpack.c.bf16 %v3671, %v3671
        %v3680 = vpack.c.bf16 %v3672, %v3672
        %v3681 = vpack.c.bf16 %v3673, %v3673
        %v3682 = vpack.c.bf16 %v3674, %v3674
        %v3683 = vpack.c.bf16 %v3675, %v3675
        %3684 = vst [vmem:[%s567] sm:$0xf] %v3676
        %3685 = vst [vmem:[%s567 + $0x4] sm:$0xf] %v3677
        %3686 = vst [vmem:[%s567 + $0x8] sm:$0xf] %v3678
        %3687 = vst [vmem:[%s567 + $0xc] sm:$0xf] %v3679
        %3688 = vst [vmem:[%s567 + $0x10] sm:$0xf] %v3680
        %3689 = vst [vmem:[%s567 + $0x14] sm:$0xf] %v3681
        %3690 = vst [vmem:[%s567 + $0x18] sm:$0xf] %v3682
        %3691 = vst [vmem:[%s567 + $0x1c] sm:$0xf] %v3683
        %v3692 = vld [vmem:[%s567] sm:$0xf]
        %v3693 = vld [vmem:[%s567 + $0x4] sm:$0xf]
        %v3694 = vld [vmem:[%s567 + $0x8] sm:$0xf]
        %v3695 = vld [vmem:[%s567 + $0xc] sm:$0xf]
        %v3696 = vld [vmem:[%s567 + $0x10] sm:$0xf]
        %v3697 = vld [vmem:[%s567 + $0x14] sm:$0xf]
        %v3698 = vld [vmem:[%s567 + $0x18] sm:$0xf]
        %v3699 = vld [vmem:[%s567 + $0x1c] sm:$0xf]
        %s3700 = scalar_lea.vmem [#allocation13], 64
        %v3701 = vld [vmem:[%s3700] sm:$0xf]
        %v3702 = vld [vmem:[%s3700 + $0x4] sm:$0xf]
        %v3703 = vld [vmem:[%s3700 + $0x8] sm:$0xf]
        %v3704 = vld [vmem:[%s3700 + $0xc] sm:$0xf]
        %v3705 = vld [vmem:[%s3700 + $0x10] sm:$0xf]
        %v3706 = vld [vmem:[%s3700 + $0x14] sm:$0xf]
        %v3707 = vld [vmem:[%s3700 + $0x18] sm:$0xf]
        %v3708 = vld [vmem:[%s3700 + $0x1c] sm:$0xf]
        %v3709 = vld [vmem:[%s3700 + $0x20] sm:$0xf]
        %v3710 = vld [vmem:[%s3700 + $0x24] sm:$0xf]
        %v3711 = vld [vmem:[%s3700 + $0x28] sm:$0xf]
        %v3712 = vld [vmem:[%s3700 + $0x2c] sm:$0xf]
        %v3713 = vld [vmem:[%s3700 + $0x30] sm:$0xf]
        %v3714 = vld [vmem:[%s3700 + $0x34] sm:$0xf]
        %v3715 = vld [vmem:[%s3700 + $0x38] sm:$0xf]
        %v3716 = vld [vmem:[%s3700 + $0x3c] sm:$0xf]
        %s3717 = scalar_lea.vmem [#allocation15], 1
        %v3718 = vld [vmem:[%s3717] sm:$0x1]
        %v3720 = vperm.slane %v3718, 0
        %v3730 = vunpack.c.l.b16 %v3692
        %v3731 = vunpack.c.l.b16 %v3693
        %v3732 = vunpack.c.l.b16 %v3694
        %v3733 = vunpack.c.l.b16 %v3695
        %v3734 = vunpack.c.l.b16 %v3696
        %v3735 = vunpack.c.l.b16 %v3697
        %v3736 = vunpack.c.l.b16 %v3698
        %v3737 = vunpack.c.l.b16 %v3699
        %v3738 = vpack.c.b16 %v3731, %v3730
        %v3739 = vpack.c.b16 %v3733, %v3732
        %v3740 = vpack.c.b16 %v3735, %v3734
        %v3741 = vpack.c.b16 %v3737, %v3736
        %v3762 = vunpack.c.l.b16 %v3701
        %v3763 = vunpack.c.l.b16 %v3702
        %v3764 = vunpack.c.l.b16 %v3703
        %v3765 = vunpack.c.l.b16 %v3704
        %v3766 = vunpack.c.l.b16 %v3705
        %v3767 = vunpack.c.l.b16 %v3706
        %v3768 = vunpack.c.l.b16 %v3707
        %v3769 = vunpack.c.l.b16 %v3708
        %v3770 = vunpack.c.l.b16 %v3709
        %v3771 = vunpack.c.l.b16 %v3710
        %v3772 = vunpack.c.l.b16 %v3711
        %v3773 = vunpack.c.l.b16 %v3712
        %v3774 = vunpack.c.l.b16 %v3713
        %v3775 = vunpack.c.l.b16 %v3714
        %v3776 = vunpack.c.l.b16 %v3715
        %v3777 = vunpack.c.l.b16 %v3716
        %v3778 = vpack.c.b16 %v3763, %v3762
        %v3779 = vpack.c.b16 %v3765, %v3764
        %v3780 = vpack.c.b16 %v3767, %v3766
        %v3781 = vpack.c.b16 %v3769, %v3768
        %v3782 = vpack.c.b16 %v3771, %v3770
        %v3783 = vpack.c.b16 %v3773, %v3772
        %v3784 = vpack.c.b16 %v3775, %v3774
        %v3785 = vpack.c.b16 %v3777, %v3776
        %3794 = vmatpush.bf16.msra.mxu0 %v3785
        %3795 = vmatpush.bf16.msra.mxu0 %v3784
        %3796 = vmatpush.bf16.msra.mxu0 %v3783
        %3797 = vmatpush.bf16.msra.mxu0 %v3782
        %3798 = vmatpush.bf16.msra.mxu0 %v3781
        %3799 = vmatpush.bf16.msra.mxu0 %v3780
        %3800 = vmatpush.bf16.msra.mxu0 %v3779
        %3801 = vmatpush.bf16.msra.mxu0 %v3778
        %3802 = vmatmul.bf16.gmra.mxu0 %v3738
        %v3803 = vpop.f32.mrf.mxu0
        %v3804 = vadd.f32 %v3720, %v3803
        %v3805 = vpop.f32.mrf.mxu0
        %v3806 = vadd.f32 %v3720, %v3805
        %3807 = vmatmul.bf16.gmra.mxu0 %v3739
        %v3808 = vpop.f32.mrf.mxu0
        %v3809 = vadd.f32 %v3720, %v3808
        %v3810 = vpop.f32.mrf.mxu0
        %v3811 = vadd.f32 %v3720, %v3810
        %3812 = vmatmul.bf16.gmra.mxu0 %v3740
        %v3813 = vpop.f32.mrf.mxu0
        %v3814 = vadd.f32 %v3720, %v3813
        %v3815 = vpop.f32.mrf.mxu0
        %v3816 = vadd.f32 %v3720, %v3815
        %3817 = vmatmul.bf16.gmra.mxu0 %v3741
        %v3818 = vpop.f32.mrf.mxu0
        %v3819 = vadd.f32 %v3720, %v3818
        %v3820 = vpop.f32.mrf.mxu0
        %v3821 = vadd.f32 %v3720, %v3820
        %3822 = vdwg.mxu0
        %v3823 = vmax.f32 %v3804, 0.0
        %v3824 = vmax.f32 %v3806, 0.0
        %v3825 = vmax.f32 %v3809, 0.0
        %v3826 = vmax.f32 %v3811, 0.0
        %v3827 = vmax.f32 %v3814, 0.0
        %v3828 = vmax.f32 %v3816, 0.0
        %v3829 = vmax.f32 %v3819, 0.0
        %v3830 = vmax.f32 %v3821, 0.0
        %v3831 = vpack.c.bf16 %v3823, %v3823
        %v3832 = vpack.c.bf16 %v3824, %v3824
        %v3833 = vpack.c.bf16 %v3825, %v3825
        %v3834 = vpack.c.bf16 %v3826, %v3826
        %v3835 = vpack.c.bf16 %v3827, %v3827
        %v3836 = vpack.c.bf16 %v3828, %v3828
        %v3837 = vpack.c.bf16 %v3829, %v3829
        %v3838 = vpack.c.bf16 %v3830, %v3830
        %3839 = vst [vmem:[%s691 + $0x8] sm:$0xf] %v3831
        %3840 = vst [vmem:[%s691 + $0x18] sm:$0xf] %v3832
        %3841 = vst [vmem:[%s691 + $0x28] sm:$0xf] %v3833
        %3842 = vst [vmem:[%s691 + $0x38] sm:$0xf] %v3834
        %3843 = vst [vmem:[%s691 + $0x48] sm:$0xf] %v3835
        %3844 = vst [vmem:[%s691 + $0x58] sm:$0xf] %v3836
        %3845 = vst [vmem:[%s691 + $0x68] sm:$0xf] %v3837
        %3846 = vst [vmem:[%s691 + $0x78] sm:$0xf] %v3838
        %s3847 = scalar_lea.vmem [#allocation18], 1
        %v3848 = vld [vmem:[%s3847] sm:$0x1]
        %v3849 = vld [vmem:[#allocation3 + $0x44] sm:$0xc]
        %v3850 = vld [vmem:[#allocation3 + $0x48] sm:$0x3]
        %v3851 = vld [vmem:[#allocation3 + $0x54] sm:$0xc]
        %v3852 = vld [vmem:[#allocation3 + $0x58] sm:$0x3]
        %v3853 = vld [vmem:[#allocation3 + $0x64] sm:$0xc]
        %v3854 = vld [vmem:[#allocation3 + $0x68] sm:$0x3]
        %v3855 = vld [vmem:[#allocation3 + $0x74] sm:$0xc]
        %v3856 = vld [vmem:[#allocation3 + $0x78] sm:$0x3]
        %v3857 = vld [vmem:[#allocation3 + $0x84] sm:$0xc]
        %v3858 = vld [vmem:[#allocation3 + $0x88] sm:$0x3]
        %v3859 = vld [vmem:[#allocation3 + $0x94] sm:$0xc]
        %v3860 = vld [vmem:[#allocation3 + $0x98] sm:$0x3]
        %v3861 = vld [vmem:[#allocation3 + $0xa4] sm:$0xc]
        %v3862 = vld [vmem:[#allocation3 + $0xa8] sm:$0x3]
        %v3863 = vld [vmem:[#allocation3 + $0xb4] sm:$0xc]
        %v3864 = vld [vmem:[#allocation3 + $0xb8] sm:$0x3]
        %v3865 = vld [vmem:[#allocation3 + $0xc4] sm:$0xc]
        %v3866 = vld [vmem:[#allocation3 + $0xc8] sm:$0x3]
        %v3867 = vld [vmem:[#allocation3 + $0xd4] sm:$0xc]
        %v3868 = vld [vmem:[#allocation3 + $0xd8] sm:$0x3]
        %v3869 = vld [vmem:[#allocation3 + $0xe4] sm:$0xc]
        %v3870 = vld [vmem:[#allocation3 + $0xe8] sm:$0x3]
        %v3871 = vld [vmem:[#allocation3 + $0xf4] sm:$0xc]
        %v3872 = vld [vmem:[#allocation3 + $0xf8] sm:$0x3]
        %v3873 = vld [vmem:[#allocation3 + $0x104] sm:$0xc]
        %v3874 = vld [vmem:[#allocation3 + $0x108] sm:$0x3]
        %v3875 = vld [vmem:[#allocation3 + $0x114] sm:$0xc]
        %v3876 = vld [vmem:[#allocation3 + $0x118] sm:$0x3]
        %v3877 = vld [vmem:[#allocation3 + $0x124] sm:$0xc]
        %v3878 = vld [vmem:[#allocation3 + $0x128] sm:$0x3]
        %v3879 = vld [vmem:[#allocation3 + $0x134] sm:$0xc]
        %v3880 = vld [vmem:[#allocation3 + $0x138] sm:$0x3]
        %vm3897 = vcmask 1041408
        %vm3898 = vcmask 1045508
        %vm3899 = vmor %vm3897, %vm3898
        %v3900 = vrot.slane %v3849, 6
        %v3901 = vrot.slane %v3900, 4
        %v3902 = vrot.slane %v3850, 6
        %v3903 = vsel %vm3899, %v3901, %v3902
        %v3904 = vrot.slane %v3851, 6
        %v3905 = vrot.slane %v3904, 4
        %v3906 = vrot.slane %v3852, 6
        %v3907 = vsel %vm3899, %v3905, %v3906
        %v3908 = vrot.slane %v3853, 6
        %v3909 = vrot.slane %v3908, 4
        %v3910 = vrot.slane %v3854, 6
        %v3911 = vsel %vm3899, %v3909, %v3910
        %v3912 = vrot.slane %v3855, 6
        %v3913 = vrot.slane %v3912, 4
        %v3914 = vrot.slane %v3856, 6
        %v3915 = vsel %vm3899, %v3913, %v3914
        %v3916 = vrot.slane %v3857, 6
        %v3917 = vrot.slane %v3916, 4
        %v3918 = vrot.slane %v3858, 6
        %v3919 = vsel %vm3899, %v3917, %v3918
        %v3920 = vrot.slane %v3859, 6
        %v3921 = vrot.slane %v3920, 4
        %v3922 = vrot.slane %v3860, 6
        %v3923 = vsel %vm3899, %v3921, %v3922
        %v3924 = vrot.slane %v3861, 6
        %v3925 = vrot.slane %v3924, 4
        %v3926 = vrot.slane %v3862, 6
        %v3927 = vsel %vm3899, %v3925, %v3926
        %v3928 = vrot.slane %v3863, 6
        %v3929 = vrot.slane %v3928, 4
        %v3930 = vrot.slane %v3864, 6
        %v3931 = vsel %vm3899, %v3929, %v3930
        %s3932 = scalar_lea.vmem [#allocation16], 576
        %v3933 = vld [vmem:[%s3932] sm:$0xf]
        %v3934 = vld [vmem:[%s3932 + $0x4] sm:$0xf]
        %v3935 = vld [vmem:[%s3932 + $0x8] sm:$0xf]
        %v3936 = vld [vmem:[%s3932 + $0xc] sm:$0xf]
        %v3937 = vld [vmem:[%s3932 + $0x10] sm:$0xf]
        %v3938 = vld [vmem:[%s3932 + $0x14] sm:$0xf]
        %v3939 = vld [vmem:[%s3932 + $0x18] sm:$0xf]
        %v3940 = vld [vmem:[%s3932 + $0x1c] sm:$0xf]
        %v3941 = vld [vmem:[%s3932 + $0x20] sm:$0xf]
        %v3942 = vld [vmem:[%s3932 + $0x24] sm:$0xf]
        %v3943 = vld [vmem:[%s3932 + $0x28] sm:$0xf]
        %v3944 = vld [vmem:[%s3932 + $0x2c] sm:$0xf]
        %v3945 = vld [vmem:[%s3932 + $0x30] sm:$0xf]
        %v3946 = vld [vmem:[%s3932 + $0x34] sm:$0xf]
        %v3947 = vld [vmem:[%s3932 + $0x38] sm:$0xf]
        %v3948 = vld [vmem:[%s3932 + $0x3c] sm:$0xf]
        %v3957 = vrot.slane %v3865, 6
        %v3958 = vrot.slane %v3957, 4
        %v3959 = vrot.slane %v3866, 6
        %v3960 = vsel %vm3899, %v3958, %v3959
        %v3961 = vrot.slane %v3867, 6
        %v3962 = vrot.slane %v3961, 4
        %v3963 = vrot.slane %v3868, 6
        %v3964 = vsel %vm3899, %v3962, %v3963
        %v3965 = vrot.slane %v3869, 6
        %v3966 = vrot.slane %v3965, 4
        %v3967 = vrot.slane %v3870, 6
        %v3968 = vsel %vm3899, %v3966, %v3967
        %v3969 = vrot.slane %v3871, 6
        %v3970 = vrot.slane %v3969, 4
        %v3971 = vrot.slane %v3872, 6
        %v3972 = vsel %vm3899, %v3970, %v3971
        %s3973 = scalar_lea.vmem [#allocation16], 768
        %v3974 = vld [vmem:[%s3973] sm:$0xf]
        %v3975 = vld [vmem:[%s3973 + $0x4] sm:$0xf]
        %v3976 = vld [vmem:[%s3973 + $0x8] sm:$0xf]
        %v3977 = vld [vmem:[%s3973 + $0xc] sm:$0xf]
        %v3978 = vld [vmem:[%s3973 + $0x10] sm:$0xf]
        %v3979 = vld [vmem:[%s3973 + $0x14] sm:$0xf]
        %v3980 = vld [vmem:[%s3973 + $0x18] sm:$0xf]
        %v3981 = vld [vmem:[%s3973 + $0x1c] sm:$0xf]
        %v3982 = vld [vmem:[%s3973 + $0x20] sm:$0xf]
        %v3983 = vld [vmem:[%s3973 + $0x24] sm:$0xf]
        %v3984 = vld [vmem:[%s3973 + $0x28] sm:$0xf]
        %v3985 = vld [vmem:[%s3973 + $0x2c] sm:$0xf]
        %v3986 = vld [vmem:[%s3973 + $0x30] sm:$0xf]
        %v3987 = vld [vmem:[%s3973 + $0x34] sm:$0xf]
        %v3988 = vld [vmem:[%s3973 + $0x38] sm:$0xf]
        %v3989 = vld [vmem:[%s3973 + $0x3c] sm:$0xf]
        %v3990 = vunpack.c.l.b16 %v3919
        %v3991 = vunpack.c.l.b16 %v3923
        %v3992 = vunpack.c.l.b16 %v3927
        %v3993 = vunpack.c.l.b16 %v3931
        %v3994 = vunpack.c.l.b16 %v3960
        %v3995 = vunpack.c.l.b16 %v3964
        %v3996 = vunpack.c.l.b16 %v3968
        %v3997 = vunpack.c.l.b16 %v3972
        %v3998 = vpack.c.b16 %v3991, %v3990
        %v3999 = vpack.c.b16 %v3993, %v3992
        %v4000 = vpack.c.b16 %v3995, %v3994
        %v4001 = vpack.c.b16 %v3997, %v3996
        %v4022 = vunpack.c.l.b16 %v3974
        %v4023 = vunpack.c.l.b16 %v3975
        %v4024 = vunpack.c.l.b16 %v3976
        %v4025 = vunpack.c.l.b16 %v3977
        %v4026 = vunpack.c.l.b16 %v3978
        %v4027 = vunpack.c.l.b16 %v3979
        %v4028 = vunpack.c.l.b16 %v3980
        %v4029 = vunpack.c.l.b16 %v3981
        %v4030 = vunpack.c.l.b16 %v3982
        %v4031 = vunpack.c.l.b16 %v3983
        %v4032 = vunpack.c.l.b16 %v3984
        %v4033 = vunpack.c.l.b16 %v3985
        %v4034 = vunpack.c.l.b16 %v3986
        %v4035 = vunpack.c.l.b16 %v3987
        %v4036 = vunpack.c.l.b16 %v3988
        %v4037 = vunpack.c.l.b16 %v3989
        %v4038 = vpack.c.b16 %v4023, %v4022
        %v4039 = vpack.c.b16 %v4025, %v4024
        %v4040 = vpack.c.b16 %v4027, %v4026
        %v4041 = vpack.c.b16 %v4029, %v4028
        %v4042 = vpack.c.b16 %v4031, %v4030
        %v4043 = vpack.c.b16 %v4033, %v4032
        %v4044 = vpack.c.b16 %v4035, %v4034
        %v4045 = vpack.c.b16 %v4037, %v4036
        %4054 = vmatpush.bf16.msra.mxu0 %v4045
        %4055 = vmatpush.bf16.msra.mxu0 %v4044
        %4056 = vmatpush.bf16.msra.mxu0 %v4043
        %4057 = vmatpush.bf16.msra.mxu0 %v4042
        %4058 = vmatpush.bf16.msra.mxu0 %v4041
        %4059 = vmatpush.bf16.msra.mxu0 %v4040
        %4060 = vmatpush.bf16.msra.mxu0 %v4039
        %4061 = vmatpush.bf16.msra.mxu0 %v4038
        %4062 = vmatmul.bf16.gmra.mxu0 %v3998
        %v4063 = vpop.f32.mrf.mxu0
        %v4064 = vadd.f32 0.0, %v4063
        %v4065 = vpop.f32.mrf.mxu0
        %v4066 = vadd.f32 0.0, %v4065
        %4067 = vmatmul.bf16.gmra.mxu0 %v3999
        %v4068 = vpop.f32.mrf.mxu0
        %v4069 = vadd.f32 0.0, %v4068
        %v4070 = vpop.f32.mrf.mxu0
        %v4071 = vadd.f32 0.0, %v4070
        %4072 = vmatmul.bf16.gmra.mxu0 %v4000
        %v4073 = vpop.f32.mrf.mxu0
        %v4074 = vadd.f32 0.0, %v4073
        %v4075 = vpop.f32.mrf.mxu0
        %v4076 = vadd.f32 0.0, %v4075
        %4077 = vmatmul.bf16.gmra.mxu0 %v4001
        %v4078 = vpop.f32.mrf.mxu0
        %v4079 = vadd.f32 0.0, %v4078
        %v4080 = vpop.f32.mrf.mxu0
        %v4081 = vadd.f32 0.0, %v4080
        %4082 = vdwg.mxu0
        %v4083 = vunpack.c.l.b16 %v3903
        %v4084 = vunpack.c.l.b16 %v3907
        %v4085 = vunpack.c.l.b16 %v3911
        %v4086 = vunpack.c.l.b16 %v3915
        %v4087 = vpack.c.b16 %v4084, %v4083
        %v4088 = vpack.c.b16 %v4086, %v4085
        %v4107 = vunpack.c.l.b16 %v3933
        %v4108 = vunpack.c.l.b16 %v3934
        %v4109 = vunpack.c.l.b16 %v3935
        %v4110 = vunpack.c.l.b16 %v3936
        %v4111 = vunpack.c.l.b16 %v3937
        %v4112 = vunpack.c.l.b16 %v3938
        %v4113 = vunpack.c.l.b16 %v3939
        %v4114 = vunpack.c.l.b16 %v3940
        %v4115 = vunpack.c.l.b16 %v3941
        %v4116 = vunpack.c.l.b16 %v3942
        %v4117 = vunpack.c.l.b16 %v3943
        %v4118 = vunpack.c.l.b16 %v3944
        %v4119 = vunpack.c.l.b16 %v3945
        %v4120 = vunpack.c.l.b16 %v3946
        %v4121 = vunpack.c.l.b16 %v3947
        %v4122 = vunpack.c.l.b16 %v3948
        %v4123 = vpack.c.b16 %v4108, %v4107
        %v4124 = vpack.c.b16 %v4110, %v4109
        %v4125 = vpack.c.b16 %v4112, %v4111
        %v4126 = vpack.c.b16 %v4114, %v4113
        %v4127 = vpack.c.b16 %v4116, %v4115
        %v4128 = vpack.c.b16 %v4118, %v4117
        %v4129 = vpack.c.b16 %v4120, %v4119
        %v4130 = vpack.c.b16 %v4122, %v4121
        %4139 = vmatpush.bf16.msra.mxu0 %v4130
        %4140 = vmatpush.bf16.msra.mxu0 %v4129
        %4141 = vmatpush.bf16.msra.mxu0 %v4128
        %4142 = vmatpush.bf16.msra.mxu0 %v4127
        %4143 = vmatpush.bf16.msra.mxu0 %v4126
        %4144 = vmatpush.bf16.msra.mxu0 %v4125
        %4145 = vmatpush.bf16.msra.mxu0 %v4124
        %4146 = vmatpush.bf16.msra.mxu0 %v4123
        %4147 = vmatmul.bf16.gmra.mxu0 %v4087
        %v4148 = vpop.f32.mrf.mxu0
        %v4149 = vadd.f32 %v4064, %v4148
        %v4150 = vpop.f32.mrf.mxu0
        %v4151 = vadd.f32 %v4066, %v4150
        %4152 = vmatmul.bf16.gmra.mxu0 %v4088
        %v4153 = vpop.f32.mrf.mxu0
        %v4154 = vadd.f32 %v4069, %v4153
        %v4155 = vpop.f32.mrf.mxu0
        %v4156 = vadd.f32 %v4071, %v4155
        %4157 = vmatmul.bf16.gmra.mxu0 %v3998
        %v4158 = vpop.f32.mrf.mxu0
        %v4159 = vadd.f32 %v4074, %v4158
        %v4160 = vpop.f32.mrf.mxu0
        %v4161 = vadd.f32 %v4076, %v4160
        %4162 = vmatmul.bf16.gmra.mxu0 %v3999
        %v4163 = vpop.f32.mrf.mxu0
        %v4164 = vadd.f32 %v4079, %v4163
        %v4165 = vpop.f32.mrf.mxu0
        %v4166 = vadd.f32 %v4081, %v4165
        %4167 = vdwg.mxu0
        %v4176 = vrot.slane %v3873, 6
        %v4177 = vrot.slane %v4176, 4
        %v4178 = vrot.slane %v3874, 6
        %v4179 = vsel %vm3899, %v4177, %v4178
        %v4180 = vrot.slane %v3875, 6
        %v4181 = vrot.slane %v4180, 4
        %v4182 = vrot.slane %v3876, 6
        %v4183 = vsel %vm3899, %v4181, %v4182
        %v4184 = vrot.slane %v3877, 6
        %v4185 = vrot.slane %v4184, 4
        %v4186 = vrot.slane %v3878, 6
        %v4187 = vsel %vm3899, %v4185, %v4186
        %v4188 = vrot.slane %v3879, 6
        %v4189 = vrot.slane %v4188, 4
        %v4190 = vrot.slane %v3880, 6
        %v4191 = vsel %vm3899, %v4189, %v4190
        %s4192 = scalar_lea.vmem [#allocation16], 960
        %v4193 = vld [vmem:[%s4192] sm:$0xf]
        %v4194 = vld [vmem:[%s4192 + $0x4] sm:$0xf]
        %v4195 = vld [vmem:[%s4192 + $0x8] sm:$0xf]
        %v4196 = vld [vmem:[%s4192 + $0xc] sm:$0xf]
        %v4197 = vld [vmem:[%s4192 + $0x10] sm:$0xf]
        %v4198 = vld [vmem:[%s4192 + $0x14] sm:$0xf]
        %v4199 = vld [vmem:[%s4192 + $0x18] sm:$0xf]
        %v4200 = vld [vmem:[%s4192 + $0x1c] sm:$0xf]
        %v4201 = vld [vmem:[%s4192 + $0x20] sm:$0xf]
        %v4202 = vld [vmem:[%s4192 + $0x24] sm:$0xf]
        %v4203 = vld [vmem:[%s4192 + $0x28] sm:$0xf]
        %v4204 = vld [vmem:[%s4192 + $0x2c] sm:$0xf]
        %v4205 = vld [vmem:[%s4192 + $0x30] sm:$0xf]
        %v4206 = vld [vmem:[%s4192 + $0x34] sm:$0xf]
        %v4207 = vld [vmem:[%s4192 + $0x38] sm:$0xf]
        %v4208 = vld [vmem:[%s4192 + $0x3c] sm:$0xf]
        %v4209 = vunpack.c.l.b16 %v4179
        %v4210 = vunpack.c.l.b16 %v4183
        %v4211 = vunpack.c.l.b16 %v4187
        %v4212 = vunpack.c.l.b16 %v4191
        %v4213 = vpack.c.b16 %v4210, %v4209
        %v4214 = vpack.c.b16 %v4212, %v4211
        %v4233 = vunpack.c.l.b16 %v4193
        %v4234 = vunpack.c.l.b16 %v4194
        %v4235 = vunpack.c.l.b16 %v4195
        %v4236 = vunpack.c.l.b16 %v4196
        %v4237 = vunpack.c.l.b16 %v4197
        %v4238 = vunpack.c.l.b16 %v4198
        %v4239 = vunpack.c.l.b16 %v4199
        %v4240 = vunpack.c.l.b16 %v4200
        %v4241 = vunpack.c.l.b16 %v4201
        %v4242 = vunpack.c.l.b16 %v4202
        %v4243 = vunpack.c.l.b16 %v4203
        %v4244 = vunpack.c.l.b16 %v4204
        %v4245 = vunpack.c.l.b16 %v4205
        %v4246 = vunpack.c.l.b16 %v4206
        %v4247 = vunpack.c.l.b16 %v4207
        %v4248 = vunpack.c.l.b16 %v4208
        %v4249 = vpack.c.b16 %v4234, %v4233
        %v4250 = vpack.c.b16 %v4236, %v4235
        %v4251 = vpack.c.b16 %v4238, %v4237
        %v4252 = vpack.c.b16 %v4240, %v4239
        %v4253 = vpack.c.b16 %v4242, %v4241
        %v4254 = vpack.c.b16 %v4244, %v4243
        %v4255 = vpack.c.b16 %v4246, %v4245
        %v4256 = vpack.c.b16 %v4248, %v4247
        %4265 = vmatpush.bf16.msra.mxu0 %v4256
        %4266 = vmatpush.bf16.msra.mxu0 %v4255
        %4267 = vmatpush.bf16.msra.mxu0 %v4254
        %4268 = vmatpush.bf16.msra.mxu0 %v4253
        %4269 = vmatpush.bf16.msra.mxu0 %v4252
        %4270 = vmatpush.bf16.msra.mxu0 %v4251
        %4271 = vmatpush.bf16.msra.mxu0 %v4250
        %4272 = vmatpush.bf16.msra.mxu0 %v4249
        %4273 = vmatmul.bf16.gmra.mxu0 %v4000
        %v4274 = vpop.f32.mrf.mxu0
        %v4275 = vadd.f32 0.0, %v4274
        %v4276 = vpop.f32.mrf.mxu0
        %v4277 = vadd.f32 0.0, %v4276
        %4278 = vmatmul.bf16.gmra.mxu0 %v4001
        %v4279 = vpop.f32.mrf.mxu0
        %v4280 = vadd.f32 0.0, %v4279
        %v4281 = vpop.f32.mrf.mxu0
        %v4282 = vadd.f32 0.0, %v4281
        %4283 = vmatmul.bf16.gmra.mxu0 %v4213
        %v4284 = vpop.f32.mrf.mxu0
        %v4285 = vadd.f32 0.0, %v4284
        %v4286 = vpop.f32.mrf.mxu0
        %v4287 = vadd.f32 0.0, %v4286
        %4288 = vmatmul.bf16.gmra.mxu0 %v4214
        %v4289 = vpop.f32.mrf.mxu0
        %v4290 = vadd.f32 0.0, %v4289
        %v4291 = vpop.f32.mrf.mxu0
        %v4292 = vadd.f32 0.0, %v4291
        %4293 = vdwg.mxu0
        %v4294 = vadd.f32 %v4149, %v4275
        %v4295 = vadd.f32 %v4151, %v4277
        %v4296 = vadd.f32 %v4154, %v4280
        %v4297 = vadd.f32 %v4156, %v4282
        %v4298 = vadd.f32 %v4159, %v4285
        %v4299 = vadd.f32 %v4161, %v4287
        %v4300 = vadd.f32 %v4164, %v4290
        %v4301 = vadd.f32 %v4166, %v4292
        %v4302 = vld [vmem:[#allocation3 + $0x48] sm:$0xf]
        %v4303 = vld [vmem:[#allocation3 + $0x58] sm:$0xf]
        %v4304 = vld [vmem:[#allocation3 + $0x68] sm:$0xf]
        %v4305 = vld [vmem:[#allocation3 + $0x78] sm:$0xf]
        %v4306 = vld [vmem:[#allocation3 + $0x88] sm:$0xf]
        %v4307 = vld [vmem:[#allocation3 + $0x98] sm:$0xf]
        %v4308 = vld [vmem:[#allocation3 + $0xa8] sm:$0xf]
        %v4309 = vld [vmem:[#allocation3 + $0xb8] sm:$0xf]
        %v4310 = vld [vmem:[#allocation3 + $0xc8] sm:$0xf]
        %v4311 = vld [vmem:[#allocation3 + $0xd8] sm:$0xf]
        %v4312 = vld [vmem:[#allocation3 + $0xe8] sm:$0xf]
        %v4313 = vld [vmem:[#allocation3 + $0xf8] sm:$0xf]
        %v4314 = vld [vmem:[#allocation3 + $0x108] sm:$0xf]
        %v4315 = vld [vmem:[#allocation3 + $0x118] sm:$0xf]
        %v4316 = vld [vmem:[#allocation3 + $0x128] sm:$0xf]
        %v4317 = vld [vmem:[#allocation3 + $0x138] sm:$0xf]
        %s4318 = scalar_lea.vmem [#allocation16], 640
        %v4319 = vld [vmem:[%s4318] sm:$0xf]
        %v4320 = vld [vmem:[%s4318 + $0x4] sm:$0xf]
        %v4321 = vld [vmem:[%s4318 + $0x8] sm:$0xf]
        %v4322 = vld [vmem:[%s4318 + $0xc] sm:$0xf]
        %v4323 = vld [vmem:[%s4318 + $0x10] sm:$0xf]
        %v4324 = vld [vmem:[%s4318 + $0x14] sm:$0xf]
        %v4325 = vld [vmem:[%s4318 + $0x18] sm:$0xf]
        %v4326 = vld [vmem:[%s4318 + $0x1c] sm:$0xf]
        %v4327 = vld [vmem:[%s4318 + $0x20] sm:$0xf]
        %v4328 = vld [vmem:[%s4318 + $0x24] sm:$0xf]
        %v4329 = vld [vmem:[%s4318 + $0x28] sm:$0xf]
        %v4330 = vld [vmem:[%s4318 + $0x2c] sm:$0xf]
        %v4331 = vld [vmem:[%s4318 + $0x30] sm:$0xf]
        %v4332 = vld [vmem:[%s4318 + $0x34] sm:$0xf]
        %v4333 = vld [vmem:[%s4318 + $0x38] sm:$0xf]
        %v4334 = vld [vmem:[%s4318 + $0x3c] sm:$0xf]
        %v4343 = vunpack.c.l.b16 %v4302
        %v4344 = vunpack.c.l.b16 %v4303
        %v4345 = vunpack.c.l.b16 %v4304
        %v4346 = vunpack.c.l.b16 %v4305
        %v4347 = vunpack.c.l.b16 %v4306
        %v4348 = vunpack.c.l.b16 %v4307
        %v4349 = vunpack.c.l.b16 %v4308
        %v4350 = vunpack.c.l.b16 %v4309
        %v4351 = vpack.c.b16 %v4344, %v4343
        %v4352 = vpack.c.b16 %v4346, %v4345
        %v4353 = vpack.c.b16 %v4348, %v4347
        %v4354 = vpack.c.b16 %v4350, %v4349
        %v4375 = vunpack.c.l.b16 %v4319
        %v4376 = vunpack.c.l.b16 %v4320
        %v4377 = vunpack.c.l.b16 %v4321
        %v4378 = vunpack.c.l.b16 %v4322
        %v4379 = vunpack.c.l.b16 %v4323
        %v4380 = vunpack.c.l.b16 %v4324
        %v4381 = vunpack.c.l.b16 %v4325
        %v4382 = vunpack.c.l.b16 %v4326
        %v4383 = vunpack.c.l.b16 %v4327
        %v4384 = vunpack.c.l.b16 %v4328
        %v4385 = vunpack.c.l.b16 %v4329
        %v4386 = vunpack.c.l.b16 %v4330
        %v4387 = vunpack.c.l.b16 %v4331
        %v4388 = vunpack.c.l.b16 %v4332
        %v4389 = vunpack.c.l.b16 %v4333
        %v4390 = vunpack.c.l.b16 %v4334
        %v4391 = vpack.c.b16 %v4376, %v4375
        %v4392 = vpack.c.b16 %v4378, %v4377
        %v4393 = vpack.c.b16 %v4380, %v4379
        %v4394 = vpack.c.b16 %v4382, %v4381
        %v4395 = vpack.c.b16 %v4384, %v4383
        %v4396 = vpack.c.b16 %v4386, %v4385
        %v4397 = vpack.c.b16 %v4388, %v4387
        %v4398 = vpack.c.b16 %v4390, %v4389
        %4407 = vmatpush.bf16.msra.mxu0 %v4398
        %4408 = vmatpush.bf16.msra.mxu0 %v4397
        %4409 = vmatpush.bf16.msra.mxu0 %v4396
        %4410 = vmatpush.bf16.msra.mxu0 %v4395
        %4411 = vmatpush.bf16.msra.mxu0 %v4394
        %4412 = vmatpush.bf16.msra.mxu0 %v4393
        %4413 = vmatpush.bf16.msra.mxu0 %v4392
        %4414 = vmatpush.bf16.msra.mxu0 %v4391
        %4415 = vmatmul.bf16.gmra.mxu0 %v4351
        %v4416 = vpop.f32.mrf.mxu0
        %v4417 = vadd.f32 0.0, %v4416
        %v4418 = vpop.f32.mrf.mxu0
        %v4419 = vadd.f32 0.0, %v4418
        %4420 = vmatmul.bf16.gmra.mxu0 %v4352
        %v4421 = vpop.f32.mrf.mxu0
        %v4422 = vadd.f32 0.0, %v4421
        %v4423 = vpop.f32.mrf.mxu0
        %v4424 = vadd.f32 0.0, %v4423
        %4425 = vmatmul.bf16.gmra.mxu0 %v4353
        %v4426 = vpop.f32.mrf.mxu0
        %v4427 = vadd.f32 0.0, %v4426
        %v4428 = vpop.f32.mrf.mxu0
        %v4429 = vadd.f32 0.0, %v4428
        %4430 = vmatmul.bf16.gmra.mxu0 %v4354
        %v4431 = vpop.f32.mrf.mxu0
        %v4432 = vadd.f32 0.0, %v4431
        %v4433 = vpop.f32.mrf.mxu0
        %v4434 = vadd.f32 0.0, %v4433
        %4435 = vdwg.mxu0
        %v4436 = vadd.f32 %v4294, %v4417
        %v4437 = vadd.f32 %v4295, %v4419
        %v4438 = vadd.f32 %v4296, %v4422
        %v4439 = vadd.f32 %v4297, %v4424
        %v4440 = vadd.f32 %v4298, %v4427
        %v4441 = vadd.f32 %v4299, %v4429
        %v4442 = vadd.f32 %v4300, %v4432
        %v4443 = vadd.f32 %v4301, %v4434
        %s4444 = scalar_lea.vmem [#allocation16], 832
        %v4445 = vld [vmem:[%s4444] sm:$0xf]
        %v4446 = vld [vmem:[%s4444 + $0x4] sm:$0xf]
        %v4447 = vld [vmem:[%s4444 + $0x8] sm:$0xf]
        %v4448 = vld [vmem:[%s4444 + $0xc] sm:$0xf]
        %v4449 = vld [vmem:[%s4444 + $0x10] sm:$0xf]
        %v4450 = vld [vmem:[%s4444 + $0x14] sm:$0xf]
        %v4451 = vld [vmem:[%s4444 + $0x18] sm:$0xf]
        %v4452 = vld [vmem:[%s4444 + $0x1c] sm:$0xf]
        %v4453 = vld [vmem:[%s4444 + $0x20] sm:$0xf]
        %v4454 = vld [vmem:[%s4444 + $0x24] sm:$0xf]
        %v4455 = vld [vmem:[%s4444 + $0x28] sm:$0xf]
        %v4456 = vld [vmem:[%s4444 + $0x2c] sm:$0xf]
        %v4457 = vld [vmem:[%s4444 + $0x30] sm:$0xf]
        %v4458 = vld [vmem:[%s4444 + $0x34] sm:$0xf]
        %v4459 = vld [vmem:[%s4444 + $0x38] sm:$0xf]
        %v4460 = vld [vmem:[%s4444 + $0x3c] sm:$0xf]
        %v4465 = vunpack.c.l.b16 %v4310
        %v4466 = vunpack.c.l.b16 %v4311
        %v4467 = vunpack.c.l.b16 %v4312
        %v4468 = vunpack.c.l.b16 %v4313
        %v4469 = vpack.c.b16 %v4466, %v4465
        %v4470 = vpack.c.b16 %v4468, %v4467
        %v4489 = vunpack.c.l.b16 %v4445
        %v4490 = vunpack.c.l.b16 %v4446
        %v4491 = vunpack.c.l.b16 %v4447
        %v4492 = vunpack.c.l.b16 %v4448
        %v4493 = vunpack.c.l.b16 %v4449
        %v4494 = vunpack.c.l.b16 %v4450
        %v4495 = vunpack.c.l.b16 %v4451
        %v4496 = vunpack.c.l.b16 %v4452
        %v4497 = vunpack.c.l.b16 %v4453
        %v4498 = vunpack.c.l.b16 %v4454
        %v4499 = vunpack.c.l.b16 %v4455
        %v4500 = vunpack.c.l.b16 %v4456
        %v4501 = vunpack.c.l.b16 %v4457
        %v4502 = vunpack.c.l.b16 %v4458
        %v4503 = vunpack.c.l.b16 %v4459
        %v4504 = vunpack.c.l.b16 %v4460
        %v4505 = vpack.c.b16 %v4490, %v4489
        %v4506 = vpack.c.b16 %v4492, %v4491
        %v4507 = vpack.c.b16 %v4494, %v4493
        %v4508 = vpack.c.b16 %v4496, %v4495
        %v4509 = vpack.c.b16 %v4498, %v4497
        %v4510 = vpack.c.b16 %v4500, %v4499
        %v4511 = vpack.c.b16 %v4502, %v4501
        %v4512 = vpack.c.b16 %v4504, %v4503
        %4521 = vmatpush.bf16.msra.mxu0 %v4512
        %4522 = vmatpush.bf16.msra.mxu0 %v4511
        %4523 = vmatpush.bf16.msra.mxu0 %v4510
        %4524 = vmatpush.bf16.msra.mxu0 %v4509
        %4525 = vmatpush.bf16.msra.mxu0 %v4508
        %4526 = vmatpush.bf16.msra.mxu0 %v4507
        %4527 = vmatpush.bf16.msra.mxu0 %v4506
        %4528 = vmatpush.bf16.msra.mxu0 %v4505
        %4529 = vmatmul.bf16.gmra.mxu0 %v4353
        %v4530 = vpop.f32.mrf.mxu0
        %v4531 = vadd.f32 0.0, %v4530
        %v4532 = vpop.f32.mrf.mxu0
        %v4533 = vadd.f32 0.0, %v4532
        %4534 = vmatmul.bf16.gmra.mxu0 %v4354
        %v4535 = vpop.f32.mrf.mxu0
        %v4536 = vadd.f32 0.0, %v4535
        %v4537 = vpop.f32.mrf.mxu0
        %v4538 = vadd.f32 0.0, %v4537
        %4539 = vmatmul.bf16.gmra.mxu0 %v4469
        %v4540 = vpop.f32.mrf.mxu0
        %v4541 = vadd.f32 0.0, %v4540
        %v4542 = vpop.f32.mrf.mxu0
        %v4543 = vadd.f32 0.0, %v4542
        %4544 = vmatmul.bf16.gmra.mxu0 %v4470
        %v4545 = vpop.f32.mrf.mxu0
        %v4546 = vadd.f32 0.0, %v4545
        %v4547 = vpop.f32.mrf.mxu0
        %v4548 = vadd.f32 0.0, %v4547
        %4549 = vdwg.mxu0
        %v4550 = vadd.f32 %v4436, %v4531
        %v4551 = vadd.f32 %v4437, %v4533
        %v4552 = vadd.f32 %v4438, %v4536
        %v4553 = vadd.f32 %v4439, %v4538
        %v4554 = vadd.f32 %v4440, %v4541
        %v4555 = vadd.f32 %v4441, %v4543
        %v4556 = vadd.f32 %v4442, %v4546
        %v4557 = vadd.f32 %v4443, %v4548
        %s4558 = scalar_lea.vmem [#allocation16], 1024
        %v4559 = vld [vmem:[%s4558] sm:$0xf]
        %v4560 = vld [vmem:[%s4558 + $0x4] sm:$0xf]
        %v4561 = vld [vmem:[%s4558 + $0x8] sm:$0xf]
        %v4562 = vld [vmem:[%s4558 + $0xc] sm:$0xf]
        %v4563 = vld [vmem:[%s4558 + $0x10] sm:$0xf]
        %v4564 = vld [vmem:[%s4558 + $0x14] sm:$0xf]
        %v4565 = vld [vmem:[%s4558 + $0x18] sm:$0xf]
        %v4566 = vld [vmem:[%s4558 + $0x1c] sm:$0xf]
        %v4567 = vld [vmem:[%s4558 + $0x20] sm:$0xf]
        %v4568 = vld [vmem:[%s4558 + $0x24] sm:$0xf]
        %v4569 = vld [vmem:[%s4558 + $0x28] sm:$0xf]
        %v4570 = vld [vmem:[%s4558 + $0x2c] sm:$0xf]
        %v4571 = vld [vmem:[%s4558 + $0x30] sm:$0xf]
        %v4572 = vld [vmem:[%s4558 + $0x34] sm:$0xf]
        %v4573 = vld [vmem:[%s4558 + $0x38] sm:$0xf]
        %v4574 = vld [vmem:[%s4558 + $0x3c] sm:$0xf]
        %v4579 = vunpack.c.l.b16 %v4314
        %v4580 = vunpack.c.l.b16 %v4315
        %v4581 = vunpack.c.l.b16 %v4316
        %v4582 = vunpack.c.l.b16 %v4317
        %v4583 = vpack.c.b16 %v4580, %v4579
        %v4584 = vpack.c.b16 %v4582, %v4581
        %v4603 = vunpack.c.l.b16 %v4559
        %v4604 = vunpack.c.l.b16 %v4560
        %v4605 = vunpack.c.l.b16 %v4561
        %v4606 = vunpack.c.l.b16 %v4562
        %v4607 = vunpack.c.l.b16 %v4563
        %v4608 = vunpack.c.l.b16 %v4564
        %v4609 = vunpack.c.l.b16 %v4565
        %v4610 = vunpack.c.l.b16 %v4566
        %v4611 = vunpack.c.l.b16 %v4567
        %v4612 = vunpack.c.l.b16 %v4568
        %v4613 = vunpack.c.l.b16 %v4569
        %v4614 = vunpack.c.l.b16 %v4570
        %v4615 = vunpack.c.l.b16 %v4571
        %v4616 = vunpack.c.l.b16 %v4572
        %v4617 = vunpack.c.l.b16 %v4573
        %v4618 = vunpack.c.l.b16 %v4574
        %v4619 = vpack.c.b16 %v4604, %v4603
        %v4620 = vpack.c.b16 %v4606, %v4605
        %v4621 = vpack.c.b16 %v4608, %v4607
        %v4622 = vpack.c.b16 %v4610, %v4609
        %v4623 = vpack.c.b16 %v4612, %v4611
        %v4624 = vpack.c.b16 %v4614, %v4613
        %v4625 = vpack.c.b16 %v4616, %v4615
        %v4626 = vpack.c.b16 %v4618, %v4617
        %4635 = vmatpush.bf16.msra.mxu0 %v4626
        %4636 = vmatpush.bf16.msra.mxu0 %v4625
        %4637 = vmatpush.bf16.msra.mxu0 %v4624
        %4638 = vmatpush.bf16.msra.mxu0 %v4623
        %4639 = vmatpush.bf16.msra.mxu0 %v4622
        %4640 = vmatpush.bf16.msra.mxu0 %v4621
        %4641 = vmatpush.bf16.msra.mxu0 %v4620
        %4642 = vmatpush.bf16.msra.mxu0 %v4619
        %4643 = vmatmul.bf16.gmra.mxu0 %v4469
        %v4644 = vpop.f32.mrf.mxu0
        %v4645 = vadd.f32 0.0, %v4644
        %v4646 = vpop.f32.mrf.mxu0
        %v4647 = vadd.f32 0.0, %v4646
        %4648 = vmatmul.bf16.gmra.mxu0 %v4470
        %v4649 = vpop.f32.mrf.mxu0
        %v4650 = vadd.f32 0.0, %v4649
        %v4651 = vpop.f32.mrf.mxu0
        %v4652 = vadd.f32 0.0, %v4651
        %4653 = vmatmul.bf16.gmra.mxu0 %v4583
        %v4654 = vpop.f32.mrf.mxu0
        %v4655 = vadd.f32 0.0, %v4654
        %v4656 = vpop.f32.mrf.mxu0
        %v4657 = vadd.f32 0.0, %v4656
        %4658 = vmatmul.bf16.gmra.mxu0 %v4584
        %v4659 = vpop.f32.mrf.mxu0
        %v4660 = vadd.f32 0.0, %v4659
        %v4661 = vpop.f32.mrf.mxu0
        %v4662 = vadd.f32 0.0, %v4661
        %4663 = vdwg.mxu0
        %v4664 = vadd.f32 %v4550, %v4645
        %v4665 = vadd.f32 %v4551, %v4647
        %v4666 = vadd.f32 %v4552, %v4650
        %v4667 = vadd.f32 %v4553, %v4652
        %v4668 = vadd.f32 %v4554, %v4655
        %v4669 = vadd.f32 %v4555, %v4657
        %v4670 = vadd.f32 %v4556, %v4660
        %v4671 = vadd.f32 %v4557, %v4662
        %v4672 = vld [vmem:[#allocation3 + $0x48] sm:$0xc]
        %v4673 = vld [vmem:[#allocation3 + $0x4c] sm:$0x3]
        %v4674 = vld [vmem:[#allocation3 + $0x58] sm:$0xc]
        %v4675 = vld [vmem:[#allocation3 + $0x5c] sm:$0x3]
        %v4676 = vld [vmem:[#allocation3 + $0x68] sm:$0xc]
        %v4677 = vld [vmem:[#allocation3 + $0x6c] sm:$0x3]
        %v4678 = vld [vmem:[#allocation3 + $0x78] sm:$0xc]
        %v4679 = vld [vmem:[#allocation3 + $0x7c] sm:$0x3]
        %v4680 = vld [vmem:[#allocation3 + $0x88] sm:$0xc]
        %v4681 = vld [vmem:[#allocation3 + $0x8c] sm:$0x3]
        %v4682 = vld [vmem:[#allocation3 + $0x98] sm:$0xc]
        %v4683 = vld [vmem:[#allocation3 + $0x9c] sm:$0x3]
        %v4684 = vld [vmem:[#allocation3 + $0xa8] sm:$0xc]
        %v4685 = vld [vmem:[#allocation3 + $0xac] sm:$0x3]
        %v4686 = vld [vmem:[#allocation3 + $0xb8] sm:$0xc]
        %v4687 = vld [vmem:[#allocation3 + $0xbc] sm:$0x3]
        %v4688 = vld [vmem:[#allocation3 + $0xc8] sm:$0xc]
        %v4689 = vld [vmem:[#allocation3 + $0xcc] sm:$0x3]
        %v4690 = vld [vmem:[#allocation3 + $0xd8] sm:$0xc]
        %v4691 = vld [vmem:[#allocation3 + $0xdc] sm:$0x3]
        %v4692 = vld [vmem:[#allocation3 + $0xe8] sm:$0xc]
        %v4693 = vld [vmem:[#allocation3 + $0xec] sm:$0x3]
        %v4694 = vld [vmem:[#allocation3 + $0xf8] sm:$0xc]
        %v4695 = vld [vmem:[#allocation3 + $0xfc] sm:$0x3]
        %v4696 = vld [vmem:[#allocation3 + $0x108] sm:$0xc]
        %v4697 = vld [vmem:[#allocation3 + $0x10c] sm:$0x3]
        %v4698 = vld [vmem:[#allocation3 + $0x118] sm:$0xc]
        %v4699 = vld [vmem:[#allocation3 + $0x11c] sm:$0x3]
        %v4700 = vld [vmem:[#allocation3 + $0x128] sm:$0xc]
        %v4701 = vld [vmem:[#allocation3 + $0x12c] sm:$0x3]
        %v4702 = vld [vmem:[#allocation3 + $0x138] sm:$0xc]
        %v4703 = vld [vmem:[#allocation3 + $0x13c] sm:$0x3]
        %v4720 = vrot.slane %v4672, 6
        %v4721 = vrot.slane %v4720, 4
        %v4722 = vrot.slane %v4673, 6
        %v4723 = vsel %vm3899, %v4721, %v4722
        %v4724 = vrot.slane %v4674, 6
        %v4725 = vrot.slane %v4724, 4
        %v4726 = vrot.slane %v4675, 6
        %v4727 = vsel %vm3899, %v4725, %v4726
        %v4728 = vrot.slane %v4676, 6
        %v4729 = vrot.slane %v4728, 4
        %v4730 = vrot.slane %v4677, 6
        %v4731 = vsel %vm3899, %v4729, %v4730
        %v4732 = vrot.slane %v4678, 6
        %v4733 = vrot.slane %v4732, 4
        %v4734 = vrot.slane %v4679, 6
        %v4735 = vsel %vm3899, %v4733, %v4734
        %v4736 = vrot.slane %v4680, 6
        %v4737 = vrot.slane %v4736, 4
        %v4738 = vrot.slane %v4681, 6
        %v4739 = vsel %vm3899, %v4737, %v4738
        %v4740 = vrot.slane %v4682, 6
        %v4741 = vrot.slane %v4740, 4
        %v4742 = vrot.slane %v4683, 6
        %v4743 = vsel %vm3899, %v4741, %v4742
        %v4744 = vrot.slane %v4684, 6
        %v4745 = vrot.slane %v4744, 4
        %v4746 = vrot.slane %v4685, 6
        %v4747 = vsel %vm3899, %v4745, %v4746
        %v4748 = vrot.slane %v4686, 6
        %v4749 = vrot.slane %v4748, 4
        %v4750 = vrot.slane %v4687, 6
        %v4751 = vsel %vm3899, %v4749, %v4750
        %s4752 = scalar_lea.vmem [#allocation16], 704
        %v4753 = vld [vmem:[%s4752] sm:$0xf]
        %v4754 = vld [vmem:[%s4752 + $0x4] sm:$0xf]
        %v4755 = vld [vmem:[%s4752 + $0x8] sm:$0xf]
        %v4756 = vld [vmem:[%s4752 + $0xc] sm:$0xf]
        %v4757 = vld [vmem:[%s4752 + $0x10] sm:$0xf]
        %v4758 = vld [vmem:[%s4752 + $0x14] sm:$0xf]
        %v4759 = vld [vmem:[%s4752 + $0x18] sm:$0xf]
        %v4760 = vld [vmem:[%s4752 + $0x1c] sm:$0xf]
        %v4761 = vld [vmem:[%s4752 + $0x20] sm:$0xf]
        %v4762 = vld [vmem:[%s4752 + $0x24] sm:$0xf]
        %v4763 = vld [vmem:[%s4752 + $0x28] sm:$0xf]
        %v4764 = vld [vmem:[%s4752 + $0x2c] sm:$0xf]
        %v4765 = vld [vmem:[%s4752 + $0x30] sm:$0xf]
        %v4766 = vld [vmem:[%s4752 + $0x34] sm:$0xf]
        %v4767 = vld [vmem:[%s4752 + $0x38] sm:$0xf]
        %v4768 = vld [vmem:[%s4752 + $0x3c] sm:$0xf]
        %v4769 = vunpack.c.l.b16 %v4723
        %v4770 = vunpack.c.l.b16 %v4727
        %v4771 = vunpack.c.l.b16 %v4731
        %v4772 = vunpack.c.l.b16 %v4735
        %v4773 = vunpack.c.l.b16 %v4739
        %v4774 = vunpack.c.l.b16 %v4743
        %v4775 = vunpack.c.l.b16 %v4747
        %v4776 = vunpack.c.l.b16 %v4751
        %v4777 = vpack.c.b16 %v4770, %v4769
        %v4778 = vpack.c.b16 %v4772, %v4771
        %v4779 = vpack.c.b16 %v4774, %v4773
        %v4780 = vpack.c.b16 %v4776, %v4775
        %v4801 = vunpack.c.l.b16 %v4753
        %v4802 = vunpack.c.l.b16 %v4754
        %v4803 = vunpack.c.l.b16 %v4755
        %v4804 = vunpack.c.l.b16 %v4756
        %v4805 = vunpack.c.l.b16 %v4757
        %v4806 = vunpack.c.l.b16 %v4758
        %v4807 = vunpack.c.l.b16 %v4759
        %v4808 = vunpack.c.l.b16 %v4760
        %v4809 = vunpack.c.l.b16 %v4761
        %v4810 = vunpack.c.l.b16 %v4762
        %v4811 = vunpack.c.l.b16 %v4763
        %v4812 = vunpack.c.l.b16 %v4764
        %v4813 = vunpack.c.l.b16 %v4765
        %v4814 = vunpack.c.l.b16 %v4766
        %v4815 = vunpack.c.l.b16 %v4767
        %v4816 = vunpack.c.l.b16 %v4768
        %v4817 = vpack.c.b16 %v4802, %v4801
        %v4818 = vpack.c.b16 %v4804, %v4803
        %v4819 = vpack.c.b16 %v4806, %v4805
        %v4820 = vpack.c.b16 %v4808, %v4807
        %v4821 = vpack.c.b16 %v4810, %v4809
        %v4822 = vpack.c.b16 %v4812, %v4811
        %v4823 = vpack.c.b16 %v4814, %v4813
        %v4824 = vpack.c.b16 %v4816, %v4815
        %4833 = vmatpush.bf16.msra.mxu0 %v4824
        %4834 = vmatpush.bf16.msra.mxu0 %v4823
        %4835 = vmatpush.bf16.msra.mxu0 %v4822
        %4836 = vmatpush.bf16.msra.mxu0 %v4821
        %4837 = vmatpush.bf16.msra.mxu0 %v4820
        %4838 = vmatpush.bf16.msra.mxu0 %v4819
        %4839 = vmatpush.bf16.msra.mxu0 %v4818
        %4840 = vmatpush.bf16.msra.mxu0 %v4817
        %4841 = vmatmul.bf16.gmra.mxu0 %v4777
        %v4842 = vpop.f32.mrf.mxu0
        %v4843 = vadd.f32 0.0, %v4842
        %v4844 = vpop.f32.mrf.mxu0
        %v4845 = vadd.f32 0.0, %v4844
        %4846 = vmatmul.bf16.gmra.mxu0 %v4778
        %v4847 = vpop.f32.mrf.mxu0
        %v4848 = vadd.f32 0.0, %v4847
        %v4849 = vpop.f32.mrf.mxu0
        %v4850 = vadd.f32 0.0, %v4849
        %4851 = vmatmul.bf16.gmra.mxu0 %v4779
        %v4852 = vpop.f32.mrf.mxu0
        %v4853 = vadd.f32 0.0, %v4852
        %v4854 = vpop.f32.mrf.mxu0
        %v4855 = vadd.f32 0.0, %v4854
        %4856 = vmatmul.bf16.gmra.mxu0 %v4780
        %v4857 = vpop.f32.mrf.mxu0
        %v4858 = vadd.f32 0.0, %v4857
        %v4859 = vpop.f32.mrf.mxu0
        %v4860 = vadd.f32 0.0, %v4859
        %4861 = vdwg.mxu0
        %v4862 = vadd.f32 %v4664, %v4843
        %v4863 = vadd.f32 %v4665, %v4845
        %v4864 = vadd.f32 %v4666, %v4848
        %v4865 = vadd.f32 %v4667, %v4850
        %v4866 = vadd.f32 %v4668, %v4853
        %v4867 = vadd.f32 %v4669, %v4855
        %v4868 = vadd.f32 %v4670, %v4858
        %v4869 = vadd.f32 %v4671, %v4860
        %v4878 = vrot.slane %v4688, 6
        %v4879 = vrot.slane %v4878, 4
        %v4880 = vrot.slane %v4689, 6
        %v4881 = vsel %vm3899, %v4879, %v4880
        %v4882 = vrot.slane %v4690, 6
        %v4883 = vrot.slane %v4882, 4
        %v4884 = vrot.slane %v4691, 6
        %v4885 = vsel %vm3899, %v4883, %v4884
        %v4886 = vrot.slane %v4692, 6
        %v4887 = vrot.slane %v4886, 4
        %v4888 = vrot.slane %v4693, 6
        %v4889 = vsel %vm3899, %v4887, %v4888
        %v4890 = vrot.slane %v4694, 6
        %v4891 = vrot.slane %v4890, 4
        %v4892 = vrot.slane %v4695, 6
        %v4893 = vsel %vm3899, %v4891, %v4892
        %s4894 = scalar_lea.vmem [#allocation16], 896
        %v4895 = vld [vmem:[%s4894] sm:$0xf]
        %v4896 = vld [vmem:[%s4894 + $0x4] sm:$0xf]
        %v4897 = vld [vmem:[%s4894 + $0x8] sm:$0xf]
        %v4898 = vld [vmem:[%s4894 + $0xc] sm:$0xf]
        %v4899 = vld [vmem:[%s4894 + $0x10] sm:$0xf]
        %v4900 = vld [vmem:[%s4894 + $0x14] sm:$0xf]
        %v4901 = vld [vmem:[%s4894 + $0x18] sm:$0xf]
        %v4902 = vld [vmem:[%s4894 + $0x1c] sm:$0xf]
        %v4903 = vld [vmem:[%s4894 + $0x20] sm:$0xf]
        %v4904 = vld [vmem:[%s4894 + $0x24] sm:$0xf]
        %v4905 = vld [vmem:[%s4894 + $0x28] sm:$0xf]
        %v4906 = vld [vmem:[%s4894 + $0x2c] sm:$0xf]
        %v4907 = vld [vmem:[%s4894 + $0x30] sm:$0xf]
        %v4908 = vld [vmem:[%s4894 + $0x34] sm:$0xf]
        %v4909 = vld [vmem:[%s4894 + $0x38] sm:$0xf]
        %v4910 = vld [vmem:[%s4894 + $0x3c] sm:$0xf]
        %v4911 = vunpack.c.l.b16 %v4881
        %v4912 = vunpack.c.l.b16 %v4885
        %v4913 = vunpack.c.l.b16 %v4889
        %v4914 = vunpack.c.l.b16 %v4893
        %v4915 = vpack.c.b16 %v4912, %v4911
        %v4916 = vpack.c.b16 %v4914, %v4913
        %v4935 = vunpack.c.l.b16 %v4895
        %v4936 = vunpack.c.l.b16 %v4896
        %v4937 = vunpack.c.l.b16 %v4897
        %v4938 = vunpack.c.l.b16 %v4898
        %v4939 = vunpack.c.l.b16 %v4899
        %v4940 = vunpack.c.l.b16 %v4900
        %v4941 = vunpack.c.l.b16 %v4901
        %v4942 = vunpack.c.l.b16 %v4902
        %v4943 = vunpack.c.l.b16 %v4903
        %v4944 = vunpack.c.l.b16 %v4904
        %v4945 = vunpack.c.l.b16 %v4905
        %v4946 = vunpack.c.l.b16 %v4906
        %v4947 = vunpack.c.l.b16 %v4907
        %v4948 = vunpack.c.l.b16 %v4908
        %v4949 = vunpack.c.l.b16 %v4909
        %v4950 = vunpack.c.l.b16 %v4910
        %v4951 = vpack.c.b16 %v4936, %v4935
        %v4952 = vpack.c.b16 %v4938, %v4937
        %v4953 = vpack.c.b16 %v4940, %v4939
        %v4954 = vpack.c.b16 %v4942, %v4941
        %v4955 = vpack.c.b16 %v4944, %v4943
        %v4956 = vpack.c.b16 %v4946, %v4945
        %v4957 = vpack.c.b16 %v4948, %v4947
        %v4958 = vpack.c.b16 %v4950, %v4949
        %4967 = vmatpush.bf16.msra.mxu0 %v4958
        %4968 = vmatpush.bf16.msra.mxu0 %v4957
        %4969 = vmatpush.bf16.msra.mxu0 %v4956
        %4970 = vmatpush.bf16.msra.mxu0 %v4955
        %4971 = vmatpush.bf16.msra.mxu0 %v4954
        %4972 = vmatpush.bf16.msra.mxu0 %v4953
        %4973 = vmatpush.bf16.msra.mxu0 %v4952
        %4974 = vmatpush.bf16.msra.mxu0 %v4951
        %4975 = vmatmul.bf16.gmra.mxu0 %v4779
        %v4976 = vpop.f32.mrf.mxu0
        %v4977 = vadd.f32 0.0, %v4976
        %v4978 = vpop.f32.mrf.mxu0
        %v4979 = vadd.f32 0.0, %v4978
        %4980 = vmatmul.bf16.gmra.mxu0 %v4780
        %v4981 = vpop.f32.mrf.mxu0
        %v4982 = vadd.f32 0.0, %v4981
        %v4983 = vpop.f32.mrf.mxu0
        %v4984 = vadd.f32 0.0, %v4983
        %4985 = vmatmul.bf16.gmra.mxu0 %v4915
        %v4986 = vpop.f32.mrf.mxu0
        %v4987 = vadd.f32 0.0, %v4986
        %v4988 = vpop.f32.mrf.mxu0
        %v4989 = vadd.f32 0.0, %v4988
        %4990 = vmatmul.bf16.gmra.mxu0 %v4916
        %v4991 = vpop.f32.mrf.mxu0
        %v4992 = vadd.f32 0.0, %v4991
        %v4993 = vpop.f32.mrf.mxu0
        %v4994 = vadd.f32 0.0, %v4993
        %4995 = vdwg.mxu0
        %v4996 = vadd.f32 %v4862, %v4977
        %v4997 = vadd.f32 %v4863, %v4979
        %v4998 = vadd.f32 %v4864, %v4982
        %v4999 = vadd.f32 %v4865, %v4984
        %v5000 = vadd.f32 %v4866, %v4987
        %v5001 = vadd.f32 %v4867, %v4989
        %v5002 = vadd.f32 %v4868, %v4992
        %v5003 = vadd.f32 %v4869, %v4994
        %v5012 = vrot.slane %v4696, 6
        %v5013 = vrot.slane %v5012, 4
        %v5014 = vrot.slane %v4697, 6
        %v5015 = vsel %vm3899, %v5013, %v5014
        %v5016 = vrot.slane %v4698, 6
        %v5017 = vrot.slane %v5016, 4
        %v5018 = vrot.slane %v4699, 6
        %v5019 = vsel %vm3899, %v5017, %v5018
        %v5020 = vrot.slane %v4700, 6
        %v5021 = vrot.slane %v5020, 4
        %v5022 = vrot.slane %v4701, 6
        %v5023 = vsel %vm3899, %v5021, %v5022
        %v5024 = vrot.slane %v4702, 6
        %v5025 = vrot.slane %v5024, 4
        %v5026 = vrot.slane %v4703, 6
        %v5027 = vsel %vm3899, %v5025, %v5026
        %s5028 = scalar_lea.vmem [#allocation16], 1088
        %v5029 = vld [vmem:[%s5028] sm:$0xf]
        %v5030 = vld [vmem:[%s5028 + $0x4] sm:$0xf]
        %v5031 = vld [vmem:[%s5028 + $0x8] sm:$0xf]
        %v5032 = vld [vmem:[%s5028 + $0xc] sm:$0xf]
        %v5033 = vld [vmem:[%s5028 + $0x10] sm:$0xf]
        %v5034 = vld [vmem:[%s5028 + $0x14] sm:$0xf]
        %v5035 = vld [vmem:[%s5028 + $0x18] sm:$0xf]
        %v5036 = vld [vmem:[%s5028 + $0x1c] sm:$0xf]
        %v5037 = vld [vmem:[%s5028 + $0x20] sm:$0xf]
        %v5038 = vld [vmem:[%s5028 + $0x24] sm:$0xf]
        %v5039 = vld [vmem:[%s5028 + $0x28] sm:$0xf]
        %v5040 = vld [vmem:[%s5028 + $0x2c] sm:$0xf]
        %v5041 = vld [vmem:[%s5028 + $0x30] sm:$0xf]
        %v5042 = vld [vmem:[%s5028 + $0x34] sm:$0xf]
        %v5043 = vld [vmem:[%s5028 + $0x38] sm:$0xf]
        %v5044 = vld [vmem:[%s5028 + $0x3c] sm:$0xf]
        %v5045 = vunpack.c.l.b16 %v5015
        %v5046 = vunpack.c.l.b16 %v5019
        %v5047 = vunpack.c.l.b16 %v5023
        %v5048 = vunpack.c.l.b16 %v5027
        %v5049 = vpack.c.b16 %v5046, %v5045
        %v5050 = vpack.c.b16 %v5048, %v5047
        %v5069 = vunpack.c.l.b16 %v5029
        %v5070 = vunpack.c.l.b16 %v5030
        %v5071 = vunpack.c.l.b16 %v5031
        %v5072 = vunpack.c.l.b16 %v5032
        %v5073 = vunpack.c.l.b16 %v5033
        %v5074 = vunpack.c.l.b16 %v5034
        %v5075 = vunpack.c.l.b16 %v5035
        %v5076 = vunpack.c.l.b16 %v5036
        %v5077 = vunpack.c.l.b16 %v5037
        %v5078 = vunpack.c.l.b16 %v5038
        %v5079 = vunpack.c.l.b16 %v5039
        %v5080 = vunpack.c.l.b16 %v5040
        %v5081 = vunpack.c.l.b16 %v5041
        %v5082 = vunpack.c.l.b16 %v5042
        %v5083 = vunpack.c.l.b16 %v5043
        %v5084 = vunpack.c.l.b16 %v5044
        %v5085 = vpack.c.b16 %v5070, %v5069
        %v5086 = vpack.c.b16 %v5072, %v5071
        %v5087 = vpack.c.b16 %v5074, %v5073
        %v5088 = vpack.c.b16 %v5076, %v5075
        %v5089 = vpack.c.b16 %v5078, %v5077
        %v5090 = vpack.c.b16 %v5080, %v5079
        %v5091 = vpack.c.b16 %v5082, %v5081
        %v5092 = vpack.c.b16 %v5084, %v5083
        %5101 = vmatpush.bf16.msra.mxu0 %v5092
        %5102 = vmatpush.bf16.msra.mxu0 %v5091
        %5103 = vmatpush.bf16.msra.mxu0 %v5090
        %5104 = vmatpush.bf16.msra.mxu0 %v5089
        %5105 = vmatpush.bf16.msra.mxu0 %v5088
        %5106 = vmatpush.bf16.msra.mxu0 %v5087
        %5107 = vmatpush.bf16.msra.mxu0 %v5086
        %5108 = vmatpush.bf16.msra.mxu0 %v5085
        %5109 = vmatmul.bf16.gmra.mxu0 %v4915
        %v5110 = vpop.f32.mrf.mxu0
        %v5111 = vadd.f32 0.0, %v5110
        %v5112 = vpop.f32.mrf.mxu0
        %v5113 = vadd.f32 0.0, %v5112
        %5114 = vmatmul.bf16.gmra.mxu0 %v4916
        %v5115 = vpop.f32.mrf.mxu0
        %v5116 = vadd.f32 0.0, %v5115
        %v5117 = vpop.f32.mrf.mxu0
        %v5118 = vadd.f32 0.0, %v5117
        %5119 = vmatmul.bf16.gmra.mxu0 %v5049
        %v5120 = vpop.f32.mrf.mxu0
        %v5121 = vadd.f32 0.0, %v5120
        %v5122 = vpop.f32.mrf.mxu0
        %v5123 = vadd.f32 0.0, %v5122
        %5124 = vmatmul.bf16.gmra.mxu0 %v5050
        %v5125 = vpop.f32.mrf.mxu0
        %v5126 = vadd.f32 0.0, %v5125
        %v5127 = vpop.f32.mrf.mxu0
        %v5128 = vadd.f32 0.0, %v5127
        %5129 = vdwg.mxu0
        %v5130 = vadd.f32 %v4996, %v5111
        %v5131 = vadd.f32 %v4997, %v5113
        %v5132 = vadd.f32 %v4998, %v5116
        %v5133 = vadd.f32 %v4999, %v5118
        %v5134 = vadd.f32 %v5000, %v5121
        %v5135 = vadd.f32 %v5001, %v5123
        %v5136 = vadd.f32 %v5002, %v5126
        %v5137 = vadd.f32 %v5003, %v5128
        %v5139 = vperm.slane %v3848, 0
        %v5141 = vadd.f32 %v5130, %v5139
        %v5142 = vadd.f32 %v5131, %v5139
        %v5143 = vadd.f32 %v5132, %v5139
        %v5144 = vadd.f32 %v5133, %v5139
        %v5145 = vadd.f32 %v5134, %v5139
        %v5146 = vadd.f32 %v5135, %v5139
        %v5147 = vadd.f32 %v5136, %v5139
        %v5148 = vadd.f32 %v5137, %v5139
        %v5149 = vmax.f32 %v5141, 0.0
        %v5150 = vmax.f32 %v5142, 0.0
        %v5151 = vmax.f32 %v5143, 0.0
        %v5152 = vmax.f32 %v5144, 0.0
        %v5153 = vmax.f32 %v5145, 0.0
        %v5154 = vmax.f32 %v5146, 0.0
        %v5155 = vmax.f32 %v5147, 0.0
        %v5156 = vmax.f32 %v5148, 0.0
        %v5157 = vpack.c.bf16 %v5150, %v5149
        %v5158 = vpack.c.bf16 %v5152, %v5151
        %v5159 = vpack.c.bf16 %v5154, %v5153
        %v5160 = vpack.c.bf16 %v5156, %v5155
        %s5161 = scalar_lea.vmem [#allocation19], 64
        %v5162 = vld [vmem:[%s5161] sm:$0xf]
        %v5163 = vld [vmem:[%s5161 + $0x4] sm:$0xf]
        %v5164 = vld [vmem:[%s5161 + $0x8] sm:$0xf]
        %v5165 = vld [vmem:[%s5161 + $0xc] sm:$0xf]
        %v5166 = vld [vmem:[%s5161 + $0x10] sm:$0xf]
        %v5167 = vld [vmem:[%s5161 + $0x14] sm:$0xf]
        %v5168 = vld [vmem:[%s5161 + $0x18] sm:$0xf]
        %v5169 = vld [vmem:[%s5161 + $0x1c] sm:$0xf]
        %v5170 = vld [vmem:[%s5161 + $0x20] sm:$0xf]
        %v5171 = vld [vmem:[%s5161 + $0x24] sm:$0xf]
        %v5172 = vld [vmem:[%s5161 + $0x28] sm:$0xf]
        %v5173 = vld [vmem:[%s5161 + $0x2c] sm:$0xf]
        %v5174 = vld [vmem:[%s5161 + $0x30] sm:$0xf]
        %v5175 = vld [vmem:[%s5161 + $0x34] sm:$0xf]
        %v5176 = vld [vmem:[%s5161 + $0x38] sm:$0xf]
        %v5177 = vld [vmem:[%s5161 + $0x3c] sm:$0xf]
        %s5178 = scalar_lea.vmem [#allocation21], 1
        %v5179 = vld [vmem:[%s5178] sm:$0x1]
        %v5181 = vperm.slane %v5179, 0
        %v5199 = vunpack.c.l.b16 %v5162
        %v5200 = vunpack.c.l.b16 %v5163
        %v5201 = vunpack.c.l.b16 %v5164
        %v5202 = vunpack.c.l.b16 %v5165
        %v5203 = vunpack.c.l.b16 %v5166
        %v5204 = vunpack.c.l.b16 %v5167
        %v5205 = vunpack.c.l.b16 %v5168
        %v5206 = vunpack.c.l.b16 %v5169
        %v5207 = vunpack.c.l.b16 %v5170
        %v5208 = vunpack.c.l.b16 %v5171
        %v5209 = vunpack.c.l.b16 %v5172
        %v5210 = vunpack.c.l.b16 %v5173
        %v5211 = vunpack.c.l.b16 %v5174
        %v5212 = vunpack.c.l.b16 %v5175
        %v5213 = vunpack.c.l.b16 %v5176
        %v5214 = vunpack.c.l.b16 %v5177
        %v5215 = vpack.c.b16 %v5200, %v5199
        %v5216 = vpack.c.b16 %v5202, %v5201
        %v5217 = vpack.c.b16 %v5204, %v5203
        %v5218 = vpack.c.b16 %v5206, %v5205
        %v5219 = vpack.c.b16 %v5208, %v5207
        %v5220 = vpack.c.b16 %v5210, %v5209
        %v5221 = vpack.c.b16 %v5212, %v5211
        %v5222 = vpack.c.b16 %v5214, %v5213
        %5231 = vmatpush.bf16.msra.mxu0 %v5222
        %5232 = vmatpush.bf16.msra.mxu0 %v5221
        %5233 = vmatpush.bf16.msra.mxu0 %v5220
        %5234 = vmatpush.bf16.msra.mxu0 %v5219
        %5235 = vmatpush.bf16.msra.mxu0 %v5218
        %5236 = vmatpush.bf16.msra.mxu0 %v5217
        %5237 = vmatpush.bf16.msra.mxu0 %v5216
        %5238 = vmatpush.bf16.msra.mxu0 %v5215
        %5239 = vmatmul.bf16.gmra.mxu0 %v5157
        %v5240 = vpop.f32.mrf.mxu0
        %v5241 = vadd.f32 %v5181, %v5240
        %v5242 = vpop.f32.mrf.mxu0
        %v5243 = vadd.f32 %v5181, %v5242
        %5244 = vmatmul.bf16.gmra.mxu0 %v5158
        %v5245 = vpop.f32.mrf.mxu0
        %v5246 = vadd.f32 %v5181, %v5245
        %v5247 = vpop.f32.mrf.mxu0
        %v5248 = vadd.f32 %v5181, %v5247
        %5249 = vmatmul.bf16.gmra.mxu0 %v5159
        %v5250 = vpop.f32.mrf.mxu0
        %v5251 = vadd.f32 %v5181, %v5250
        %v5252 = vpop.f32.mrf.mxu0
        %v5253 = vadd.f32 %v5181, %v5252
        %5254 = vmatmul.bf16.gmra.mxu0 %v5160
        %v5255 = vpop.f32.mrf.mxu0
        %v5256 = vadd.f32 %v5181, %v5255
        %v5257 = vpop.f32.mrf.mxu0
        %v5258 = vadd.f32 %v5181, %v5257
        %5259 = vdwg.mxu0
        %v5260 = vmax.f32 %v5241, 0.0
        %v5261 = vmax.f32 %v5243, 0.0
        %v5262 = vmax.f32 %v5246, 0.0
        %v5263 = vmax.f32 %v5248, 0.0
        %v5264 = vmax.f32 %v5251, 0.0
        %v5265 = vmax.f32 %v5253, 0.0
        %v5266 = vmax.f32 %v5256, 0.0
        %v5267 = vmax.f32 %v5258, 0.0
        %v5268 = vld [vmem:[%s567] sm:$0xf]
        %v5269 = vld [vmem:[%s567 + $0x4] sm:$0xf]
        %v5270 = vld [vmem:[%s567 + $0x8] sm:$0xf]
        %v5271 = vld [vmem:[%s567 + $0xc] sm:$0xf]
        %v5272 = vld [vmem:[%s567 + $0x10] sm:$0xf]
        %v5273 = vld [vmem:[%s567 + $0x14] sm:$0xf]
        %v5274 = vld [vmem:[%s567 + $0x18] sm:$0xf]
        %v5275 = vld [vmem:[%s567 + $0x1c] sm:$0xf]
        %v5276 = vunpack.c.l.bf16 %v5268
        %v5277 = vunpack.c.l.bf16 %v5269
        %v5278 = vunpack.c.l.bf16 %v5270
        %v5279 = vunpack.c.l.bf16 %v5271
        %v5280 = vunpack.c.l.bf16 %v5272
        %v5281 = vunpack.c.l.bf16 %v5273
        %v5282 = vunpack.c.l.bf16 %v5274
        %v5283 = vunpack.c.l.bf16 %v5275
        %v5284 = vadd.f32 %v5260, %v5276
        %v5285 = vadd.f32 %v5261, %v5277
        %v5286 = vadd.f32 %v5262, %v5278
        %v5287 = vadd.f32 %v5263, %v5279
        %v5288 = vadd.f32 %v5264, %v5280
        %v5289 = vadd.f32 %v5265, %v5281
        %v5290 = vadd.f32 %v5266, %v5282
        %v5291 = vadd.f32 %v5267, %v5283
        %v5292 = vpack.c.bf16 %v5284, %v5284
        %v5293 = vpack.c.bf16 %v5285, %v5285
        %v5294 = vpack.c.bf16 %v5286, %v5286
        %v5295 = vpack.c.bf16 %v5287, %v5287
        %v5296 = vpack.c.bf16 %v5288, %v5288
        %v5297 = vpack.c.bf16 %v5289, %v5289
        %v5298 = vpack.c.bf16 %v5290, %v5290
        %v5299 = vpack.c.bf16 %v5291, %v5291
        %5300 = vst [vmem:[%s567] sm:$0xf] %v5292
        %5301 = vst [vmem:[%s567 + $0x4] sm:$0xf] %v5293
        %5302 = vst [vmem:[%s567 + $0x8] sm:$0xf] %v5294
        %5303 = vst [vmem:[%s567 + $0xc] sm:$0xf] %v5295
        %5304 = vst [vmem:[%s567 + $0x10] sm:$0xf] %v5296
        %5305 = vst [vmem:[%s567 + $0x14] sm:$0xf] %v5297
        %5306 = vst [vmem:[%s567 + $0x18] sm:$0xf] %v5298
        %5307 = vst [vmem:[%s567 + $0x1c] sm:$0xf] %v5299
        %v5308 = vld [vmem:[%s567] sm:$0xf]
        %v5309 = vld [vmem:[%s567 + $0x4] sm:$0xf]
        %v5310 = vld [vmem:[%s567 + $0x8] sm:$0xf]
        %v5311 = vld [vmem:[%s567 + $0xc] sm:$0xf]
        %v5312 = vld [vmem:[%s567 + $0x10] sm:$0xf]
        %v5313 = vld [vmem:[%s567 + $0x14] sm:$0xf]
        %v5314 = vld [vmem:[%s567 + $0x18] sm:$0xf]
        %v5315 = vld [vmem:[%s567 + $0x1c] sm:$0xf]
        %s5316 = scalar_lea.vmem [#allocation13], 128
        %v5317 = vld [vmem:[%s5316] sm:$0xf]
        %v5318 = vld [vmem:[%s5316 + $0x4] sm:$0xf]
        %v5319 = vld [vmem:[%s5316 + $0x8] sm:$0xf]
        %v5320 = vld [vmem:[%s5316 + $0xc] sm:$0xf]
        %v5321 = vld [vmem:[%s5316 + $0x10] sm:$0xf]
        %v5322 = vld [vmem:[%s5316 + $0x14] sm:$0xf]
        %v5323 = vld [vmem:[%s5316 + $0x18] sm:$0xf]
        %v5324 = vld [vmem:[%s5316 + $0x1c] sm:$0xf]
        %v5325 = vld [vmem:[%s5316 + $0x20] sm:$0xf]
        %v5326 = vld [vmem:[%s5316 + $0x24] sm:$0xf]
        %v5327 = vld [vmem:[%s5316 + $0x28] sm:$0xf]
        %v5328 = vld [vmem:[%s5316 + $0x2c] sm:$0xf]
        %v5329 = vld [vmem:[%s5316 + $0x30] sm:$0xf]
        %v5330 = vld [vmem:[%s5316 + $0x34] sm:$0xf]
        %v5331 = vld [vmem:[%s5316 + $0x38] sm:$0xf]
        %v5332 = vld [vmem:[%s5316 + $0x3c] sm:$0xf]
        %s5333 = scalar_lea.vmem [#allocation15], 2
        %v5334 = vld [vmem:[%s5333] sm:$0x1]
        %v5336 = vperm.slane %v5334, 0
        %v5346 = vunpack.c.l.b16 %v5308
        %v5347 = vunpack.c.l.b16 %v5309
        %v5348 = vunpack.c.l.b16 %v5310
        %v5349 = vunpack.c.l.b16 %v5311
        %v5350 = vunpack.c.l.b16 %v5312
        %v5351 = vunpack.c.l.b16 %v5313
        %v5352 = vunpack.c.l.b16 %v5314
        %v5353 = vunpack.c.l.b16 %v5315
        %v5354 = vpack.c.b16 %v5347, %v5346
        %v5355 = vpack.c.b16 %v5349, %v5348
        %v5356 = vpack.c.b16 %v5351, %v5350
        %v5357 = vpack.c.b16 %v5353, %v5352
        %v5378 = vunpack.c.l.b16 %v5317
        %v5379 = vunpack.c.l.b16 %v5318
        %v5380 = vunpack.c.l.b16 %v5319
        %v5381 = vunpack.c.l.b16 %v5320
        %v5382 = vunpack.c.l.b16 %v5321
        %v5383 = vunpack.c.l.b16 %v5322
        %v5384 = vunpack.c.l.b16 %v5323
        %v5385 = vunpack.c.l.b16 %v5324
        %v5386 = vunpack.c.l.b16 %v5325
        %v5387 = vunpack.c.l.b16 %v5326
        %v5388 = vunpack.c.l.b16 %v5327
        %v5389 = vunpack.c.l.b16 %v5328
        %v5390 = vunpack.c.l.b16 %v5329
        %v5391 = vunpack.c.l.b16 %v5330
        %v5392 = vunpack.c.l.b16 %v5331
        %v5393 = vunpack.c.l.b16 %v5332
        %v5394 = vpack.c.b16 %v5379, %v5378
        %v5395 = vpack.c.b16 %v5381, %v5380
        %v5396 = vpack.c.b16 %v5383, %v5382
        %v5397 = vpack.c.b16 %v5385, %v5384
        %v5398 = vpack.c.b16 %v5387, %v5386
        %v5399 = vpack.c.b16 %v5389, %v5388
        %v5400 = vpack.c.b16 %v5391, %v5390
        %v5401 = vpack.c.b16 %v5393, %v5392
        %5410 = vmatpush.bf16.msra.mxu0 %v5401
        %5411 = vmatpush.bf16.msra.mxu0 %v5400
        %5412 = vmatpush.bf16.msra.mxu0 %v5399
        %5413 = vmatpush.bf16.msra.mxu0 %v5398
        %5414 = vmatpush.bf16.msra.mxu0 %v5397
        %5415 = vmatpush.bf16.msra.mxu0 %v5396
        %5416 = vmatpush.bf16.msra.mxu0 %v5395
        %5417 = vmatpush.bf16.msra.mxu0 %v5394
        %5418 = vmatmul.bf16.gmra.mxu0 %v5354
        %v5419 = vpop.f32.mrf.mxu0
        %v5420 = vadd.f32 %v5336, %v5419
        %v5421 = vpop.f32.mrf.mxu0
        %v5422 = vadd.f32 %v5336, %v5421
        %5423 = vmatmul.bf16.gmra.mxu0 %v5355
        %v5424 = vpop.f32.mrf.mxu0
        %v5425 = vadd.f32 %v5336, %v5424
        %v5426 = vpop.f32.mrf.mxu0
        %v5427 = vadd.f32 %v5336, %v5426
        %5428 = vmatmul.bf16.gmra.mxu0 %v5356
        %v5429 = vpop.f32.mrf.mxu0
        %v5430 = vadd.f32 %v5336, %v5429
        %v5431 = vpop.f32.mrf.mxu0
        %v5432 = vadd.f32 %v5336, %v5431
        %5433 = vmatmul.bf16.gmra.mxu0 %v5357
        %v5434 = vpop.f32.mrf.mxu0
        %v5435 = vadd.f32 %v5336, %v5434
        %v5436 = vpop.f32.mrf.mxu0
        %v5437 = vadd.f32 %v5336, %v5436
        %5438 = vdwg.mxu0
        %v5439 = vmax.f32 %v5420, 0.0
        %v5440 = vmax.f32 %v5422, 0.0
        %v5441 = vmax.f32 %v5425, 0.0
        %v5442 = vmax.f32 %v5427, 0.0
        %v5443 = vmax.f32 %v5430, 0.0
        %v5444 = vmax.f32 %v5432, 0.0
        %v5445 = vmax.f32 %v5435, 0.0
        %v5446 = vmax.f32 %v5437, 0.0
        %v5447 = vpack.c.bf16 %v5439, %v5439
        %v5448 = vpack.c.bf16 %v5440, %v5440
        %v5449 = vpack.c.bf16 %v5441, %v5441
        %v5450 = vpack.c.bf16 %v5442, %v5442
        %v5451 = vpack.c.bf16 %v5443, %v5443
        %v5452 = vpack.c.bf16 %v5444, %v5444
        %v5453 = vpack.c.bf16 %v5445, %v5445
        %v5454 = vpack.c.bf16 %v5446, %v5446
        %5455 = vst [vmem:[%s691 + $0x8] sm:$0xf] %v5447
        %5456 = vst [vmem:[%s691 + $0x18] sm:$0xf] %v5448
        %5457 = vst [vmem:[%s691 + $0x28] sm:$0xf] %v5449
        %5458 = vst [vmem:[%s691 + $0x38] sm:$0xf] %v5450
        %5459 = vst [vmem:[%s691 + $0x48] sm:$0xf] %v5451
        %5460 = vst [vmem:[%s691 + $0x58] sm:$0xf] %v5452
        %5461 = vst [vmem:[%s691 + $0x68] sm:$0xf] %v5453
        %5462 = vst [vmem:[%s691 + $0x78] sm:$0xf] %v5454
        %s5463 = scalar_lea.vmem [#allocation18], 2
        %v5464 = vld [vmem:[%s5463] sm:$0x1]
        %v5465 = vld [vmem:[#allocation3 + $0x24] sm:$0xe]
        %v5466 = vld [vmem:[#allocation3 + $0x28] sm:$0x1]
        %v5467 = vld [vmem:[#allocation3 + $0x34] sm:$0xe]
        %v5468 = vld [vmem:[#allocation3 + $0x38] sm:$0x1]
        %v5469 = vld [vmem:[#allocation3 + $0x44] sm:$0xe]
        %v5470 = vld [vmem:[#allocation3 + $0x48] sm:$0x1]
        %v5471 = vld [vmem:[#allocation3 + $0x54] sm:$0xe]
        %v5472 = vld [vmem:[#allocation3 + $0x58] sm:$0x1]
        %v5473 = vld [vmem:[#allocation3 + $0x64] sm:$0xe]
        %v5474 = vld [vmem:[#allocation3 + $0x68] sm:$0x1]
        %v5475 = vld [vmem:[#allocation3 + $0x74] sm:$0xe]
        %v5476 = vld [vmem:[#allocation3 + $0x78] sm:$0x1]
        %v5477 = vld [vmem:[#allocation3 + $0x84] sm:$0xe]
        %v5478 = vld [vmem:[#allocation3 + $0x88] sm:$0x1]
        %v5479 = vld [vmem:[#allocation3 + $0x94] sm:$0xe]
        %v5480 = vld [vmem:[#allocation3 + $0x98] sm:$0x1]
        %v5481 = vld [vmem:[#allocation3 + $0xa4] sm:$0xe]
        %v5482 = vld [vmem:[#allocation3 + $0xa8] sm:$0x1]
        %v5483 = vld [vmem:[#allocation3 + $0xb4] sm:$0xe]
        %v5484 = vld [vmem:[#allocation3 + $0xb8] sm:$0x1]
        %v5485 = vld [vmem:[#allocation3 + $0xc4] sm:$0xe]
        %v5486 = vld [vmem:[#allocation3 + $0xc8] sm:$0x1]
        %v5487 = vld [vmem:[#allocation3 + $0xd4] sm:$0xe]
        %v5488 = vld [vmem:[#allocation3 + $0xd8] sm:$0x1]
        %v5489 = vld [vmem:[#allocation3 + $0xe4] sm:$0xe]
        %v5490 = vld [vmem:[#allocation3 + $0xe8] sm:$0x1]
        %v5491 = vld [vmem:[#allocation3 + $0xf4] sm:$0xe]
        %v5492 = vld [vmem:[#allocation3 + $0xf8] sm:$0x1]
        %v5493 = vld [vmem:[#allocation3 + $0x104] sm:$0xe]
        %v5494 = vld [vmem:[#allocation3 + $0x108] sm:$0x1]
        %v5495 = vld [vmem:[#allocation3 + $0x114] sm:$0xe]
        %v5496 = vld [vmem:[#allocation3 + $0x118] sm:$0x1]
        %v5497 = vld [vmem:[#allocation3 + $0x124] sm:$0xe]
        %v5498 = vld [vmem:[#allocation3 + $0x128] sm:$0x1]
        %v5499 = vld [vmem:[#allocation3 + $0x134] sm:$0xe]
        %v5500 = vld [vmem:[#allocation3 + $0x138] sm:$0x1]
        %v5501 = vld [vmem:[#allocation3 + $0x144] sm:$0xe]
        %v5502 = vld [vmem:[#allocation3 + $0x148] sm:$0x1]
        %v5503 = vld [vmem:[#allocation3 + $0x154] sm:$0xe]
        %v5504 = vld [vmem:[#allocation3 + $0x158] sm:$0x1]
        %v5521 = vrot.slane %v5465, 5
        %v5522 = vrot.slane %v5521, 4
        %v5523 = vrot.slane %v5466, 5
        %v5524 = vsel %vm3137, %v5522, %v5523
        %v5525 = vrot.slane %v5467, 5
        %v5526 = vrot.slane %v5525, 4
        %v5527 = vrot.slane %v5468, 5
        %v5528 = vsel %vm3137, %v5526, %v5527
        %v5529 = vrot.slane %v5469, 5
        %v5530 = vrot.slane %v5529, 4
        %v5531 = vrot.slane %v5470, 5
        %v5532 = vsel %vm3137, %v5530, %v5531
        %v5533 = vrot.slane %v5471, 5
        %v5534 = vrot.slane %v5533, 4
        %v5535 = vrot.slane %v5472, 5
        %v5536 = vsel %vm3137, %v5534, %v5535
        %v5537 = vrot.slane %v5473, 5
        %v5538 = vrot.slane %v5537, 4
        %v5539 = vrot.slane %v5474, 5
        %v5540 = vsel %vm3137, %v5538, %v5539
        %v5541 = vrot.slane %v5475, 5
        %v5542 = vrot.slane %v5541, 4
        %v5543 = vrot.slane %v5476, 5
        %v5544 = vsel %vm3137, %v5542, %v5543
        %v5545 = vrot.slane %v5477, 5
        %v5546 = vrot.slane %v5545, 4
        %v5547 = vrot.slane %v5478, 5
        %v5548 = vsel %vm3137, %v5546, %v5547
        %v5549 = vrot.slane %v5479, 5
        %v5550 = vrot.slane %v5549, 4
        %v5551 = vrot.slane %v5480, 5
        %v5552 = vsel %vm3137, %v5550, %v5551
        %s5553 = scalar_lea.vmem [#allocation16], 1152
        %v5554 = vld [vmem:[%s5553] sm:$0xf]
        %v5555 = vld [vmem:[%s5553 + $0x4] sm:$0xf]
        %v5556 = vld [vmem:[%s5553 + $0x8] sm:$0xf]
        %v5557 = vld [vmem:[%s5553 + $0xc] sm:$0xf]
        %v5558 = vld [vmem:[%s5553 + $0x10] sm:$0xf]
        %v5559 = vld [vmem:[%s5553 + $0x14] sm:$0xf]
        %v5560 = vld [vmem:[%s5553 + $0x18] sm:$0xf]
        %v5561 = vld [vmem:[%s5553 + $0x1c] sm:$0xf]
        %v5562 = vld [vmem:[%s5553 + $0x20] sm:$0xf]
        %v5563 = vld [vmem:[%s5553 + $0x24] sm:$0xf]
        %v5564 = vld [vmem:[%s5553 + $0x28] sm:$0xf]
        %v5565 = vld [vmem:[%s5553 + $0x2c] sm:$0xf]
        %v5566 = vld [vmem:[%s5553 + $0x30] sm:$0xf]
        %v5567 = vld [vmem:[%s5553 + $0x34] sm:$0xf]
        %v5568 = vld [vmem:[%s5553 + $0x38] sm:$0xf]
        %v5569 = vld [vmem:[%s5553 + $0x3c] sm:$0xf]
        %v5582 = vrot.slane %v5481, 5
        %v5583 = vrot.slane %v5582, 4
        %v5584 = vrot.slane %v5482, 5
        %v5585 = vsel %vm3137, %v5583, %v5584
        %v5586 = vrot.slane %v5483, 5
        %v5587 = vrot.slane %v5586, 4
        %v5588 = vrot.slane %v5484, 5
        %v5589 = vsel %vm3137, %v5587, %v5588
        %v5590 = vrot.slane %v5485, 5
        %v5591 = vrot.slane %v5590, 4
        %v5592 = vrot.slane %v5486, 5
        %v5593 = vsel %vm3137, %v5591, %v5592
        %v5594 = vrot.slane %v5487, 5
        %v5595 = vrot.slane %v5594, 4
        %v5596 = vrot.slane %v5488, 5
        %v5597 = vsel %vm3137, %v5595, %v5596
        %v5598 = vrot.slane %v5489, 5
        %v5599 = vrot.slane %v5598, 4
        %v5600 = vrot.slane %v5490, 5
        %v5601 = vsel %vm3137, %v5599, %v5600
        %v5602 = vrot.slane %v5491, 5
        %v5603 = vrot.slane %v5602, 4
        %v5604 = vrot.slane %v5492, 5
        %v5605 = vsel %vm3137, %v5603, %v5604
        %s5606 = scalar_lea.vmem [#allocation16], 1344
        %v5607 = vld [vmem:[%s5606] sm:$0xf]
        %v5608 = vld [vmem:[%s5606 + $0x4] sm:$0xf]
        %v5609 = vld [vmem:[%s5606 + $0x8] sm:$0xf]
        %v5610 = vld [vmem:[%s5606 + $0xc] sm:$0xf]
        %v5611 = vld [vmem:[%s5606 + $0x10] sm:$0xf]
        %v5612 = vld [vmem:[%s5606 + $0x14] sm:$0xf]
        %v5613 = vld [vmem:[%s5606 + $0x18] sm:$0xf]
        %v5614 = vld [vmem:[%s5606 + $0x1c] sm:$0xf]
        %v5615 = vld [vmem:[%s5606 + $0x20] sm:$0xf]
        %v5616 = vld [vmem:[%s5606 + $0x24] sm:$0xf]
        %v5617 = vld [vmem:[%s5606 + $0x28] sm:$0xf]
        %v5618 = vld [vmem:[%s5606 + $0x2c] sm:$0xf]
        %v5619 = vld [vmem:[%s5606 + $0x30] sm:$0xf]
        %v5620 = vld [vmem:[%s5606 + $0x34] sm:$0xf]
        %v5621 = vld [vmem:[%s5606 + $0x38] sm:$0xf]
        %v5622 = vld [vmem:[%s5606 + $0x3c] sm:$0xf]
        %v5623 = vunpack.c.l.b16 %v5548
        %v5624 = vunpack.c.l.b16 %v5552
        %v5625 = vunpack.c.l.b16 %v5585
        %v5626 = vunpack.c.l.b16 %v5589
        %v5627 = vunpack.c.l.b16 %v5593
        %v5628 = vunpack.c.l.b16 %v5597
        %v5629 = vunpack.c.l.b16 %v5601
        %v5630 = vunpack.c.l.b16 %v5605
        %v5631 = vpack.c.b16 %v5624, %v5623
        %v5632 = vpack.c.b16 %v5626, %v5625
        %v5633 = vpack.c.b16 %v5628, %v5627
        %v5634 = vpack.c.b16 %v5630, %v5629
        %v5655 = vunpack.c.l.b16 %v5607
        %v5656 = vunpack.c.l.b16 %v5608
        %v5657 = vunpack.c.l.b16 %v5609
        %v5658 = vunpack.c.l.b16 %v5610
        %v5659 = vunpack.c.l.b16 %v5611
        %v5660 = vunpack.c.l.b16 %v5612
        %v5661 = vunpack.c.l.b16 %v5613
        %v5662 = vunpack.c.l.b16 %v5614
        %v5663 = vunpack.c.l.b16 %v5615
        %v5664 = vunpack.c.l.b16 %v5616
        %v5665 = vunpack.c.l.b16 %v5617
        %v5666 = vunpack.c.l.b16 %v5618
        %v5667 = vunpack.c.l.b16 %v5619
        %v5668 = vunpack.c.l.b16 %v5620
        %v5669 = vunpack.c.l.b16 %v5621
        %v5670 = vunpack.c.l.b16 %v5622
        %v5671 = vpack.c.b16 %v5656, %v5655
        %v5672 = vpack.c.b16 %v5658, %v5657
        %v5673 = vpack.c.b16 %v5660, %v5659
        %v5674 = vpack.c.b16 %v5662, %v5661
        %v5675 = vpack.c.b16 %v5664, %v5663
        %v5676 = vpack.c.b16 %v5666, %v5665
        %v5677 = vpack.c.b16 %v5668, %v5667
        %v5678 = vpack.c.b16 %v5670, %v5669
        %5687 = vmatpush.bf16.msra.mxu0 %v5678
        %5688 = vmatpush.bf16.msra.mxu0 %v5677
        %5689 = vmatpush.bf16.msra.mxu0 %v5676
        %5690 = vmatpush.bf16.msra.mxu0 %v5675
        %5691 = vmatpush.bf16.msra.mxu0 %v5674
        %5692 = vmatpush.bf16.msra.mxu0 %v5673
        %5693 = vmatpush.bf16.msra.mxu0 %v5672
        %5694 = vmatpush.bf16.msra.mxu0 %v5671
        %5695 = vmatmul.bf16.gmra.mxu0 %v5631
        %v5696 = vpop.f32.mrf.mxu0
        %v5697 = vadd.f32 0.0, %v5696
        %v5698 = vpop.f32.mrf.mxu0
        %v5699 = vadd.f32 0.0, %v5698
        %5700 = vmatmul.bf16.gmra.mxu0 %v5632
        %v5701 = vpop.f32.mrf.mxu0
        %v5702 = vadd.f32 0.0, %v5701
        %v5703 = vpop.f32.mrf.mxu0
        %v5704 = vadd.f32 0.0, %v5703
        %5705 = vmatmul.bf16.gmra.mxu0 %v5633
        %v5706 = vpop.f32.mrf.mxu0
        %v5707 = vadd.f32 0.0, %v5706
        %v5708 = vpop.f32.mrf.mxu0
        %v5709 = vadd.f32 0.0, %v5708
        %5710 = vmatmul.bf16.gmra.mxu0 %v5634
        %v5711 = vpop.f32.mrf.mxu0
        %v5712 = vadd.f32 0.0, %v5711
        %v5713 = vpop.f32.mrf.mxu0
        %v5714 = vadd.f32 0.0, %v5713
        %5715 = vdwg.mxu0
        %v5716 = vunpack.c.l.b16 %v5524
        %v5717 = vunpack.c.l.b16 %v5528
        %v5718 = vunpack.c.l.b16 %v5532
        %v5719 = vunpack.c.l.b16 %v5536
        %v5720 = vunpack.c.l.b16 %v5540
        %v5721 = vunpack.c.l.b16 %v5544
        %v5722 = vpack.c.b16 %v5717, %v5716
        %v5723 = vpack.c.b16 %v5719, %v5718
        %v5724 = vpack.c.b16 %v5721, %v5720
        %v5744 = vunpack.c.l.b16 %v5554
        %v5745 = vunpack.c.l.b16 %v5555
        %v5746 = vunpack.c.l.b16 %v5556
        %v5747 = vunpack.c.l.b16 %v5557
        %v5748 = vunpack.c.l.b16 %v5558
        %v5749 = vunpack.c.l.b16 %v5559
        %v5750 = vunpack.c.l.b16 %v5560
        %v5751 = vunpack.c.l.b16 %v5561
        %v5752 = vunpack.c.l.b16 %v5562
        %v5753 = vunpack.c.l.b16 %v5563
        %v5754 = vunpack.c.l.b16 %v5564
        %v5755 = vunpack.c.l.b16 %v5565
        %v5756 = vunpack.c.l.b16 %v5566
        %v5757 = vunpack.c.l.b16 %v5567
        %v5758 = vunpack.c.l.b16 %v5568
        %v5759 = vunpack.c.l.b16 %v5569
        %v5760 = vpack.c.b16 %v5745, %v5744
        %v5761 = vpack.c.b16 %v5747, %v5746
        %v5762 = vpack.c.b16 %v5749, %v5748
        %v5763 = vpack.c.b16 %v5751, %v5750
        %v5764 = vpack.c.b16 %v5753, %v5752
        %v5765 = vpack.c.b16 %v5755, %v5754
        %v5766 = vpack.c.b16 %v5757, %v5756
        %v5767 = vpack.c.b16 %v5759, %v5758
        %5776 = vmatpush.bf16.msra.mxu0 %v5767
        %5777 = vmatpush.bf16.msra.mxu0 %v5766
        %5778 = vmatpush.bf16.msra.mxu0 %v5765
        %5779 = vmatpush.bf16.msra.mxu0 %v5764
        %5780 = vmatpush.bf16.msra.mxu0 %v5763
        %5781 = vmatpush.bf16.msra.mxu0 %v5762
        %5782 = vmatpush.bf16.msra.mxu0 %v5761
        %5783 = vmatpush.bf16.msra.mxu0 %v5760
        %5784 = vmatmul.bf16.gmra.mxu0 %v5722
        %v5785 = vpop.f32.mrf.mxu0
        %v5786 = vadd.f32 %v5697, %v5785
        %v5787 = vpop.f32.mrf.mxu0
        %v5788 = vadd.f32 %v5699, %v5787
        %5789 = vmatmul.bf16.gmra.mxu0 %v5723
        %v5790 = vpop.f32.mrf.mxu0
        %v5791 = vadd.f32 %v5702, %v5790
        %v5792 = vpop.f32.mrf.mxu0
        %v5793 = vadd.f32 %v5704, %v5792
        %5794 = vmatmul.bf16.gmra.mxu0 %v5724
        %v5795 = vpop.f32.mrf.mxu0
        %v5796 = vadd.f32 %v5707, %v5795
        %v5797 = vpop.f32.mrf.mxu0
        %v5798 = vadd.f32 %v5709, %v5797
        %5799 = vmatmul.bf16.gmra.mxu0 %v5631
        %v5800 = vpop.f32.mrf.mxu0
        %v5801 = vadd.f32 %v5712, %v5800
        %v5802 = vpop.f32.mrf.mxu0
        %v5803 = vadd.f32 %v5714, %v5802
        %5804 = vdwg.mxu0
        %v5817 = vrot.slane %v5493, 5
        %v5818 = vrot.slane %v5817, 4
        %v5819 = vrot.slane %v5494, 5
        %v5820 = vsel %vm3137, %v5818, %v5819
        %v5821 = vrot.slane %v5495, 5
        %v5822 = vrot.slane %v5821, 4
        %v5823 = vrot.slane %v5496, 5
        %v5824 = vsel %vm3137, %v5822, %v5823
        %v5825 = vrot.slane %v5497, 5
        %v5826 = vrot.slane %v5825, 4
        %v5827 = vrot.slane %v5498, 5
        %v5828 = vsel %vm3137, %v5826, %v5827
        %v5829 = vrot.slane %v5499, 5
        %v5830 = vrot.slane %v5829, 4
        %v5831 = vrot.slane %v5500, 5
        %v5832 = vsel %vm3137, %v5830, %v5831
        %v5833 = vrot.slane %v5501, 5
        %v5834 = vrot.slane %v5833, 4
        %v5835 = vrot.slane %v5502, 5
        %v5836 = vsel %vm3137, %v5834, %v5835
        %v5837 = vrot.slane %v5503, 5
        %v5838 = vrot.slane %v5837, 4
        %v5839 = vrot.slane %v5504, 5
        %v5840 = vsel %vm3137, %v5838, %v5839
        %s5841 = scalar_lea.vmem [#allocation16], 1536
        %v5842 = vld [vmem:[%s5841] sm:$0xf]
        %v5843 = vld [vmem:[%s5841 + $0x4] sm:$0xf]
        %v5844 = vld [vmem:[%s5841 + $0x8] sm:$0xf]
        %v5845 = vld [vmem:[%s5841 + $0xc] sm:$0xf]
        %v5846 = vld [vmem:[%s5841 + $0x10] sm:$0xf]
        %v5847 = vld [vmem:[%s5841 + $0x14] sm:$0xf]
        %v5848 = vld [vmem:[%s5841 + $0x18] sm:$0xf]
        %v5849 = vld [vmem:[%s5841 + $0x1c] sm:$0xf]
        %v5850 = vld [vmem:[%s5841 + $0x20] sm:$0xf]
        %v5851 = vld [vmem:[%s5841 + $0x24] sm:$0xf]
        %v5852 = vld [vmem:[%s5841 + $0x28] sm:$0xf]
        %v5853 = vld [vmem:[%s5841 + $0x2c] sm:$0xf]
        %v5854 = vld [vmem:[%s5841 + $0x30] sm:$0xf]
        %v5855 = vld [vmem:[%s5841 + $0x34] sm:$0xf]
        %v5856 = vld [vmem:[%s5841 + $0x38] sm:$0xf]
        %v5857 = vld [vmem:[%s5841 + $0x3c] sm:$0xf]
        %v5858 = vunpack.c.l.b16 %v5820
        %v5859 = vunpack.c.l.b16 %v5824
        %v5860 = vunpack.c.l.b16 %v5828
        %v5861 = vunpack.c.l.b16 %v5832
        %v5862 = vunpack.c.l.b16 %v5836
        %v5863 = vunpack.c.l.b16 %v5840
        %v5864 = vpack.c.b16 %v5859, %v5858
        %v5865 = vpack.c.b16 %v5861, %v5860
        %v5866 = vpack.c.b16 %v5863, %v5862
        %v5886 = vunpack.c.l.b16 %v5842
        %v5887 = vunpack.c.l.b16 %v5843
        %v5888 = vunpack.c.l.b16 %v5844
        %v5889 = vunpack.c.l.b16 %v5845
        %v5890 = vunpack.c.l.b16 %v5846
        %v5891 = vunpack.c.l.b16 %v5847
        %v5892 = vunpack.c.l.b16 %v5848
        %v5893 = vunpack.c.l.b16 %v5849
        %v5894 = vunpack.c.l.b16 %v5850
        %v5895 = vunpack.c.l.b16 %v5851
        %v5896 = vunpack.c.l.b16 %v5852
        %v5897 = vunpack.c.l.b16 %v5853
        %v5898 = vunpack.c.l.b16 %v5854
        %v5899 = vunpack.c.l.b16 %v5855
        %v5900 = vunpack.c.l.b16 %v5856
        %v5901 = vunpack.c.l.b16 %v5857
        %v5902 = vpack.c.b16 %v5887, %v5886
        %v5903 = vpack.c.b16 %v5889, %v5888
        %v5904 = vpack.c.b16 %v5891, %v5890
        %v5905 = vpack.c.b16 %v5893, %v5892
        %v5906 = vpack.c.b16 %v5895, %v5894
        %v5907 = vpack.c.b16 %v5897, %v5896
        %v5908 = vpack.c.b16 %v5899, %v5898
        %v5909 = vpack.c.b16 %v5901, %v5900
        %5918 = vmatpush.bf16.msra.mxu0 %v5909
        %5919 = vmatpush.bf16.msra.mxu0 %v5908
        %5920 = vmatpush.bf16.msra.mxu0 %v5907
        %5921 = vmatpush.bf16.msra.mxu0 %v5906
        %5922 = vmatpush.bf16.msra.mxu0 %v5905
        %5923 = vmatpush.bf16.msra.mxu0 %v5904
        %5924 = vmatpush.bf16.msra.mxu0 %v5903
        %5925 = vmatpush.bf16.msra.mxu0 %v5902
        %5926 = vmatmul.bf16.gmra.mxu0 %v5634
        %v5927 = vpop.f32.mrf.mxu0
        %v5928 = vadd.f32 0.0, %v5927
        %v5929 = vpop.f32.mrf.mxu0
        %v5930 = vadd.f32 0.0, %v5929
        %5931 = vmatmul.bf16.gmra.mxu0 %v5864
        %v5932 = vpop.f32.mrf.mxu0
        %v5933 = vadd.f32 0.0, %v5932
        %v5934 = vpop.f32.mrf.mxu0
        %v5935 = vadd.f32 0.0, %v5934
        %5936 = vmatmul.bf16.gmra.mxu0 %v5865
        %v5937 = vpop.f32.mrf.mxu0
        %v5938 = vadd.f32 0.0, %v5937
        %v5939 = vpop.f32.mrf.mxu0
        %v5940 = vadd.f32 0.0, %v5939
        %5941 = vmatmul.bf16.gmra.mxu0 %v5866
        %v5942 = vpop.f32.mrf.mxu0
        %v5943 = vadd.f32 0.0, %v5942
        %v5944 = vpop.f32.mrf.mxu0
        %v5945 = vadd.f32 0.0, %v5944
        %5946 = vdwg.mxu0
        %v5947 = vadd.f32 %v5786, %v5928
        %v5948 = vadd.f32 %v5788, %v5930
        %v5949 = vadd.f32 %v5791, %v5933
        %v5950 = vadd.f32 %v5793, %v5935
        %v5951 = vadd.f32 %v5796, %v5938
        %v5952 = vadd.f32 %v5798, %v5940
        %v5953 = vadd.f32 %v5801, %v5943
        %v5954 = vadd.f32 %v5803, %v5945
        %v5955 = vld [vmem:[#allocation3 + $0x28] sm:$0xf]
        %v5956 = vld [vmem:[#allocation3 + $0x38] sm:$0xf]
        %v5957 = vld [vmem:[#allocation3 + $0x48] sm:$0xf]
        %v5958 = vld [vmem:[#allocation3 + $0x58] sm:$0xf]
        %v5959 = vld [vmem:[#allocation3 + $0x68] sm:$0xf]
        %v5960 = vld [vmem:[#allocation3 + $0x78] sm:$0xf]
        %v5961 = vld [vmem:[#allocation3 + $0x88] sm:$0xf]
        %v5962 = vld [vmem:[#allocation3 + $0x98] sm:$0xf]
        %v5963 = vld [vmem:[#allocation3 + $0xa8] sm:$0xf]
        %v5964 = vld [vmem:[#allocation3 + $0xb8] sm:$0xf]
        %v5965 = vld [vmem:[#allocation3 + $0xc8] sm:$0xf]
        %v5966 = vld [vmem:[#allocation3 + $0xd8] sm:$0xf]
        %v5967 = vld [vmem:[#allocation3 + $0xe8] sm:$0xf]
        %v5968 = vld [vmem:[#allocation3 + $0xf8] sm:$0xf]
        %v5969 = vld [vmem:[#allocation3 + $0x108] sm:$0xf]
        %v5970 = vld [vmem:[#allocation3 + $0x118] sm:$0xf]
        %v5971 = vld [vmem:[#allocation3 + $0x128] sm:$0xf]
        %v5972 = vld [vmem:[#allocation3 + $0x138] sm:$0xf]
        %v5973 = vld [vmem:[#allocation3 + $0x148] sm:$0xf]
        %v5974 = vld [vmem:[#allocation3 + $0x158] sm:$0xf]
        %s5975 = scalar_lea.vmem [#allocation16], 1216
        %v5976 = vld [vmem:[%s5975] sm:$0xf]
        %v5977 = vld [vmem:[%s5975 + $0x4] sm:$0xf]
        %v5978 = vld [vmem:[%s5975 + $0x8] sm:$0xf]
        %v5979 = vld [vmem:[%s5975 + $0xc] sm:$0xf]
        %v5980 = vld [vmem:[%s5975 + $0x10] sm:$0xf]
        %v5981 = vld [vmem:[%s5975 + $0x14] sm:$0xf]
        %v5982 = vld [vmem:[%s5975 + $0x18] sm:$0xf]
        %v5983 = vld [vmem:[%s5975 + $0x1c] sm:$0xf]
        %v5984 = vld [vmem:[%s5975 + $0x20] sm:$0xf]
        %v5985 = vld [vmem:[%s5975 + $0x24] sm:$0xf]
        %v5986 = vld [vmem:[%s5975 + $0x28] sm:$0xf]
        %v5987 = vld [vmem:[%s5975 + $0x2c] sm:$0xf]
        %v5988 = vld [vmem:[%s5975 + $0x30] sm:$0xf]
        %v5989 = vld [vmem:[%s5975 + $0x34] sm:$0xf]
        %v5990 = vld [vmem:[%s5975 + $0x38] sm:$0xf]
        %v5991 = vld [vmem:[%s5975 + $0x3c] sm:$0xf]
        %v6000 = vunpack.c.l.b16 %v5955
        %v6001 = vunpack.c.l.b16 %v5956
        %v6002 = vunpack.c.l.b16 %v5957
        %v6003 = vunpack.c.l.b16 %v5958
        %v6004 = vunpack.c.l.b16 %v5959
        %v6005 = vunpack.c.l.b16 %v5960
        %v6006 = vunpack.c.l.b16 %v5961
        %v6007 = vunpack.c.l.b16 %v5962
        %v6008 = vpack.c.b16 %v6001, %v6000
        %v6009 = vpack.c.b16 %v6003, %v6002
        %v6010 = vpack.c.b16 %v6005, %v6004
        %v6011 = vpack.c.b16 %v6007, %v6006
        %v6032 = vunpack.c.l.b16 %v5976
        %v6033 = vunpack.c.l.b16 %v5977
        %v6034 = vunpack.c.l.b16 %v5978
        %v6035 = vunpack.c.l.b16 %v5979
        %v6036 = vunpack.c.l.b16 %v5980
        %v6037 = vunpack.c.l.b16 %v5981
        %v6038 = vunpack.c.l.b16 %v5982
        %v6039 = vunpack.c.l.b16 %v5983
        %v6040 = vunpack.c.l.b16 %v5984
        %v6041 = vunpack.c.l.b16 %v5985
        %v6042 = vunpack.c.l.b16 %v5986
        %v6043 = vunpack.c.l.b16 %v5987
        %v6044 = vunpack.c.l.b16 %v5988
        %v6045 = vunpack.c.l.b16 %v5989
        %v6046 = vunpack.c.l.b16 %v5990
        %v6047 = vunpack.c.l.b16 %v5991
        %v6048 = vpack.c.b16 %v6033, %v6032
        %v6049 = vpack.c.b16 %v6035, %v6034
        %v6050 = vpack.c.b16 %v6037, %v6036
        %v6051 = vpack.c.b16 %v6039, %v6038
        %v6052 = vpack.c.b16 %v6041, %v6040
        %v6053 = vpack.c.b16 %v6043, %v6042
        %v6054 = vpack.c.b16 %v6045, %v6044
        %v6055 = vpack.c.b16 %v6047, %v6046
        %6064 = vmatpush.bf16.msra.mxu0 %v6055
        %6065 = vmatpush.bf16.msra.mxu0 %v6054
        %6066 = vmatpush.bf16.msra.mxu0 %v6053
        %6067 = vmatpush.bf16.msra.mxu0 %v6052
        %6068 = vmatpush.bf16.msra.mxu0 %v6051
        %6069 = vmatpush.bf16.msra.mxu0 %v6050
        %6070 = vmatpush.bf16.msra.mxu0 %v6049
        %6071 = vmatpush.bf16.msra.mxu0 %v6048
        %6072 = vmatmul.bf16.gmra.mxu0 %v6008
        %v6073 = vpop.f32.mrf.mxu0
        %v6074 = vadd.f32 0.0, %v6073
        %v6075 = vpop.f32.mrf.mxu0
        %v6076 = vadd.f32 0.0, %v6075
        %6077 = vmatmul.bf16.gmra.mxu0 %v6009
        %v6078 = vpop.f32.mrf.mxu0
        %v6079 = vadd.f32 0.0, %v6078
        %v6080 = vpop.f32.mrf.mxu0
        %v6081 = vadd.f32 0.0, %v6080
        %6082 = vmatmul.bf16.gmra.mxu0 %v6010
        %v6083 = vpop.f32.mrf.mxu0
        %v6084 = vadd.f32 0.0, %v6083
        %v6085 = vpop.f32.mrf.mxu0
        %v6086 = vadd.f32 0.0, %v6085
        %6087 = vmatmul.bf16.gmra.mxu0 %v6011
        %v6088 = vpop.f32.mrf.mxu0
        %v6089 = vadd.f32 0.0, %v6088
        %v6090 = vpop.f32.mrf.mxu0
        %v6091 = vadd.f32 0.0, %v6090
        %6092 = vdwg.mxu0
        %v6093 = vadd.f32 %v5947, %v6074
        %v6094 = vadd.f32 %v5948, %v6076
        %v6095 = vadd.f32 %v5949, %v6079
        %v6096 = vadd.f32 %v5950, %v6081
        %v6097 = vadd.f32 %v5951, %v6084
        %v6098 = vadd.f32 %v5952, %v6086
        %v6099 = vadd.f32 %v5953, %v6089
        %v6100 = vadd.f32 %v5954, %v6091
        %s6101 = scalar_lea.vmem [#allocation16], 1408
        %v6102 = vld [vmem:[%s6101] sm:$0xf]
        %v6103 = vld [vmem:[%s6101 + $0x4] sm:$0xf]
        %v6104 = vld [vmem:[%s6101 + $0x8] sm:$0xf]
        %v6105 = vld [vmem:[%s6101 + $0xc] sm:$0xf]
        %v6106 = vld [vmem:[%s6101 + $0x10] sm:$0xf]
        %v6107 = vld [vmem:[%s6101 + $0x14] sm:$0xf]
        %v6108 = vld [vmem:[%s6101 + $0x18] sm:$0xf]
        %v6109 = vld [vmem:[%s6101 + $0x1c] sm:$0xf]
        %v6110 = vld [vmem:[%s6101 + $0x20] sm:$0xf]
        %v6111 = vld [vmem:[%s6101 + $0x24] sm:$0xf]
        %v6112 = vld [vmem:[%s6101 + $0x28] sm:$0xf]
        %v6113 = vld [vmem:[%s6101 + $0x2c] sm:$0xf]
        %v6114 = vld [vmem:[%s6101 + $0x30] sm:$0xf]
        %v6115 = vld [vmem:[%s6101 + $0x34] sm:$0xf]
        %v6116 = vld [vmem:[%s6101 + $0x38] sm:$0xf]
        %v6117 = vld [vmem:[%s6101 + $0x3c] sm:$0xf]
        %v6124 = vunpack.c.l.b16 %v5963
        %v6125 = vunpack.c.l.b16 %v5964
        %v6126 = vunpack.c.l.b16 %v5965
        %v6127 = vunpack.c.l.b16 %v5966
        %v6128 = vunpack.c.l.b16 %v5967
        %v6129 = vunpack.c.l.b16 %v5968
        %v6130 = vpack.c.b16 %v6125, %v6124
        %v6131 = vpack.c.b16 %v6127, %v6126
        %v6132 = vpack.c.b16 %v6129, %v6128
        %v6152 = vunpack.c.l.b16 %v6102
        %v6153 = vunpack.c.l.b16 %v6103
        %v6154 = vunpack.c.l.b16 %v6104
        %v6155 = vunpack.c.l.b16 %v6105
        %v6156 = vunpack.c.l.b16 %v6106
        %v6157 = vunpack.c.l.b16 %v6107
        %v6158 = vunpack.c.l.b16 %v6108
        %v6159 = vunpack.c.l.b16 %v6109
        %v6160 = vunpack.c.l.b16 %v6110
        %v6161 = vunpack.c.l.b16 %v6111
        %v6162 = vunpack.c.l.b16 %v6112
        %v6163 = vunpack.c.l.b16 %v6113
        %v6164 = vunpack.c.l.b16 %v6114
        %v6165 = vunpack.c.l.b16 %v6115
        %v6166 = vunpack.c.l.b16 %v6116
        %v6167 = vunpack.c.l.b16 %v6117
        %v6168 = vpack.c.b16 %v6153, %v6152
        %v6169 = vpack.c.b16 %v6155, %v6154
        %v6170 = vpack.c.b16 %v6157, %v6156
        %v6171 = vpack.c.b16 %v6159, %v6158
        %v6172 = vpack.c.b16 %v6161, %v6160
        %v6173 = vpack.c.b16 %v6163, %v6162
        %v6174 = vpack.c.b16 %v6165, %v6164
        %v6175 = vpack.c.b16 %v6167, %v6166
        %6184 = vmatpush.bf16.msra.mxu0 %v6175
        %6185 = vmatpush.bf16.msra.mxu0 %v6174
        %6186 = vmatpush.bf16.msra.mxu0 %v6173
        %6187 = vmatpush.bf16.msra.mxu0 %v6172
        %6188 = vmatpush.bf16.msra.mxu0 %v6171
        %6189 = vmatpush.bf16.msra.mxu0 %v6170
        %6190 = vmatpush.bf16.msra.mxu0 %v6169
        %6191 = vmatpush.bf16.msra.mxu0 %v6168
        %6192 = vmatmul.bf16.gmra.mxu0 %v6011
        %v6193 = vpop.f32.mrf.mxu0
        %v6194 = vadd.f32 0.0, %v6193
        %v6195 = vpop.f32.mrf.mxu0
        %v6196 = vadd.f32 0.0, %v6195
        %6197 = vmatmul.bf16.gmra.mxu0 %v6130
        %v6198 = vpop.f32.mrf.mxu0
        %v6199 = vadd.f32 0.0, %v6198
        %v6200 = vpop.f32.mrf.mxu0
        %v6201 = vadd.f32 0.0, %v6200
        %6202 = vmatmul.bf16.gmra.mxu0 %v6131
        %v6203 = vpop.f32.mrf.mxu0
        %v6204 = vadd.f32 0.0, %v6203
        %v6205 = vpop.f32.mrf.mxu0
        %v6206 = vadd.f32 0.0, %v6205
        %6207 = vmatmul.bf16.gmra.mxu0 %v6132
        %v6208 = vpop.f32.mrf.mxu0
        %v6209 = vadd.f32 0.0, %v6208
        %v6210 = vpop.f32.mrf.mxu0
        %v6211 = vadd.f32 0.0, %v6210
        %6212 = vdwg.mxu0
        %v6213 = vadd.f32 %v6093, %v6194
        %v6214 = vadd.f32 %v6094, %v6196
        %v6215 = vadd.f32 %v6095, %v6199
        %v6216 = vadd.f32 %v6096, %v6201
        %v6217 = vadd.f32 %v6097, %v6204
        %v6218 = vadd.f32 %v6098, %v6206
        %v6219 = vadd.f32 %v6099, %v6209
        %v6220 = vadd.f32 %v6100, %v6211
        %s6221 = scalar_lea.vmem [#allocation16], 1600
        %v6222 = vld [vmem:[%s6221] sm:$0xf]
        %v6223 = vld [vmem:[%s6221 + $0x4] sm:$0xf]
        %v6224 = vld [vmem:[%s6221 + $0x8] sm:$0xf]
        %v6225 = vld [vmem:[%s6221 + $0xc] sm:$0xf]
        %v6226 = vld [vmem:[%s6221 + $0x10] sm:$0xf]
        %v6227 = vld [vmem:[%s6221 + $0x14] sm:$0xf]
        %v6228 = vld [vmem:[%s6221 + $0x18] sm:$0xf]
        %v6229 = vld [vmem:[%s6221 + $0x1c] sm:$0xf]
        %v6230 = vld [vmem:[%s6221 + $0x20] sm:$0xf]
        %v6231 = vld [vmem:[%s6221 + $0x24] sm:$0xf]
        %v6232 = vld [vmem:[%s6221 + $0x28] sm:$0xf]
        %v6233 = vld [vmem:[%s6221 + $0x2c] sm:$0xf]
        %v6234 = vld [vmem:[%s6221 + $0x30] sm:$0xf]
        %v6235 = vld [vmem:[%s6221 + $0x34] sm:$0xf]
        %v6236 = vld [vmem:[%s6221 + $0x38] sm:$0xf]
        %v6237 = vld [vmem:[%s6221 + $0x3c] sm:$0xf]
        %v6244 = vunpack.c.l.b16 %v5969
        %v6245 = vunpack.c.l.b16 %v5970
        %v6246 = vunpack.c.l.b16 %v5971
        %v6247 = vunpack.c.l.b16 %v5972
        %v6248 = vunpack.c.l.b16 %v5973
        %v6249 = vunpack.c.l.b16 %v5974
        %v6250 = vpack.c.b16 %v6245, %v6244
        %v6251 = vpack.c.b16 %v6247, %v6246
        %v6252 = vpack.c.b16 %v6249, %v6248
        %v6272 = vunpack.c.l.b16 %v6222
        %v6273 = vunpack.c.l.b16 %v6223
        %v6274 = vunpack.c.l.b16 %v6224
        %v6275 = vunpack.c.l.b16 %v6225
        %v6276 = vunpack.c.l.b16 %v6226
        %v6277 = vunpack.c.l.b16 %v6227
        %v6278 = vunpack.c.l.b16 %v6228
        %v6279 = vunpack.c.l.b16 %v6229
        %v6280 = vunpack.c.l.b16 %v6230
        %v6281 = vunpack.c.l.b16 %v6231
        %v6282 = vunpack.c.l.b16 %v6232
        %v6283 = vunpack.c.l.b16 %v6233
        %v6284 = vunpack.c.l.b16 %v6234
        %v6285 = vunpack.c.l.b16 %v6235
        %v6286 = vunpack.c.l.b16 %v6236
        %v6287 = vunpack.c.l.b16 %v6237
        %v6288 = vpack.c.b16 %v6273, %v6272
        %v6289 = vpack.c.b16 %v6275, %v6274
        %v6290 = vpack.c.b16 %v6277, %v6276
        %v6291 = vpack.c.b16 %v6279, %v6278
        %v6292 = vpack.c.b16 %v6281, %v6280
        %v6293 = vpack.c.b16 %v6283, %v6282
        %v6294 = vpack.c.b16 %v6285, %v6284
        %v6295 = vpack.c.b16 %v6287, %v6286
        %6304 = vmatpush.bf16.msra.mxu0 %v6295
        %6305 = vmatpush.bf16.msra.mxu0 %v6294
        %6306 = vmatpush.bf16.msra.mxu0 %v6293
        %6307 = vmatpush.bf16.msra.mxu0 %v6292
        %6308 = vmatpush.bf16.msra.mxu0 %v6291
        %6309 = vmatpush.bf16.msra.mxu0 %v6290
        %6310 = vmatpush.bf16.msra.mxu0 %v6289
        %6311 = vmatpush.bf16.msra.mxu0 %v6288
        %6312 = vmatmul.bf16.gmra.mxu0 %v6132
        %v6313 = vpop.f32.mrf.mxu0
        %v6314 = vadd.f32 0.0, %v6313
        %v6315 = vpop.f32.mrf.mxu0
        %v6316 = vadd.f32 0.0, %v6315
        %6317 = vmatmul.bf16.gmra.mxu0 %v6250
        %v6318 = vpop.f32.mrf.mxu0
        %v6319 = vadd.f32 0.0, %v6318
        %v6320 = vpop.f32.mrf.mxu0
        %v6321 = vadd.f32 0.0, %v6320
        %6322 = vmatmul.bf16.gmra.mxu0 %v6251
        %v6323 = vpop.f32.mrf.mxu0
        %v6324 = vadd.f32 0.0, %v6323
        %v6325 = vpop.f32.mrf.mxu0
        %v6326 = vadd.f32 0.0, %v6325
        %6327 = vmatmul.bf16.gmra.mxu0 %v6252
        %v6328 = vpop.f32.mrf.mxu0
        %v6329 = vadd.f32 0.0, %v6328
        %v6330 = vpop.f32.mrf.mxu0
        %v6331 = vadd.f32 0.0, %v6330
        %6332 = vdwg.mxu0
        %v6333 = vadd.f32 %v6213, %v6314
        %v6334 = vadd.f32 %v6214, %v6316
        %v6335 = vadd.f32 %v6215, %v6319
        %v6336 = vadd.f32 %v6216, %v6321
        %v6337 = vadd.f32 %v6217, %v6324
        %v6338 = vadd.f32 %v6218, %v6326
        %v6339 = vadd.f32 %v6219, %v6329
        %v6340 = vadd.f32 %v6220, %v6331
        %v6341 = vld [vmem:[#allocation3 + $0x28] sm:$0x8]
        %v6342 = vld [vmem:[#allocation3 + $0x2c] sm:$0x7]
        %v6343 = vld [vmem:[#allocation3 + $0x38] sm:$0x8]
        %v6344 = vld [vmem:[#allocation3 + $0x3c] sm:$0x7]
        %v6345 = vld [vmem:[#allocation3 + $0x48] sm:$0x8]
        %v6346 = vld [vmem:[#allocation3 + $0x4c] sm:$0x7]
        %v6347 = vld [vmem:[#allocation3 + $0x58] sm:$0x8]
        %v6348 = vld [vmem:[#allocation3 + $0x5c] sm:$0x7]
        %v6349 = vld [vmem:[#allocation3 + $0x68] sm:$0x8]
        %v6350 = vld [vmem:[#allocation3 + $0x6c] sm:$0x7]
        %v6351 = vld [vmem:[#allocation3 + $0x78] sm:$0x8]
        %v6352 = vld [vmem:[#allocation3 + $0x7c] sm:$0x7]
        %v6353 = vld [vmem:[#allocation3 + $0x88] sm:$0x8]
        %v6354 = vld [vmem:[#allocation3 + $0x8c] sm:$0x7]
        %v6355 = vld [vmem:[#allocation3 + $0x98] sm:$0x8]
        %v6356 = vld [vmem:[#allocation3 + $0x9c] sm:$0x7]
        %v6357 = vld [vmem:[#allocation3 + $0xa8] sm:$0x8]
        %v6358 = vld [vmem:[#allocation3 + $0xac] sm:$0x7]
        %v6359 = vld [vmem:[#allocation3 + $0xb8] sm:$0x8]
        %v6360 = vld [vmem:[#allocation3 + $0xbc] sm:$0x7]
        %v6361 = vld [vmem:[#allocation3 + $0xc8] sm:$0x8]
        %v6362 = vld [vmem:[#allocation3 + $0xcc] sm:$0x7]
        %v6363 = vld [vmem:[#allocation3 + $0xd8] sm:$0x8]
        %v6364 = vld [vmem:[#allocation3 + $0xdc] sm:$0x7]
        %v6365 = vld [vmem:[#allocation3 + $0xe8] sm:$0x8]
        %v6366 = vld [vmem:[#allocation3 + $0xec] sm:$0x7]
        %v6367 = vld [vmem:[#allocation3 + $0xf8] sm:$0x8]
        %v6368 = vld [vmem:[#allocation3 + $0xfc] sm:$0x7]
        %v6369 = vld [vmem:[#allocation3 + $0x108] sm:$0x8]
        %v6370 = vld [vmem:[#allocation3 + $0x10c] sm:$0x7]
        %v6371 = vld [vmem:[#allocation3 + $0x118] sm:$0x8]
        %v6372 = vld [vmem:[#allocation3 + $0x11c] sm:$0x7]
        %v6373 = vld [vmem:[#allocation3 + $0x128] sm:$0x8]
        %v6374 = vld [vmem:[#allocation3 + $0x12c] sm:$0x7]
        %v6375 = vld [vmem:[#allocation3 + $0x138] sm:$0x8]
        %v6376 = vld [vmem:[#allocation3 + $0x13c] sm:$0x7]
        %v6377 = vld [vmem:[#allocation3 + $0x148] sm:$0x8]
        %v6378 = vld [vmem:[#allocation3 + $0x14c] sm:$0x7]
        %v6379 = vld [vmem:[#allocation3 + $0x158] sm:$0x8]
        %v6380 = vld [vmem:[#allocation3 + $0x15c] sm:$0x7]
        %v6397 = vrot.slane %v6341, 7
        %v6398 = vrot.slane %v6397, 4
        %v6399 = vrot.slane %v6342, 7
        %v6400 = vsel %vm2371, %v6398, %v6399
        %v6401 = vrot.slane %v6343, 7
        %v6402 = vrot.slane %v6401, 4
        %v6403 = vrot.slane %v6344, 7
        %v6404 = vsel %vm2371, %v6402, %v6403
        %v6405 = vrot.slane %v6345, 7
        %v6406 = vrot.slane %v6405, 4
        %v6407 = vrot.slane %v6346, 7
        %v6408 = vsel %vm2371, %v6406, %v6407
        %v6409 = vrot.slane %v6347, 7
        %v6410 = vrot.slane %v6409, 4
        %v6411 = vrot.slane %v6348, 7
        %v6412 = vsel %vm2371, %v6410, %v6411
        %v6413 = vrot.slane %v6349, 7
        %v6414 = vrot.slane %v6413, 4
        %v6415 = vrot.slane %v6350, 7
        %v6416 = vsel %vm2371, %v6414, %v6415
        %v6417 = vrot.slane %v6351, 7
        %v6418 = vrot.slane %v6417, 4
        %v6419 = vrot.slane %v6352, 7
        %v6420 = vsel %vm2371, %v6418, %v6419
        %v6421 = vrot.slane %v6353, 7
        %v6422 = vrot.slane %v6421, 4
        %v6423 = vrot.slane %v6354, 7
        %v6424 = vsel %vm2371, %v6422, %v6423
        %v6425 = vrot.slane %v6355, 7
        %v6426 = vrot.slane %v6425, 4
        %v6427 = vrot.slane %v6356, 7
        %v6428 = vsel %vm2371, %v6426, %v6427
        %s6429 = scalar_lea.vmem [#allocation16], 1280
        %v6430 = vld [vmem:[%s6429] sm:$0xf]
        %v6431 = vld [vmem:[%s6429 + $0x4] sm:$0xf]
        %v6432 = vld [vmem:[%s6429 + $0x8] sm:$0xf]
        %v6433 = vld [vmem:[%s6429 + $0xc] sm:$0xf]
        %v6434 = vld [vmem:[%s6429 + $0x10] sm:$0xf]
        %v6435 = vld [vmem:[%s6429 + $0x14] sm:$0xf]
        %v6436 = vld [vmem:[%s6429 + $0x18] sm:$0xf]
        %v6437 = vld [vmem:[%s6429 + $0x1c] sm:$0xf]
        %v6438 = vld [vmem:[%s6429 + $0x20] sm:$0xf]
        %v6439 = vld [vmem:[%s6429 + $0x24] sm:$0xf]
        %v6440 = vld [vmem:[%s6429 + $0x28] sm:$0xf]
        %v6441 = vld [vmem:[%s6429 + $0x2c] sm:$0xf]
        %v6442 = vld [vmem:[%s6429 + $0x30] sm:$0xf]
        %v6443 = vld [vmem:[%s6429 + $0x34] sm:$0xf]
        %v6444 = vld [vmem:[%s6429 + $0x38] sm:$0xf]
        %v6445 = vld [vmem:[%s6429 + $0x3c] sm:$0xf]
        %v6446 = vunpack.c.l.b16 %v6400
        %v6447 = vunpack.c.l.b16 %v6404
        %v6448 = vunpack.c.l.b16 %v6408
        %v6449 = vunpack.c.l.b16 %v6412
        %v6450 = vunpack.c.l.b16 %v6416
        %v6451 = vunpack.c.l.b16 %v6420
        %v6452 = vunpack.c.l.b16 %v6424
        %v6453 = vunpack.c.l.b16 %v6428
        %v6454 = vpack.c.b16 %v6447, %v6446
        %v6455 = vpack.c.b16 %v6449, %v6448
        %v6456 = vpack.c.b16 %v6451, %v6450
        %v6457 = vpack.c.b16 %v6453, %v6452
        %v6478 = vunpack.c.l.b16 %v6430
        %v6479 = vunpack.c.l.b16 %v6431
        %v6480 = vunpack.c.l.b16 %v6432
        %v6481 = vunpack.c.l.b16 %v6433
        %v6482 = vunpack.c.l.b16 %v6434
        %v6483 = vunpack.c.l.b16 %v6435
        %v6484 = vunpack.c.l.b16 %v6436
        %v6485 = vunpack.c.l.b16 %v6437
        %v6486 = vunpack.c.l.b16 %v6438
        %v6487 = vunpack.c.l.b16 %v6439
        %v6488 = vunpack.c.l.b16 %v6440
        %v6489 = vunpack.c.l.b16 %v6441
        %v6490 = vunpack.c.l.b16 %v6442
        %v6491 = vunpack.c.l.b16 %v6443
        %v6492 = vunpack.c.l.b16 %v6444
        %v6493 = vunpack.c.l.b16 %v6445
        %v6494 = vpack.c.b16 %v6479, %v6478
        %v6495 = vpack.c.b16 %v6481, %v6480
        %v6496 = vpack.c.b16 %v6483, %v6482
        %v6497 = vpack.c.b16 %v6485, %v6484
        %v6498 = vpack.c.b16 %v6487, %v6486
        %v6499 = vpack.c.b16 %v6489, %v6488
        %v6500 = vpack.c.b16 %v6491, %v6490
        %v6501 = vpack.c.b16 %v6493, %v6492
        %6510 = vmatpush.bf16.msra.mxu0 %v6501
        %6511 = vmatpush.bf16.msra.mxu0 %v6500
        %6512 = vmatpush.bf16.msra.mxu0 %v6499
        %6513 = vmatpush.bf16.msra.mxu0 %v6498
        %6514 = vmatpush.bf16.msra.mxu0 %v6497
        %6515 = vmatpush.bf16.msra.mxu0 %v6496
        %6516 = vmatpush.bf16.msra.mxu0 %v6495
        %6517 = vmatpush.bf16.msra.mxu0 %v6494
        %6518 = vmatmul.bf16.gmra.mxu0 %v6454
        %v6519 = vpop.f32.mrf.mxu0
        %v6520 = vadd.f32 0.0, %v6519
        %v6521 = vpop.f32.mrf.mxu0
        %v6522 = vadd.f32 0.0, %v6521
        %6523 = vmatmul.bf16.gmra.mxu0 %v6455
        %v6524 = vpop.f32.mrf.mxu0
        %v6525 = vadd.f32 0.0, %v6524
        %v6526 = vpop.f32.mrf.mxu0
        %v6527 = vadd.f32 0.0, %v6526
        %6528 = vmatmul.bf16.gmra.mxu0 %v6456
        %v6529 = vpop.f32.mrf.mxu0
        %v6530 = vadd.f32 0.0, %v6529
        %v6531 = vpop.f32.mrf.mxu0
        %v6532 = vadd.f32 0.0, %v6531
        %6533 = vmatmul.bf16.gmra.mxu0 %v6457
        %v6534 = vpop.f32.mrf.mxu0
        %v6535 = vadd.f32 0.0, %v6534
        %v6536 = vpop.f32.mrf.mxu0
        %v6537 = vadd.f32 0.0, %v6536
        %6538 = vdwg.mxu0
        %v6539 = vadd.f32 %v6333, %v6520
        %v6540 = vadd.f32 %v6334, %v6522
        %v6541 = vadd.f32 %v6335, %v6525
        %v6542 = vadd.f32 %v6336, %v6527
        %v6543 = vadd.f32 %v6337, %v6530
        %v6544 = vadd.f32 %v6338, %v6532
        %v6545 = vadd.f32 %v6339, %v6535
        %v6546 = vadd.f32 %v6340, %v6537
        %v6559 = vrot.slane %v6357, 7
        %v6560 = vrot.slane %v6559, 4
        %v6561 = vrot.slane %v6358, 7
        %v6562 = vsel %vm2371, %v6560, %v6561
        %v6563 = vrot.slane %v6359, 7
        %v6564 = vrot.slane %v6563, 4
        %v6565 = vrot.slane %v6360, 7
        %v6566 = vsel %vm2371, %v6564, %v6565
        %v6567 = vrot.slane %v6361, 7
        %v6568 = vrot.slane %v6567, 4
        %v6569 = vrot.slane %v6362, 7
        %v6570 = vsel %vm2371, %v6568, %v6569
        %v6571 = vrot.slane %v6363, 7
        %v6572 = vrot.slane %v6571, 4
        %v6573 = vrot.slane %v6364, 7
        %v6574 = vsel %vm2371, %v6572, %v6573
        %v6575 = vrot.slane %v6365, 7
        %v6576 = vrot.slane %v6575, 4
        %v6577 = vrot.slane %v6366, 7
        %v6578 = vsel %vm2371, %v6576, %v6577
        %v6579 = vrot.slane %v6367, 7
        %v6580 = vrot.slane %v6579, 4
        %v6581 = vrot.slane %v6368, 7
        %v6582 = vsel %vm2371, %v6580, %v6581
        %s6583 = scalar_lea.vmem [#allocation16], 1472
        %v6584 = vld [vmem:[%s6583] sm:$0xf]
        %v6585 = vld [vmem:[%s6583 + $0x4] sm:$0xf]
        %v6586 = vld [vmem:[%s6583 + $0x8] sm:$0xf]
        %v6587 = vld [vmem:[%s6583 + $0xc] sm:$0xf]
        %v6588 = vld [vmem:[%s6583 + $0x10] sm:$0xf]
        %v6589 = vld [vmem:[%s6583 + $0x14] sm:$0xf]
        %v6590 = vld [vmem:[%s6583 + $0x18] sm:$0xf]
        %v6591 = vld [vmem:[%s6583 + $0x1c] sm:$0xf]
        %v6592 = vld [vmem:[%s6583 + $0x20] sm:$0xf]
        %v6593 = vld [vmem:[%s6583 + $0x24] sm:$0xf]
        %v6594 = vld [vmem:[%s6583 + $0x28] sm:$0xf]
        %v6595 = vld [vmem:[%s6583 + $0x2c] sm:$0xf]
        %v6596 = vld [vmem:[%s6583 + $0x30] sm:$0xf]
        %v6597 = vld [vmem:[%s6583 + $0x34] sm:$0xf]
        %v6598 = vld [vmem:[%s6583 + $0x38] sm:$0xf]
        %v6599 = vld [vmem:[%s6583 + $0x3c] sm:$0xf]
        %v6600 = vunpack.c.l.b16 %v6562
        %v6601 = vunpack.c.l.b16 %v6566
        %v6602 = vunpack.c.l.b16 %v6570
        %v6603 = vunpack.c.l.b16 %v6574
        %v6604 = vunpack.c.l.b16 %v6578
        %v6605 = vunpack.c.l.b16 %v6582
        %v6606 = vpack.c.b16 %v6601, %v6600
        %v6607 = vpack.c.b16 %v6603, %v6602
        %v6608 = vpack.c.b16 %v6605, %v6604
        %v6628 = vunpack.c.l.b16 %v6584
        %v6629 = vunpack.c.l.b16 %v6585
        %v6630 = vunpack.c.l.b16 %v6586
        %v6631 = vunpack.c.l.b16 %v6587
        %v6632 = vunpack.c.l.b16 %v6588
        %v6633 = vunpack.c.l.b16 %v6589
        %v6634 = vunpack.c.l.b16 %v6590
        %v6635 = vunpack.c.l.b16 %v6591
        %v6636 = vunpack.c.l.b16 %v6592
        %v6637 = vunpack.c.l.b16 %v6593
        %v6638 = vunpack.c.l.b16 %v6594
        %v6639 = vunpack.c.l.b16 %v6595
        %v6640 = vunpack.c.l.b16 %v6596
        %v6641 = vunpack.c.l.b16 %v6597
        %v6642 = vunpack.c.l.b16 %v6598
        %v6643 = vunpack.c.l.b16 %v6599
        %v6644 = vpack.c.b16 %v6629, %v6628
        %v6645 = vpack.c.b16 %v6631, %v6630
        %v6646 = vpack.c.b16 %v6633, %v6632
        %v6647 = vpack.c.b16 %v6635, %v6634
        %v6648 = vpack.c.b16 %v6637, %v6636
        %v6649 = vpack.c.b16 %v6639, %v6638
        %v6650 = vpack.c.b16 %v6641, %v6640
        %v6651 = vpack.c.b16 %v6643, %v6642
        %6660 = vmatpush.bf16.msra.mxu0 %v6651
        %6661 = vmatpush.bf16.msra.mxu0 %v6650
        %6662 = vmatpush.bf16.msra.mxu0 %v6649
        %6663 = vmatpush.bf16.msra.mxu0 %v6648
        %6664 = vmatpush.bf16.msra.mxu0 %v6647
        %6665 = vmatpush.bf16.msra.mxu0 %v6646
        %6666 = vmatpush.bf16.msra.mxu0 %v6645
        %6667 = vmatpush.bf16.msra.mxu0 %v6644
        %6668 = vmatmul.bf16.gmra.mxu0 %v6457
        %v6669 = vpop.f32.mrf.mxu0
        %v6670 = vadd.f32 0.0, %v6669
        %v6671 = vpop.f32.mrf.mxu0
        %v6672 = vadd.f32 0.0, %v6671
        %6673 = vmatmul.bf16.gmra.mxu0 %v6606
        %v6674 = vpop.f32.mrf.mxu0
        %v6675 = vadd.f32 0.0, %v6674
        %v6676 = vpop.f32.mrf.mxu0
        %v6677 = vadd.f32 0.0, %v6676
        %6678 = vmatmul.bf16.gmra.mxu0 %v6607
        %v6679 = vpop.f32.mrf.mxu0
        %v6680 = vadd.f32 0.0, %v6679
        %v6681 = vpop.f32.mrf.mxu0
        %v6682 = vadd.f32 0.0, %v6681
        %6683 = vmatmul.bf16.gmra.mxu0 %v6608
        %v6684 = vpop.f32.mrf.mxu0
        %v6685 = vadd.f32 0.0, %v6684
        %v6686 = vpop.f32.mrf.mxu0
        %v6687 = vadd.f32 0.0, %v6686
        %6688 = vdwg.mxu0
        %v6689 = vadd.f32 %v6539, %v6670
        %v6690 = vadd.f32 %v6540, %v6672
        %v6691 = vadd.f32 %v6541, %v6675
        %v6692 = vadd.f32 %v6542, %v6677
        %v6693 = vadd.f32 %v6543, %v6680
        %v6694 = vadd.f32 %v6544, %v6682
        %v6695 = vadd.f32 %v6545, %v6685
        %v6696 = vadd.f32 %v6546, %v6687
        %v6709 = vrot.slane %v6369, 7
        %v6710 = vrot.slane %v6709, 4
        %v6711 = vrot.slane %v6370, 7
        %v6712 = vsel %vm2371, %v6710, %v6711
        %v6713 = vrot.slane %v6371, 7
        %v6714 = vrot.slane %v6713, 4
        %v6715 = vrot.slane %v6372, 7
        %v6716 = vsel %vm2371, %v6714, %v6715
        %v6717 = vrot.slane %v6373, 7
        %v6718 = vrot.slane %v6717, 4
        %v6719 = vrot.slane %v6374, 7
        %v6720 = vsel %vm2371, %v6718, %v6719
        %v6721 = vrot.slane %v6375, 7
        %v6722 = vrot.slane %v6721, 4
        %v6723 = vrot.slane %v6376, 7
        %v6724 = vsel %vm2371, %v6722, %v6723
        %v6725 = vrot.slane %v6377, 7
        %v6726 = vrot.slane %v6725, 4
        %v6727 = vrot.slane %v6378, 7
        %v6728 = vsel %vm2371, %v6726, %v6727
        %v6729 = vrot.slane %v6379, 7
        %v6730 = vrot.slane %v6729, 4
        %v6731 = vrot.slane %v6380, 7
        %v6732 = vsel %vm2371, %v6730, %v6731
        %s6733 = scalar_lea.vmem [#allocation16], 1664
        %v6734 = vld [vmem:[%s6733] sm:$0xf]
        %v6735 = vld [vmem:[%s6733 + $0x4] sm:$0xf]
        %v6736 = vld [vmem:[%s6733 + $0x8] sm:$0xf]
        %v6737 = vld [vmem:[%s6733 + $0xc] sm:$0xf]
        %v6738 = vld [vmem:[%s6733 + $0x10] sm:$0xf]
        %v6739 = vld [vmem:[%s6733 + $0x14] sm:$0xf]
        %v6740 = vld [vmem:[%s6733 + $0x18] sm:$0xf]
        %v6741 = vld [vmem:[%s6733 + $0x1c] sm:$0xf]
        %v6742 = vld [vmem:[%s6733 + $0x20] sm:$0xf]
        %v6743 = vld [vmem:[%s6733 + $0x24] sm:$0xf]
        %v6744 = vld [vmem:[%s6733 + $0x28] sm:$0xf]
        %v6745 = vld [vmem:[%s6733 + $0x2c] sm:$0xf]
        %v6746 = vld [vmem:[%s6733 + $0x30] sm:$0xf]
        %v6747 = vld [vmem:[%s6733 + $0x34] sm:$0xf]
        %v6748 = vld [vmem:[%s6733 + $0x38] sm:$0xf]
        %v6749 = vld [vmem:[%s6733 + $0x3c] sm:$0xf]
        %v6750 = vunpack.c.l.b16 %v6712
        %v6751 = vunpack.c.l.b16 %v6716
        %v6752 = vunpack.c.l.b16 %v6720
        %v6753 = vunpack.c.l.b16 %v6724
        %v6754 = vunpack.c.l.b16 %v6728
        %v6755 = vunpack.c.l.b16 %v6732
        %v6756 = vpack.c.b16 %v6751, %v6750
        %v6757 = vpack.c.b16 %v6753, %v6752
        %v6758 = vpack.c.b16 %v6755, %v6754
        %v6778 = vunpack.c.l.b16 %v6734
        %v6779 = vunpack.c.l.b16 %v6735
        %v6780 = vunpack.c.l.b16 %v6736
        %v6781 = vunpack.c.l.b16 %v6737
        %v6782 = vunpack.c.l.b16 %v6738
        %v6783 = vunpack.c.l.b16 %v6739
        %v6784 = vunpack.c.l.b16 %v6740
        %v6785 = vunpack.c.l.b16 %v6741
        %v6786 = vunpack.c.l.b16 %v6742
        %v6787 = vunpack.c.l.b16 %v6743
        %v6788 = vunpack.c.l.b16 %v6744
        %v6789 = vunpack.c.l.b16 %v6745
        %v6790 = vunpack.c.l.b16 %v6746
        %v6791 = vunpack.c.l.b16 %v6747
        %v6792 = vunpack.c.l.b16 %v6748
        %v6793 = vunpack.c.l.b16 %v6749
        %v6794 = vpack.c.b16 %v6779, %v6778
        %v6795 = vpack.c.b16 %v6781, %v6780
        %v6796 = vpack.c.b16 %v6783, %v6782
        %v6797 = vpack.c.b16 %v6785, %v6784
        %v6798 = vpack.c.b16 %v6787, %v6786
        %v6799 = vpack.c.b16 %v6789, %v6788
        %v6800 = vpack.c.b16 %v6791, %v6790
        %v6801 = vpack.c.b16 %v6793, %v6792
        %6810 = vmatpush.bf16.msra.mxu0 %v6801
        %6811 = vmatpush.bf16.msra.mxu0 %v6800
        %6812 = vmatpush.bf16.msra.mxu0 %v6799
        %6813 = vmatpush.bf16.msra.mxu0 %v6798
        %6814 = vmatpush.bf16.msra.mxu0 %v6797
        %6815 = vmatpush.bf16.msra.mxu0 %v6796
        %6816 = vmatpush.bf16.msra.mxu0 %v6795
        %6817 = vmatpush.bf16.msra.mxu0 %v6794
        %6818 = vmatmul.bf16.gmra.mxu0 %v6608
        %v6819 = vpop.f32.mrf.mxu0
        %v6820 = vadd.f32 0.0, %v6819
        %v6821 = vpop.f32.mrf.mxu0
        %v6822 = vadd.f32 0.0, %v6821
        %6823 = vmatmul.bf16.gmra.mxu0 %v6756
        %v6824 = vpop.f32.mrf.mxu0
        %v6825 = vadd.f32 0.0, %v6824
        %v6826 = vpop.f32.mrf.mxu0
        %v6827 = vadd.f32 0.0, %v6826
        %6828 = vmatmul.bf16.gmra.mxu0 %v6757
        %v6829 = vpop.f32.mrf.mxu0
        %v6830 = vadd.f32 0.0, %v6829
        %v6831 = vpop.f32.mrf.mxu0
        %v6832 = vadd.f32 0.0, %v6831
        %6833 = vmatmul.bf16.gmra.mxu0 %v6758
        %v6834 = vpop.f32.mrf.mxu0
        %v6835 = vadd.f32 0.0, %v6834
        %v6836 = vpop.f32.mrf.mxu0
        %v6837 = vadd.f32 0.0, %v6836
        %6838 = vdwg.mxu0
        %v6839 = vadd.f32 %v6689, %v6820
        %v6840 = vadd.f32 %v6690, %v6822
        %v6841 = vadd.f32 %v6691, %v6825
        %v6842 = vadd.f32 %v6692, %v6827
        %v6843 = vadd.f32 %v6693, %v6830
        %v6844 = vadd.f32 %v6694, %v6832
        %v6845 = vadd.f32 %v6695, %v6835
        %v6846 = vadd.f32 %v6696, %v6837
        %v6848 = vperm.slane %v5464, 0
        %v6850 = vadd.f32 %v6839, %v6848
        %v6851 = vadd.f32 %v6840, %v6848
        %v6852 = vadd.f32 %v6841, %v6848
        %v6853 = vadd.f32 %v6842, %v6848
        %v6854 = vadd.f32 %v6843, %v6848
        %v6855 = vadd.f32 %v6844, %v6848
        %v6856 = vadd.f32 %v6845, %v6848
        %v6857 = vadd.f32 %v6846, %v6848
        %v6858 = vmax.f32 %v6850, 0.0
        %v6859 = vmax.f32 %v6851, 0.0
        %v6860 = vmax.f32 %v6852, 0.0
        %v6861 = vmax.f32 %v6853, 0.0
        %v6862 = vmax.f32 %v6854, 0.0
        %v6863 = vmax.f32 %v6855, 0.0
        %v6864 = vmax.f32 %v6856, 0.0
        %v6865 = vmax.f32 %v6857, 0.0
        %v6866 = vpack.c.bf16 %v6859, %v6858
        %v6867 = vpack.c.bf16 %v6861, %v6860
        %v6868 = vpack.c.bf16 %v6863, %v6862
        %v6869 = vpack.c.bf16 %v6865, %v6864
        %s6870 = scalar_lea.vmem [#allocation19], 128
        %v6871 = vld [vmem:[%s6870] sm:$0xf]
        %v6872 = vld [vmem:[%s6870 + $0x4] sm:$0xf]
        %v6873 = vld [vmem:[%s6870 + $0x8] sm:$0xf]
        %v6874 = vld [vmem:[%s6870 + $0xc] sm:$0xf]
        %v6875 = vld [vmem:[%s6870 + $0x10] sm:$0xf]
        %v6876 = vld [vmem:[%s6870 + $0x14] sm:$0xf]
        %v6877 = vld [vmem:[%s6870 + $0x18] sm:$0xf]
        %v6878 = vld [vmem:[%s6870 + $0x1c] sm:$0xf]
        %v6879 = vld [vmem:[%s6870 + $0x20] sm:$0xf]
        %v6880 = vld [vmem:[%s6870 + $0x24] sm:$0xf]
        %v6881 = vld [vmem:[%s6870 + $0x28] sm:$0xf]
        %v6882 = vld [vmem:[%s6870 + $0x2c] sm:$0xf]
        %v6883 = vld [vmem:[%s6870 + $0x30] sm:$0xf]
        %v6884 = vld [vmem:[%s6870 + $0x34] sm:$0xf]
        %v6885 = vld [vmem:[%s6870 + $0x38] sm:$0xf]
        %v6886 = vld [vmem:[%s6870 + $0x3c] sm:$0xf]
        %s6887 = scalar_lea.vmem [#allocation21], 2
        %v6888 = vld [vmem:[%s6887] sm:$0x1]
        %v6890 = vperm.slane %v6888, 0
        %v6908 = vunpack.c.l.b16 %v6871
        %v6909 = vunpack.c.l.b16 %v6872
        %v6910 = vunpack.c.l.b16 %v6873
        %v6911 = vunpack.c.l.b16 %v6874
        %v6912 = vunpack.c.l.b16 %v6875
        %v6913 = vunpack.c.l.b16 %v6876
        %v6914 = vunpack.c.l.b16 %v6877
        %v6915 = vunpack.c.l.b16 %v6878
        %v6916 = vunpack.c.l.b16 %v6879
        %v6917 = vunpack.c.l.b16 %v6880
        %v6918 = vunpack.c.l.b16 %v6881
        %v6919 = vunpack.c.l.b16 %v6882
        %v6920 = vunpack.c.l.b16 %v6883
        %v6921 = vunpack.c.l.b16 %v6884
        %v6922 = vunpack.c.l.b16 %v6885
        %v6923 = vunpack.c.l.b16 %v6886
        %v6924 = vpack.c.b16 %v6909, %v6908
        %v6925 = vpack.c.b16 %v6911, %v6910
        %v6926 = vpack.c.b16 %v6913, %v6912
        %v6927 = vpack.c.b16 %v6915, %v6914
        %v6928 = vpack.c.b16 %v6917, %v6916
        %v6929 = vpack.c.b16 %v6919, %v6918
        %v6930 = vpack.c.b16 %v6921, %v6920
        %v6931 = vpack.c.b16 %v6923, %v6922
        %6940 = vmatpush.bf16.msra.mxu0 %v6931
        %6941 = vmatpush.bf16.msra.mxu0 %v6930
        %6942 = vmatpush.bf16.msra.mxu0 %v6929
        %6943 = vmatpush.bf16.msra.mxu0 %v6928
        %6944 = vmatpush.bf16.msra.mxu0 %v6927
        %6945 = vmatpush.bf16.msra.mxu0 %v6926
        %6946 = vmatpush.bf16.msra.mxu0 %v6925
        %6947 = vmatpush.bf16.msra.mxu0 %v6924
        %6948 = vmatmul.bf16.gmra.mxu0 %v6866
        %v6949 = vpop.f32.mrf.mxu0
        %v6950 = vadd.f32 %v6890, %v6949
        %v6951 = vpop.f32.mrf.mxu0
        %v6952 = vadd.f32 %v6890, %v6951
        %6953 = vmatmul.bf16.gmra.mxu0 %v6867
        %v6954 = vpop.f32.mrf.mxu0
        %v6955 = vadd.f32 %v6890, %v6954
        %v6956 = vpop.f32.mrf.mxu0
        %v6957 = vadd.f32 %v6890, %v6956
        %6958 = vmatmul.bf16.gmra.mxu0 %v6868
        %v6959 = vpop.f32.mrf.mxu0
        %v6960 = vadd.f32 %v6890, %v6959
        %v6961 = vpop.f32.mrf.mxu0
        %v6962 = vadd.f32 %v6890, %v6961
        %6963 = vmatmul.bf16.gmra.mxu0 %v6869
        %v6964 = vpop.f32.mrf.mxu0
        %v6965 = vadd.f32 %v6890, %v6964
        %v6966 = vpop.f32.mrf.mxu0
        %v6967 = vadd.f32 %v6890, %v6966
        %6968 = vdwg.mxu0
        %v6969 = vmax.f32 %v6950, 0.0
        %v6970 = vmax.f32 %v6952, 0.0
        %v6971 = vmax.f32 %v6955, 0.0
        %v6972 = vmax.f32 %v6957, 0.0
        %v6973 = vmax.f32 %v6960, 0.0
        %v6974 = vmax.f32 %v6962, 0.0
        %v6975 = vmax.f32 %v6965, 0.0
        %v6976 = vmax.f32 %v6967, 0.0
        %v6977 = vld [vmem:[%s567] sm:$0xf]
        %v6978 = vld [vmem:[%s567 + $0x4] sm:$0xf]
        %v6979 = vld [vmem:[%s567 + $0x8] sm:$0xf]
        %v6980 = vld [vmem:[%s567 + $0xc] sm:$0xf]
        %v6981 = vld [vmem:[%s567 + $0x10] sm:$0xf]
        %v6982 = vld [vmem:[%s567 + $0x14] sm:$0xf]
        %v6983 = vld [vmem:[%s567 + $0x18] sm:$0xf]
        %v6984 = vld [vmem:[%s567 + $0x1c] sm:$0xf]
        %v6985 = vunpack.c.l.bf16 %v6977
        %v6986 = vunpack.c.l.bf16 %v6978
        %v6987 = vunpack.c.l.bf16 %v6979
        %v6988 = vunpack.c.l.bf16 %v6980
        %v6989 = vunpack.c.l.bf16 %v6981
        %v6990 = vunpack.c.l.bf16 %v6982
        %v6991 = vunpack.c.l.bf16 %v6983
        %v6992 = vunpack.c.l.bf16 %v6984
        %v6993 = vadd.f32 %v6969, %v6985
        %v6994 = vadd.f32 %v6970, %v6986
        %v6995 = vadd.f32 %v6971, %v6987
        %v6996 = vadd.f32 %v6972, %v6988
        %v6997 = vadd.f32 %v6973, %v6989
        %v6998 = vadd.f32 %v6974, %v6990
        %v6999 = vadd.f32 %v6975, %v6991
        %v7000 = vadd.f32 %v6976, %v6992
        %v7001 = vpack.c.bf16 %v6993, %v6993
        %v7002 = vpack.c.bf16 %v6994, %v6994
        %v7003 = vpack.c.bf16 %v6995, %v6995
        %v7004 = vpack.c.bf16 %v6996, %v6996
        %v7005 = vpack.c.bf16 %v6997, %v6997
        %v7006 = vpack.c.bf16 %v6998, %v6998
        %v7007 = vpack.c.bf16 %v6999, %v6999
        %v7008 = vpack.c.bf16 %v7000, %v7000
        %7009 = vst [vmem:[%s567] sm:$0xf] %v7001
        %7010 = vst [vmem:[%s567 + $0x4] sm:$0xf] %v7002
        %7011 = vst [vmem:[%s567 + $0x8] sm:$0xf] %v7003
        %7012 = vst [vmem:[%s567 + $0xc] sm:$0xf] %v7004
        %7013 = vst [vmem:[%s567 + $0x10] sm:$0xf] %v7005
        %7014 = vst [vmem:[%s567 + $0x14] sm:$0xf] %v7006
        %7015 = vst [vmem:[%s567 + $0x18] sm:$0xf] %v7007
        %7016 = vst [vmem:[%s567 + $0x1c] sm:$0xf] %v7008
        %v7017 = vld [vmem:[%s567] sm:$0xf]
        %v7018 = vld [vmem:[%s567 + $0x4] sm:$0xf]
        %v7019 = vld [vmem:[%s567 + $0x8] sm:$0xf]
        %v7020 = vld [vmem:[%s567 + $0xc] sm:$0xf]
        %v7021 = vld [vmem:[%s567 + $0x10] sm:$0xf]
        %v7022 = vld [vmem:[%s567 + $0x14] sm:$0xf]
        %v7023 = vld [vmem:[%s567 + $0x18] sm:$0xf]
        %v7024 = vld [vmem:[%s567 + $0x1c] sm:$0xf]
        %s7025 = scalar_lea.vmem [#allocation13], 192
        %v7026 = vld [vmem:[%s7025] sm:$0xf]
        %v7027 = vld [vmem:[%s7025 + $0x4] sm:$0xf]
        %v7028 = vld [vmem:[%s7025 + $0x8] sm:$0xf]
        %v7029 = vld [vmem:[%s7025 + $0xc] sm:$0xf]
        %v7030 = vld [vmem:[%s7025 + $0x10] sm:$0xf]
        %v7031 = vld [vmem:[%s7025 + $0x14] sm:$0xf]
        %v7032 = vld [vmem:[%s7025 + $0x18] sm:$0xf]
        %v7033 = vld [vmem:[%s7025 + $0x1c] sm:$0xf]
        %v7034 = vld [vmem:[%s7025 + $0x20] sm:$0xf]
        %v7035 = vld [vmem:[%s7025 + $0x24] sm:$0xf]
        %v7036 = vld [vmem:[%s7025 + $0x28] sm:$0xf]
        %v7037 = vld [vmem:[%s7025 + $0x2c] sm:$0xf]
        %v7038 = vld [vmem:[%s7025 + $0x30] sm:$0xf]
        %v7039 = vld [vmem:[%s7025 + $0x34] sm:$0xf]
        %v7040 = vld [vmem:[%s7025 + $0x38] sm:$0xf]
        %v7041 = vld [vmem:[%s7025 + $0x3c] sm:$0xf]
        %s7042 = scalar_lea.vmem [#allocation15], 3
        %v7043 = vld [vmem:[%s7042] sm:$0x1]
        %v7045 = vperm.slane %v7043, 0
        %v7055 = vunpack.c.l.b16 %v7017
        %v7056 = vunpack.c.l.b16 %v7018
        %v7057 = vunpack.c.l.b16 %v7019
        %v7058 = vunpack.c.l.b16 %v7020
        %v7059 = vunpack.c.l.b16 %v7021
        %v7060 = vunpack.c.l.b16 %v7022
        %v7061 = vunpack.c.l.b16 %v7023
        %v7062 = vunpack.c.l.b16 %v7024
        %v7063 = vpack.c.b16 %v7056, %v7055
        %v7064 = vpack.c.b16 %v7058, %v7057
        %v7065 = vpack.c.b16 %v7060, %v7059
        %v7066 = vpack.c.b16 %v7062, %v7061
        %v7087 = vunpack.c.l.b16 %v7026
        %v7088 = vunpack.c.l.b16 %v7027
        %v7089 = vunpack.c.l.b16 %v7028
        %v7090 = vunpack.c.l.b16 %v7029
        %v7091 = vunpack.c.l.b16 %v7030
        %v7092 = vunpack.c.l.b16 %v7031
        %v7093 = vunpack.c.l.b16 %v7032
        %v7094 = vunpack.c.l.b16 %v7033
        %v7095 = vunpack.c.l.b16 %v7034
        %v7096 = vunpack.c.l.b16 %v7035
        %v7097 = vunpack.c.l.b16 %v7036
        %v7098 = vunpack.c.l.b16 %v7037
        %v7099 = vunpack.c.l.b16 %v7038
        %v7100 = vunpack.c.l.b16 %v7039
        %v7101 = vunpack.c.l.b16 %v7040
        %v7102 = vunpack.c.l.b16 %v7041
        %v7103 = vpack.c.b16 %v7088, %v7087
        %v7104 = vpack.c.b16 %v7090, %v7089
        %v7105 = vpack.c.b16 %v7092, %v7091
        %v7106 = vpack.c.b16 %v7094, %v7093
        %v7107 = vpack.c.b16 %v7096, %v7095
        %v7108 = vpack.c.b16 %v7098, %v7097
        %v7109 = vpack.c.b16 %v7100, %v7099
        %v7110 = vpack.c.b16 %v7102, %v7101
        %7119 = vmatpush.bf16.msra.mxu0 %v7110
        %7120 = vmatpush.bf16.msra.mxu0 %v7109
        %7121 = vmatpush.bf16.msra.mxu0 %v7108
        %7122 = vmatpush.bf16.msra.mxu0 %v7107
        %7123 = vmatpush.bf16.msra.mxu0 %v7106
        %7124 = vmatpush.bf16.msra.mxu0 %v7105
        %7125 = vmatpush.bf16.msra.mxu0 %v7104
        %7126 = vmatpush.bf16.msra.mxu0 %v7103
        %7127 = vmatmul.bf16.gmra.mxu0 %v7063
        %v7128 = vpop.f32.mrf.mxu0
        %v7129 = vadd.f32 %v7045, %v7128
        %v7130 = vpop.f32.mrf.mxu0
        %v7131 = vadd.f32 %v7045, %v7130
        %7132 = vmatmul.bf16.gmra.mxu0 %v7064
        %v7133 = vpop.f32.mrf.mxu0
        %v7134 = vadd.f32 %v7045, %v7133
        %v7135 = vpop.f32.mrf.mxu0
        %v7136 = vadd.f32 %v7045, %v7135
        %7137 = vmatmul.bf16.gmra.mxu0 %v7065
        %v7138 = vpop.f32.mrf.mxu0
        %v7139 = vadd.f32 %v7045, %v7138
        %v7140 = vpop.f32.mrf.mxu0
        %v7141 = vadd.f32 %v7045, %v7140
        %7142 = vmatmul.bf16.gmra.mxu0 %v7066
        %v7143 = vpop.f32.mrf.mxu0
        %v7144 = vadd.f32 %v7045, %v7143
        %v7145 = vpop.f32.mrf.mxu0
        %v7146 = vadd.f32 %v7045, %v7145
        %7147 = vdwg.mxu0
        %v7148 = vmax.f32 %v7129, 0.0
        %v7149 = vmax.f32 %v7131, 0.0
        %v7150 = vmax.f32 %v7134, 0.0
        %v7151 = vmax.f32 %v7136, 0.0
        %v7152 = vmax.f32 %v7139, 0.0
        %v7153 = vmax.f32 %v7141, 0.0
        %v7154 = vmax.f32 %v7144, 0.0
        %v7155 = vmax.f32 %v7146, 0.0
        %v7156 = vpack.c.bf16 %v7148, %v7148
        %v7157 = vpack.c.bf16 %v7149, %v7149
        %v7158 = vpack.c.bf16 %v7150, %v7150
        %v7159 = vpack.c.bf16 %v7151, %v7151
        %v7160 = vpack.c.bf16 %v7152, %v7152
        %v7161 = vpack.c.bf16 %v7153, %v7153
        %v7162 = vpack.c.bf16 %v7154, %v7154
        %v7163 = vpack.c.bf16 %v7155, %v7155
        %7164 = vst [vmem:[%s691 + $0x8] sm:$0xf] %v7156
        %7165 = vst [vmem:[%s691 + $0x18] sm:$0xf] %v7157
        %7166 = vst [vmem:[%s691 + $0x28] sm:$0xf] %v7158
        %7167 = vst [vmem:[%s691 + $0x38] sm:$0xf] %v7159
        %7168 = vst [vmem:[%s691 + $0x48] sm:$0xf] %v7160
        %7169 = vst [vmem:[%s691 + $0x58] sm:$0xf] %v7161
        %7170 = vst [vmem:[%s691 + $0x68] sm:$0xf] %v7162
        %7171 = vst [vmem:[%s691 + $0x78] sm:$0xf] %v7163
        %s7172 = scalar_lea.vmem [#allocation18], 3
        %v7173 = vld [vmem:[%s7172] sm:$0x1]
        %v7174 = vld [vmem:[#allocation3 + $0x4] sm:$0xf]
        %v7175 = vld [vmem:[#allocation3 + $0x14] sm:$0xf]
        %v7176 = vld [vmem:[#allocation3 + $0x24] sm:$0xf]
        %v7177 = vld [vmem:[#allocation3 + $0x34] sm:$0xf]
        %v7178 = vld [vmem:[#allocation3 + $0x44] sm:$0xf]
        %v7179 = vld [vmem:[#allocation3 + $0x54] sm:$0xf]
        %v7180 = vld [vmem:[#allocation3 + $0x64] sm:$0xf]
        %v7181 = vld [vmem:[#allocation3 + $0x74] sm:$0xf]
        %v7182 = vld [vmem:[#allocation3 + $0x84] sm:$0xf]
        %v7183 = vld [vmem:[#allocation3 + $0x94] sm:$0xf]
        %v7184 = vld [vmem:[#allocation3 + $0xa4] sm:$0xf]
        %v7185 = vld [vmem:[#allocation3 + $0xb4] sm:$0xf]
        %v7186 = vld [vmem:[#allocation3 + $0xc4] sm:$0xf]
        %v7187 = vld [vmem:[#allocation3 + $0xd4] sm:$0xf]
        %v7188 = vld [vmem:[#allocation3 + $0xe4] sm:$0xf]
        %v7189 = vld [vmem:[#allocation3 + $0xf4] sm:$0xf]
        %v7190 = vld [vmem:[#allocation3 + $0x104] sm:$0xf]
        %v7191 = vld [vmem:[#allocation3 + $0x114] sm:$0xf]
        %v7192 = vld [vmem:[#allocation3 + $0x124] sm:$0xf]
        %v7193 = vld [vmem:[#allocation3 + $0x134] sm:$0xf]
        %v7194 = vld [vmem:[#allocation3 + $0x144] sm:$0xf]
        %v7195 = vld [vmem:[#allocation3 + $0x154] sm:$0xf]
        %v7196 = vld [vmem:[#allocation3 + $0x164] sm:$0xf]
        %v7197 = vld [vmem:[#allocation3 + $0x174] sm:$0xf]
        %s7198 = scalar_lea.vmem [#allocation16], 1728
        %v7199 = vld [vmem:[%s7198] sm:$0xf]
        %v7200 = vld [vmem:[%s7198 + $0x4] sm:$0xf]
        %v7201 = vld [vmem:[%s7198 + $0x8] sm:$0xf]
        %v7202 = vld [vmem:[%s7198 + $0xc] sm:$0xf]
        %v7203 = vld [vmem:[%s7198 + $0x10] sm:$0xf]
        %v7204 = vld [vmem:[%s7198 + $0x14] sm:$0xf]
        %v7205 = vld [vmem:[%s7198 + $0x18] sm:$0xf]
        %v7206 = vld [vmem:[%s7198 + $0x1c] sm:$0xf]
        %v7207 = vld [vmem:[%s7198 + $0x20] sm:$0xf]
        %v7208 = vld [vmem:[%s7198 + $0x24] sm:$0xf]
        %v7209 = vld [vmem:[%s7198 + $0x28] sm:$0xf]
        %v7210 = vld [vmem:[%s7198 + $0x2c] sm:$0xf]
        %v7211 = vld [vmem:[%s7198 + $0x30] sm:$0xf]
        %v7212 = vld [vmem:[%s7198 + $0x34] sm:$0xf]
        %v7213 = vld [vmem:[%s7198 + $0x38] sm:$0xf]
        %v7214 = vld [vmem:[%s7198 + $0x3c] sm:$0xf]
        %s7215 = scalar_lea.vmem [#allocation16], 1920
        %v7216 = vld [vmem:[%s7215] sm:$0xf]
        %v7217 = vld [vmem:[%s7215 + $0x4] sm:$0xf]
        %v7218 = vld [vmem:[%s7215 + $0x8] sm:$0xf]
        %v7219 = vld [vmem:[%s7215 + $0xc] sm:$0xf]
        %v7220 = vld [vmem:[%s7215 + $0x10] sm:$0xf]
        %v7221 = vld [vmem:[%s7215 + $0x14] sm:$0xf]
        %v7222 = vld [vmem:[%s7215 + $0x18] sm:$0xf]
        %v7223 = vld [vmem:[%s7215 + $0x1c] sm:$0xf]
        %v7224 = vld [vmem:[%s7215 + $0x20] sm:$0xf]
        %v7225 = vld [vmem:[%s7215 + $0x24] sm:$0xf]
        %v7226 = vld [vmem:[%s7215 + $0x28] sm:$0xf]
        %v7227 = vld [vmem:[%s7215 + $0x2c] sm:$0xf]
        %v7228 = vld [vmem:[%s7215 + $0x30] sm:$0xf]
        %v7229 = vld [vmem:[%s7215 + $0x34] sm:$0xf]
        %v7230 = vld [vmem:[%s7215 + $0x38] sm:$0xf]
        %v7231 = vld [vmem:[%s7215 + $0x3c] sm:$0xf]
        %v7240 = vunpack.c.l.b16 %v7182
        %v7241 = vunpack.c.l.b16 %v7183
        %v7242 = vunpack.c.l.b16 %v7184
        %v7243 = vunpack.c.l.b16 %v7185
        %v7244 = vunpack.c.l.b16 %v7186
        %v7245 = vunpack.c.l.b16 %v7187
        %v7246 = vunpack.c.l.b16 %v7188
        %v7247 = vunpack.c.l.b16 %v7189
        %v7248 = vpack.c.b16 %v7241, %v7240
        %v7249 = vpack.c.b16 %v7243, %v7242
        %v7250 = vpack.c.b16 %v7245, %v7244
        %v7251 = vpack.c.b16 %v7247, %v7246
        %v7272 = vunpack.c.l.b16 %v7216
        %v7273 = vunpack.c.l.b16 %v7217
        %v7274 = vunpack.c.l.b16 %v7218
        %v7275 = vunpack.c.l.b16 %v7219
        %v7276 = vunpack.c.l.b16 %v7220
        %v7277 = vunpack.c.l.b16 %v7221
        %v7278 = vunpack.c.l.b16 %v7222
        %v7279 = vunpack.c.l.b16 %v7223
        %v7280 = vunpack.c.l.b16 %v7224
        %v7281 = vunpack.c.l.b16 %v7225
        %v7282 = vunpack.c.l.b16 %v7226
        %v7283 = vunpack.c.l.b16 %v7227
        %v7284 = vunpack.c.l.b16 %v7228
        %v7285 = vunpack.c.l.b16 %v7229
        %v7286 = vunpack.c.l.b16 %v7230
        %v7287 = vunpack.c.l.b16 %v7231
        %v7288 = vpack.c.b16 %v7273, %v7272
        %v7289 = vpack.c.b16 %v7275, %v7274
        %v7290 = vpack.c.b16 %v7277, %v7276
        %v7291 = vpack.c.b16 %v7279, %v7278
        %v7292 = vpack.c.b16 %v7281, %v7280
        %v7293 = vpack.c.b16 %v7283, %v7282
        %v7294 = vpack.c.b16 %v7285, %v7284
        %v7295 = vpack.c.b16 %v7287, %v7286
        %7304 = vmatpush.bf16.msra.mxu0 %v7295
        %7305 = vmatpush.bf16.msra.mxu0 %v7294
        %7306 = vmatpush.bf16.msra.mxu0 %v7293
        %7307 = vmatpush.bf16.msra.mxu0 %v7292
        %7308 = vmatpush.bf16.msra.mxu0 %v7291
        %7309 = vmatpush.bf16.msra.mxu0 %v7290
        %7310 = vmatpush.bf16.msra.mxu0 %v7289
        %7311 = vmatpush.bf16.msra.mxu0 %v7288
        %7312 = vmatmul.bf16.gmra.mxu0 %v7248
        %v7313 = vpop.f32.mrf.mxu0
        %v7314 = vadd.f32 0.0, %v7313
        %v7315 = vpop.f32.mrf.mxu0
        %v7316 = vadd.f32 0.0, %v7315
        %7317 = vmatmul.bf16.gmra.mxu0 %v7249
        %v7318 = vpop.f32.mrf.mxu0
        %v7319 = vadd.f32 0.0, %v7318
        %v7320 = vpop.f32.mrf.mxu0
        %v7321 = vadd.f32 0.0, %v7320
        %7322 = vmatmul.bf16.gmra.mxu0 %v7250
        %v7323 = vpop.f32.mrf.mxu0
        %v7324 = vadd.f32 0.0, %v7323
        %v7325 = vpop.f32.mrf.mxu0
        %v7326 = vadd.f32 0.0, %v7325
        %7327 = vmatmul.bf16.gmra.mxu0 %v7251
        %v7328 = vpop.f32.mrf.mxu0
        %v7329 = vadd.f32 0.0, %v7328
        %v7330 = vpop.f32.mrf.mxu0
        %v7331 = vadd.f32 0.0, %v7330
        %7332 = vdwg.mxu0
        %v7341 = vunpack.c.l.b16 %v7174
        %v7342 = vunpack.c.l.b16 %v7175
        %v7343 = vunpack.c.l.b16 %v7176
        %v7344 = vunpack.c.l.b16 %v7177
        %v7345 = vunpack.c.l.b16 %v7178
        %v7346 = vunpack.c.l.b16 %v7179
        %v7347 = vunpack.c.l.b16 %v7180
        %v7348 = vunpack.c.l.b16 %v7181
        %v7349 = vpack.c.b16 %v7342, %v7341
        %v7350 = vpack.c.b16 %v7344, %v7343
        %v7351 = vpack.c.b16 %v7346, %v7345
        %v7352 = vpack.c.b16 %v7348, %v7347
        %v7373 = vunpack.c.l.b16 %v7199
        %v7374 = vunpack.c.l.b16 %v7200
        %v7375 = vunpack.c.l.b16 %v7201
        %v7376 = vunpack.c.l.b16 %v7202
        %v7377 = vunpack.c.l.b16 %v7203
        %v7378 = vunpack.c.l.b16 %v7204
        %v7379 = vunpack.c.l.b16 %v7205
        %v7380 = vunpack.c.l.b16 %v7206
        %v7381 = vunpack.c.l.b16 %v7207
        %v7382 = vunpack.c.l.b16 %v7208
        %v7383 = vunpack.c.l.b16 %v7209
        %v7384 = vunpack.c.l.b16 %v7210
        %v7385 = vunpack.c.l.b16 %v7211
        %v7386 = vunpack.c.l.b16 %v7212
        %v7387 = vunpack.c.l.b16 %v7213
        %v7388 = vunpack.c.l.b16 %v7214
        %v7389 = vpack.c.b16 %v7374, %v7373
        %v7390 = vpack.c.b16 %v7376, %v7375
        %v7391 = vpack.c.b16 %v7378, %v7377
        %v7392 = vpack.c.b16 %v7380, %v7379
        %v7393 = vpack.c.b16 %v7382, %v7381
        %v7394 = vpack.c.b16 %v7384, %v7383
        %v7395 = vpack.c.b16 %v7386, %v7385
        %v7396 = vpack.c.b16 %v7388, %v7387
        %7405 = vmatpush.bf16.msra.mxu0 %v7396
        %7406 = vmatpush.bf16.msra.mxu0 %v7395
        %7407 = vmatpush.bf16.msra.mxu0 %v7394
        %7408 = vmatpush.bf16.msra.mxu0 %v7393
        %7409 = vmatpush.bf16.msra.mxu0 %v7392
        %7410 = vmatpush.bf16.msra.mxu0 %v7391
        %7411 = vmatpush.bf16.msra.mxu0 %v7390
        %7412 = vmatpush.bf16.msra.mxu0 %v7389
        %7413 = vmatmul.bf16.gmra.mxu0 %v7349
        %v7414 = vpop.f32.mrf.mxu0
        %v7415 = vadd.f32 %v7314, %v7414
        %v7416 = vpop.f32.mrf.mxu0
        %v7417 = vadd.f32 %v7316, %v7416
        %7418 = vmatmul.bf16.gmra.mxu0 %v7350
        %v7419 = vpop.f32.mrf.mxu0
        %v7420 = vadd.f32 %v7319, %v7419
        %v7421 = vpop.f32.mrf.mxu0
        %v7422 = vadd.f32 %v7321, %v7421
        %7423 = vmatmul.bf16.gmra.mxu0 %v7351
        %v7424 = vpop.f32.mrf.mxu0
        %v7425 = vadd.f32 %v7324, %v7424
        %v7426 = vpop.f32.mrf.mxu0
        %v7427 = vadd.f32 %v7326, %v7426
        %7428 = vmatmul.bf16.gmra.mxu0 %v7352
        %v7429 = vpop.f32.mrf.mxu0
        %v7430 = vadd.f32 %v7329, %v7429
        %v7431 = vpop.f32.mrf.mxu0
        %v7432 = vadd.f32 %v7331, %v7431
        %7433 = vdwg.mxu0
        %s7434 = scalar_lea.vmem [#allocation16], 2112
        %v7435 = vld [vmem:[%s7434] sm:$0xf]
        %v7436 = vld [vmem:[%s7434 + $0x4] sm:$0xf]
        %v7437 = vld [vmem:[%s7434 + $0x8] sm:$0xf]
        %v7438 = vld [vmem:[%s7434 + $0xc] sm:$0xf]
        %v7439 = vld [vmem:[%s7434 + $0x10] sm:$0xf]
        %v7440 = vld [vmem:[%s7434 + $0x14] sm:$0xf]
        %v7441 = vld [vmem:[%s7434 + $0x18] sm:$0xf]
        %v7442 = vld [vmem:[%s7434 + $0x1c] sm:$0xf]
        %v7443 = vld [vmem:[%s7434 + $0x20] sm:$0xf]
        %v7444 = vld [vmem:[%s7434 + $0x24] sm:$0xf]
        %v7445 = vld [vmem:[%s7434 + $0x28] sm:$0xf]
        %v7446 = vld [vmem:[%s7434 + $0x2c] sm:$0xf]
        %v7447 = vld [vmem:[%s7434 + $0x30] sm:$0xf]
        %v7448 = vld [vmem:[%s7434 + $0x34] sm:$0xf]
        %v7449 = vld [vmem:[%s7434 + $0x38] sm:$0xf]
        %v7450 = vld [vmem:[%s7434 + $0x3c] sm:$0xf]
        %v7459 = vunpack.c.l.b16 %v7190
        %v7460 = vunpack.c.l.b16 %v7191
        %v7461 = vunpack.c.l.b16 %v7192
        %v7462 = vunpack.c.l.b16 %v7193
        %v7463 = vunpack.c.l.b16 %v7194
        %v7464 = vunpack.c.l.b16 %v7195
        %v7465 = vunpack.c.l.b16 %v7196
        %v7466 = vunpack.c.l.b16 %v7197
        %v7467 = vpack.c.b16 %v7460, %v7459
        %v7468 = vpack.c.b16 %v7462, %v7461
        %v7469 = vpack.c.b16 %v7464, %v7463
        %v7470 = vpack.c.b16 %v7466, %v7465
        %v7491 = vunpack.c.l.b16 %v7435
        %v7492 = vunpack.c.l.b16 %v7436
        %v7493 = vunpack.c.l.b16 %v7437
        %v7494 = vunpack.c.l.b16 %v7438
        %v7495 = vunpack.c.l.b16 %v7439
        %v7496 = vunpack.c.l.b16 %v7440
        %v7497 = vunpack.c.l.b16 %v7441
        %v7498 = vunpack.c.l.b16 %v7442
        %v7499 = vunpack.c.l.b16 %v7443
        %v7500 = vunpack.c.l.b16 %v7444
        %v7501 = vunpack.c.l.b16 %v7445
        %v7502 = vunpack.c.l.b16 %v7446
        %v7503 = vunpack.c.l.b16 %v7447
        %v7504 = vunpack.c.l.b16 %v7448
        %v7505 = vunpack.c.l.b16 %v7449
        %v7506 = vunpack.c.l.b16 %v7450
        %v7507 = vpack.c.b16 %v7492, %v7491
        %v7508 = vpack.c.b16 %v7494, %v7493
        %v7509 = vpack.c.b16 %v7496, %v7495
        %v7510 = vpack.c.b16 %v7498, %v7497
        %v7511 = vpack.c.b16 %v7500, %v7499
        %v7512 = vpack.c.b16 %v7502, %v7501
        %v7513 = vpack.c.b16 %v7504, %v7503
        %v7514 = vpack.c.b16 %v7506, %v7505
        %7523 = vmatpush.bf16.msra.mxu0 %v7514
        %7524 = vmatpush.bf16.msra.mxu0 %v7513
        %7525 = vmatpush.bf16.msra.mxu0 %v7512
        %7526 = vmatpush.bf16.msra.mxu0 %v7511
        %7527 = vmatpush.bf16.msra.mxu0 %v7510
        %7528 = vmatpush.bf16.msra.mxu0 %v7509
        %7529 = vmatpush.bf16.msra.mxu0 %v7508
        %7530 = vmatpush.bf16.msra.mxu0 %v7507
        %7531 = vmatmul.bf16.gmra.mxu0 %v7467
        %v7532 = vpop.f32.mrf.mxu0
        %v7533 = vadd.f32 0.0, %v7532
        %v7534 = vpop.f32.mrf.mxu0
        %v7535 = vadd.f32 0.0, %v7534
        %7536 = vmatmul.bf16.gmra.mxu0 %v7468
        %v7537 = vpop.f32.mrf.mxu0
        %v7538 = vadd.f32 0.0, %v7537
        %v7539 = vpop.f32.mrf.mxu0
        %v7540 = vadd.f32 0.0, %v7539
        %7541 = vmatmul.bf16.gmra.mxu0 %v7469
        %v7542 = vpop.f32.mrf.mxu0
        %v7543 = vadd.f32 0.0, %v7542
        %v7544 = vpop.f32.mrf.mxu0
        %v7545 = vadd.f32 0.0, %v7544
        %7546 = vmatmul.bf16.gmra.mxu0 %v7470
        %v7547 = vpop.f32.mrf.mxu0
        %v7548 = vadd.f32 0.0, %v7547
        %v7549 = vpop.f32.mrf.mxu0
        %v7550 = vadd.f32 0.0, %v7549
        %7551 = vdwg.mxu0
        %v7552 = vadd.f32 %v7415, %v7533
        %v7553 = vadd.f32 %v7417, %v7535
        %v7554 = vadd.f32 %v7420, %v7538
        %v7555 = vadd.f32 %v7422, %v7540
        %v7556 = vadd.f32 %v7425, %v7543
        %v7557 = vadd.f32 %v7427, %v7545
        %v7558 = vadd.f32 %v7430, %v7548
        %v7559 = vadd.f32 %v7432, %v7550
        %v7560 = vld [vmem:[#allocation3 + $0x8] sm:$0xf]
        %v7561 = vld [vmem:[#allocation3 + $0x18] sm:$0xf]
        %v7562 = vld [vmem:[#allocation3 + $0x28] sm:$0xf]
        %v7563 = vld [vmem:[#allocation3 + $0x38] sm:$0xf]
        %v7564 = vld [vmem:[#allocation3 + $0x48] sm:$0xf]
        %v7565 = vld [vmem:[#allocation3 + $0x58] sm:$0xf]
        %v7566 = vld [vmem:[#allocation3 + $0x68] sm:$0xf]
        %v7567 = vld [vmem:[#allocation3 + $0x78] sm:$0xf]
        %v7568 = vld [vmem:[#allocation3 + $0x88] sm:$0xf]
        %v7569 = vld [vmem:[#allocation3 + $0x98] sm:$0xf]
        %v7570 = vld [vmem:[#allocation3 + $0xa8] sm:$0xf]
        %v7571 = vld [vmem:[#allocation3 + $0xb8] sm:$0xf]
        %v7572 = vld [vmem:[#allocation3 + $0xc8] sm:$0xf]
        %v7573 = vld [vmem:[#allocation3 + $0xd8] sm:$0xf]
        %v7574 = vld [vmem:[#allocation3 + $0xe8] sm:$0xf]
        %v7575 = vld [vmem:[#allocation3 + $0xf8] sm:$0xf]
        %v7576 = vld [vmem:[#allocation3 + $0x108] sm:$0xf]
        %v7577 = vld [vmem:[#allocation3 + $0x118] sm:$0xf]
        %v7578 = vld [vmem:[#allocation3 + $0x128] sm:$0xf]
        %v7579 = vld [vmem:[#allocation3 + $0x138] sm:$0xf]
        %v7580 = vld [vmem:[#allocation3 + $0x148] sm:$0xf]
        %v7581 = vld [vmem:[#allocation3 + $0x158] sm:$0xf]
        %v7582 = vld [vmem:[#allocation3 + $0x168] sm:$0xf]
        %v7583 = vld [vmem:[#allocation3 + $0x178] sm:$0xf]
        %s7584 = scalar_lea.vmem [#allocation16], 1792
        %v7585 = vld [vmem:[%s7584] sm:$0xf]
        %v7586 = vld [vmem:[%s7584 + $0x4] sm:$0xf]
        %v7587 = vld [vmem:[%s7584 + $0x8] sm:$0xf]
        %v7588 = vld [vmem:[%s7584 + $0xc] sm:$0xf]
        %v7589 = vld [vmem:[%s7584 + $0x10] sm:$0xf]
        %v7590 = vld [vmem:[%s7584 + $0x14] sm:$0xf]
        %v7591 = vld [vmem:[%s7584 + $0x18] sm:$0xf]
        %v7592 = vld [vmem:[%s7584 + $0x1c] sm:$0xf]
        %v7593 = vld [vmem:[%s7584 + $0x20] sm:$0xf]
        %v7594 = vld [vmem:[%s7584 + $0x24] sm:$0xf]
        %v7595 = vld [vmem:[%s7584 + $0x28] sm:$0xf]
        %v7596 = vld [vmem:[%s7584 + $0x2c] sm:$0xf]
        %v7597 = vld [vmem:[%s7584 + $0x30] sm:$0xf]
        %v7598 = vld [vmem:[%s7584 + $0x34] sm:$0xf]
        %v7599 = vld [vmem:[%s7584 + $0x38] sm:$0xf]
        %v7600 = vld [vmem:[%s7584 + $0x3c] sm:$0xf]
        %v7609 = vunpack.c.l.b16 %v7560
        %v7610 = vunpack.c.l.b16 %v7561
        %v7611 = vunpack.c.l.b16 %v7562
        %v7612 = vunpack.c.l.b16 %v7563
        %v7613 = vunpack.c.l.b16 %v7564
        %v7614 = vunpack.c.l.b16 %v7565
        %v7615 = vunpack.c.l.b16 %v7566
        %v7616 = vunpack.c.l.b16 %v7567
        %v7617 = vpack.c.b16 %v7610, %v7609
        %v7618 = vpack.c.b16 %v7612, %v7611
        %v7619 = vpack.c.b16 %v7614, %v7613
        %v7620 = vpack.c.b16 %v7616, %v7615
        %v7641 = vunpack.c.l.b16 %v7585
        %v7642 = vunpack.c.l.b16 %v7586
        %v7643 = vunpack.c.l.b16 %v7587
        %v7644 = vunpack.c.l.b16 %v7588
        %v7645 = vunpack.c.l.b16 %v7589
        %v7646 = vunpack.c.l.b16 %v7590
        %v7647 = vunpack.c.l.b16 %v7591
        %v7648 = vunpack.c.l.b16 %v7592
        %v7649 = vunpack.c.l.b16 %v7593
        %v7650 = vunpack.c.l.b16 %v7594
        %v7651 = vunpack.c.l.b16 %v7595
        %v7652 = vunpack.c.l.b16 %v7596
        %v7653 = vunpack.c.l.b16 %v7597
        %v7654 = vunpack.c.l.b16 %v7598
        %v7655 = vunpack.c.l.b16 %v7599
        %v7656 = vunpack.c.l.b16 %v7600
        %v7657 = vpack.c.b16 %v7642, %v7641
        %v7658 = vpack.c.b16 %v7644, %v7643
        %v7659 = vpack.c.b16 %v7646, %v7645
        %v7660 = vpack.c.b16 %v7648, %v7647
        %v7661 = vpack.c.b16 %v7650, %v7649
        %v7662 = vpack.c.b16 %v7652, %v7651
        %v7663 = vpack.c.b16 %v7654, %v7653
        %v7664 = vpack.c.b16 %v7656, %v7655
        %7673 = vmatpush.bf16.msra.mxu0 %v7664
        %7674 = vmatpush.bf16.msra.mxu0 %v7663
        %7675 = vmatpush.bf16.msra.mxu0 %v7662
        %7676 = vmatpush.bf16.msra.mxu0 %v7661
        %7677 = vmatpush.bf16.msra.mxu0 %v7660
        %7678 = vmatpush.bf16.msra.mxu0 %v7659
        %7679 = vmatpush.bf16.msra.mxu0 %v7658
        %7680 = vmatpush.bf16.msra.mxu0 %v7657
        %7681 = vmatmul.bf16.gmra.mxu0 %v7617
        %v7682 = vpop.f32.mrf.mxu0
        %v7683 = vadd.f32 0.0, %v7682
        %v7684 = vpop.f32.mrf.mxu0
        %v7685 = vadd.f32 0.0, %v7684
        %7686 = vmatmul.bf16.gmra.mxu0 %v7618
        %v7687 = vpop.f32.mrf.mxu0
        %v7688 = vadd.f32 0.0, %v7687
        %v7689 = vpop.f32.mrf.mxu0
        %v7690 = vadd.f32 0.0, %v7689
        %7691 = vmatmul.bf16.gmra.mxu0 %v7619
        %v7692 = vpop.f32.mrf.mxu0
        %v7693 = vadd.f32 0.0, %v7692
        %v7694 = vpop.f32.mrf.mxu0
        %v7695 = vadd.f32 0.0, %v7694
        %7696 = vmatmul.bf16.gmra.mxu0 %v7620
        %v7697 = vpop.f32.mrf.mxu0
        %v7698 = vadd.f32 0.0, %v7697
        %v7699 = vpop.f32.mrf.mxu0
        %v7700 = vadd.f32 0.0, %v7699
        %7701 = vdwg.mxu0
        %v7702 = vadd.f32 %v7552, %v7683
        %v7703 = vadd.f32 %v7553, %v7685
        %v7704 = vadd.f32 %v7554, %v7688
        %v7705 = vadd.f32 %v7555, %v7690
        %v7706 = vadd.f32 %v7556, %v7693
        %v7707 = vadd.f32 %v7557, %v7695
        %v7708 = vadd.f32 %v7558, %v7698
        %v7709 = vadd.f32 %v7559, %v7700
        %s7710 = scalar_lea.vmem [#allocation16], 1984
        %v7711 = vld [vmem:[%s7710] sm:$0xf]
        %v7712 = vld [vmem:[%s7710 + $0x4] sm:$0xf]
        %v7713 = vld [vmem:[%s7710 + $0x8] sm:$0xf]
        %v7714 = vld [vmem:[%s7710 + $0xc] sm:$0xf]
        %v7715 = vld [vmem:[%s7710 + $0x10] sm:$0xf]
        %v7716 = vld [vmem:[%s7710 + $0x14] sm:$0xf]
        %v7717 = vld [vmem:[%s7710 + $0x18] sm:$0xf]
        %v7718 = vld [vmem:[%s7710 + $0x1c] sm:$0xf]
        %v7719 = vld [vmem:[%s7710 + $0x20] sm:$0xf]
        %v7720 = vld [vmem:[%s7710 + $0x24] sm:$0xf]
        %v7721 = vld [vmem:[%s7710 + $0x28] sm:$0xf]
        %v7722 = vld [vmem:[%s7710 + $0x2c] sm:$0xf]
        %v7723 = vld [vmem:[%s7710 + $0x30] sm:$0xf]
        %v7724 = vld [vmem:[%s7710 + $0x34] sm:$0xf]
        %v7725 = vld [vmem:[%s7710 + $0x38] sm:$0xf]
        %v7726 = vld [vmem:[%s7710 + $0x3c] sm:$0xf]
        %v7735 = vunpack.c.l.b16 %v7568
        %v7736 = vunpack.c.l.b16 %v7569
        %v7737 = vunpack.c.l.b16 %v7570
        %v7738 = vunpack.c.l.b16 %v7571
        %v7739 = vunpack.c.l.b16 %v7572
        %v7740 = vunpack.c.l.b16 %v7573
        %v7741 = vunpack.c.l.b16 %v7574
        %v7742 = vunpack.c.l.b16 %v7575
        %v7743 = vpack.c.b16 %v7736, %v7735
        %v7744 = vpack.c.b16 %v7738, %v7737
        %v7745 = vpack.c.b16 %v7740, %v7739
        %v7746 = vpack.c.b16 %v7742, %v7741
        %v7767 = vunpack.c.l.b16 %v7711
        %v7768 = vunpack.c.l.b16 %v7712
        %v7769 = vunpack.c.l.b16 %v7713
        %v7770 = vunpack.c.l.b16 %v7714
        %v7771 = vunpack.c.l.b16 %v7715
        %v7772 = vunpack.c.l.b16 %v7716
        %v7773 = vunpack.c.l.b16 %v7717
        %v7774 = vunpack.c.l.b16 %v7718
        %v7775 = vunpack.c.l.b16 %v7719
        %v7776 = vunpack.c.l.b16 %v7720
        %v7777 = vunpack.c.l.b16 %v7721
        %v7778 = vunpack.c.l.b16 %v7722
        %v7779 = vunpack.c.l.b16 %v7723
        %v7780 = vunpack.c.l.b16 %v7724
        %v7781 = vunpack.c.l.b16 %v7725
        %v7782 = vunpack.c.l.b16 %v7726
        %v7783 = vpack.c.b16 %v7768, %v7767
        %v7784 = vpack.c.b16 %v7770, %v7769
        %v7785 = vpack.c.b16 %v7772, %v7771
        %v7786 = vpack.c.b16 %v7774, %v7773
        %v7787 = vpack.c.b16 %v7776, %v7775
        %v7788 = vpack.c.b16 %v7778, %v7777
        %v7789 = vpack.c.b16 %v7780, %v7779
        %v7790 = vpack.c.b16 %v7782, %v7781
        %7799 = vmatpush.bf16.msra.mxu0 %v7790
        %7800 = vmatpush.bf16.msra.mxu0 %v7789
        %7801 = vmatpush.bf16.msra.mxu0 %v7788
        %7802 = vmatpush.bf16.msra.mxu0 %v7787
        %7803 = vmatpush.bf16.msra.mxu0 %v7786
        %7804 = vmatpush.bf16.msra.mxu0 %v7785
        %7805 = vmatpush.bf16.msra.mxu0 %v7784
        %7806 = vmatpush.bf16.msra.mxu0 %v7783
        %7807 = vmatmul.bf16.gmra.mxu0 %v7743
        %v7808 = vpop.f32.mrf.mxu0
        %v7809 = vadd.f32 0.0, %v7808
        %v7810 = vpop.f32.mrf.mxu0
        %v7811 = vadd.f32 0.0, %v7810
        %7812 = vmatmul.bf16.gmra.mxu0 %v7744
        %v7813 = vpop.f32.mrf.mxu0
        %v7814 = vadd.f32 0.0, %v7813
        %v7815 = vpop.f32.mrf.mxu0
        %v7816 = vadd.f32 0.0, %v7815
        %7817 = vmatmul.bf16.gmra.mxu0 %v7745
        %v7818 = vpop.f32.mrf.mxu0
        %v7819 = vadd.f32 0.0, %v7818
        %v7820 = vpop.f32.mrf.mxu0
        %v7821 = vadd.f32 0.0, %v7820
        %7822 = vmatmul.bf16.gmra.mxu0 %v7746
        %v7823 = vpop.f32.mrf.mxu0
        %v7824 = vadd.f32 0.0, %v7823
        %v7825 = vpop.f32.mrf.mxu0
        %v7826 = vadd.f32 0.0, %v7825
        %7827 = vdwg.mxu0
        %v7828 = vadd.f32 %v7702, %v7809
        %v7829 = vadd.f32 %v7703, %v7811
        %v7830 = vadd.f32 %v7704, %v7814
        %v7831 = vadd.f32 %v7705, %v7816
        %v7832 = vadd.f32 %v7706, %v7819
        %v7833 = vadd.f32 %v7707, %v7821
        %v7834 = vadd.f32 %v7708, %v7824
        %v7835 = vadd.f32 %v7709, %v7826
        %s7836 = scalar_lea.vmem [#allocation16], 2176
        %v7837 = vld [vmem:[%s7836] sm:$0xf]
        %v7838 = vld [vmem:[%s7836 + $0x4] sm:$0xf]
        %v7839 = vld [vmem:[%s7836 + $0x8] sm:$0xf]
        %v7840 = vld [vmem:[%s7836 + $0xc] sm:$0xf]
        %v7841 = vld [vmem:[%s7836 + $0x10] sm:$0xf]
        %v7842 = vld [vmem:[%s7836 + $0x14] sm:$0xf]
        %v7843 = vld [vmem:[%s7836 + $0x18] sm:$0xf]
        %v7844 = vld [vmem:[%s7836 + $0x1c] sm:$0xf]
        %v7845 = vld [vmem:[%s7836 + $0x20] sm:$0xf]
        %v7846 = vld [vmem:[%s7836 + $0x24] sm:$0xf]
        %v7847 = vld [vmem:[%s7836 + $0x28] sm:$0xf]
        %v7848 = vld [vmem:[%s7836 + $0x2c] sm:$0xf]
        %v7849 = vld [vmem:[%s7836 + $0x30] sm:$0xf]
        %v7850 = vld [vmem:[%s7836 + $0x34] sm:$0xf]
        %v7851 = vld [vmem:[%s7836 + $0x38] sm:$0xf]
        %v7852 = vld [vmem:[%s7836 + $0x3c] sm:$0xf]
        %v7861 = vunpack.c.l.b16 %v7576
        %v7862 = vunpack.c.l.b16 %v7577
        %v7863 = vunpack.c.l.b16 %v7578
        %v7864 = vunpack.c.l.b16 %v7579
        %v7865 = vunpack.c.l.b16 %v7580
        %v7866 = vunpack.c.l.b16 %v7581
        %v7867 = vunpack.c.l.b16 %v7582
        %v7868 = vunpack.c.l.b16 %v7583
        %v7869 = vpack.c.b16 %v7862, %v7861
        %v7870 = vpack.c.b16 %v7864, %v7863
        %v7871 = vpack.c.b16 %v7866, %v7865
        %v7872 = vpack.c.b16 %v7868, %v7867
        %v7893 = vunpack.c.l.b16 %v7837
        %v7894 = vunpack.c.l.b16 %v7838
        %v7895 = vunpack.c.l.b16 %v7839
        %v7896 = vunpack.c.l.b16 %v7840
        %v7897 = vunpack.c.l.b16 %v7841
        %v7898 = vunpack.c.l.b16 %v7842
        %v7899 = vunpack.c.l.b16 %v7843
        %v7900 = vunpack.c.l.b16 %v7844
        %v7901 = vunpack.c.l.b16 %v7845
        %v7902 = vunpack.c.l.b16 %v7846
        %v7903 = vunpack.c.l.b16 %v7847
        %v7904 = vunpack.c.l.b16 %v7848
        %v7905 = vunpack.c.l.b16 %v7849
        %v7906 = vunpack.c.l.b16 %v7850
        %v7907 = vunpack.c.l.b16 %v7851
        %v7908 = vunpack.c.l.b16 %v7852
        %v7909 = vpack.c.b16 %v7894, %v7893
        %v7910 = vpack.c.b16 %v7896, %v7895
        %v7911 = vpack.c.b16 %v7898, %v7897
        %v7912 = vpack.c.b16 %v7900, %v7899
        %v7913 = vpack.c.b16 %v7902, %v7901
        %v7914 = vpack.c.b16 %v7904, %v7903
        %v7915 = vpack.c.b16 %v7906, %v7905
        %v7916 = vpack.c.b16 %v7908, %v7907
        %7925 = vmatpush.bf16.msra.mxu0 %v7916
        %7926 = vmatpush.bf16.msra.mxu0 %v7915
        %7927 = vmatpush.bf16.msra.mxu0 %v7914
        %7928 = vmatpush.bf16.msra.mxu0 %v7913
        %7929 = vmatpush.bf16.msra.mxu0 %v7912
        %7930 = vmatpush.bf16.msra.mxu0 %v7911
        %7931 = vmatpush.bf16.msra.mxu0 %v7910
        %7932 = vmatpush.bf16.msra.mxu0 %v7909
        %7933 = vmatmul.bf16.gmra.mxu0 %v7869
        %v7934 = vpop.f32.mrf.mxu0
        %v7935 = vadd.f32 0.0, %v7934
        %v7936 = vpop.f32.mrf.mxu0
        %v7937 = vadd.f32 0.0, %v7936
        %7938 = vmatmul.bf16.gmra.mxu0 %v7870
        %v7939 = vpop.f32.mrf.mxu0
        %v7940 = vadd.f32 0.0, %v7939
        %v7941 = vpop.f32.mrf.mxu0
        %v7942 = vadd.f32 0.0, %v7941
        %7943 = vmatmul.bf16.gmra.mxu0 %v7871
        %v7944 = vpop.f32.mrf.mxu0
        %v7945 = vadd.f32 0.0, %v7944
        %v7946 = vpop.f32.mrf.mxu0
        %v7947 = vadd.f32 0.0, %v7946
        %7948 = vmatmul.bf16.gmra.mxu0 %v7872
        %v7949 = vpop.f32.mrf.mxu0
        %v7950 = vadd.f32 0.0, %v7949
        %v7951 = vpop.f32.mrf.mxu0
        %v7952 = vadd.f32 0.0, %v7951
        %7953 = vdwg.mxu0
        %v7954 = vadd.f32 %v7828, %v7935
        %v7955 = vadd.f32 %v7829, %v7937
        %v7956 = vadd.f32 %v7830, %v7940
        %v7957 = vadd.f32 %v7831, %v7942
        %v7958 = vadd.f32 %v7832, %v7945
        %v7959 = vadd.f32 %v7833, %v7947
        %v7960 = vadd.f32 %v7834, %v7950
        %v7961 = vadd.f32 %v7835, %v7952
        %v7962 = vld [vmem:[#allocation3 + $0xc] sm:$0xf]
        %v7963 = vld [vmem:[#allocation3 + $0x1c] sm:$0xf]
        %v7964 = vld [vmem:[#allocation3 + $0x2c] sm:$0xf]
        %v7965 = vld [vmem:[#allocation3 + $0x3c] sm:$0xf]
        %v7966 = vld [vmem:[#allocation3 + $0x4c] sm:$0xf]
        %v7967 = vld [vmem:[#allocation3 + $0x5c] sm:$0xf]
        %v7968 = vld [vmem:[#allocation3 + $0x6c] sm:$0xf]
        %v7969 = vld [vmem:[#allocation3 + $0x7c] sm:$0xf]
        %v7970 = vld [vmem:[#allocation3 + $0x8c] sm:$0xf]
        %v7971 = vld [vmem:[#allocation3 + $0x9c] sm:$0xf]
        %v7972 = vld [vmem:[#allocation3 + $0xac] sm:$0xf]
        %v7973 = vld [vmem:[#allocation3 + $0xbc] sm:$0xf]
        %v7974 = vld [vmem:[#allocation3 + $0xcc] sm:$0xf]
        %v7975 = vld [vmem:[#allocation3 + $0xdc] sm:$0xf]
        %v7976 = vld [vmem:[#allocation3 + $0xec] sm:$0xf]
        %v7977 = vld [vmem:[#allocation3 + $0xfc] sm:$0xf]
        %v7978 = vld [vmem:[#allocation3 + $0x10c] sm:$0xf]
        %v7979 = vld [vmem:[#allocation3 + $0x11c] sm:$0xf]
        %v7980 = vld [vmem:[#allocation3 + $0x12c] sm:$0xf]
        %v7981 = vld [vmem:[#allocation3 + $0x13c] sm:$0xf]
        %v7982 = vld [vmem:[#allocation3 + $0x14c] sm:$0xf]
        %v7983 = vld [vmem:[#allocation3 + $0x15c] sm:$0xf]
        %v7984 = vld [vmem:[#allocation3 + $0x16c] sm:$0xf]
        %v7985 = vld [vmem:[#allocation3 + $0x17c] sm:$0xf]
        %s7986 = scalar_lea.vmem [#allocation16], 1856
        %v7987 = vld [vmem:[%s7986] sm:$0xf]
        %v7988 = vld [vmem:[%s7986 + $0x4] sm:$0xf]
        %v7989 = vld [vmem:[%s7986 + $0x8] sm:$0xf]
        %v7990 = vld [vmem:[%s7986 + $0xc] sm:$0xf]
        %v7991 = vld [vmem:[%s7986 + $0x10] sm:$0xf]
        %v7992 = vld [vmem:[%s7986 + $0x14] sm:$0xf]
        %v7993 = vld [vmem:[%s7986 + $0x18] sm:$0xf]
        %v7994 = vld [vmem:[%s7986 + $0x1c] sm:$0xf]
        %v7995 = vld [vmem:[%s7986 + $0x20] sm:$0xf]
        %v7996 = vld [vmem:[%s7986 + $0x24] sm:$0xf]
        %v7997 = vld [vmem:[%s7986 + $0x28] sm:$0xf]
        %v7998 = vld [vmem:[%s7986 + $0x2c] sm:$0xf]
        %v7999 = vld [vmem:[%s7986 + $0x30] sm:$0xf]
        %v8000 = vld [vmem:[%s7986 + $0x34] sm:$0xf]
        %v8001 = vld [vmem:[%s7986 + $0x38] sm:$0xf]
        %v8002 = vld [vmem:[%s7986 + $0x3c] sm:$0xf]
        %v8011 = vunpack.c.l.b16 %v7962
        %v8012 = vunpack.c.l.b16 %v7963
        %v8013 = vunpack.c.l.b16 %v7964
        %v8014 = vunpack.c.l.b16 %v7965
        %v8015 = vunpack.c.l.b16 %v7966
        %v8016 = vunpack.c.l.b16 %v7967
        %v8017 = vunpack.c.l.b16 %v7968
        %v8018 = vunpack.c.l.b16 %v7969
        %v8019 = vpack.c.b16 %v8012, %v8011
        %v8020 = vpack.c.b16 %v8014, %v8013
        %v8021 = vpack.c.b16 %v8016, %v8015
        %v8022 = vpack.c.b16 %v8018, %v8017
        %v8043 = vunpack.c.l.b16 %v7987
        %v8044 = vunpack.c.l.b16 %v7988
        %v8045 = vunpack.c.l.b16 %v7989
        %v8046 = vunpack.c.l.b16 %v7990
        %v8047 = vunpack.c.l.b16 %v7991
        %v8048 = vunpack.c.l.b16 %v7992
        %v8049 = vunpack.c.l.b16 %v7993
        %v8050 = vunpack.c.l.b16 %v7994
        %v8051 = vunpack.c.l.b16 %v7995
        %v8052 = vunpack.c.l.b16 %v7996
        %v8053 = vunpack.c.l.b16 %v7997
        %v8054 = vunpack.c.l.b16 %v7998
        %v8055 = vunpack.c.l.b16 %v7999
        %v8056 = vunpack.c.l.b16 %v8000
        %v8057 = vunpack.c.l.b16 %v8001
        %v8058 = vunpack.c.l.b16 %v8002
        %v8059 = vpack.c.b16 %v8044, %v8043
        %v8060 = vpack.c.b16 %v8046, %v8045
        %v8061 = vpack.c.b16 %v8048, %v8047
        %v8062 = vpack.c.b16 %v8050, %v8049
        %v8063 = vpack.c.b16 %v8052, %v8051
        %v8064 = vpack.c.b16 %v8054, %v8053
        %v8065 = vpack.c.b16 %v8056, %v8055
        %v8066 = vpack.c.b16 %v8058, %v8057
        %8075 = vmatpush.bf16.msra.mxu0 %v8066
        %8076 = vmatpush.bf16.msra.mxu0 %v8065
        %8077 = vmatpush.bf16.msra.mxu0 %v8064
        %8078 = vmatpush.bf16.msra.mxu0 %v8063
        %8079 = vmatpush.bf16.msra.mxu0 %v8062
        %8080 = vmatpush.bf16.msra.mxu0 %v8061
        %8081 = vmatpush.bf16.msra.mxu0 %v8060
        %8082 = vmatpush.bf16.msra.mxu0 %v8059
        %8083 = vmatmul.bf16.gmra.mxu0 %v8019
        %v8084 = vpop.f32.mrf.mxu0
        %v8085 = vadd.f32 0.0, %v8084
        %v8086 = vpop.f32.mrf.mxu0
        %v8087 = vadd.f32 0.0, %v8086
        %8088 = vmatmul.bf16.gmra.mxu0 %v8020
        %v8089 = vpop.f32.mrf.mxu0
        %v8090 = vadd.f32 0.0, %v8089
        %v8091 = vpop.f32.mrf.mxu0
        %v8092 = vadd.f32 0.0, %v8091
        %8093 = vmatmul.bf16.gmra.mxu0 %v8021
        %v8094 = vpop.f32.mrf.mxu0
        %v8095 = vadd.f32 0.0, %v8094
        %v8096 = vpop.f32.mrf.mxu0
        %v8097 = vadd.f32 0.0, %v8096
        %8098 = vmatmul.bf16.gmra.mxu0 %v8022
        %v8099 = vpop.f32.mrf.mxu0
        %v8100 = vadd.f32 0.0, %v8099
        %v8101 = vpop.f32.mrf.mxu0
        %v8102 = vadd.f32 0.0, %v8101
        %8103 = vdwg.mxu0
        %v8104 = vadd.f32 %v7954, %v8085
        %v8105 = vadd.f32 %v7955, %v8087
        %v8106 = vadd.f32 %v7956, %v8090
        %v8107 = vadd.f32 %v7957, %v8092
        %v8108 = vadd.f32 %v7958, %v8095
        %v8109 = vadd.f32 %v7959, %v8097
        %v8110 = vadd.f32 %v7960, %v8100
        %v8111 = vadd.f32 %v7961, %v8102
        %s8112 = scalar_lea.vmem [#allocation16], 2048
        %v8113 = vld [vmem:[%s8112] sm:$0xf]
        %v8114 = vld [vmem:[%s8112 + $0x4] sm:$0xf]
        %v8115 = vld [vmem:[%s8112 + $0x8] sm:$0xf]
        %v8116 = vld [vmem:[%s8112 + $0xc] sm:$0xf]
        %v8117 = vld [vmem:[%s8112 + $0x10] sm:$0xf]
        %v8118 = vld [vmem:[%s8112 + $0x14] sm:$0xf]
        %v8119 = vld [vmem:[%s8112 + $0x18] sm:$0xf]
        %v8120 = vld [vmem:[%s8112 + $0x1c] sm:$0xf]
        %v8121 = vld [vmem:[%s8112 + $0x20] sm:$0xf]
        %v8122 = vld [vmem:[%s8112 + $0x24] sm:$0xf]
        %v8123 = vld [vmem:[%s8112 + $0x28] sm:$0xf]
        %v8124 = vld [vmem:[%s8112 + $0x2c] sm:$0xf]
        %v8125 = vld [vmem:[%s8112 + $0x30] sm:$0xf]
        %v8126 = vld [vmem:[%s8112 + $0x34] sm:$0xf]
        %v8127 = vld [vmem:[%s8112 + $0x38] sm:$0xf]
        %v8128 = vld [vmem:[%s8112 + $0x3c] sm:$0xf]
        %v8137 = vunpack.c.l.b16 %v7970
        %v8138 = vunpack.c.l.b16 %v7971
        %v8139 = vunpack.c.l.b16 %v7972
        %v8140 = vunpack.c.l.b16 %v7973
        %v8141 = vunpack.c.l.b16 %v7974
        %v8142 = vunpack.c.l.b16 %v7975
        %v8143 = vunpack.c.l.b16 %v7976
        %v8144 = vunpack.c.l.b16 %v7977
        %v8145 = vpack.c.b16 %v8138, %v8137
        %v8146 = vpack.c.b16 %v8140, %v8139
        %v8147 = vpack.c.b16 %v8142, %v8141
        %v8148 = vpack.c.b16 %v8144, %v8143
        %v8169 = vunpack.c.l.b16 %v8113
        %v8170 = vunpack.c.l.b16 %v8114
        %v8171 = vunpack.c.l.b16 %v8115
        %v8172 = vunpack.c.l.b16 %v8116
        %v8173 = vunpack.c.l.b16 %v8117
        %v8174 = vunpack.c.l.b16 %v8118
        %v8175 = vunpack.c.l.b16 %v8119
        %v8176 = vunpack.c.l.b16 %v8120
        %v8177 = vunpack.c.l.b16 %v8121
        %v8178 = vunpack.c.l.b16 %v8122
        %v8179 = vunpack.c.l.b16 %v8123
        %v8180 = vunpack.c.l.b16 %v8124
        %v8181 = vunpack.c.l.b16 %v8125
        %v8182 = vunpack.c.l.b16 %v8126
        %v8183 = vunpack.c.l.b16 %v8127
        %v8184 = vunpack.c.l.b16 %v8128
        %v8185 = vpack.c.b16 %v8170, %v8169
        %v8186 = vpack.c.b16 %v8172, %v8171
        %v8187 = vpack.c.b16 %v8174, %v8173
        %v8188 = vpack.c.b16 %v8176, %v8175
        %v8189 = vpack.c.b16 %v8178, %v8177
        %v8190 = vpack.c.b16 %v8180, %v8179
        %v8191 = vpack.c.b16 %v8182, %v8181
        %v8192 = vpack.c.b16 %v8184, %v8183
        %8201 = vmatpush.bf16.msra.mxu0 %v8192
        %8202 = vmatpush.bf16.msra.mxu0 %v8191
        %8203 = vmatpush.bf16.msra.mxu0 %v8190
        %8204 = vmatpush.bf16.msra.mxu0 %v8189
        %8205 = vmatpush.bf16.msra.mxu0 %v8188
        %8206 = vmatpush.bf16.msra.mxu0 %v8187
        %8207 = vmatpush.bf16.msra.mxu0 %v8186
        %8208 = vmatpush.bf16.msra.mxu0 %v8185
        %8209 = vmatmul.bf16.gmra.mxu0 %v8145
        %v8210 = vpop.f32.mrf.mxu0
        %v8211 = vadd.f32 0.0, %v8210
        %v8212 = vpop.f32.mrf.mxu0
        %v8213 = vadd.f32 0.0, %v8212
        %8214 = vmatmul.bf16.gmra.mxu0 %v8146
        %v8215 = vpop.f32.mrf.mxu0
        %v8216 = vadd.f32 0.0, %v8215
        %v8217 = vpop.f32.mrf.mxu0
        %v8218 = vadd.f32 0.0, %v8217
        %8219 = vmatmul.bf16.gmra.mxu0 %v8147
        %v8220 = vpop.f32.mrf.mxu0
        %v8221 = vadd.f32 0.0, %v8220
        %v8222 = vpop.f32.mrf.mxu0
        %v8223 = vadd.f32 0.0, %v8222
        %8224 = vmatmul.bf16.gmra.mxu0 %v8148
        %v8225 = vpop.f32.mrf.mxu0
        %v8226 = vadd.f32 0.0, %v8225
        %v8227 = vpop.f32.mrf.mxu0
        %v8228 = vadd.f32 0.0, %v8227
        %8229 = vdwg.mxu0
        %v8230 = vadd.f32 %v8104, %v8211
        %v8231 = vadd.f32 %v8105, %v8213
        %v8232 = vadd.f32 %v8106, %v8216
        %v8233 = vadd.f32 %v8107, %v8218
        %v8234 = vadd.f32 %v8108, %v8221
        %v8235 = vadd.f32 %v8109, %v8223
        %v8236 = vadd.f32 %v8110, %v8226
        %v8237 = vadd.f32 %v8111, %v8228
        %s8238 = scalar_lea.vmem [#allocation16], 2240
        %v8239 = vld [vmem:[%s8238] sm:$0xf]
        %v8240 = vld [vmem:[%s8238 + $0x4] sm:$0xf]
        %v8241 = vld [vmem:[%s8238 + $0x8] sm:$0xf]
        %v8242 = vld [vmem:[%s8238 + $0xc] sm:$0xf]
        %v8243 = vld [vmem:[%s8238 + $0x10] sm:$0xf]
        %v8244 = vld [vmem:[%s8238 + $0x14] sm:$0xf]
        %v8245 = vld [vmem:[%s8238 + $0x18] sm:$0xf]
        %v8246 = vld [vmem:[%s8238 + $0x1c] sm:$0xf]
        %v8247 = vld [vmem:[%s8238 + $0x20] sm:$0xf]
        %v8248 = vld [vmem:[%s8238 + $0x24] sm:$0xf]
        %v8249 = vld [vmem:[%s8238 + $0x28] sm:$0xf]
        %v8250 = vld [vmem:[%s8238 + $0x2c] sm:$0xf]
        %v8251 = vld [vmem:[%s8238 + $0x30] sm:$0xf]
        %v8252 = vld [vmem:[%s8238 + $0x34] sm:$0xf]
        %v8253 = vld [vmem:[%s8238 + $0x38] sm:$0xf]
        %v8254 = vld [vmem:[%s8238 + $0x3c] sm:$0xf]
        %v8263 = vunpack.c.l.b16 %v7978
        %v8264 = vunpack.c.l.b16 %v7979
        %v8265 = vunpack.c.l.b16 %v7980
        %v8266 = vunpack.c.l.b16 %v7981
        %v8267 = vunpack.c.l.b16 %v7982
        %v8268 = vunpack.c.l.b16 %v7983
        %v8269 = vunpack.c.l.b16 %v7984
        %v8270 = vunpack.c.l.b16 %v7985
        %v8271 = vpack.c.b16 %v8264, %v8263
        %v8272 = vpack.c.b16 %v8266, %v8265
        %v8273 = vpack.c.b16 %v8268, %v8267
        %v8274 = vpack.c.b16 %v8270, %v8269
        %v8295 = vunpack.c.l.b16 %v8239
        %v8296 = vunpack.c.l.b16 %v8240
        %v8297 = vunpack.c.l.b16 %v8241
        %v8298 = vunpack.c.l.b16 %v8242
        %v8299 = vunpack.c.l.b16 %v8243
        %v8300 = vunpack.c.l.b16 %v8244
        %v8301 = vunpack.c.l.b16 %v8245
        %v8302 = vunpack.c.l.b16 %v8246
        %v8303 = vunpack.c.l.b16 %v8247
        %v8304 = vunpack.c.l.b16 %v8248
        %v8305 = vunpack.c.l.b16 %v8249
        %v8306 = vunpack.c.l.b16 %v8250
        %v8307 = vunpack.c.l.b16 %v8251
        %v8308 = vunpack.c.l.b16 %v8252
        %v8309 = vunpack.c.l.b16 %v8253
        %v8310 = vunpack.c.l.b16 %v8254
        %v8311 = vpack.c.b16 %v8296, %v8295
        %v8312 = vpack.c.b16 %v8298, %v8297
        %v8313 = vpack.c.b16 %v8300, %v8299
        %v8314 = vpack.c.b16 %v8302, %v8301
        %v8315 = vpack.c.b16 %v8304, %v8303
        %v8316 = vpack.c.b16 %v8306, %v8305
        %v8317 = vpack.c.b16 %v8308, %v8307
        %v8318 = vpack.c.b16 %v8310, %v8309
        %8327 = vmatpush.bf16.msra.mxu0 %v8318
        %8328 = vmatpush.bf16.msra.mxu0 %v8317
        %8329 = vmatpush.bf16.msra.mxu0 %v8316
        %8330 = vmatpush.bf16.msra.mxu0 %v8315
        %8331 = vmatpush.bf16.msra.mxu0 %v8314
        %8332 = vmatpush.bf16.msra.mxu0 %v8313
        %8333 = vmatpush.bf16.msra.mxu0 %v8312
        %8334 = vmatpush.bf16.msra.mxu0 %v8311
        %8335 = vmatmul.bf16.gmra.mxu0 %v8271
        %v8336 = vpop.f32.mrf.mxu0
        %v8337 = vadd.f32 0.0, %v8336
        %v8338 = vpop.f32.mrf.mxu0
        %v8339 = vadd.f32 0.0, %v8338
        %8340 = vmatmul.bf16.gmra.mxu0 %v8272
        %v8341 = vpop.f32.mrf.mxu0
        %v8342 = vadd.f32 0.0, %v8341
        %v8343 = vpop.f32.mrf.mxu0
        %v8344 = vadd.f32 0.0, %v8343
        %8345 = vmatmul.bf16.gmra.mxu0 %v8273
        %v8346 = vpop.f32.mrf.mxu0
        %v8347 = vadd.f32 0.0, %v8346
        %v8348 = vpop.f32.mrf.mxu0
        %v8349 = vadd.f32 0.0, %v8348
        %8350 = vmatmul.bf16.gmra.mxu0 %v8274
        %v8351 = vpop.f32.mrf.mxu0
        %v8352 = vadd.f32 0.0, %v8351
        %v8353 = vpop.f32.mrf.mxu0
        %v8354 = vadd.f32 0.0, %v8353
        %8355 = vdwg.mxu0
        %v8356 = vadd.f32 %v8230, %v8337
        %v8357 = vadd.f32 %v8231, %v8339
        %v8358 = vadd.f32 %v8232, %v8342
        %v8359 = vadd.f32 %v8233, %v8344
        %v8360 = vadd.f32 %v8234, %v8347
        %v8361 = vadd.f32 %v8235, %v8349
        %v8362 = vadd.f32 %v8236, %v8352
        %v8363 = vadd.f32 %v8237, %v8354
        %v8365 = vperm.slane %v7173, 0
        %v8367 = vadd.f32 %v8356, %v8365
        %v8368 = vadd.f32 %v8357, %v8365
        %v8369 = vadd.f32 %v8358, %v8365
        %v8370 = vadd.f32 %v8359, %v8365
        %v8371 = vadd.f32 %v8360, %v8365
        %v8372 = vadd.f32 %v8361, %v8365
        %v8373 = vadd.f32 %v8362, %v8365
        %v8374 = vadd.f32 %v8363, %v8365
        %v8375 = vmax.f32 %v8367, 0.0
        %v8376 = vmax.f32 %v8368, 0.0
        %v8377 = vmax.f32 %v8369, 0.0
        %v8378 = vmax.f32 %v8370, 0.0
        %v8379 = vmax.f32 %v8371, 0.0
        %v8380 = vmax.f32 %v8372, 0.0
        %v8381 = vmax.f32 %v8373, 0.0
        %v8382 = vmax.f32 %v8374, 0.0
        %v8383 = vpack.c.bf16 %v8376, %v8375
        %v8384 = vpack.c.bf16 %v8378, %v8377
        %v8385 = vpack.c.bf16 %v8380, %v8379
        %v8386 = vpack.c.bf16 %v8382, %v8381
        %s8387 = scalar_lea.vmem [#allocation19], 192
        %v8388 = vld [vmem:[%s8387] sm:$0xf]
        %v8389 = vld [vmem:[%s8387 + $0x4] sm:$0xf]
        %v8390 = vld [vmem:[%s8387 + $0x8] sm:$0xf]
        %v8391 = vld [vmem:[%s8387 + $0xc] sm:$0xf]
        %v8392 = vld [vmem:[%s8387 + $0x10] sm:$0xf]
        %v8393 = vld [vmem:[%s8387 + $0x14] sm:$0xf]
        %v8394 = vld [vmem:[%s8387 + $0x18] sm:$0xf]
        %v8395 = vld [vmem:[%s8387 + $0x1c] sm:$0xf]
        %v8396 = vld [vmem:[%s8387 + $0x20] sm:$0xf]
        %v8397 = vld [vmem:[%s8387 + $0x24] sm:$0xf]
        %v8398 = vld [vmem:[%s8387 + $0x28] sm:$0xf]
        %v8399 = vld [vmem:[%s8387 + $0x2c] sm:$0xf]
        %v8400 = vld [vmem:[%s8387 + $0x30] sm:$0xf]
        %v8401 = vld [vmem:[%s8387 + $0x34] sm:$0xf]
        %v8402 = vld [vmem:[%s8387 + $0x38] sm:$0xf]
        %v8403 = vld [vmem:[%s8387 + $0x3c] sm:$0xf]
        %s8404 = scalar_lea.vmem [#allocation21], 3
        %v8405 = vld [vmem:[%s8404] sm:$0x1]
        %v8407 = vperm.slane %v8405, 0
        %v8425 = vunpack.c.l.b16 %v8388
        %v8426 = vunpack.c.l.b16 %v8389
        %v8427 = vunpack.c.l.b16 %v8390
        %v8428 = vunpack.c.l.b16 %v8391
        %v8429 = vunpack.c.l.b16 %v8392
        %v8430 = vunpack.c.l.b16 %v8393
        %v8431 = vunpack.c.l.b16 %v8394
        %v8432 = vunpack.c.l.b16 %v8395
        %v8433 = vunpack.c.l.b16 %v8396
        %v8434 = vunpack.c.l.b16 %v8397
        %v8435 = vunpack.c.l.b16 %v8398
        %v8436 = vunpack.c.l.b16 %v8399
        %v8437 = vunpack.c.l.b16 %v8400
        %v8438 = vunpack.c.l.b16 %v8401
        %v8439 = vunpack.c.l.b16 %v8402
        %v8440 = vunpack.c.l.b16 %v8403
        %v8441 = vpack.c.b16 %v8426, %v8425
        %v8442 = vpack.c.b16 %v8428, %v8427
        %v8443 = vpack.c.b16 %v8430, %v8429
        %v8444 = vpack.c.b16 %v8432, %v8431
        %v8445 = vpack.c.b16 %v8434, %v8433
        %v8446 = vpack.c.b16 %v8436, %v8435
        %v8447 = vpack.c.b16 %v8438, %v8437
        %v8448 = vpack.c.b16 %v8440, %v8439
        %8457 = vmatpush.bf16.msra.mxu0 %v8448
        %8458 = vmatpush.bf16.msra.mxu0 %v8447
        %8459 = vmatpush.bf16.msra.mxu0 %v8446
        %8460 = vmatpush.bf16.msra.mxu0 %v8445
        %8461 = vmatpush.bf16.msra.mxu0 %v8444
        %8462 = vmatpush.bf16.msra.mxu0 %v8443
        %8463 = vmatpush.bf16.msra.mxu0 %v8442
        %8464 = vmatpush.bf16.msra.mxu0 %v8441
        %8465 = vmatmul.bf16.gmra.mxu0 %v8383
        %v8466 = vpop.f32.mrf.mxu0
        %v8467 = vadd.f32 %v8407, %v8466
        %v8468 = vpop.f32.mrf.mxu0
        %v8469 = vadd.f32 %v8407, %v8468
        %8470 = vmatmul.bf16.gmra.mxu0 %v8384
        %v8471 = vpop.f32.mrf.mxu0
        %v8472 = vadd.f32 %v8407, %v8471
        %v8473 = vpop.f32.mrf.mxu0
        %v8474 = vadd.f32 %v8407, %v8473
        %8475 = vmatmul.bf16.gmra.mxu0 %v8385
        %v8476 = vpop.f32.mrf.mxu0
        %v8477 = vadd.f32 %v8407, %v8476
        %v8478 = vpop.f32.mrf.mxu0
        %v8479 = vadd.f32 %v8407, %v8478
        %8480 = vmatmul.bf16.gmra.mxu0 %v8386
        %v8481 = vpop.f32.mrf.mxu0
        %v8482 = vadd.f32 %v8407, %v8481
        %v8483 = vpop.f32.mrf.mxu0
        %v8484 = vadd.f32 %v8407, %v8483
        %8485 = vdwg.mxu0
        %v8486 = vmax.f32 %v8467, 0.0
        %v8487 = vmax.f32 %v8469, 0.0
        %v8488 = vmax.f32 %v8472, 0.0
        %v8489 = vmax.f32 %v8474, 0.0
        %v8490 = vmax.f32 %v8477, 0.0
        %v8491 = vmax.f32 %v8479, 0.0
        %v8492 = vmax.f32 %v8482, 0.0
        %v8493 = vmax.f32 %v8484, 0.0
        %v8494 = vld [vmem:[%s567] sm:$0xf]
        %v8495 = vld [vmem:[%s567 + $0x4] sm:$0xf]
        %v8496 = vld [vmem:[%s567 + $0x8] sm:$0xf]
        %v8497 = vld [vmem:[%s567 + $0xc] sm:$0xf]
        %v8498 = vld [vmem:[%s567 + $0x10] sm:$0xf]
        %v8499 = vld [vmem:[%s567 + $0x14] sm:$0xf]
        %v8500 = vld [vmem:[%s567 + $0x18] sm:$0xf]
        %v8501 = vld [vmem:[%s567 + $0x1c] sm:$0xf]
        %v8502 = vunpack.c.l.bf16 %v8494
        %v8503 = vunpack.c.l.bf16 %v8495
        %v8504 = vunpack.c.l.bf16 %v8496
        %v8505 = vunpack.c.l.bf16 %v8497
        %v8506 = vunpack.c.l.bf16 %v8498
        %v8507 = vunpack.c.l.bf16 %v8499
        %v8508 = vunpack.c.l.bf16 %v8500
        %v8509 = vunpack.c.l.bf16 %v8501
        %v8510 = vadd.f32 %v8486, %v8502
        %v8511 = vadd.f32 %v8487, %v8503
        %v8512 = vadd.f32 %v8488, %v8504
        %v8513 = vadd.f32 %v8489, %v8505
        %v8514 = vadd.f32 %v8490, %v8506
        %v8515 = vadd.f32 %v8491, %v8507
        %v8516 = vadd.f32 %v8492, %v8508
        %v8517 = vadd.f32 %v8493, %v8509
        %v8518 = vpack.c.bf16 %v8510, %v8510
        %v8519 = vpack.c.bf16 %v8511, %v8511
        %v8520 = vpack.c.bf16 %v8512, %v8512
        %v8521 = vpack.c.bf16 %v8513, %v8513
        %v8522 = vpack.c.bf16 %v8514, %v8514
        %v8523 = vpack.c.bf16 %v8515, %v8515
        %v8524 = vpack.c.bf16 %v8516, %v8516
        %v8525 = vpack.c.bf16 %v8517, %v8517
        %8526 = vst [vmem:[%s567] sm:$0xf] %v8518
        %8527 = vst [vmem:[%s567 + $0x4] sm:$0xf] %v8519
        %8528 = vst [vmem:[%s567 + $0x8] sm:$0xf] %v8520
        %8529 = vst [vmem:[%s567 + $0xc] sm:$0xf] %v8521
        %8530 = vst [vmem:[%s567 + $0x10] sm:$0xf] %v8522
        %8531 = vst [vmem:[%s567 + $0x14] sm:$0xf] %v8523
        %8532 = vst [vmem:[%s567 + $0x18] sm:$0xf] %v8524
        %8533 = vst [vmem:[%s567 + $0x1c] sm:$0xf] %v8525
        %s8534 = sand.u32 %s277, 1
        %s8535 = scalar_lea.sflag [#allocation6], %s8534
        %s8536 = sand.u32 %s277, 1
        %s8537 = smul.addr %s8536, 32
        %s8538 = scalar_lea.vmem [#allocation22], %s8537
        // Predicated region
        $region109: #{tpu_custom_call.1} parent=63 // pred_check
          %p8539 = pneg %p287
        $region110: #{tpu_custom_call.1} parent=63 // pred_check_branch
          %8541 = sbr.rel (%p8539) target = $region112
        $region111: #{tpu_custom_call.1} parent=63 // pred_region
          %8543 = vsyncadd %s8535, 0
          %s8544 = smul.addr %s33, 8
          %s8545 = smul.addr %s8544, 4
          %s8546 = scalar_lea.hbm %s11, %s8545
          %s8547 = sshll.u32 %s8538, 4
          %s8548 = int_to_ptr.vmem [resolvable:$true] %s8547
          %s8549 = sshll.u32 %s8546, 4
          %s8550 = int_to_ptr.hbm [resolvable:$true] %s8549
          %8555 = dma.vmem_to_hbm [thread:$0]  %s8548, 512, %s8550, %s8535, 64, 64, 4
        $region112: #{tpu_custom_call.1} parent=63 // pred_fallthru
          _
      $region64: #{tpu_custom_call.1} parent=5 // pred_fallthru
        _
      %p8556 = scmp.le.s32.totalorder 2, %s28
      // Predicated region
      $region113: #{tpu_custom_call.1} parent=5 // pred_check
        %p8557 = pneg %p8556
      $region114: #{tpu_custom_call.1} parent=5 // pred_check_branch
        %8559 = sbr.rel (%p8557) target = $region116
      $region115: #{tpu_custom_call.1} parent=5 // pred_region
        %s8560 = ssub.s32 %s28, 2
        // Predicated region
        $region117: #{tpu_custom_call.1} parent=115 // pred_check
          %p8561 = pneg %p293
        $region118: #{tpu_custom_call.1} parent=115 // pred_check_branch
          %8563 = sbr.rel (%p8561) target = $region120
        $region119: #{tpu_custom_call.1} parent=115 // pred_region
          %s8564 = sand.u32 %s278, 1
          %s8565 = scalar_lea.sflag [#allocation6], %s8564
          %s8566 = sand.u32 %s278, 1
          %s8567 = smul.addr %s8566, 32
          %s8568 = scalar_lea.vmem [#allocation22], %s8567
          %8570 = dma.done %s8565, 512
        $region120: #{tpu_custom_call.1} parent=115 // pred_fallthru
          _
      $region116: #{tpu_custom_call.1} parent=5 // pred_fallthru
        _
    $region6: #{tpu_custom_call.1} parent=1 // loop_footer
      %s32 = sadd.s32 1, %s28
    $region7: #{tpu_custom_call.1} parent=1 // loop_footer_branch
      %27 = sbr.rel target = $region3
    $region8: #{tpu_custom_call.1} parent=1 // loop_exit
      _
    %8571 = vsyncpa [#allocation5], 1
    %s8572 = scalar_lea.sflag [#allocation5], 1
    %8573 = vsyncpa %s8572, 1
    %8574 = vsyncpa [#allocation8], 1
    %8575 = vsyncpa [#allocation11], 1
    %8576 = vsyncpa [#allocation14], 1
    %8577 = vsyncpa [#allocation17], 1
    %8578 = vsyncpa [#allocation20], 1
    %8579 = vsyncpa [#allocation6], 1
    %s8580 = scalar_lea.sflag [#allocation6], 1
    %8581 = vsyncpa %s8580, 1

</llo_original>
